<compile_context>
chip_gen: v5e
topology: v5e:2x2
jax: 0.10.0
libtpu: 0.0.40
codegen_flags: <defaults>
</compile_context>

<pallas_src>
import jax
import jax.numpy as jnp
from jax.experimental import pallas as pl
from jax.experimental.pallas import tpu as pltpu

EPS = 1e-5


def _bn_train(y, gamma, beta):
    """Train-mode BatchNorm over rows of (M, C); f32, biased variance.

    Two-pass (mean, then centered sum of squares) for numerical robustness —
    E[x^2] - mean^2 can catastrophically cancel when |mean| >> std.
    """
    inv_m = 1.0 / y.shape[0]
    mean = jnp.sum(y, axis=0, keepdims=True) * inv_m
    d = y - mean
    var = jnp.sum(d * d, axis=0, keepdims=True) * inv_m
    return d * jax.lax.rsqrt(var + EPS) * gamma + beta


def _conv3x3_from_refs(tap_view, w_ref, m, c, cast_to_bf16):
    """3x3 conv as 9 accumulating MXU matmuls (K = c each), f32 accumulation.

    tap_view(kh, kw) must return the (n, ho, wo, c) tap read as a zero-cost
    ref view.  w_ref is a (9, c, cout) bf16 ref (tap-major, kh*3 + kw).
    """
    acc = None
    for kh in range(3):
        for kw in range(3):
            p = tap_view(kh, kw).reshape(m, c)
            if cast_to_bf16:
                p = p.astype(jnp.bfloat16)
            y = jnp.dot(p, w_ref[kh * 3 + kw], preferred_element_type=jnp.float32)
            acc = y if acc is None else acc + y
    return acc


def _make_kernel(n, ho, wo, cin, cout, stride, has_proj, n_xparts, x_is_bf16):
    m = n * ho * wo

    def kernel(*refs):
        it = iter(refs)
        xparts = [next(it) for _ in range(n_xparts)]
        w1_ref, g1_ref, b1_ref = next(it), next(it), next(it)
        w2_ref, g2_ref, b2_ref = next(it), next(it), next(it)
        if has_proj:
            ws_ref, gs_ref, bs_ref = next(it), next(it), next(it)
        out_ref = next(it)
        mid_ref = next(it)

        # ---- conv1 (3x3, stride) -> bn1 (batch stats) -> relu --------------
        def conv1_tap(kh, kw):
            if stride == 1:
                return xparts[0][:, pl.ds(kh, ho), pl.ds(kw, wo), :]
            # stride 2: tap (kh, kw) lives in the (kh&1, kw&1) parity plane at
            # block offset (kh//2, kw//2) -> contiguous, unstrided ref view.
            part = xparts[(kh % 2) * 2 + (kw % 2)]
            return part[:, pl.ds(kh // 2, ho), pl.ds(kw // 2, wo), :]

        y1 = _conv3x3_from_refs(conv1_tap, w1_ref, m, cin, not x_is_bf16)
        y1 = jnp.maximum(_bn_train(y1, g1_ref[...], b1_ref[...]), 0.0)

        # Padded intermediate: one bulk zero (replaces four thin masked halo
        # strips), then the interior.  Interior double-write is negligible at
        # these shapes; once gridded, zero only on first visit.
        mid_ref[...] = jnp.zeros(mid_ref.shape, mid_ref.dtype)
        mid_ref[:, pl.ds(1, ho), pl.ds(1, wo), :] = y1.reshape(n, ho, wo, cout)

        # ---- conv2 (3x3, stride 1) -> bn2 ----------------------------------
        # mid is kept f32 so the halo-offset stores stay on robust 32-bit
        # layouts; the per-tap bf16 casts below are tiny (9 * m * cout VPU ops).
        def conv2_tap(kh, kw):
            return mid_ref[:, pl.ds(kh, ho), pl.ds(kw, wo), :]

        y2 = _conv3x3_from_refs(conv2_tap, w2_ref, m, cout, True)
        y2 = _bn_train(y2, g2_ref[...], b2_ref[...])

        # ---- shortcut: identity, or 1x1 conv (pure matmul) + bn ------------
        if stride == 1:
            xsc = xparts[0][:, pl.ds(1, ho), pl.ds(1, wo), :]      # interior of xpad
        else:
            xsc = xparts[3][:, pl.ds(0, ho), pl.ds(0, wo), :]      # x[:, ::2, ::2, :]
        xsc = xsc.reshape(m, cin)
        if has_proj:
            sc = jnp.dot(xsc.astype(jnp.bfloat16), ws_ref[...],
                         preferred_element_type=jnp.float32)
            sc = _bn_train(sc, gs_ref[...], bs_ref[...])
        else:
            sc = xsc.astype(jnp.float32)

        out_ref[...] = jnp.maximum(y2 + sc, 0.0)

    return kernel


def _compiler_params():
    # Generation-aware scoped-VMEM budget: ~100 MiB on 128-MiB parts (v5e/v6e)
    # so mid-size shapes stay resident; 40 MiB on v7x (64 MiB physical) to
    # leave double-buffering headroom once this kernel is gridded.
    limit = 40 * 1024 * 1024
    try:
        info = pltpu.get_tpu_info()
        phys = getattr(info, "vmem_capacity_bytes", None)
        if phys is None:
            phys = getattr(info, "vmem_size_bytes", None)
        if phys is not None and phys >= 96 * 1024 * 1024:
            limit = 100 * 1024 * 1024
    except Exception:
        pass
    return pltpu.CompilerParams(vmem_limit_bytes=limit)


def basic_block_forward(x_nchw, params, stride=1):
    """Wrapper: NCHW in, NCHW out (matches the PyTorch module)."""
    w1, g1, b1, w2, g2, b2, ws, gs, bs = params
    n, cin, h, w_sp = x_nchw.shape
    cout = w1.shape[-1]
    assert stride in (1, 2), "BasicBlock only uses stride 1 or 2"
    has_proj = (stride != 1) or (cin != cout)
    ho = (h - 1) // stride + 1
    wo = (w_sp - 1) // stride + 1
    m = n * ho * wo
    f32 = jnp.float32
    bf16 = jnp.bfloat16

    # Glue: NCHW -> NHWC, explicit zero padding (done once in XLA).
    x = jnp.transpose(x_nchw, (0, 2, 3, 1)).astype(f32)
    xpad = jnp.pad(x, ((0, 0), (1, 1), (1, 1), (0, 0)))

    if stride == 1:
        # bf16 HBM->VMEM input: halves the largest DMA and removes the nine
        # per-tap casts.  Guard: keep the packed second-minor (wo) tile-aligned
        # for the in-kernel (n,ho,wo,C)->(M,C) merge of bf16 tap views.
        in_dt = bf16 if (wo % 16 == 0) else f32
        xparts = [xpad.astype(in_dt)]
        x_is_bf16 = in_dt == bf16
    else:
        # stride 2: pre-split the padded input into the four (H,W)-parity
        # planes so every conv1 tap (and the shortcut's x[::2, ::2] == the
        # odd/odd plane) is a contiguous, unstrided ref view inside the kernel.
        # Rare (one block per stage), kept f32 for robust packed-row alignment.
        xparts = [xpad[:, i::2, j::2, :].astype(f32) for i in (0, 1) for j in (0, 1)]
        x_is_bf16 = False

    args = list(xparts)
    args += [
        w1.reshape(9, cin, cout).astype(bf16),          # tap-major (kh*3+kw, Cin, Cout)
        g1.reshape(1, cout).astype(f32), b1.reshape(1, cout).astype(f32),
        w2.reshape(9, cout, cout).astype(bf16),
        g2.reshape(1, cout).astype(f32), b2.reshape(1, cout).astype(f32),
    ]
    if has_proj:
        args += [ws.astype(bf16),
                 gs.reshape(1, cout).astype(f32), bs.reshape(1, cout).astype(f32)]

    kernel = _make_kernel(n, ho, wo, cin, cout, stride, has_proj,
                          len(xparts), x_is_bf16)
    out2d = pl.pallas_call(
        kernel,
        out_shape=jax.ShapeDtypeStruct((m, cout), f32),
        # Everything fits comfortably in VMEM at these shapes: whole arrays, no grid.
        in_specs=[pl.BlockSpec(memory_space=pltpu.MemorySpace.VMEM)] * len(args),
        out_specs=pl.BlockSpec(memory_space=pltpu.MemorySpace.VMEM),
        scratch_shapes=[
            pltpu.VMEM((n, ho + 2, wo + 2, cout), f32),   # padded conv2 input
        ],
        compiler_params=_compiler_params(),
    )(*args)
    return jnp.transpose(out2d.reshape(n, ho, wo, cout), (0, 3, 1, 2))


def reference_forward(x_nchw, params, stride=1):
    """Pure-JAX f32 reference mirroring the PyTorch forward (train-mode BN)."""
    w1, g1, b1, w2, g2, b2, ws, gs, bs = params
    cin = x_nchw.shape[1]
    cout = w1.shape[-1]
    has_proj = (stride != 1) or (cin != cout)

    def conv(x, w_hwio, s, pad):
        return jax.lax.conv_general_dilated(
            x, w_hwio, (s, s), ((pad, pad), (pad, pad)),
            dimension_numbers=("NCHW", "HWIO", "NCHW"))

    def bn(y, g, b):
        mean = jnp.mean(y, axis=(0, 2, 3), keepdims=True)
        var = jnp.mean((y - mean) ** 2, axis=(0, 2, 3), keepdims=True)
        return ((y - mean) * jax.lax.rsqrt(var + EPS) * g.reshape(1, -1, 1, 1)
                + b.reshape(1, -1, 1, 1))

    out = jax.nn.relu(bn(conv(x_nchw, w1, stride, 1), g1, b1))
    out = bn(conv(out, w2, 1, 1), g2, b2)
    if has_proj:
        sc = bn(conv(x_nchw, ws.reshape(1, 1, cin, cout), stride, 0), gs, bs)
    else:
        sc = x_nchw
    return jax.nn.relu(out + sc)


def _run_case(name, n, cin, cout, h, w, stride, key):
    ks = jax.random.split(key, 7)
    x = jax.random.normal(ks[0], (n, cin, h, w), jnp.float32)
    # Deterministic synthetic parameters (conv weights generated directly in HWIO).
    w1 = 0.2 * jax.random.normal(ks[1], (3, 3, cin, cout), jnp.float32)
    w2 = 0.2 * jax.random.normal(ks[2], (3, 3, cout, cout), jnp.float32)
    ws = 0.2 * jax.random.normal(ks[3], (cin, cout), jnp.float32)
    g1 = 1.0 + 0.1 * jax.random.normal(ks[4], (cout,), jnp.float32)
    g2 = 1.0 + 0.1 * jax.random.normal(ks[5], (cout,), jnp.float32)
    gs = 1.0 + 0.1 * jax.random.normal(ks[6], (cout,), jnp.float32)
    b1 = jnp.zeros((cout,), jnp.float32)
    b2 = 0.05 * jnp.ones((cout,), jnp.float32)
    bs = jnp.zeros((cout,), jnp.float32)
    params = (w1, g1, b1, w2, g2, b2, ws, gs, bs)

    ho = (h - 1) // stride + 1
    wo = (w - 1) // stride + 1
    out = jax.block_until_ready(basic_block_forward(x, params, stride=stride))
    ref = jax.block_until_ready(reference_forward(x, params, stride=stride))
    assert out.shape == (n, cout, ho, wo), (name, out.shape)
    # bf16 MXU operands (and bf16 input activations) vs f32 reference.
    err_abs = float(jnp.max(jnp.abs(out - ref)))
    err_rel = float(jnp.linalg.norm(out - ref) / (jnp.linalg.norm(ref) + 1e-12))
    assert err_abs < 1e-1 and err_rel < 5e-2, (name, err_abs, err_rel)


if __name__ == "__main__":
    key = jax.random.PRNGKey(0)
    k1, k2, k3 = jax.random.split(key, 3)
    # Projection shortcut path (1x1 conv + bn): in_planes != planes, stride 1.
    _run_case("proj", n=2, cin=4, cout=8, h=16, w=16, stride=1, key=k1)
    # Identity shortcut path: in_planes == planes, stride 1.
    _run_case("identity", n=2, cin=8, cout=8, h=16, w=16, stride=1, key=k2)
    # Downsampling path (stride 2, projection shortcut) — now exercised.
    _run_case("stride2", n=2, cin=4, cout=8, h=16, w=16, stride=2, key=k3)
    print("KERNEL_OK")
</pallas_src>

<mosaic_0001>
module attributes {stable_mosaic.version = 11 : i64} {
  func.func @kernel(%arg0: memref<2x18x18x4xbf16, #tpu.memory_space<vmem>>, %arg1: memref<9x4x8xbf16, #tpu.memory_space<vmem>>, %arg2: memref<1x8xf32, #tpu.memory_space<vmem>>, %arg3: memref<1x8xf32, #tpu.memory_space<vmem>>, %arg4: memref<9x8x8xbf16, #tpu.memory_space<vmem>>, %arg5: memref<1x8xf32, #tpu.memory_space<vmem>>, %arg6: memref<1x8xf32, #tpu.memory_space<vmem>>, %arg7: memref<4x8xbf16, #tpu.memory_space<vmem>>, %arg8: memref<1x8xf32, #tpu.memory_space<vmem>>, %arg9: memref<1x8xf32, #tpu.memory_space<vmem>>, %arg10: memref<512x8xf32, #tpu.memory_space<vmem>>, %arg11: memref<2x18x18x8xf32, #tpu.memory_space<vmem>>) attributes {dimension_semantics = [], scalar_prefetch = 0 : i64, scratch_operands = 1 : i64, tpu.core_type = #tpu.core_type<tc>} {
    %c0 = arith.constant 0 : index
    %c0_0 = arith.constant 0 : index
    %c0_1 = arith.constant 0 : index
    %c0_2 = arith.constant 0 : index
    %0 = vector.load %arg0[%c0, %c0_0, %c0_1, %c0_2] : memref<2x18x18x4xbf16, #tpu.memory_space<vmem>>, vector<2x16x16x4xbf16>
    %1 = vector.shape_cast %0 : vector<2x16x16x4xbf16> to vector<512x4xbf16>
    %c0_3 = arith.constant 0 : index
    %c0_4 = arith.constant 0 : index
    %c0_5 = arith.constant 0 : index
    %2 = vector.load %arg1[%c0_3, %c0_4, %c0_5] : memref<9x4x8xbf16, #tpu.memory_space<vmem>>, vector<1x4x8xbf16>
    %3 = vector.shape_cast %2 : vector<1x4x8xbf16> to vector<4x8xbf16>
    %cst = arith.constant dense<0.000000e+00> : vector<512x8xf32>
    %4 = tpu.matmul %1, %3, %cst {dimension_numbers = #tpu.dot_dimension_numbers<[1], [0], [0], [1], [0, 0, 1, 1], [], []>} : vector<512x4xbf16>, vector<4x8xbf16>, vector<512x8xf32> -> vector<512x8xf32>
    %c0_6 = arith.constant 0 : index
    %c0_7 = arith.constant 0 : index
    %c1 = arith.constant 1 : index
    %c0_8 = arith.constant 0 : index
    %5 = vector.load %arg0[%c0_6, %c0_7, %c1, %c0_8] : memref<2x18x18x4xbf16, #tpu.memory_space<vmem>>, vector<2x16x16x4xbf16>
    %6 = vector.shape_cast %5 : vector<2x16x16x4xbf16> to vector<512x4xbf16>
    %c1_9 = arith.constant 1 : index
    %c0_10 = arith.constant 0 : index
    %c0_11 = arith.constant 0 : index
    %7 = vector.load %arg1[%c1_9, %c0_10, %c0_11] : memref<9x4x8xbf16, #tpu.memory_space<vmem>>, vector<1x4x8xbf16>
    %8 = vector.shape_cast %7 : vector<1x4x8xbf16> to vector<4x8xbf16>
    %cst_12 = arith.constant dense<0.000000e+00> : vector<512x8xf32>
    %9 = tpu.matmul %6, %8, %cst_12 {dimension_numbers = #tpu.dot_dimension_numbers<[1], [0], [0], [1], [0, 0, 1, 1], [], []>} : vector<512x4xbf16>, vector<4x8xbf16>, vector<512x8xf32> -> vector<512x8xf32>
    %10 = arith.addf %4, %9 : vector<512x8xf32>
    %c0_13 = arith.constant 0 : index
    %c0_14 = arith.constant 0 : index
    %c2 = arith.constant 2 : index
    %c0_15 = arith.constant 0 : index
    %11 = vector.load %arg0[%c0_13, %c0_14, %c2, %c0_15] : memref<2x18x18x4xbf16, #tpu.memory_space<vmem>>, vector<2x16x16x4xbf16>
    %12 = vector.shape_cast %11 : vector<2x16x16x4xbf16> to vector<512x4xbf16>
    %c2_16 = arith.constant 2 : index
    %c0_17 = arith.constant 0 : index
    %c0_18 = arith.constant 0 : index
    %13 = vector.load %arg1[%c2_16, %c0_17, %c0_18] : memref<9x4x8xbf16, #tpu.memory_space<vmem>>, vector<1x4x8xbf16>
    %14 = vector.shape_cast %13 : vector<1x4x8xbf16> to vector<4x8xbf16>
    %cst_19 = arith.constant dense<0.000000e+00> : vector<512x8xf32>
    %15 = tpu.matmul %12, %14, %cst_19 {dimension_numbers = #tpu.dot_dimension_numbers<[1], [0], [0], [1], [0, 0, 1, 1], [], []>} : vector<512x4xbf16>, vector<4x8xbf16>, vector<512x8xf32> -> vector<512x8xf32>
    %16 = arith.addf %10, %15 : vector<512x8xf32>
    %c0_20 = arith.constant 0 : index
    %c1_21 = arith.constant 1 : index
    %c0_22 = arith.constant 0 : index
    %c0_23 = arith.constant 0 : index
    %17 = vector.load %arg0[%c0_20, %c1_21, %c0_22, %c0_23] : memref<2x18x18x4xbf16, #tpu.memory_space<vmem>>, vector<2x16x16x4xbf16>
    %18 = vector.shape_cast %17 : vector<2x16x16x4xbf16> to vector<512x4xbf16>
    %c3 = arith.constant 3 : index
    %c0_24 = arith.constant 0 : index
    %c0_25 = arith.constant 0 : index
    %19 = vector.load %arg1[%c3, %c0_24, %c0_25] : memref<9x4x8xbf16, #tpu.memory_space<vmem>>, vector<1x4x8xbf16>
    %20 = vector.shape_cast %19 : vector<1x4x8xbf16> to vector<4x8xbf16>
    %cst_26 = arith.constant dense<0.000000e+00> : vector<512x8xf32>
    %21 = tpu.matmul %18, %20, %cst_26 {dimension_numbers = #tpu.dot_dimension_numbers<[1], [0], [0], [1], [0, 0, 1, 1], [], []>} : vector<512x4xbf16>, vector<4x8xbf16>, vector<512x8xf32> -> vector<512x8xf32>
    %22 = arith.addf %16, %21 : vector<512x8xf32>
    %c0_27 = arith.constant 0 : index
    %c1_28 = arith.constant 1 : index
    %c1_29 = arith.constant 1 : index
    %c0_30 = arith.constant 0 : index
    %23 = vector.load %arg0[%c0_27, %c1_28, %c1_29, %c0_30] : memref<2x18x18x4xbf16, #tpu.memory_space<vmem>>, vector<2x16x16x4xbf16>
    %24 = vector.shape_cast %23 : vector<2x16x16x4xbf16> to vector<512x4xbf16>
    %c4 = arith.constant 4 : index
    %c0_31 = arith.constant 0 : index
    %c0_32 = arith.constant 0 : index
    %25 = vector.load %arg1[%c4, %c0_31, %c0_32] : memref<9x4x8xbf16, #tpu.memory_space<vmem>>, vector<1x4x8xbf16>
    %26 = vector.shape_cast %25 : vector<1x4x8xbf16> to vector<4x8xbf16>
    %cst_33 = arith.constant dense<0.000000e+00> : vector<512x8xf32>
    %27 = tpu.matmul %24, %26, %cst_33 {dimension_numbers = #tpu.dot_dimension_numbers<[1], [0], [0], [1], [0, 0, 1, 1], [], []>} : vector<512x4xbf16>, vector<4x8xbf16>, vector<512x8xf32> -> vector<512x8xf32>
    %28 = arith.addf %22, %27 : vector<512x8xf32>
    %c0_34 = arith.constant 0 : index
    %c1_35 = arith.constant 1 : index
    %c2_36 = arith.constant 2 : index
    %c0_37 = arith.constant 0 : index
    %29 = vector.load %arg0[%c0_34, %c1_35, %c2_36, %c0_37] : memref<2x18x18x4xbf16, #tpu.memory_space<vmem>>, vector<2x16x16x4xbf16>
    %30 = vector.shape_cast %29 : vector<2x16x16x4xbf16> to vector<512x4xbf16>
    %c5 = arith.constant 5 : index
    %c0_38 = arith.constant 0 : index
    %c0_39 = arith.constant 0 : index
    %31 = vector.load %arg1[%c5, %c0_38, %c0_39] : memref<9x4x8xbf16, #tpu.memory_space<vmem>>, vector<1x4x8xbf16>
    %32 = vector.shape_cast %31 : vector<1x4x8xbf16> to vector<4x8xbf16>
    %cst_40 = arith.constant dense<0.000000e+00> : vector<512x8xf32>
    %33 = tpu.matmul %30, %32, %cst_40 {dimension_numbers = #tpu.dot_dimension_numbers<[1], [0], [0], [1], [0, 0, 1, 1], [], []>} : vector<512x4xbf16>, vector<4x8xbf16>, vector<512x8xf32> -> vector<512x8xf32>
    %34 = arith.addf %28, %33 : vector<512x8xf32>
    %c0_41 = arith.constant 0 : index
    %c2_42 = arith.constant 2 : index
    %c0_43 = arith.constant 0 : index
    %c0_44 = arith.constant 0 : index
    %35 = vector.load %arg0[%c0_41, %c2_42, %c0_43, %c0_44] : memref<2x18x18x4xbf16, #tpu.memory_space<vmem>>, vector<2x16x16x4xbf16>
    %36 = vector.shape_cast %35 : vector<2x16x16x4xbf16> to vector<512x4xbf16>
    %c6 = arith.constant 6 : index
    %c0_45 = arith.constant 0 : index
    %c0_46 = arith.constant 0 : index
    %37 = vector.load %arg1[%c6, %c0_45, %c0_46] : memref<9x4x8xbf16, #tpu.memory_space<vmem>>, vector<1x4x8xbf16>
    %38 = vector.shape_cast %37 : vector<1x4x8xbf16> to vector<4x8xbf16>
    %cst_47 = arith.constant dense<0.000000e+00> : vector<512x8xf32>
    %39 = tpu.matmul %36, %38, %cst_47 {dimension_numbers = #tpu.dot_dimension_numbers<[1], [0], [0], [1], [0, 0, 1, 1], [], []>} : vector<512x4xbf16>, vector<4x8xbf16>, vector<512x8xf32> -> vector<512x8xf32>
    %40 = arith.addf %34, %39 : vector<512x8xf32>
    %c0_48 = arith.constant 0 : index
    %c2_49 = arith.constant 2 : index
    %c1_50 = arith.constant 1 : index
    %c0_51 = arith.constant 0 : index
    %41 = vector.load %arg0[%c0_48, %c2_49, %c1_50, %c0_51] : memref<2x18x18x4xbf16, #tpu.memory_space<vmem>>, vector<2x16x16x4xbf16>
    %42 = vector.shape_cast %41 : vector<2x16x16x4xbf16> to vector<512x4xbf16>
    %c7 = arith.constant 7 : index
    %c0_52 = arith.constant 0 : index
    %c0_53 = arith.constant 0 : index
    %43 = vector.load %arg1[%c7, %c0_52, %c0_53] : memref<9x4x8xbf16, #tpu.memory_space<vmem>>, vector<1x4x8xbf16>
    %44 = vector.shape_cast %43 : vector<1x4x8xbf16> to vector<4x8xbf16>
    %cst_54 = arith.constant dense<0.000000e+00> : vector<512x8xf32>
    %45 = tpu.matmul %42, %44, %cst_54 {dimension_numbers = #tpu.dot_dimension_numbers<[1], [0], [0], [1], [0, 0, 1, 1], [], []>} : vector<512x4xbf16>, vector<4x8xbf16>, vector<512x8xf32> -> vector<512x8xf32>
    %46 = arith.addf %40, %45 : vector<512x8xf32>
    %c0_55 = arith.constant 0 : index
    %c2_56 = arith.constant 2 : index
    %c2_57 = arith.constant 2 : index
    %c0_58 = arith.constant 0 : index
    %47 = vector.load %arg0[%c0_55, %c2_56, %c2_57, %c0_58] : memref<2x18x18x4xbf16, #tpu.memory_space<vmem>>, vector<2x16x16x4xbf16>
    %48 = vector.shape_cast %47 : vector<2x16x16x4xbf16> to vector<512x4xbf16>
    %c8 = arith.constant 8 : index
    %c0_59 = arith.constant 0 : index
    %c0_60 = arith.constant 0 : index
    %49 = vector.load %arg1[%c8, %c0_59, %c0_60] : memref<9x4x8xbf16, #tpu.memory_space<vmem>>, vector<1x4x8xbf16>
    %50 = vector.shape_cast %49 : vector<1x4x8xbf16> to vector<4x8xbf16>
    %cst_61 = arith.constant dense<0.000000e+00> : vector<512x8xf32>
    %51 = tpu.matmul %48, %50, %cst_61 {dimension_numbers = #tpu.dot_dimension_numbers<[1], [0], [0], [1], [0, 0, 1, 1], [], []>} : vector<512x4xbf16>, vector<4x8xbf16>, vector<512x8xf32> -> vector<512x8xf32>
    %52 = arith.addf %46, %51 : vector<512x8xf32>
    %c0_62 = arith.constant 0 : index
    %c0_63 = arith.constant 0 : index
    %53 = vector.load %arg2[%c0_62, %c0_63] : memref<1x8xf32, #tpu.memory_space<vmem>>, vector<1x8xf32>
    %c0_64 = arith.constant 0 : index
    %c0_65 = arith.constant 0 : index
    %54 = vector.load %arg3[%c0_64, %c0_65] : memref<1x8xf32, #tpu.memory_space<vmem>>, vector<1x8xf32>
    %cst_66 = arith.constant dense<0.000000e+00> : vector<8xf32>
    %55 = vector.multi_reduction <add>, %52, %cst_66 [0] : vector<512x8xf32> to vector<8xf32>
    %56 = vector.shape_cast %55 : vector<8xf32> to vector<1x8xf32>
    %cst_67 = arith.constant 0.001953125 : f32
    %57 = vector.broadcast %cst_67 : f32 to vector<1x8xf32>
    %58 = arith.mulf %56, %57 : vector<1x8xf32>
    %59 = vector.broadcast %58 : vector<1x8xf32> to vector<512x8xf32>
    %60 = arith.subf %52, %59 : vector<512x8xf32>
    %61 = arith.mulf %60, %60 : vector<512x8xf32>
    %cst_68 = arith.constant dense<0.000000e+00> : vector<8xf32>
    %62 = vector.multi_reduction <add>, %61, %cst_68 [0] : vector<512x8xf32> to vector<8xf32>
    %63 = vector.shape_cast %62 : vector<8xf32> to vector<1x8xf32>
    %cst_69 = arith.constant 0.001953125 : f32
    %64 = vector.broadcast %cst_69 : f32 to vector<1x8xf32>
    %65 = arith.mulf %63, %64 : vector<1x8xf32>
    %cst_70 = arith.constant 9.99999974E-6 : f32
    %66 = vector.broadcast %cst_70 : f32 to vector<1x8xf32>
    %67 = arith.addf %65, %66 : vector<1x8xf32>
    %68 = math.rsqrt %67 : vector<1x8xf32>
    %69 = vector.broadcast %68 : vector<1x8xf32> to vector<512x8xf32>
    %70 = arith.mulf %60, %69 : vector<512x8xf32>
    %71 = vector.broadcast %53 : vector<1x8xf32> to vector<512x8xf32>
    %72 = arith.mulf %70, %71 : vector<512x8xf32>
    %73 = vector.broadcast %54 : vector<1x8xf32> to vector<512x8xf32>
    %74 = arith.addf %72, %73 : vector<512x8xf32>
    %cst_71 = arith.constant 0.000000e+00 : f32
    %75 = vector.broadcast %cst_71 : f32 to vector<512x8xf32>
    %76 = arith.maximumf %74, %75 : vector<512x8xf32>
    %cst_72 = arith.constant 0.000000e+00 : f32
    %77 = vector.broadcast %cst_72 : f32 to vector<2x18x18x8xf32>
    %c0_73 = arith.constant 0 : index
    %c0_74 = arith.constant 0 : index
    %c0_75 = arith.constant 0 : index
    %c0_76 = arith.constant 0 : index
    %78 = vector.load %arg11[%c0_73, %c0_74, %c0_75, %c0_76] : memref<2x18x18x8xf32, #tpu.memory_space<vmem>>, vector<2x18x18x8xf32>
    tpu.vector_store %arg11[%c0_73, %c0_74, %c0_75, %c0_76], %77 {strides = array<i32>} : memref<2x18x18x8xf32, #tpu.memory_space<vmem>>, vector<2x18x18x8xf32>,
    %79 = vector.shape_cast %76 : vector<512x8xf32> to vector<2x16x16x8xf32>
    %c0_77 = arith.constant 0 : index
    %c1_78 = arith.constant 1 : index
    %c1_79 = arith.constant 1 : index
    %c0_80 = arith.constant 0 : index
    %80 = vector.load %arg11[%c0_77, %c1_78, %c1_79, %c0_80] : memref<2x18x18x8xf32, #tpu.memory_space<vmem>>, vector<2x16x16x8xf32>
    tpu.vector_store %arg11[%c0_77, %c1_78, %c1_79, %c0_80], %79 {strides = array<i32>} : memref<2x18x18x8xf32, #tpu.memory_space<vmem>>, vector<2x16x16x8xf32>,
    %c0_81 = arith.constant 0 : index
    %c0_82 = arith.constant 0 : index
    %c0_83 = arith.constant 0 : index
    %c0_84 = arith.constant 0 : index
    %81 = vector.load %arg11[%c0_81, %c0_82, %c0_83, %c0_84] : memref<2x18x18x8xf32, #tpu.memory_space<vmem>>, vector<2x16x16x8xf32>
    %82 = vector.shape_cast %81 : vector<2x16x16x8xf32> to vector<512x8xf32>
    %83 = arith.truncf %82 : vector<512x8xf32> to vector<512x8xbf16>
    %c0_85 = arith.constant 0 : index
    %c0_86 = arith.constant 0 : index
    %c0_87 = arith.constant 0 : index
    %84 = vector.load %arg4[%c0_85, %c0_86, %c0_87] : memref<9x8x8xbf16, #tpu.memory_space<vmem>>, vector<1x8x8xbf16>
    %85 = vector.shape_cast %84 : vector<1x8x8xbf16> to vector<8x8xbf16>
    %cst_88 = arith.constant dense<0.000000e+00> : vector<512x8xf32>
    %86 = tpu.matmul %83, %85, %cst_88 {dimension_numbers = #tpu.dot_dimension_numbers<[1], [0], [0], [1], [0, 0, 1, 1], [], []>} : vector<512x8xbf16>, vector<8x8xbf16>, vector<512x8xf32> -> vector<512x8xf32>
    %c0_89 = arith.constant 0 : index
    %c0_90 = arith.constant 0 : index
    %c1_91 = arith.constant 1 : index
    %c0_92 = arith.constant 0 : index
    %87 = vector.load %arg11[%c0_89, %c0_90, %c1_91, %c0_92] : memref<2x18x18x8xf32, #tpu.memory_space<vmem>>, vector<2x16x16x8xf32>
    %88 = vector.shape_cast %87 : vector<2x16x16x8xf32> to vector<512x8xf32>
    %89 = arith.truncf %88 : vector<512x8xf32> to vector<512x8xbf16>
    %c1_93 = arith.constant 1 : index
    %c0_94 = arith.constant 0 : index
    %c0_95 = arith.constant 0 : index
    %90 = vector.load %arg4[%c1_93, %c0_94, %c0_95] : memref<9x8x8xbf16, #tpu.memory_space<vmem>>, vector<1x8x8xbf16>
    %91 = vector.shape_cast %90 : vector<1x8x8xbf16> to vector<8x8xbf16>
    %cst_96 = arith.constant dense<0.000000e+00> : vector<512x8xf32>
    %92 = tpu.matmul %89, %91, %cst_96 {dimension_numbers = #tpu.dot_dimension_numbers<[1], [0], [0], [1], [0, 0, 1, 1], [], []>} : vector<512x8xbf16>, vector<8x8xbf16>, vector<512x8xf32> -> vector<512x8xf32>
    %93 = arith.addf %86, %92 : vector<512x8xf32>
    %c0_97 = arith.constant 0 : index
    %c0_98 = arith.constant 0 : index
    %c2_99 = arith.constant 2 : index
    %c0_100 = arith.constant 0 : index
    %94 = vector.load %arg11[%c0_97, %c0_98, %c2_99, %c0_100] : memref<2x18x18x8xf32, #tpu.memory_space<vmem>>, vector<2x16x16x8xf32>
    %95 = vector.shape_cast %94 : vector<2x16x16x8xf32> to vector<512x8xf32>
    %96 = arith.truncf %95 : vector<512x8xf32> to vector<512x8xbf16>
    %c2_101 = arith.constant 2 : index
    %c0_102 = arith.constant 0 : index
    %c0_103 = arith.constant 0 : index
    %97 = vector.load %arg4[%c2_101, %c0_102, %c0_103] : memref<9x8x8xbf16, #tpu.memory_space<vmem>>, vector<1x8x8xbf16>
    %98 = vector.shape_cast %97 : vector<1x8x8xbf16> to vector<8x8xbf16>
    %cst_104 = arith.constant dense<0.000000e+00> : vector<512x8xf32>
    %99 = tpu.matmul %96, %98, %cst_104 {dimension_numbers = #tpu.dot_dimension_numbers<[1], [0], [0], [1], [0, 0, 1, 1], [], []>} : vector<512x8xbf16>, vector<8x8xbf16>, vector<512x8xf32> -> vector<512x8xf32>
    %100 = arith.addf %93, %99 : vector<512x8xf32>
    %c0_105 = arith.constant 0 : index
    %c1_106 = arith.constant 1 : index
    %c0_107 = arith.constant 0 : index
    %c0_108 = arith.constant 0 : index
    %101 = vector.load %arg11[%c0_105, %c1_106, %c0_107, %c0_108] : memref<2x18x18x8xf32, #tpu.memory_space<vmem>>, vector<2x16x16x8xf32>
    %102 = vector.shape_cast %101 : vector<2x16x16x8xf32> to vector<512x8xf32>
    %103 = arith.truncf %102 : vector<512x8xf32> to vector<512x8xbf16>
    %c3_109 = arith.constant 3 : index
    %c0_110 = arith.constant 0 : index
    %c0_111 = arith.constant 0 : index
    %104 = vector.load %arg4[%c3_109, %c0_110, %c0_111] : memref<9x8x8xbf16, #tpu.memory_space<vmem>>, vector<1x8x8xbf16>
    %105 = vector.shape_cast %104 : vector<1x8x8xbf16> to vector<8x8xbf16>
    %cst_112 = arith.constant dense<0.000000e+00> : vector<512x8xf32>
    %106 = tpu.matmul %103, %105, %cst_112 {dimension_numbers = #tpu.dot_dimension_numbers<[1], [0], [0], [1], [0, 0, 1, 1], [], []>} : vector<512x8xbf16>, vector<8x8xbf16>, vector<512x8xf32> -> vector<512x8xf32>
    %107 = arith.addf %100, %106 : vector<512x8xf32>
    %c0_113 = arith.constant 0 : index
    %c1_114 = arith.constant 1 : index
    %c1_115 = arith.constant 1 : index
    %c0_116 = arith.constant 0 : index
    %108 = vector.load %arg11[%c0_113, %c1_114, %c1_115, %c0_116] : memref<2x18x18x8xf32, #tpu.memory_space<vmem>>, vector<2x16x16x8xf32>
    %109 = vector.shape_cast %108 : vector<2x16x16x8xf32> to vector<512x8xf32>
    %110 = arith.truncf %109 : vector<512x8xf32> to vector<512x8xbf16>
    %c4_117 = arith.constant 4 : index
    %c0_118 = arith.constant 0 : index
    %c0_119 = arith.constant 0 : index
    %111 = vector.load %arg4[%c4_117, %c0_118, %c0_119] : memref<9x8x8xbf16, #tpu.memory_space<vmem>>, vector<1x8x8xbf16>
    %112 = vector.shape_cast %111 : vector<1x8x8xbf16> to vector<8x8xbf16>
    %cst_120 = arith.constant dense<0.000000e+00> : vector<512x8xf32>
    %113 = tpu.matmul %110, %112, %cst_120 {dimension_numbers = #tpu.dot_dimension_numbers<[1], [0], [0], [1], [0, 0, 1, 1], [], []>} : vector<512x8xbf16>, vector<8x8xbf16>, vector<512x8xf32> -> vector<512x8xf32>
    %114 = arith.addf %107, %113 : vector<512x8xf32>
    %c0_121 = arith.constant 0 : index
    %c1_122 = arith.constant 1 : index
    %c2_123 = arith.constant 2 : index
    %c0_124 = arith.constant 0 : index
    %115 = vector.load %arg11[%c0_121, %c1_122, %c2_123, %c0_124] : memref<2x18x18x8xf32, #tpu.memory_space<vmem>>, vector<2x16x16x8xf32>
    %116 = vector.shape_cast %115 : vector<2x16x16x8xf32> to vector<512x8xf32>
    %117 = arith.truncf %116 : vector<512x8xf32> to vector<512x8xbf16>
    %c5_125 = arith.constant 5 : index
    %c0_126 = arith.constant 0 : index
    %c0_127 = arith.constant 0 : index
    %118 = vector.load %arg4[%c5_125, %c0_126, %c0_127] : memref<9x8x8xbf16, #tpu.memory_space<vmem>>, vector<1x8x8xbf16>
    %119 = vector.shape_cast %118 : vector<1x8x8xbf16> to vector<8x8xbf16>
    %cst_128 = arith.constant dense<0.000000e+00> : vector<512x8xf32>
    %120 = tpu.matmul %117, %119, %cst_128 {dimension_numbers = #tpu.dot_dimension_numbers<[1], [0], [0], [1], [0, 0, 1, 1], [], []>} : vector<512x8xbf16>, vector<8x8xbf16>, vector<512x8xf32> -> vector<512x8xf32>
    %121 = arith.addf %114, %120 : vector<512x8xf32>
    %c0_129 = arith.constant 0 : index
    %c2_130 = arith.constant 2 : index
    %c0_131 = arith.constant 0 : index
    %c0_132 = arith.constant 0 : index
    %122 = vector.load %arg11[%c0_129, %c2_130, %c0_131, %c0_132] : memref<2x18x18x8xf32, #tpu.memory_space<vmem>>, vector<2x16x16x8xf32>
    %123 = vector.shape_cast %122 : vector<2x16x16x8xf32> to vector<512x8xf32>
    %124 = arith.truncf %123 : vector<512x8xf32> to vector<512x8xbf16>
    %c6_133 = arith.constant 6 : index
    %c0_134 = arith.constant 0 : index
    %c0_135 = arith.constant 0 : index
    %125 = vector.load %arg4[%c6_133, %c0_134, %c0_135] : memref<9x8x8xbf16, #tpu.memory_space<vmem>>, vector<1x8x8xbf16>
    %126 = vector.shape_cast %125 : vector<1x8x8xbf16> to vector<8x8xbf16>
    %cst_136 = arith.constant dense<0.000000e+00> : vector<512x8xf32>
    %127 = tpu.matmul %124, %126, %cst_136 {dimension_numbers = #tpu.dot_dimension_numbers<[1], [0], [0], [1], [0, 0, 1, 1], [], []>} : vector<512x8xbf16>, vector<8x8xbf16>, vector<512x8xf32> -> vector<512x8xf32>
    %128 = arith.addf %121, %127 : vector<512x8xf32>
    %c0_137 = arith.constant 0 : index
    %c2_138 = arith.constant 2 : index
    %c1_139 = arith.constant 1 : index
    %c0_140 = arith.constant 0 : index
    %129 = vector.load %arg11[%c0_137, %c2_138, %c1_139, %c0_140] : memref<2x18x18x8xf32, #tpu.memory_space<vmem>>, vector<2x16x16x8xf32>
    %130 = vector.shape_cast %129 : vector<2x16x16x8xf32> to vector<512x8xf32>
    %131 = arith.truncf %130 : vector<512x8xf32> to vector<512x8xbf16>
    %c7_141 = arith.constant 7 : index
    %c0_142 = arith.constant 0 : index
    %c0_143 = arith.constant 0 : index
    %132 = vector.load %arg4[%c7_141, %c0_142, %c0_143] : memref<9x8x8xbf16, #tpu.memory_space<vmem>>, vector<1x8x8xbf16>
    %133 = vector.shape_cast %132 : vector<1x8x8xbf16> to vector<8x8xbf16>
    %cst_144 = arith.constant dense<0.000000e+00> : vector<512x8xf32>
    %134 = tpu.matmul %131, %133, %cst_144 {dimension_numbers = #tpu.dot_dimension_numbers<[1], [0], [0], [1], [0, 0, 1, 1], [], []>} : vector<512x8xbf16>, vector<8x8xbf16>, vector<512x8xf32> -> vector<512x8xf32>
    %135 = arith.addf %128, %134 : vector<512x8xf32>
    %c0_145 = arith.constant 0 : index
    %c2_146 = arith.constant 2 : index
    %c2_147 = arith.constant 2 : index
    %c0_148 = arith.constant 0 : index
    %136 = vector.load %arg11[%c0_145, %c2_146, %c2_147, %c0_148] : memref<2x18x18x8xf32, #tpu.memory_space<vmem>>, vector<2x16x16x8xf32>
    %137 = vector.shape_cast %136 : vector<2x16x16x8xf32> to vector<512x8xf32>
    %138 = arith.truncf %137 : vector<512x8xf32> to vector<512x8xbf16>
    %c8_149 = arith.constant 8 : index
    %c0_150 = arith.constant 0 : index
    %c0_151 = arith.constant 0 : index
    %139 = vector.load %arg4[%c8_149, %c0_150, %c0_151] : memref<9x8x8xbf16, #tpu.memory_space<vmem>>, vector<1x8x8xbf16>
    %140 = vector.shape_cast %139 : vector<1x8x8xbf16> to vector<8x8xbf16>
    %cst_152 = arith.constant dense<0.000000e+00> : vector<512x8xf32>
    %141 = tpu.matmul %138, %140, %cst_152 {dimension_numbers = #tpu.dot_dimension_numbers<[1], [0], [0], [1], [0, 0, 1, 1], [], []>} : vector<512x8xbf16>, vector<8x8xbf16>, vector<512x8xf32> -> vector<512x8xf32>
    %142 = arith.addf %135, %141 : vector<512x8xf32>
    %c0_153 = arith.constant 0 : index
    %c0_154 = arith.constant 0 : index
    %143 = vector.load %arg5[%c0_153, %c0_154] : memref<1x8xf32, #tpu.memory_space<vmem>>, vector<1x8xf32>
    %c0_155 = arith.constant 0 : index
    %c0_156 = arith.constant 0 : index
    %144 = vector.load %arg6[%c0_155, %c0_156] : memref<1x8xf32, #tpu.memory_space<vmem>>, vector<1x8xf32>
    %cst_157 = arith.constant dense<0.000000e+00> : vector<8xf32>
    %145 = vector.multi_reduction <add>, %142, %cst_157 [0] : vector<512x8xf32> to vector<8xf32>
    %146 = vector.shape_cast %145 : vector<8xf32> to vector<1x8xf32>
    %cst_158 = arith.constant 0.001953125 : f32
    %147 = vector.broadcast %cst_158 : f32 to vector<1x8xf32>
    %148 = arith.mulf %146, %147 : vector<1x8xf32>
    %149 = vector.broadcast %148 : vector<1x8xf32> to vector<512x8xf32>
    %150 = arith.subf %142, %149 : vector<512x8xf32>
    %151 = arith.mulf %150, %150 : vector<512x8xf32>
    %cst_159 = arith.constant dense<0.000000e+00> : vector<8xf32>
    %152 = vector.multi_reduction <add>, %151, %cst_159 [0] : vector<512x8xf32> to vector<8xf32>
    %153 = vector.shape_cast %152 : vector<8xf32> to vector<1x8xf32>
    %cst_160 = arith.constant 0.001953125 : f32
    %154 = vector.broadcast %cst_160 : f32 to vector<1x8xf32>
    %155 = arith.mulf %153, %154 : vector<1x8xf32>
    %cst_161 = arith.constant 9.99999974E-6 : f32
    %156 = vector.broadcast %cst_161 : f32 to vector<1x8xf32>
    %157 = arith.addf %155, %156 : vector<1x8xf32>
    %158 = math.rsqrt %157 : vector<1x8xf32>
    %159 = vector.broadcast %158 : vector<1x8xf32> to vector<512x8xf32>
    %160 = arith.mulf %150, %159 : vector<512x8xf32>
    %161 = vector.broadcast %143 : vector<1x8xf32> to vector<512x8xf32>
    %162 = arith.mulf %160, %161 : vector<512x8xf32>
    %163 = vector.broadcast %144 : vector<1x8xf32> to vector<512x8xf32>
    %164 = arith.addf %162, %163 : vector<512x8xf32>
    %c0_162 = arith.constant 0 : index
    %c1_163 = arith.constant 1 : index
    %c1_164 = arith.constant 1 : index
    %c0_165 = arith.constant 0 : index
    %165 = vector.load %arg0[%c0_162, %c1_163, %c1_164, %c0_165] : memref<2x18x18x4xbf16, #tpu.memory_space<vmem>>, vector<2x16x16x4xbf16>
    %166 = vector.shape_cast %165 : vector<2x16x16x4xbf16> to vector<512x4xbf16>
    %c0_166 = arith.constant 0 : index
    %c0_167 = arith.constant 0 : index
    %167 = vector.load %arg7[%c0_166, %c0_167] : memref<4x8xbf16, #tpu.memory_space<vmem>>, vector<4x8xbf16>
    %cst_168 = arith.constant dense<0.000000e+00> : vector<512x8xf32>
    %168 = tpu.matmul %166, %167, %cst_168 {dimension_numbers = #tpu.dot_dimension_numbers<[1], [0], [0], [1], [0, 0, 1, 1], [], []>} : vector<512x4xbf16>, vector<4x8xbf16>, vector<512x8xf32> -> vector<512x8xf32>
    %c0_169 = arith.constant 0 : index
    %c0_170 = arith.constant 0 : index
    %169 = vector.load %arg8[%c0_169, %c0_170] : memref<1x8xf32, #tpu.memory_space<vmem>>, vector<1x8xf32>
    %c0_171 = arith.constant 0 : index
    %c0_172 = arith.constant 0 : index
    %170 = vector.load %arg9[%c0_171, %c0_172] : memref<1x8xf32, #tpu.memory_space<vmem>>, vector<1x8xf32>
    %cst_173 = arith.constant dense<0.000000e+00> : vector<8xf32>
    %171 = vector.multi_reduction <add>, %168, %cst_173 [0] : vector<512x8xf32> to vector<8xf32>
    %172 = vector.shape_cast %171 : vector<8xf32> to vector<1x8xf32>
    %cst_174 = arith.constant 0.001953125 : f32
    %173 = vector.broadcast %cst_174 : f32 to vector<1x8xf32>
    %174 = arith.mulf %172, %173 : vector<1x8xf32>
    %175 = vector.broadcast %174 : vector<1x8xf32> to vector<512x8xf32>
    %176 = arith.subf %168, %175 : vector<512x8xf32>
    %177 = arith.mulf %176, %176 : vector<512x8xf32>
    %cst_175 = arith.constant dense<0.000000e+00> : vector<8xf32>
    %178 = vector.multi_reduction <add>, %177, %cst_175 [0] : vector<512x8xf32> to vector<8xf32>
    %179 = vector.shape_cast %178 : vector<8xf32> to vector<1x8xf32>
    %cst_176 = arith.constant 0.001953125 : f32
    %180 = vector.broadcast %cst_176 : f32 to vector<1x8xf32>
    %181 = arith.mulf %179, %180 : vector<1x8xf32>
    %cst_177 = arith.constant 9.99999974E-6 : f32
    %182 = vector.broadcast %cst_177 : f32 to vector<1x8xf32>
    %183 = arith.addf %181, %182 : vector<1x8xf32>
    %184 = math.rsqrt %183 : vector<1x8xf32>
    %185 = vector.broadcast %184 : vector<1x8xf32> to vector<512x8xf32>
    %186 = arith.mulf %176, %185 : vector<512x8xf32>
    %187 = vector.broadcast %169 : vector<1x8xf32> to vector<512x8xf32>
    %188 = arith.mulf %186, %187 : vector<512x8xf32>
    %189 = vector.broadcast %170 : vector<1x8xf32> to vector<512x8xf32>
    %190 = arith.addf %188, %189 : vector<512x8xf32>
    %191 = arith.addf %164, %190 : vector<512x8xf32>
    %cst_178 = arith.constant 0.000000e+00 : f32
    %192 = vector.broadcast %cst_178 : f32 to vector<512x8xf32>
    %193 = arith.maximumf %191, %192 : vector<512x8xf32>
    %c0_179 = arith.constant 0 : index
    %c0_180 = arith.constant 0 : index
    %194 = vector.load %arg10[%c0_179, %c0_180] : memref<512x8xf32, #tpu.memory_space<vmem>>, vector<512x8xf32>
    tpu.vector_store %arg10[%c0_179, %c0_180], %193 {strides = array<i32>} : memref<512x8xf32, #tpu.memory_space<vmem>>, vector<512x8xf32>,
    return
  }
}

</mosaic_0001>

<llo_original>
// kernel: tpu_custom_call.1
$region0: #{tpu_custom_call.1}
  #allocation0 [shape = 'u32[]', space=smem, size = 0x4, offset = 0x4, fixed_abs, tag = 'smem constant byte address 0x4 - core index']
  #allocation1 [shape = 'u32[72,128]{1,0:T(1,128)}', space=vmem, size = 0x9000, scoped, tag = 'internal scratch']
  #allocation2 [shape = 'f32[2,18,18,8]{3,2,1,0:T(8,128)}', space=vmem, size = 0x6c000, scoped, tag = 'scratch operand']
  %s0 = inlined_call_operand.vmem [shape: bf16[2,18,18,4], index: 0, kind: input, shape index: {}]
  %s1 = inlined_call_operand.vmem [shape: bf16[9,4,8], index: 1, kind: input, shape index: {}]
  %s2 = inlined_call_operand.vmem [shape: f32[1,8], index: 2, kind: input, shape index: {}]
  %s3 = inlined_call_operand.vmem [shape: f32[1,8], index: 3, kind: input, shape index: {}]
  %s4 = inlined_call_operand.vmem [shape: bf16[9,8,8], index: 4, kind: input, shape index: {}]
  %s5 = inlined_call_operand.vmem [shape: f32[1,8], index: 5, kind: input, shape index: {}]
  %s6 = inlined_call_operand.vmem [shape: f32[1,8], index: 6, kind: input, shape index: {}]
  %s7 = inlined_call_operand.vmem [shape: bf16[4,8], index: 7, kind: input, shape index: {}]
  %s8 = inlined_call_operand.vmem [shape: f32[1,8], index: 8, kind: input, shape index: {}]
  %s9 = inlined_call_operand.vmem [shape: f32[1,8], index: 9, kind: input, shape index: {}]
  %s10 = inlined_call_operand.vmem [shape: f32[512,8], index: 10, kind: output, shape index: {}]
  %s11 = sld [smem:[#allocation0]]
  $region50: #{tpu_custom_call.1} parent=0
    _
  %s13 = ssub.s32 1, %s11
  %s14 = scalar_select 0, %s13, %s11
  // Predicated region
  $region2: #{tpu_custom_call.1} parent=0 // pred_check
    _
  $region3: #{tpu_custom_call.1} parent=0 // pred_check_branch
    %16 = sbr.rel (0) target = $region5
  $region4: #{tpu_custom_call.1} parent=0 // pred_region
    _
  $region5: #{tpu_custom_call.1} parent=0 // pred_fallthru
    _
  // Predicated region
  $region6: #{tpu_custom_call.1} parent=0 // pred_check
    _
  $region7: #{tpu_custom_call.1} parent=0 // pred_check_branch
    %18 = sbr.rel (0) target = $region9
  $region8: #{tpu_custom_call.1} parent=0 // pred_region
    _
  $region9: #{tpu_custom_call.1} parent=0 // pred_fallthru
    _
  // Predicated region
  $region10: #{tpu_custom_call.1} parent=0 // pred_check
    _
  $region11: #{tpu_custom_call.1} parent=0 // pred_check_branch
    %20 = sbr.rel (0) target = $region13
  $region12: #{tpu_custom_call.1} parent=0 // pred_region
    _
  $region13: #{tpu_custom_call.1} parent=0 // pred_fallthru
    _
  // Predicated region
  $region14: #{tpu_custom_call.1} parent=0 // pred_check
    _
  $region15: #{tpu_custom_call.1} parent=0 // pred_check_branch
    %22 = sbr.rel (0) target = $region17
  $region16: #{tpu_custom_call.1} parent=0 // pred_region
    _
  $region17: #{tpu_custom_call.1} parent=0 // pred_fallthru
    _
  // Predicated region
  $region18: #{tpu_custom_call.1} parent=0 // pred_check
    _
  $region19: #{tpu_custom_call.1} parent=0 // pred_check_branch
    %24 = sbr.rel (0) target = $region21
  $region20: #{tpu_custom_call.1} parent=0 // pred_region
    _
  $region21: #{tpu_custom_call.1} parent=0 // pred_fallthru
    _
  // Predicated region
  $region22: #{tpu_custom_call.1} parent=0 // pred_check
    _
  $region23: #{tpu_custom_call.1} parent=0 // pred_check_branch
    %26 = sbr.rel (0) target = $region25
  $region24: #{tpu_custom_call.1} parent=0 // pred_region
    _
  $region25: #{tpu_custom_call.1} parent=0 // pred_fallthru
    _
  // Predicated region
  $region26: #{tpu_custom_call.1} parent=0 // pred_check
    _
  $region27: #{tpu_custom_call.1} parent=0 // pred_check_branch
    %28 = sbr.rel (0) target = $region29
  $region28: #{tpu_custom_call.1} parent=0 // pred_region
    _
  $region29: #{tpu_custom_call.1} parent=0 // pred_fallthru
    _
  // Predicated region
  $region30: #{tpu_custom_call.1} parent=0 // pred_check
    _
  $region31: #{tpu_custom_call.1} parent=0 // pred_check_branch
    %30 = sbr.rel (0) target = $region33
  $region32: #{tpu_custom_call.1} parent=0 // pred_region
    _
  $region33: #{tpu_custom_call.1} parent=0 // pred_fallthru
    _
  // Predicated region
  $region34: #{tpu_custom_call.1} parent=0 // pred_check
    _
  $region35: #{tpu_custom_call.1} parent=0 // pred_check_branch
    %32 = sbr.rel (0) target = $region37
  $region36: #{tpu_custom_call.1} parent=0 // pred_region
    _
  $region37: #{tpu_custom_call.1} parent=0 // pred_fallthru
    _
  // Predicated region
  $region38: #{tpu_custom_call.1} parent=0 // pred_check
    _
  $region39: #{tpu_custom_call.1} parent=0 // pred_check_branch
    %34 = sbr.rel (0) target = $region41
  $region40: #{tpu_custom_call.1} parent=0 // pred_region
    _
  $region41: #{tpu_custom_call.1} parent=0 // pred_fallthru
    _
  %v36 = vld [vmem:[%s0] sm:$0xf]
  %v37 = vld [vmem:[%s0 + $0x4] sm:$0xf]
  %v38 = vld [vmem:[%s0 + $0xc] sm:$0xf]
  %v39 = vld [vmem:[%s0 + $0x10] sm:$0xf]
  %v40 = vld [vmem:[%s0 + $0x18] sm:$0xf]
  %v41 = vld [vmem:[%s0 + $0x1c] sm:$0xf]
  %v42 = vld [vmem:[%s0 + $0x24] sm:$0xf]
  %v43 = vld [vmem:[%s0 + $0x28] sm:$0xf]
  %v44 = vld [vmem:[%s0 + $0x30] sm:$0xf]
  %v45 = vld [vmem:[%s0 + $0x34] sm:$0xf]
  %v46 = vld [vmem:[%s0 + $0x3c] sm:$0xf]
  %v47 = vld [vmem:[%s0 + $0x40] sm:$0xf]
  %v48 = vld [vmem:[%s0 + $0x48] sm:$0xf]
  %v49 = vld [vmem:[%s0 + $0x4c] sm:$0xf]
  %v50 = vld [vmem:[%s0 + $0x54] sm:$0xf]
  %v51 = vld [vmem:[%s0 + $0x58] sm:$0xf]
  %v52 = vld [vmem:[%s0 + $0x60] sm:$0xf]
  %v53 = vld [vmem:[%s0 + $0x64] sm:$0xf]
  %v54 = vld [vmem:[%s0 + $0x6c] sm:$0xf]
  %v55 = vld [vmem:[%s0 + $0x70] sm:$0xf]
  %v56 = vld [vmem:[%s0 + $0x78] sm:$0xf]
  %v57 = vld [vmem:[%s0 + $0x7c] sm:$0xf]
  %v58 = vld [vmem:[%s0 + $0x84] sm:$0xf]
  %v59 = vld [vmem:[%s0 + $0x88] sm:$0xf]
  %v60 = vld [vmem:[%s0 + $0x90] sm:$0xf]
  %v61 = vld [vmem:[%s0 + $0x94] sm:$0xf]
  %v62 = vld [vmem:[%s0 + $0x9c] sm:$0xf]
  %v63 = vld [vmem:[%s0 + $0xa0] sm:$0xf]
  %v64 = vld [vmem:[%s0 + $0xa8] sm:$0xf]
  %v65 = vld [vmem:[%s0 + $0xac] sm:$0xf]
  %v66 = vld [vmem:[%s0 + $0xb4] sm:$0xf]
  %v67 = vld [vmem:[%s0 + $0xb8] sm:$0xf]
  %v68 = vld [vmem:[%s0 + $0xd8] sm:$0xf]
  %v69 = vld [vmem:[%s0 + $0xdc] sm:$0xf]
  %v70 = vld [vmem:[%s0 + $0xe4] sm:$0xf]
  %v71 = vld [vmem:[%s0 + $0xe8] sm:$0xf]
  %v72 = vld [vmem:[%s0 + $0xf0] sm:$0xf]
  %v73 = vld [vmem:[%s0 + $0xf4] sm:$0xf]
  %v74 = vld [vmem:[%s0 + $0xfc] sm:$0xf]
  %v75 = vld [vmem:[%s0 + $0x100] sm:$0xf]
  %v76 = vld [vmem:[%s0 + $0x108] sm:$0xf]
  %v77 = vld [vmem:[%s0 + $0x10c] sm:$0xf]
  %v78 = vld [vmem:[%s0 + $0x114] sm:$0xf]
  %v79 = vld [vmem:[%s0 + $0x118] sm:$0xf]
  %v80 = vld [vmem:[%s0 + $0x120] sm:$0xf]
  %v81 = vld [vmem:[%s0 + $0x124] sm:$0xf]
  %v82 = vld [vmem:[%s0 + $0x12c] sm:$0xf]
  %v83 = vld [vmem:[%s0 + $0x130] sm:$0xf]
  %v84 = vld [vmem:[%s0 + $0x138] sm:$0xf]
  %v85 = vld [vmem:[%s0 + $0x13c] sm:$0xf]
  %v86 = vld [vmem:[%s0 + $0x144] sm:$0xf]
  %v87 = vld [vmem:[%s0 + $0x148] sm:$0xf]
  %v88 = vld [vmem:[%s0 + $0x150] sm:$0xf]
  %v89 = vld [vmem:[%s0 + $0x154] sm:$0xf]
  %v90 = vld [vmem:[%s0 + $0x15c] sm:$0xf]
  %v91 = vld [vmem:[%s0 + $0x160] sm:$0xf]
  %v92 = vld [vmem:[%s0 + $0x168] sm:$0xf]
  %v93 = vld [vmem:[%s0 + $0x16c] sm:$0xf]
  %v94 = vld [vmem:[%s0 + $0x174] sm:$0xf]
  %v95 = vld [vmem:[%s0 + $0x178] sm:$0xf]
  %v96 = vld [vmem:[%s0 + $0x180] sm:$0xf]
  %v97 = vld [vmem:[%s0 + $0x184] sm:$0xf]
  %v98 = vld [vmem:[%s0 + $0x18c] sm:$0xf]
  %v99 = vld [vmem:[%s0 + $0x190] sm:$0xf]
  %v100 = vld [vmem:[%s1] sm:$0x3]
  %v101 = vld [vmem:[%s0 + $0x8] sm:$0x1]
  %v102 = vld [vmem:[%s0 + $0x14] sm:$0x1]
  %v103 = vld [vmem:[%s0 + $0x20] sm:$0x1]
  %v104 = vld [vmem:[%s0 + $0x2c] sm:$0x1]
  %v105 = vld [vmem:[%s0 + $0x38] sm:$0x1]
  %v106 = vld [vmem:[%s0 + $0x44] sm:$0x1]
  %v107 = vld [vmem:[%s0 + $0x50] sm:$0x1]
  %v108 = vld [vmem:[%s0 + $0x5c] sm:$0x1]
  %v109 = vld [vmem:[%s0 + $0x68] sm:$0x1]
  %v110 = vld [vmem:[%s0 + $0x74] sm:$0x1]
  %v111 = vld [vmem:[%s0 + $0x80] sm:$0x1]
  %v112 = vld [vmem:[%s0 + $0x8c] sm:$0x1]
  %v113 = vld [vmem:[%s0 + $0x98] sm:$0x1]
  %v114 = vld [vmem:[%s0 + $0xa4] sm:$0x1]
  %v115 = vld [vmem:[%s0 + $0xb0] sm:$0x1]
  %v116 = vld [vmem:[%s0 + $0xbc] sm:$0x1]
  %v117 = vld [vmem:[%s0 + $0xe0] sm:$0x1]
  %v118 = vld [vmem:[%s0 + $0xec] sm:$0x1]
  %v119 = vld [vmem:[%s0 + $0xf8] sm:$0x1]
  %v120 = vld [vmem:[%s0 + $0x104] sm:$0x1]
  %v121 = vld [vmem:[%s0 + $0x110] sm:$0x1]
  %v122 = vld [vmem:[%s0 + $0x11c] sm:$0x1]
  %v123 = vld [vmem:[%s0 + $0x128] sm:$0x1]
  %v124 = vld [vmem:[%s0 + $0x134] sm:$0x1]
  %v125 = vld [vmem:[%s0 + $0x140] sm:$0x1]
  %v126 = vld [vmem:[%s0 + $0x14c] sm:$0x1]
  %v127 = vld [vmem:[%s0 + $0x158] sm:$0x1]
  %v128 = vld [vmem:[%s0 + $0x164] sm:$0x1]
  %v129 = vld [vmem:[%s0 + $0x170] sm:$0x1]
  %v130 = vld [vmem:[%s0 + $0x17c] sm:$0x1]
  %v131 = vld [vmem:[%s0 + $0x188] sm:$0x1]
  %v132 = vld [vmem:[%s0 + $0x194] sm:$0x1]
  %vm133 = vsmask.f32 3328
  %vm134 = vsmask.f32 7440
  %vm135 = vmor %vm133, %vm134
  %v137 = vshrl.u32 %v36, 16
  %v139 = vrot.slane %v137, 4
  %v140 = vshll.u32 %v36, 16
  %v142 = vrot.slane %v140, 5
  %v143 = vor.u32 %v139, %v142
  %v144 = vrot.slane %v143, 4
  %v146 = vshll.u32 %v37, 16
  %v148 = vrot.slane %v146, 5
  %v149 = vsel %vm135, %v144, %v148
  %v150 = vshrl.u32 %v37, 16
  %v152 = vrot.slane %v150, 4
  %v153 = vor.u32 %v152, %v148
  %v154 = vrot.slane %v153, 4
  %v156 = vshll.u32 %v101, 16
  %v158 = vrot.slane %v156, 5
  %v159 = vsel %vm135, %v154, %v158
  %v161 = vshrl.u32 %v38, 16
  %v163 = vrot.slane %v161, 4
  %v164 = vshll.u32 %v38, 16
  %v166 = vrot.slane %v164, 5
  %v167 = vor.u32 %v163, %v166
  %v168 = vrot.slane %v167, 4
  %v170 = vshll.u32 %v39, 16
  %v172 = vrot.slane %v170, 5
  %v173 = vsel %vm135, %v168, %v172
  %v174 = vshrl.u32 %v39, 16
  %v176 = vrot.slane %v174, 4
  %v177 = vor.u32 %v176, %v172
  %v178 = vrot.slane %v177, 4
  %v180 = vshll.u32 %v102, 16
  %v182 = vrot.slane %v180, 5
  %v183 = vsel %vm135, %v178, %v182
  %v185 = vshrl.u32 %v40, 16
  %v187 = vrot.slane %v185, 4
  %v188 = vshll.u32 %v40, 16
  %v190 = vrot.slane %v188, 5
  %v191 = vor.u32 %v187, %v190
  %v192 = vrot.slane %v191, 4
  %v194 = vshll.u32 %v41, 16
  %v196 = vrot.slane %v194, 5
  %v197 = vsel %vm135, %v192, %v196
  %v198 = vshrl.u32 %v41, 16
  %v200 = vrot.slane %v198, 4
  %v201 = vor.u32 %v200, %v196
  %v202 = vrot.slane %v201, 4
  %v204 = vshll.u32 %v103, 16
  %v206 = vrot.slane %v204, 5
  %v207 = vsel %vm135, %v202, %v206
  %v209 = vshrl.u32 %v42, 16
  %v211 = vrot.slane %v209, 4
  %v212 = vshll.u32 %v42, 16
  %v214 = vrot.slane %v212, 5
  %v215 = vor.u32 %v211, %v214
  %v216 = vrot.slane %v215, 4
  %v218 = vshll.u32 %v43, 16
  %v220 = vrot.slane %v218, 5
  %v221 = vsel %vm135, %v216, %v220
  %v222 = vshrl.u32 %v43, 16
  %v224 = vrot.slane %v222, 4
  %v225 = vor.u32 %v224, %v220
  %v226 = vrot.slane %v225, 4
  %v228 = vshll.u32 %v104, 16
  %v230 = vrot.slane %v228, 5
  %v231 = vsel %vm135, %v226, %v230
  %v233 = vshrl.u32 %v44, 16
  %v235 = vrot.slane %v233, 4
  %v236 = vshll.u32 %v44, 16
  %v238 = vrot.slane %v236, 5
  %v239 = vor.u32 %v235, %v238
  %v240 = vrot.slane %v239, 4
  %v242 = vshll.u32 %v45, 16
  %v244 = vrot.slane %v242, 5
  %v245 = vsel %vm135, %v240, %v244
  %v246 = vshrl.u32 %v45, 16
  %v248 = vrot.slane %v246, 4
  %v249 = vor.u32 %v248, %v244
  %v250 = vrot.slane %v249, 4
  %v252 = vshll.u32 %v105, 16
  %v254 = vrot.slane %v252, 5
  %v255 = vsel %vm135, %v250, %v254
  %v257 = vshrl.u32 %v46, 16
  %v259 = vrot.slane %v257, 4
  %v260 = vshll.u32 %v46, 16
  %v262 = vrot.slane %v260, 5
  %v263 = vor.u32 %v259, %v262
  %v264 = vrot.slane %v263, 4
  %v266 = vshll.u32 %v47, 16
  %v268 = vrot.slane %v266, 5
  %v269 = vsel %vm135, %v264, %v268
  %v270 = vshrl.u32 %v47, 16
  %v272 = vrot.slane %v270, 4
  %v273 = vor.u32 %v272, %v268
  %v274 = vrot.slane %v273, 4
  %v276 = vshll.u32 %v106, 16
  %v278 = vrot.slane %v276, 5
  %v279 = vsel %vm135, %v274, %v278
  %v281 = vshrl.u32 %v48, 16
  %v283 = vrot.slane %v281, 4
  %v284 = vshll.u32 %v48, 16
  %v286 = vrot.slane %v284, 5
  %v287 = vor.u32 %v283, %v286
  %v288 = vrot.slane %v287, 4
  %v290 = vshll.u32 %v49, 16
  %v292 = vrot.slane %v290, 5
  %v293 = vsel %vm135, %v288, %v292
  %v294 = vshrl.u32 %v49, 16
  %v296 = vrot.slane %v294, 4
  %v297 = vor.u32 %v296, %v292
  %v298 = vrot.slane %v297, 4
  %v300 = vshll.u32 %v107, 16
  %v302 = vrot.slane %v300, 5
  %v303 = vsel %vm135, %v298, %v302
  %v305 = vshrl.u32 %v50, 16
  %v307 = vrot.slane %v305, 4
  %v308 = vshll.u32 %v50, 16
  %v310 = vrot.slane %v308, 5
  %v311 = vor.u32 %v307, %v310
  %v312 = vrot.slane %v311, 4
  %v314 = vshll.u32 %v51, 16
  %v316 = vrot.slane %v314, 5
  %v317 = vsel %vm135, %v312, %v316
  %v318 = vshrl.u32 %v51, 16
  %v320 = vrot.slane %v318, 4
  %v321 = vor.u32 %v320, %v316
  %v322 = vrot.slane %v321, 4
  %v324 = vshll.u32 %v108, 16
  %v326 = vrot.slane %v324, 5
  %v327 = vsel %vm135, %v322, %v326
  %v329 = vshrl.u32 %v52, 16
  %v331 = vrot.slane %v329, 4
  %v332 = vshll.u32 %v52, 16
  %v334 = vrot.slane %v332, 5
  %v335 = vor.u32 %v331, %v334
  %v336 = vrot.slane %v335, 4
  %v338 = vshll.u32 %v53, 16
  %v340 = vrot.slane %v338, 5
  %v341 = vsel %vm135, %v336, %v340
  %v342 = vshrl.u32 %v53, 16
  %v344 = vrot.slane %v342, 4
  %v345 = vor.u32 %v344, %v340
  %v346 = vrot.slane %v345, 4
  %v348 = vshll.u32 %v109, 16
  %v350 = vrot.slane %v348, 5
  %v351 = vsel %vm135, %v346, %v350
  %v353 = vshrl.u32 %v54, 16
  %v355 = vrot.slane %v353, 4
  %v356 = vshll.u32 %v54, 16
  %v358 = vrot.slane %v356, 5
  %v359 = vor.u32 %v355, %v358
  %v360 = vrot.slane %v359, 4
  %v362 = vshll.u32 %v55, 16
  %v364 = vrot.slane %v362, 5
  %v365 = vsel %vm135, %v360, %v364
  %v366 = vshrl.u32 %v55, 16
  %v368 = vrot.slane %v366, 4
  %v369 = vor.u32 %v368, %v364
  %v370 = vrot.slane %v369, 4
  %v372 = vshll.u32 %v110, 16
  %v374 = vrot.slane %v372, 5
  %v375 = vsel %vm135, %v370, %v374
  %v377 = vshrl.u32 %v56, 16
  %v379 = vrot.slane %v377, 4
  %v380 = vshll.u32 %v56, 16
  %v382 = vrot.slane %v380, 5
  %v383 = vor.u32 %v379, %v382
  %v384 = vrot.slane %v383, 4
  %v386 = vshll.u32 %v57, 16
  %v388 = vrot.slane %v386, 5
  %v389 = vsel %vm135, %v384, %v388
  %v390 = vshrl.u32 %v57, 16
  %v392 = vrot.slane %v390, 4
  %v393 = vor.u32 %v392, %v388
  %v394 = vrot.slane %v393, 4
  %v396 = vshll.u32 %v111, 16
  %v398 = vrot.slane %v396, 5
  %v399 = vsel %vm135, %v394, %v398
  %v401 = vshrl.u32 %v58, 16
  %v403 = vrot.slane %v401, 4
  %v404 = vshll.u32 %v58, 16
  %v406 = vrot.slane %v404, 5
  %v407 = vor.u32 %v403, %v406
  %v408 = vrot.slane %v407, 4
  %v410 = vshll.u32 %v59, 16
  %v412 = vrot.slane %v410, 5
  %v413 = vsel %vm135, %v408, %v412
  %v414 = vshrl.u32 %v59, 16
  %v416 = vrot.slane %v414, 4
  %v417 = vor.u32 %v416, %v412
  %v418 = vrot.slane %v417, 4
  %v420 = vshll.u32 %v112, 16
  %v422 = vrot.slane %v420, 5
  %v423 = vsel %vm135, %v418, %v422
  %v425 = vshrl.u32 %v60, 16
  %v427 = vrot.slane %v425, 4
  %v428 = vshll.u32 %v60, 16
  %v430 = vrot.slane %v428, 5
  %v431 = vor.u32 %v427, %v430
  %v432 = vrot.slane %v431, 4
  %v434 = vshll.u32 %v61, 16
  %v436 = vrot.slane %v434, 5
  %v437 = vsel %vm135, %v432, %v436
  %v438 = vshrl.u32 %v61, 16
  %v440 = vrot.slane %v438, 4
  %v441 = vor.u32 %v440, %v436
  %v442 = vrot.slane %v441, 4
  %v444 = vshll.u32 %v113, 16
  %v446 = vrot.slane %v444, 5
  %v447 = vsel %vm135, %v442, %v446
  %v449 = vshrl.u32 %v62, 16
  %v451 = vrot.slane %v449, 4
  %v452 = vshll.u32 %v62, 16
  %v454 = vrot.slane %v452, 5
  %v455 = vor.u32 %v451, %v454
  %v456 = vrot.slane %v455, 4
  %v458 = vshll.u32 %v63, 16
  %v460 = vrot.slane %v458, 5
  %v461 = vsel %vm135, %v456, %v460
  %v462 = vshrl.u32 %v63, 16
  %v464 = vrot.slane %v462, 4
  %v465 = vor.u32 %v464, %v460
  %v466 = vrot.slane %v465, 4
  %v468 = vshll.u32 %v114, 16
  %v470 = vrot.slane %v468, 5
  %v471 = vsel %vm135, %v466, %v470
  %v473 = vshrl.u32 %v64, 16
  %v475 = vrot.slane %v473, 4
  %v476 = vshll.u32 %v64, 16
  %v478 = vrot.slane %v476, 5
  %v479 = vor.u32 %v475, %v478
  %v480 = vrot.slane %v479, 4
  %v482 = vshll.u32 %v65, 16
  %v484 = vrot.slane %v482, 5
  %v485 = vsel %vm135, %v480, %v484
  %v486 = vshrl.u32 %v65, 16
  %v488 = vrot.slane %v486, 4
  %v489 = vor.u32 %v488, %v484
  %v490 = vrot.slane %v489, 4
  %v492 = vshll.u32 %v115, 16
  %v494 = vrot.slane %v492, 5
  %v495 = vsel %vm135, %v490, %v494
  %v497 = vshrl.u32 %v66, 16
  %v499 = vrot.slane %v497, 4
  %v500 = vshll.u32 %v66, 16
  %v502 = vrot.slane %v500, 5
  %v503 = vor.u32 %v499, %v502
  %v504 = vrot.slane %v503, 4
  %v506 = vshll.u32 %v67, 16
  %v508 = vrot.slane %v506, 5
  %v509 = vsel %vm135, %v504, %v508
  %v510 = vshrl.u32 %v67, 16
  %v512 = vrot.slane %v510, 4
  %v513 = vor.u32 %v512, %v508
  %v514 = vrot.slane %v513, 4
  %v516 = vshll.u32 %v116, 16
  %v518 = vrot.slane %v516, 5
  %v519 = vsel %vm135, %v514, %v518
  %v521 = vshrl.u32 %v68, 16
  %v523 = vrot.slane %v521, 4
  %v524 = vshll.u32 %v68, 16
  %v526 = vrot.slane %v524, 5
  %v527 = vor.u32 %v523, %v526
  %v528 = vrot.slane %v527, 4
  %v530 = vshll.u32 %v69, 16
  %v532 = vrot.slane %v530, 5
  %v533 = vsel %vm135, %v528, %v532
  %v534 = vshrl.u32 %v69, 16
  %v536 = vrot.slane %v534, 4
  %v537 = vor.u32 %v536, %v532
  %v538 = vrot.slane %v537, 4
  %v540 = vshll.u32 %v117, 16
  %v542 = vrot.slane %v540, 5
  %v543 = vsel %vm135, %v538, %v542
  %v545 = vshrl.u32 %v70, 16
  %v547 = vrot.slane %v545, 4
  %v548 = vshll.u32 %v70, 16
  %v550 = vrot.slane %v548, 5
  %v551 = vor.u32 %v547, %v550
  %v552 = vrot.slane %v551, 4
  %v554 = vshll.u32 %v71, 16
  %v556 = vrot.slane %v554, 5
  %v557 = vsel %vm135, %v552, %v556
  %v558 = vshrl.u32 %v71, 16
  %v560 = vrot.slane %v558, 4
  %v561 = vor.u32 %v560, %v556
  %v562 = vrot.slane %v561, 4
  %v564 = vshll.u32 %v118, 16
  %v566 = vrot.slane %v564, 5
  %v567 = vsel %vm135, %v562, %v566
  %v569 = vshrl.u32 %v72, 16
  %v571 = vrot.slane %v569, 4
  %v572 = vshll.u32 %v72, 16
  %v574 = vrot.slane %v572, 5
  %v575 = vor.u32 %v571, %v574
  %v576 = vrot.slane %v575, 4
  %v578 = vshll.u32 %v73, 16
  %v580 = vrot.slane %v578, 5
  %v581 = vsel %vm135, %v576, %v580
  %v582 = vshrl.u32 %v73, 16
  %v584 = vrot.slane %v582, 4
  %v585 = vor.u32 %v584, %v580
  %v586 = vrot.slane %v585, 4
  %v588 = vshll.u32 %v119, 16
  %v590 = vrot.slane %v588, 5
  %v591 = vsel %vm135, %v586, %v590
  %v593 = vshrl.u32 %v74, 16
  %v595 = vrot.slane %v593, 4
  %v596 = vshll.u32 %v74, 16
  %v598 = vrot.slane %v596, 5
  %v599 = vor.u32 %v595, %v598
  %v600 = vrot.slane %v599, 4
  %v602 = vshll.u32 %v75, 16
  %v604 = vrot.slane %v602, 5
  %v605 = vsel %vm135, %v600, %v604
  %v606 = vshrl.u32 %v75, 16
  %v608 = vrot.slane %v606, 4
  %v609 = vor.u32 %v608, %v604
  %v610 = vrot.slane %v609, 4
  %v612 = vshll.u32 %v120, 16
  %v614 = vrot.slane %v612, 5
  %v615 = vsel %vm135, %v610, %v614
  %v617 = vshrl.u32 %v76, 16
  %v619 = vrot.slane %v617, 4
  %v620 = vshll.u32 %v76, 16
  %v622 = vrot.slane %v620, 5
  %v623 = vor.u32 %v619, %v622
  %v624 = vrot.slane %v623, 4
  %v626 = vshll.u32 %v77, 16
  %v628 = vrot.slane %v626, 5
  %v629 = vsel %vm135, %v624, %v628
  %v630 = vshrl.u32 %v77, 16
  %v632 = vrot.slane %v630, 4
  %v633 = vor.u32 %v632, %v628
  %v634 = vrot.slane %v633, 4
  %v636 = vshll.u32 %v121, 16
  %v638 = vrot.slane %v636, 5
  %v639 = vsel %vm135, %v634, %v638
  %v641 = vshrl.u32 %v78, 16
  %v643 = vrot.slane %v641, 4
  %v644 = vshll.u32 %v78, 16
  %v646 = vrot.slane %v644, 5
  %v647 = vor.u32 %v643, %v646
  %v648 = vrot.slane %v647, 4
  %v650 = vshll.u32 %v79, 16
  %v652 = vrot.slane %v650, 5
  %v653 = vsel %vm135, %v648, %v652
  %v654 = vshrl.u32 %v79, 16
  %v656 = vrot.slane %v654, 4
  %v657 = vor.u32 %v656, %v652
  %v658 = vrot.slane %v657, 4
  %v660 = vshll.u32 %v122, 16
  %v662 = vrot.slane %v660, 5
  %v663 = vsel %vm135, %v658, %v662
  %v665 = vshrl.u32 %v80, 16
  %v667 = vrot.slane %v665, 4
  %v668 = vshll.u32 %v80, 16
  %v670 = vrot.slane %v668, 5
  %v671 = vor.u32 %v667, %v670
  %v672 = vrot.slane %v671, 4
  %v674 = vshll.u32 %v81, 16
  %v676 = vrot.slane %v674, 5
  %v677 = vsel %vm135, %v672, %v676
  %v678 = vshrl.u32 %v81, 16
  %v680 = vrot.slane %v678, 4
  %v681 = vor.u32 %v680, %v676
  %v682 = vrot.slane %v681, 4
  %v684 = vshll.u32 %v123, 16
  %v686 = vrot.slane %v684, 5
  %v687 = vsel %vm135, %v682, %v686
  %v689 = vshrl.u32 %v82, 16
  %v691 = vrot.slane %v689, 4
  %v692 = vshll.u32 %v82, 16
  %v694 = vrot.slane %v692, 5
  %v695 = vor.u32 %v691, %v694
  %v696 = vrot.slane %v695, 4
  %v698 = vshll.u32 %v83, 16
  %v700 = vrot.slane %v698, 5
  %v701 = vsel %vm135, %v696, %v700
  %v702 = vshrl.u32 %v83, 16
  %v704 = vrot.slane %v702, 4
  %v705 = vor.u32 %v704, %v700
  %v706 = vrot.slane %v705, 4
  %v708 = vshll.u32 %v124, 16
  %v710 = vrot.slane %v708, 5
  %v711 = vsel %vm135, %v706, %v710
  %v713 = vshrl.u32 %v84, 16
  %v715 = vrot.slane %v713, 4
  %v716 = vshll.u32 %v84, 16
  %v718 = vrot.slane %v716, 5
  %v719 = vor.u32 %v715, %v718
  %v720 = vrot.slane %v719, 4
  %v722 = vshll.u32 %v85, 16
  %v724 = vrot.slane %v722, 5
  %v725 = vsel %vm135, %v720, %v724
  %v726 = vshrl.u32 %v85, 16
  %v728 = vrot.slane %v726, 4
  %v729 = vor.u32 %v728, %v724
  %v730 = vrot.slane %v729, 4
  %v732 = vshll.u32 %v125, 16
  %v734 = vrot.slane %v732, 5
  %v735 = vsel %vm135, %v730, %v734
  %v737 = vshrl.u32 %v86, 16
  %v739 = vrot.slane %v737, 4
  %v740 = vshll.u32 %v86, 16
  %v742 = vrot.slane %v740, 5
  %v743 = vor.u32 %v739, %v742
  %v744 = vrot.slane %v743, 4
  %v746 = vshll.u32 %v87, 16
  %v748 = vrot.slane %v746, 5
  %v749 = vsel %vm135, %v744, %v748
  %v750 = vshrl.u32 %v87, 16
  %v752 = vrot.slane %v750, 4
  %v753 = vor.u32 %v752, %v748
  %v754 = vrot.slane %v753, 4
  %v756 = vshll.u32 %v126, 16
  %v758 = vrot.slane %v756, 5
  %v759 = vsel %vm135, %v754, %v758
  %v761 = vshrl.u32 %v88, 16
  %v763 = vrot.slane %v761, 4
  %v764 = vshll.u32 %v88, 16
  %v766 = vrot.slane %v764, 5
  %v767 = vor.u32 %v763, %v766
  %v768 = vrot.slane %v767, 4
  %v770 = vshll.u32 %v89, 16
  %v772 = vrot.slane %v770, 5
  %v773 = vsel %vm135, %v768, %v772
  %v774 = vshrl.u32 %v89, 16
  %v776 = vrot.slane %v774, 4
  %v777 = vor.u32 %v776, %v772
  %v778 = vrot.slane %v777, 4
  %v780 = vshll.u32 %v127, 16
  %v782 = vrot.slane %v780, 5
  %v783 = vsel %vm135, %v778, %v782
  %v785 = vshrl.u32 %v90, 16
  %v787 = vrot.slane %v785, 4
  %v788 = vshll.u32 %v90, 16
  %v790 = vrot.slane %v788, 5
  %v791 = vor.u32 %v787, %v790
  %v792 = vrot.slane %v791, 4
  %v794 = vshll.u32 %v91, 16
  %v796 = vrot.slane %v794, 5
  %v797 = vsel %vm135, %v792, %v796
  %v798 = vshrl.u32 %v91, 16
  %v800 = vrot.slane %v798, 4
  %v801 = vor.u32 %v800, %v796
  %v802 = vrot.slane %v801, 4
  %v804 = vshll.u32 %v128, 16
  %v806 = vrot.slane %v804, 5
  %v807 = vsel %vm135, %v802, %v806
  %v809 = vshrl.u32 %v92, 16
  %v811 = vrot.slane %v809, 4
  %v812 = vshll.u32 %v92, 16
  %v814 = vrot.slane %v812, 5
  %v815 = vor.u32 %v811, %v814
  %v816 = vrot.slane %v815, 4
  %v818 = vshll.u32 %v93, 16
  %v820 = vrot.slane %v818, 5
  %v821 = vsel %vm135, %v816, %v820
  %v822 = vshrl.u32 %v93, 16
  %v824 = vrot.slane %v822, 4
  %v825 = vor.u32 %v824, %v820
  %v826 = vrot.slane %v825, 4
  %v828 = vshll.u32 %v129, 16
  %v830 = vrot.slane %v828, 5
  %v831 = vsel %vm135, %v826, %v830
  %v833 = vshrl.u32 %v94, 16
  %v835 = vrot.slane %v833, 4
  %v836 = vshll.u32 %v94, 16
  %v838 = vrot.slane %v836, 5
  %v839 = vor.u32 %v835, %v838
  %v840 = vrot.slane %v839, 4
  %v842 = vshll.u32 %v95, 16
  %v844 = vrot.slane %v842, 5
  %v845 = vsel %vm135, %v840, %v844
  %v846 = vshrl.u32 %v95, 16
  %v848 = vrot.slane %v846, 4
  %v849 = vor.u32 %v848, %v844
  %v850 = vrot.slane %v849, 4
  %v852 = vshll.u32 %v130, 16
  %v854 = vrot.slane %v852, 5
  %v855 = vsel %vm135, %v850, %v854
  %v857 = vshrl.u32 %v96, 16
  %v859 = vrot.slane %v857, 4
  %v860 = vshll.u32 %v96, 16
  %v862 = vrot.slane %v860, 5
  %v863 = vor.u32 %v859, %v862
  %v864 = vrot.slane %v863, 4
  %v866 = vshll.u32 %v97, 16
  %v868 = vrot.slane %v866, 5
  %v869 = vsel %vm135, %v864, %v868
  %v870 = vshrl.u32 %v97, 16
  %v872 = vrot.slane %v870, 4
  %v873 = vor.u32 %v872, %v868
  %v874 = vrot.slane %v873, 4
  %v876 = vshll.u32 %v131, 16
  %v878 = vrot.slane %v876, 5
  %v879 = vsel %vm135, %v874, %v878
  %v881 = vshrl.u32 %v98, 16
  %v883 = vrot.slane %v881, 4
  %v884 = vshll.u32 %v98, 16
  %v886 = vrot.slane %v884, 5
  %v887 = vor.u32 %v883, %v886
  %v888 = vrot.slane %v887, 4
  %v890 = vshll.u32 %v99, 16
  %v892 = vrot.slane %v890, 5
  %v893 = vsel %vm135, %v888, %v892
  %v894 = vshrl.u32 %v99, 16
  %v896 = vrot.slane %v894, 4
  %v897 = vor.u32 %v896, %v892
  %v898 = vrot.slane %v897, 4
  %v900 = vshll.u32 %v132, 16
  %v902 = vrot.slane %v900, 5
  %v903 = vsel %vm135, %v898, %v902
  %s904 = scalar_lea.vmem %s1, 2
  %v905 = vld [vmem:[%s904] sm:$0x3]
  %v906 = vunpack.c.l.b16 %v149
  %v907 = vunpack.c.l.b16 %v159
  %v908 = vunpack.c.l.b16 %v173
  %v909 = vunpack.c.l.b16 %v183
  %v910 = vunpack.c.l.b16 %v197
  %v911 = vunpack.c.l.b16 %v207
  %v912 = vunpack.c.l.b16 %v221
  %v913 = vunpack.c.l.b16 %v231
  %v914 = vunpack.c.l.b16 %v245
  %v915 = vunpack.c.l.b16 %v255
  %v916 = vunpack.c.l.b16 %v269
  %v917 = vunpack.c.l.b16 %v279
  %v918 = vunpack.c.l.b16 %v293
  %v919 = vunpack.c.l.b16 %v303
  %v920 = vunpack.c.l.b16 %v317
  %v921 = vunpack.c.l.b16 %v327
  %v922 = vunpack.c.l.b16 %v341
  %v923 = vunpack.c.l.b16 %v351
  %v924 = vunpack.c.l.b16 %v365
  %v925 = vunpack.c.l.b16 %v375
  %v926 = vunpack.c.l.b16 %v389
  %v927 = vunpack.c.l.b16 %v399
  %v928 = vunpack.c.l.b16 %v413
  %v929 = vunpack.c.l.b16 %v423
  %v930 = vunpack.c.l.b16 %v437
  %v931 = vunpack.c.l.b16 %v447
  %v932 = vunpack.c.l.b16 %v461
  %v933 = vunpack.c.l.b16 %v471
  %v934 = vunpack.c.l.b16 %v485
  %v935 = vunpack.c.l.b16 %v495
  %v936 = vunpack.c.l.b16 %v509
  %v937 = vunpack.c.l.b16 %v519
  %v938 = vunpack.c.l.b16 %v533
  %v939 = vunpack.c.l.b16 %v543
  %v940 = vunpack.c.l.b16 %v557
  %v941 = vunpack.c.l.b16 %v567
  %v942 = vunpack.c.l.b16 %v581
  %v943 = vunpack.c.l.b16 %v591
  %v944 = vunpack.c.l.b16 %v605
  %v945 = vunpack.c.l.b16 %v615
  %v946 = vunpack.c.l.b16 %v629
  %v947 = vunpack.c.l.b16 %v639
  %v948 = vunpack.c.l.b16 %v653
  %v949 = vunpack.c.l.b16 %v663
  %v950 = vunpack.c.l.b16 %v677
  %v951 = vunpack.c.l.b16 %v687
  %v952 = vunpack.c.l.b16 %v701
  %v953 = vunpack.c.l.b16 %v711
  %v954 = vunpack.c.l.b16 %v725
  %v955 = vunpack.c.l.b16 %v735
  %v956 = vunpack.c.l.b16 %v749
  %v957 = vunpack.c.l.b16 %v759
  %v958 = vunpack.c.l.b16 %v773
  %v959 = vunpack.c.l.b16 %v783
  %v960 = vunpack.c.l.b16 %v797
  %v961 = vunpack.c.l.b16 %v807
  %v962 = vunpack.c.l.b16 %v821
  %v963 = vunpack.c.l.b16 %v831
  %v964 = vunpack.c.l.b16 %v845
  %v965 = vunpack.c.l.b16 %v855
  %v966 = vunpack.c.l.b16 %v869
  %v967 = vunpack.c.l.b16 %v879
  %v968 = vunpack.c.l.b16 %v893
  %v969 = vunpack.c.l.b16 %v903
  %v970 = vpack.c.b16 %v907, %v906
  %v971 = vpack.c.b16 %v909, %v908
  %v972 = vpack.c.b16 %v911, %v910
  %v973 = vpack.c.b16 %v913, %v912
  %v974 = vpack.c.b16 %v915, %v914
  %v975 = vpack.c.b16 %v917, %v916
  %v976 = vpack.c.b16 %v919, %v918
  %v977 = vpack.c.b16 %v921, %v920
  %v978 = vpack.c.b16 %v923, %v922
  %v979 = vpack.c.b16 %v925, %v924
  %v980 = vpack.c.b16 %v927, %v926
  %v981 = vpack.c.b16 %v929, %v928
  %v982 = vpack.c.b16 %v931, %v930
  %v983 = vpack.c.b16 %v933, %v932
  %v984 = vpack.c.b16 %v935, %v934
  %v985 = vpack.c.b16 %v937, %v936
  %v986 = vpack.c.b16 %v939, %v938
  %v987 = vpack.c.b16 %v941, %v940
  %v988 = vpack.c.b16 %v943, %v942
  %v989 = vpack.c.b16 %v945, %v944
  %v990 = vpack.c.b16 %v947, %v946
  %v991 = vpack.c.b16 %v949, %v948
  %v992 = vpack.c.b16 %v951, %v950
  %v993 = vpack.c.b16 %v953, %v952
  %v994 = vpack.c.b16 %v955, %v954
  %v995 = vpack.c.b16 %v957, %v956
  %v996 = vpack.c.b16 %v959, %v958
  %v997 = vpack.c.b16 %v961, %v960
  %v998 = vpack.c.b16 %v963, %v962
  %v999 = vpack.c.b16 %v965, %v964
  %v1000 = vpack.c.b16 %v967, %v966
  %v1001 = vpack.c.b16 %v969, %v968
  %vm1002 = vcmask 31744
  %v1004 = vsel %vm1002, %v970, 0
  %v1007 = vsel %vm1002, %v971, 0
  %v1010 = vsel %vm1002, %v972, 0
  %v1013 = vsel %vm1002, %v973, 0
  %v1016 = vsel %vm1002, %v974, 0
  %v1019 = vsel %vm1002, %v975, 0
  %v1022 = vsel %vm1002, %v976, 0
  %v1025 = vsel %vm1002, %v977, 0
  %v1028 = vsel %vm1002, %v978, 0
  %v1031 = vsel %vm1002, %v979, 0
  %v1034 = vsel %vm1002, %v980, 0
  %v1037 = vsel %vm1002, %v981, 0
  %v1040 = vsel %vm1002, %v982, 0
  %v1043 = vsel %vm1002, %v983, 0
  %v1046 = vsel %vm1002, %v984, 0
  %v1049 = vsel %vm1002, %v985, 0
  %v1052 = vsel %vm1002, %v986, 0
  %v1055 = vsel %vm1002, %v987, 0
  %v1058 = vsel %vm1002, %v988, 0
  %v1061 = vsel %vm1002, %v989, 0
  %v1064 = vsel %vm1002, %v990, 0
  %v1067 = vsel %vm1002, %v991, 0
  %v1070 = vsel %vm1002, %v992, 0
  %v1073 = vsel %vm1002, %v993, 0
  %v1076 = vsel %vm1002, %v994, 0
  %v1079 = vsel %vm1002, %v995, 0
  %v1082 = vsel %vm1002, %v996, 0
  %v1085 = vsel %vm1002, %v997, 0
  %v1088 = vsel %vm1002, %v998, 0
  %v1091 = vsel %vm1002, %v999, 0
  %v1094 = vsel %vm1002, %v1000, 0
  %v1097 = vsel %vm1002, %v1001, 0
  %vm1099 = vcmask 1041408
  %v1101 = vsel %vm1099, %v905, 0
  %1103 = vmatpush.bf16.msra.mxu0 0
  %1104 = vmatpush.bf16.msra.mxu0 0
  %1105 = vmatpush.bf16.msra.mxu0 0
  %1106 = vmatpush.bf16.msra.mxu0 0
  %1107 = vmatpush.bf16.msra.mxu0 0
  %1108 = vmatpush.bf16.msra.mxu0 0
  %1109 = vmatpush.bf16.msra.mxu0 0
  %1110 = vmatpush.bf16.msra.mxu0 %v1101
  %1111 = vmatmul.bf16.gmra.mxu0 %v1004
  %v1112 = vpop.f32.mrf.mxu0
  %v1113 = vadd.f32 0.0, %v1112
  %v1114 = vpop.f32.mrf.mxu0
  %v1115 = vadd.f32 0.0, %v1114
  %1116 = vmatmul.bf16.gmra.mxu0 %v1007
  %v1117 = vpop.f32.mrf.mxu0
  %v1118 = vadd.f32 0.0, %v1117
  %v1119 = vpop.f32.mrf.mxu0
  %v1120 = vadd.f32 0.0, %v1119
  %1121 = vmatmul.bf16.gmra.mxu0 %v1010
  %v1122 = vpop.f32.mrf.mxu0
  %v1123 = vadd.f32 0.0, %v1122
  %v1124 = vpop.f32.mrf.mxu0
  %v1125 = vadd.f32 0.0, %v1124
  %1126 = vmatmul.bf16.gmra.mxu0 %v1013
  %v1127 = vpop.f32.mrf.mxu0
  %v1128 = vadd.f32 0.0, %v1127
  %v1129 = vpop.f32.mrf.mxu0
  %v1130 = vadd.f32 0.0, %v1129
  %1131 = vmatmul.bf16.gmra.mxu0 %v1016
  %v1132 = vpop.f32.mrf.mxu0
  %v1133 = vadd.f32 0.0, %v1132
  %v1134 = vpop.f32.mrf.mxu0
  %v1135 = vadd.f32 0.0, %v1134
  %1136 = vmatmul.bf16.gmra.mxu0 %v1019
  %v1137 = vpop.f32.mrf.mxu0
  %v1138 = vadd.f32 0.0, %v1137
  %v1139 = vpop.f32.mrf.mxu0
  %v1140 = vadd.f32 0.0, %v1139
  %1141 = vmatmul.bf16.gmra.mxu0 %v1022
  %v1142 = vpop.f32.mrf.mxu0
  %v1143 = vadd.f32 0.0, %v1142
  %v1144 = vpop.f32.mrf.mxu0
  %v1145 = vadd.f32 0.0, %v1144
  %1146 = vmatmul.bf16.gmra.mxu0 %v1025
  %v1147 = vpop.f32.mrf.mxu0
  %v1148 = vadd.f32 0.0, %v1147
  %v1149 = vpop.f32.mrf.mxu0
  %v1150 = vadd.f32 0.0, %v1149
  %1151 = vmatmul.bf16.gmra.mxu0 %v1028
  %v1152 = vpop.f32.mrf.mxu0
  %v1153 = vadd.f32 0.0, %v1152
  %v1154 = vpop.f32.mrf.mxu0
  %v1155 = vadd.f32 0.0, %v1154
  %1156 = vmatmul.bf16.gmra.mxu0 %v1031
  %v1157 = vpop.f32.mrf.mxu0
  %v1158 = vadd.f32 0.0, %v1157
  %v1159 = vpop.f32.mrf.mxu0
  %v1160 = vadd.f32 0.0, %v1159
  %1161 = vmatmul.bf16.gmra.mxu0 %v1034
  %v1162 = vpop.f32.mrf.mxu0
  %v1163 = vadd.f32 0.0, %v1162
  %v1164 = vpop.f32.mrf.mxu0
  %v1165 = vadd.f32 0.0, %v1164
  %1166 = vmatmul.bf16.gmra.mxu0 %v1037
  %v1167 = vpop.f32.mrf.mxu0
  %v1168 = vadd.f32 0.0, %v1167
  %v1169 = vpop.f32.mrf.mxu0
  %v1170 = vadd.f32 0.0, %v1169
  %1171 = vmatmul.bf16.gmra.mxu0 %v1040
  %v1172 = vpop.f32.mrf.mxu0
  %v1173 = vadd.f32 0.0, %v1172
  %v1174 = vpop.f32.mrf.mxu0
  %v1175 = vadd.f32 0.0, %v1174
  %1176 = vmatmul.bf16.gmra.mxu0 %v1043
  %v1177 = vpop.f32.mrf.mxu0
  %v1178 = vadd.f32 0.0, %v1177
  %v1179 = vpop.f32.mrf.mxu0
  %v1180 = vadd.f32 0.0, %v1179
  %1181 = vmatmul.bf16.gmra.mxu0 %v1046
  %v1182 = vpop.f32.mrf.mxu0
  %v1183 = vadd.f32 0.0, %v1182
  %v1184 = vpop.f32.mrf.mxu0
  %v1185 = vadd.f32 0.0, %v1184
  %1186 = vmatmul.bf16.gmra.mxu0 %v1049
  %v1187 = vpop.f32.mrf.mxu0
  %v1188 = vadd.f32 0.0, %v1187
  %v1189 = vpop.f32.mrf.mxu0
  %v1190 = vadd.f32 0.0, %v1189
  %1191 = vmatmul.bf16.gmra.mxu0 %v1052
  %v1192 = vpop.f32.mrf.mxu0
  %v1193 = vadd.f32 0.0, %v1192
  %v1194 = vpop.f32.mrf.mxu0
  %v1195 = vadd.f32 0.0, %v1194
  %1196 = vmatmul.bf16.gmra.mxu0 %v1055
  %v1197 = vpop.f32.mrf.mxu0
  %v1198 = vadd.f32 0.0, %v1197
  %v1199 = vpop.f32.mrf.mxu0
  %v1200 = vadd.f32 0.0, %v1199
  %1201 = vmatmul.bf16.gmra.mxu0 %v1058
  %v1202 = vpop.f32.mrf.mxu0
  %v1203 = vadd.f32 0.0, %v1202
  %v1204 = vpop.f32.mrf.mxu0
  %v1205 = vadd.f32 0.0, %v1204
  %1206 = vmatmul.bf16.gmra.mxu0 %v1061
  %v1207 = vpop.f32.mrf.mxu0
  %v1208 = vadd.f32 0.0, %v1207
  %v1209 = vpop.f32.mrf.mxu0
  %v1210 = vadd.f32 0.0, %v1209
  %1211 = vmatmul.bf16.gmra.mxu0 %v1064
  %v1212 = vpop.f32.mrf.mxu0
  %v1213 = vadd.f32 0.0, %v1212
  %v1214 = vpop.f32.mrf.mxu0
  %v1215 = vadd.f32 0.0, %v1214
  %1216 = vmatmul.bf16.gmra.mxu0 %v1067
  %v1217 = vpop.f32.mrf.mxu0
  %v1218 = vadd.f32 0.0, %v1217
  %v1219 = vpop.f32.mrf.mxu0
  %v1220 = vadd.f32 0.0, %v1219
  %1221 = vmatmul.bf16.gmra.mxu0 %v1070
  %v1222 = vpop.f32.mrf.mxu0
  %v1223 = vadd.f32 0.0, %v1222
  %v1224 = vpop.f32.mrf.mxu0
  %v1225 = vadd.f32 0.0, %v1224
  %1226 = vmatmul.bf16.gmra.mxu0 %v1073
  %v1227 = vpop.f32.mrf.mxu0
  %v1228 = vadd.f32 0.0, %v1227
  %v1229 = vpop.f32.mrf.mxu0
  %v1230 = vadd.f32 0.0, %v1229
  %1231 = vmatmul.bf16.gmra.mxu0 %v1076
  %v1232 = vpop.f32.mrf.mxu0
  %v1233 = vadd.f32 0.0, %v1232
  %v1234 = vpop.f32.mrf.mxu0
  %v1235 = vadd.f32 0.0, %v1234
  %1236 = vmatmul.bf16.gmra.mxu0 %v1079
  %v1237 = vpop.f32.mrf.mxu0
  %v1238 = vadd.f32 0.0, %v1237
  %v1239 = vpop.f32.mrf.mxu0
  %v1240 = vadd.f32 0.0, %v1239
  %1241 = vmatmul.bf16.gmra.mxu0 %v1082
  %v1242 = vpop.f32.mrf.mxu0
  %v1243 = vadd.f32 0.0, %v1242
  %v1244 = vpop.f32.mrf.mxu0
  %v1245 = vadd.f32 0.0, %v1244
  %1246 = vmatmul.bf16.gmra.mxu0 %v1085
  %v1247 = vpop.f32.mrf.mxu0
  %v1248 = vadd.f32 0.0, %v1247
  %v1249 = vpop.f32.mrf.mxu0
  %v1250 = vadd.f32 0.0, %v1249
  %1251 = vmatmul.bf16.gmra.mxu0 %v1088
  %v1252 = vpop.f32.mrf.mxu0
  %v1253 = vadd.f32 0.0, %v1252
  %v1254 = vpop.f32.mrf.mxu0
  %v1255 = vadd.f32 0.0, %v1254
  %1256 = vmatmul.bf16.gmra.mxu0 %v1091
  %v1257 = vpop.f32.mrf.mxu0
  %v1258 = vadd.f32 0.0, %v1257
  %v1259 = vpop.f32.mrf.mxu0
  %v1260 = vadd.f32 0.0, %v1259
  %1261 = vmatmul.bf16.gmra.mxu0 %v1094
  %v1262 = vpop.f32.mrf.mxu0
  %v1263 = vadd.f32 0.0, %v1262
  %v1264 = vpop.f32.mrf.mxu0
  %v1265 = vadd.f32 0.0, %v1264
  %1266 = vmatmul.bf16.gmra.mxu0 %v1097
  %v1267 = vpop.f32.mrf.mxu0
  %v1268 = vadd.f32 0.0, %v1267
  %v1269 = vpop.f32.mrf.mxu0
  %v1270 = vadd.f32 0.0, %v1269
  %1271 = vdwg.mxu0
  %v1336 = vunpack.c.l.b16 %v36
  %v1337 = vunpack.c.l.b16 %v37
  %v1338 = vunpack.c.l.b16 %v38
  %v1339 = vunpack.c.l.b16 %v39
  %v1340 = vunpack.c.l.b16 %v40
  %v1341 = vunpack.c.l.b16 %v41
  %v1342 = vunpack.c.l.b16 %v42
  %v1343 = vunpack.c.l.b16 %v43
  %v1344 = vunpack.c.l.b16 %v44
  %v1345 = vunpack.c.l.b16 %v45
  %v1346 = vunpack.c.l.b16 %v46
  %v1347 = vunpack.c.l.b16 %v47
  %v1348 = vunpack.c.l.b16 %v48
  %v1349 = vunpack.c.l.b16 %v49
  %v1350 = vunpack.c.l.b16 %v50
  %v1351 = vunpack.c.l.b16 %v51
  %v1352 = vunpack.c.l.b16 %v52
  %v1353 = vunpack.c.l.b16 %v53
  %v1354 = vunpack.c.l.b16 %v54
  %v1355 = vunpack.c.l.b16 %v55
  %v1356 = vunpack.c.l.b16 %v56
  %v1357 = vunpack.c.l.b16 %v57
  %v1358 = vunpack.c.l.b16 %v58
  %v1359 = vunpack.c.l.b16 %v59
  %v1360 = vunpack.c.l.b16 %v60
  %v1361 = vunpack.c.l.b16 %v61
  %v1362 = vunpack.c.l.b16 %v62
  %v1363 = vunpack.c.l.b16 %v63
  %v1364 = vunpack.c.l.b16 %v64
  %v1365 = vunpack.c.l.b16 %v65
  %v1366 = vunpack.c.l.b16 %v66
  %v1367 = vunpack.c.l.b16 %v67
  %v1368 = vunpack.c.l.b16 %v68
  %v1369 = vunpack.c.l.b16 %v69
  %v1370 = vunpack.c.l.b16 %v70
  %v1371 = vunpack.c.l.b16 %v71
  %v1372 = vunpack.c.l.b16 %v72
  %v1373 = vunpack.c.l.b16 %v73
  %v1374 = vunpack.c.l.b16 %v74
  %v1375 = vunpack.c.l.b16 %v75
  %v1376 = vunpack.c.l.b16 %v76
  %v1377 = vunpack.c.l.b16 %v77
  %v1378 = vunpack.c.l.b16 %v78
  %v1379 = vunpack.c.l.b16 %v79
  %v1380 = vunpack.c.l.b16 %v80
  %v1381 = vunpack.c.l.b16 %v81
  %v1382 = vunpack.c.l.b16 %v82
  %v1383 = vunpack.c.l.b16 %v83
  %v1384 = vunpack.c.l.b16 %v84
  %v1385 = vunpack.c.l.b16 %v85
  %v1386 = vunpack.c.l.b16 %v86
  %v1387 = vunpack.c.l.b16 %v87
  %v1388 = vunpack.c.l.b16 %v88
  %v1389 = vunpack.c.l.b16 %v89
  %v1390 = vunpack.c.l.b16 %v90
  %v1391 = vunpack.c.l.b16 %v91
  %v1392 = vunpack.c.l.b16 %v92
  %v1393 = vunpack.c.l.b16 %v93
  %v1394 = vunpack.c.l.b16 %v94
  %v1395 = vunpack.c.l.b16 %v95
  %v1396 = vunpack.c.l.b16 %v96
  %v1397 = vunpack.c.l.b16 %v97
  %v1398 = vunpack.c.l.b16 %v98
  %v1399 = vunpack.c.l.b16 %v99
  %v1400 = vpack.c.b16 %v1337, %v1336
  %v1401 = vpack.c.b16 %v1339, %v1338
  %v1402 = vpack.c.b16 %v1341, %v1340
  %v1403 = vpack.c.b16 %v1343, %v1342
  %v1404 = vpack.c.b16 %v1345, %v1344
  %v1405 = vpack.c.b16 %v1347, %v1346
  %v1406 = vpack.c.b16 %v1349, %v1348
  %v1407 = vpack.c.b16 %v1351, %v1350
  %v1408 = vpack.c.b16 %v1353, %v1352
  %v1409 = vpack.c.b16 %v1355, %v1354
  %v1410 = vpack.c.b16 %v1357, %v1356
  %v1411 = vpack.c.b16 %v1359, %v1358
  %v1412 = vpack.c.b16 %v1361, %v1360
  %v1413 = vpack.c.b16 %v1363, %v1362
  %v1414 = vpack.c.b16 %v1365, %v1364
  %v1415 = vpack.c.b16 %v1367, %v1366
  %v1416 = vpack.c.b16 %v1369, %v1368
  %v1417 = vpack.c.b16 %v1371, %v1370
  %v1418 = vpack.c.b16 %v1373, %v1372
  %v1419 = vpack.c.b16 %v1375, %v1374
  %v1420 = vpack.c.b16 %v1377, %v1376
  %v1421 = vpack.c.b16 %v1379, %v1378
  %v1422 = vpack.c.b16 %v1381, %v1380
  %v1423 = vpack.c.b16 %v1383, %v1382
  %v1424 = vpack.c.b16 %v1385, %v1384
  %v1425 = vpack.c.b16 %v1387, %v1386
  %v1426 = vpack.c.b16 %v1389, %v1388
  %v1427 = vpack.c.b16 %v1391, %v1390
  %v1428 = vpack.c.b16 %v1393, %v1392
  %v1429 = vpack.c.b16 %v1395, %v1394
  %v1430 = vpack.c.b16 %v1397, %v1396
  %v1431 = vpack.c.b16 %v1399, %v1398
  %v1433 = vsel %vm1002, %v1400, 0
  %v1436 = vsel %vm1002, %v1401, 0
  %v1439 = vsel %vm1002, %v1402, 0
  %v1442 = vsel %vm1002, %v1403, 0
  %v1445 = vsel %vm1002, %v1404, 0
  %v1448 = vsel %vm1002, %v1405, 0
  %v1451 = vsel %vm1002, %v1406, 0
  %v1454 = vsel %vm1002, %v1407, 0
  %v1457 = vsel %vm1002, %v1408, 0
  %v1460 = vsel %vm1002, %v1409, 0
  %v1463 = vsel %vm1002, %v1410, 0
  %v1466 = vsel %vm1002, %v1411, 0
  %v1469 = vsel %vm1002, %v1412, 0
  %v1472 = vsel %vm1002, %v1413, 0
  %v1475 = vsel %vm1002, %v1414, 0
  %v1478 = vsel %vm1002, %v1415, 0
  %v1481 = vsel %vm1002, %v1416, 0
  %v1484 = vsel %vm1002, %v1417, 0
  %v1487 = vsel %vm1002, %v1418, 0
  %v1490 = vsel %vm1002, %v1419, 0
  %v1493 = vsel %vm1002, %v1420, 0
  %v1496 = vsel %vm1002, %v1421, 0
  %v1499 = vsel %vm1002, %v1422, 0
  %v1502 = vsel %vm1002, %v1423, 0
  %v1505 = vsel %vm1002, %v1424, 0
  %v1508 = vsel %vm1002, %v1425, 0
  %v1511 = vsel %vm1002, %v1426, 0
  %v1514 = vsel %vm1002, %v1427, 0
  %v1517 = vsel %vm1002, %v1428, 0
  %v1520 = vsel %vm1002, %v1429, 0
  %v1523 = vsel %vm1002, %v1430, 0
  %v1526 = vsel %vm1002, %v1431, 0
  %v1529 = vsel %vm1099, %v100, 0
  %1531 = vmatpush.bf16.msra.mxu0 0
  %1532 = vmatpush.bf16.msra.mxu0 0
  %1533 = vmatpush.bf16.msra.mxu0 0
  %1534 = vmatpush.bf16.msra.mxu0 0
  %1535 = vmatpush.bf16.msra.mxu0 0
  %1536 = vmatpush.bf16.msra.mxu0 0
  %1537 = vmatpush.bf16.msra.mxu0 0
  %1538 = vmatpush.bf16.msra.mxu0 %v1529
  %1539 = vmatmul.bf16.gmra.mxu0 %v1433
  %v1540 = vpop.f32.mrf.mxu0
  %v1541 = vadd.f32 %v1113, %v1540
  %v1542 = vpop.f32.mrf.mxu0
  %v1543 = vadd.f32 %v1115, %v1542
  %1544 = vmatmul.bf16.gmra.mxu0 %v1436
  %v1545 = vpop.f32.mrf.mxu0
  %v1546 = vadd.f32 %v1118, %v1545
  %v1547 = vpop.f32.mrf.mxu0
  %v1548 = vadd.f32 %v1120, %v1547
  %1549 = vmatmul.bf16.gmra.mxu0 %v1439
  %v1550 = vpop.f32.mrf.mxu0
  %v1551 = vadd.f32 %v1123, %v1550
  %v1552 = vpop.f32.mrf.mxu0
  %v1553 = vadd.f32 %v1125, %v1552
  %1554 = vmatmul.bf16.gmra.mxu0 %v1442
  %v1555 = vpop.f32.mrf.mxu0
  %v1556 = vadd.f32 %v1128, %v1555
  %v1557 = vpop.f32.mrf.mxu0
  %v1558 = vadd.f32 %v1130, %v1557
  %1559 = vmatmul.bf16.gmra.mxu0 %v1445
  %v1560 = vpop.f32.mrf.mxu0
  %v1561 = vadd.f32 %v1133, %v1560
  %v1562 = vpop.f32.mrf.mxu0
  %v1563 = vadd.f32 %v1135, %v1562
  %1564 = vmatmul.bf16.gmra.mxu0 %v1448
  %v1565 = vpop.f32.mrf.mxu0
  %v1566 = vadd.f32 %v1138, %v1565
  %v1567 = vpop.f32.mrf.mxu0
  %v1568 = vadd.f32 %v1140, %v1567
  %1569 = vmatmul.bf16.gmra.mxu0 %v1451
  %v1570 = vpop.f32.mrf.mxu0
  %v1571 = vadd.f32 %v1143, %v1570
  %v1572 = vpop.f32.mrf.mxu0
  %v1573 = vadd.f32 %v1145, %v1572
  %1574 = vmatmul.bf16.gmra.mxu0 %v1454
  %v1575 = vpop.f32.mrf.mxu0
  %v1576 = vadd.f32 %v1148, %v1575
  %v1577 = vpop.f32.mrf.mxu0
  %v1578 = vadd.f32 %v1150, %v1577
  %1579 = vmatmul.bf16.gmra.mxu0 %v1457
  %v1580 = vpop.f32.mrf.mxu0
  %v1581 = vadd.f32 %v1153, %v1580
  %v1582 = vpop.f32.mrf.mxu0
  %v1583 = vadd.f32 %v1155, %v1582
  %1584 = vmatmul.bf16.gmra.mxu0 %v1460
  %v1585 = vpop.f32.mrf.mxu0
  %v1586 = vadd.f32 %v1158, %v1585
  %v1587 = vpop.f32.mrf.mxu0
  %v1588 = vadd.f32 %v1160, %v1587
  %1589 = vmatmul.bf16.gmra.mxu0 %v1463
  %v1590 = vpop.f32.mrf.mxu0
  %v1591 = vadd.f32 %v1163, %v1590
  %v1592 = vpop.f32.mrf.mxu0
  %v1593 = vadd.f32 %v1165, %v1592
  %1594 = vmatmul.bf16.gmra.mxu0 %v1466
  %v1595 = vpop.f32.mrf.mxu0
  %v1596 = vadd.f32 %v1168, %v1595
  %v1597 = vpop.f32.mrf.mxu0
  %v1598 = vadd.f32 %v1170, %v1597
  %1599 = vmatmul.bf16.gmra.mxu0 %v1469
  %v1600 = vpop.f32.mrf.mxu0
  %v1601 = vadd.f32 %v1173, %v1600
  %v1602 = vpop.f32.mrf.mxu0
  %v1603 = vadd.f32 %v1175, %v1602
  %1604 = vmatmul.bf16.gmra.mxu0 %v1472
  %v1605 = vpop.f32.mrf.mxu0
  %v1606 = vadd.f32 %v1178, %v1605
  %v1607 = vpop.f32.mrf.mxu0
  %v1608 = vadd.f32 %v1180, %v1607
  %1609 = vmatmul.bf16.gmra.mxu0 %v1475
  %v1610 = vpop.f32.mrf.mxu0
  %v1611 = vadd.f32 %v1183, %v1610
  %v1612 = vpop.f32.mrf.mxu0
  %v1613 = vadd.f32 %v1185, %v1612
  %1614 = vmatmul.bf16.gmra.mxu0 %v1478
  %v1615 = vpop.f32.mrf.mxu0
  %v1616 = vadd.f32 %v1188, %v1615
  %v1617 = vpop.f32.mrf.mxu0
  %v1618 = vadd.f32 %v1190, %v1617
  %1619 = vmatmul.bf16.gmra.mxu0 %v1481
  %v1620 = vpop.f32.mrf.mxu0
  %v1621 = vadd.f32 %v1193, %v1620
  %v1622 = vpop.f32.mrf.mxu0
  %v1623 = vadd.f32 %v1195, %v1622
  %1624 = vmatmul.bf16.gmra.mxu0 %v1484
  %v1625 = vpop.f32.mrf.mxu0
  %v1626 = vadd.f32 %v1198, %v1625
  %v1627 = vpop.f32.mrf.mxu0
  %v1628 = vadd.f32 %v1200, %v1627
  %1629 = vmatmul.bf16.gmra.mxu0 %v1487
  %v1630 = vpop.f32.mrf.mxu0
  %v1631 = vadd.f32 %v1203, %v1630
  %v1632 = vpop.f32.mrf.mxu0
  %v1633 = vadd.f32 %v1205, %v1632
  %1634 = vmatmul.bf16.gmra.mxu0 %v1490
  %v1635 = vpop.f32.mrf.mxu0
  %v1636 = vadd.f32 %v1208, %v1635
  %v1637 = vpop.f32.mrf.mxu0
  %v1638 = vadd.f32 %v1210, %v1637
  %1639 = vmatmul.bf16.gmra.mxu0 %v1493
  %v1640 = vpop.f32.mrf.mxu0
  %v1641 = vadd.f32 %v1213, %v1640
  %v1642 = vpop.f32.mrf.mxu0
  %v1643 = vadd.f32 %v1215, %v1642
  %1644 = vmatmul.bf16.gmra.mxu0 %v1496
  %v1645 = vpop.f32.mrf.mxu0
  %v1646 = vadd.f32 %v1218, %v1645
  %v1647 = vpop.f32.mrf.mxu0
  %v1648 = vadd.f32 %v1220, %v1647
  %1649 = vmatmul.bf16.gmra.mxu0 %v1499
  %v1650 = vpop.f32.mrf.mxu0
  %v1651 = vadd.f32 %v1223, %v1650
  %v1652 = vpop.f32.mrf.mxu0
  %v1653 = vadd.f32 %v1225, %v1652
  %1654 = vmatmul.bf16.gmra.mxu0 %v1502
  %v1655 = vpop.f32.mrf.mxu0
  %v1656 = vadd.f32 %v1228, %v1655
  %v1657 = vpop.f32.mrf.mxu0
  %v1658 = vadd.f32 %v1230, %v1657
  %1659 = vmatmul.bf16.gmra.mxu0 %v1505
  %v1660 = vpop.f32.mrf.mxu0
  %v1661 = vadd.f32 %v1233, %v1660
  %v1662 = vpop.f32.mrf.mxu0
  %v1663 = vadd.f32 %v1235, %v1662
  %1664 = vmatmul.bf16.gmra.mxu0 %v1508
  %v1665 = vpop.f32.mrf.mxu0
  %v1666 = vadd.f32 %v1238, %v1665
  %v1667 = vpop.f32.mrf.mxu0
  %v1668 = vadd.f32 %v1240, %v1667
  %1669 = vmatmul.bf16.gmra.mxu0 %v1511
  %v1670 = vpop.f32.mrf.mxu0
  %v1671 = vadd.f32 %v1243, %v1670
  %v1672 = vpop.f32.mrf.mxu0
  %v1673 = vadd.f32 %v1245, %v1672
  %1674 = vmatmul.bf16.gmra.mxu0 %v1514
  %v1675 = vpop.f32.mrf.mxu0
  %v1676 = vadd.f32 %v1248, %v1675
  %v1677 = vpop.f32.mrf.mxu0
  %v1678 = vadd.f32 %v1250, %v1677
  %1679 = vmatmul.bf16.gmra.mxu0 %v1517
  %v1680 = vpop.f32.mrf.mxu0
  %v1681 = vadd.f32 %v1253, %v1680
  %v1682 = vpop.f32.mrf.mxu0
  %v1683 = vadd.f32 %v1255, %v1682
  %1684 = vmatmul.bf16.gmra.mxu0 %v1520
  %v1685 = vpop.f32.mrf.mxu0
  %v1686 = vadd.f32 %v1258, %v1685
  %v1687 = vpop.f32.mrf.mxu0
  %v1688 = vadd.f32 %v1260, %v1687
  %1689 = vmatmul.bf16.gmra.mxu0 %v1523
  %v1690 = vpop.f32.mrf.mxu0
  %v1691 = vadd.f32 %v1263, %v1690
  %v1692 = vpop.f32.mrf.mxu0
  %v1693 = vadd.f32 %v1265, %v1692
  %1694 = vmatmul.bf16.gmra.mxu0 %v1526
  %v1695 = vpop.f32.mrf.mxu0
  %v1696 = vadd.f32 %v1268, %v1695
  %v1697 = vpop.f32.mrf.mxu0
  %v1698 = vadd.f32 %v1270, %v1697
  %1699 = vdwg.mxu0
  %v1700 = vld [vmem:[%s0] sm:$0xe]
  %v1701 = vld [vmem:[%s0 + $0xc] sm:$0xe]
  %v1702 = vld [vmem:[%s0 + $0x18] sm:$0xe]
  %v1703 = vld [vmem:[%s0 + $0x24] sm:$0xe]
  %v1704 = vld [vmem:[%s0 + $0x30] sm:$0xe]
  %v1705 = vld [vmem:[%s0 + $0x3c] sm:$0xe]
  %v1706 = vld [vmem:[%s0 + $0x48] sm:$0xe]
  %v1707 = vld [vmem:[%s0 + $0x54] sm:$0xe]
  %v1708 = vld [vmem:[%s0 + $0x60] sm:$0xe]
  %v1709 = vld [vmem:[%s0 + $0x6c] sm:$0xe]
  %v1710 = vld [vmem:[%s0 + $0x78] sm:$0xe]
  %v1711 = vld [vmem:[%s0 + $0x84] sm:$0xe]
  %v1712 = vld [vmem:[%s0 + $0x90] sm:$0xe]
  %v1713 = vld [vmem:[%s0 + $0x9c] sm:$0xe]
  %v1714 = vld [vmem:[%s0 + $0xa8] sm:$0xe]
  %v1715 = vld [vmem:[%s0 + $0xb4] sm:$0xe]
  %v1716 = vld [vmem:[%s0 + $0xd8] sm:$0xe]
  %v1717 = vld [vmem:[%s0 + $0xe4] sm:$0xe]
  %v1718 = vld [vmem:[%s0 + $0xf0] sm:$0xe]
  %v1719 = vld [vmem:[%s0 + $0xfc] sm:$0xe]
  %v1720 = vld [vmem:[%s0 + $0x108] sm:$0xe]
  %v1721 = vld [vmem:[%s0 + $0x114] sm:$0xe]
  %v1722 = vld [vmem:[%s0 + $0x120] sm:$0xe]
  %v1723 = vld [vmem:[%s0 + $0x12c] sm:$0xe]
  %v1724 = vld [vmem:[%s0 + $0x138] sm:$0xe]
  %v1725 = vld [vmem:[%s0 + $0x144] sm:$0xe]
  %v1726 = vld [vmem:[%s0 + $0x150] sm:$0xe]
  %v1727 = vld [vmem:[%s0 + $0x15c] sm:$0xe]
  %v1728 = vld [vmem:[%s0 + $0x168] sm:$0xe]
  %v1729 = vld [vmem:[%s0 + $0x174] sm:$0xe]
  %v1730 = vld [vmem:[%s0 + $0x180] sm:$0xe]
  %v1731 = vld [vmem:[%s0 + $0x18c] sm:$0xe]
  %vm1796 = vcmask 1042432
  %vm1797 = vcmask 1046532
  %vm1798 = vmor %vm1796, %vm1797
  %v1799 = vrot.slane %v1700, 5
  %v1800 = vrot.slane %v1799, 4
  %v1801 = vrot.slane %v37, 5
  %v1802 = vsel %vm1798, %v1800, %v1801
  %v1803 = vrot.slane %v1801, 4
  %v1804 = vrot.slane %v101, 5
  %v1805 = vsel %vm1798, %v1803, %v1804
  %v1806 = vrot.slane %v1701, 5
  %v1807 = vrot.slane %v1806, 4
  %v1808 = vrot.slane %v39, 5
  %v1809 = vsel %vm1798, %v1807, %v1808
  %v1810 = vrot.slane %v1808, 4
  %v1811 = vrot.slane %v102, 5
  %v1812 = vsel %vm1798, %v1810, %v1811
  %v1813 = vrot.slane %v1702, 5
  %v1814 = vrot.slane %v1813, 4
  %v1815 = vrot.slane %v41, 5
  %v1816 = vsel %vm1798, %v1814, %v1815
  %v1817 = vrot.slane %v1815, 4
  %v1818 = vrot.slane %v103, 5
  %v1819 = vsel %vm1798, %v1817, %v1818
  %v1820 = vrot.slane %v1703, 5
  %v1821 = vrot.slane %v1820, 4
  %v1822 = vrot.slane %v43, 5
  %v1823 = vsel %vm1798, %v1821, %v1822
  %v1824 = vrot.slane %v1822, 4
  %v1825 = vrot.slane %v104, 5
  %v1826 = vsel %vm1798, %v1824, %v1825
  %v1827 = vrot.slane %v1704, 5
  %v1828 = vrot.slane %v1827, 4
  %v1829 = vrot.slane %v45, 5
  %v1830 = vsel %vm1798, %v1828, %v1829
  %v1831 = vrot.slane %v1829, 4
  %v1832 = vrot.slane %v105, 5
  %v1833 = vsel %vm1798, %v1831, %v1832
  %v1834 = vrot.slane %v1705, 5
  %v1835 = vrot.slane %v1834, 4
  %v1836 = vrot.slane %v47, 5
  %v1837 = vsel %vm1798, %v1835, %v1836
  %v1838 = vrot.slane %v1836, 4
  %v1839 = vrot.slane %v106, 5
  %v1840 = vsel %vm1798, %v1838, %v1839
  %v1841 = vrot.slane %v1706, 5
  %v1842 = vrot.slane %v1841, 4
  %v1843 = vrot.slane %v49, 5
  %v1844 = vsel %vm1798, %v1842, %v1843
  %v1845 = vrot.slane %v1843, 4
  %v1846 = vrot.slane %v107, 5
  %v1847 = vsel %vm1798, %v1845, %v1846
  %v1848 = vrot.slane %v1707, 5
  %v1849 = vrot.slane %v1848, 4
  %v1850 = vrot.slane %v51, 5
  %v1851 = vsel %vm1798, %v1849, %v1850
  %v1852 = vrot.slane %v1850, 4
  %v1853 = vrot.slane %v108, 5
  %v1854 = vsel %vm1798, %v1852, %v1853
  %v1855 = vrot.slane %v1708, 5
  %v1856 = vrot.slane %v1855, 4
  %v1857 = vrot.slane %v53, 5
  %v1858 = vsel %vm1798, %v1856, %v1857
  %v1859 = vrot.slane %v1857, 4
  %v1860 = vrot.slane %v109, 5
  %v1861 = vsel %vm1798, %v1859, %v1860
  %v1862 = vrot.slane %v1709, 5
  %v1863 = vrot.slane %v1862, 4
  %v1864 = vrot.slane %v55, 5
  %v1865 = vsel %vm1798, %v1863, %v1864
  %v1866 = vrot.slane %v1864, 4
  %v1867 = vrot.slane %v110, 5
  %v1868 = vsel %vm1798, %v1866, %v1867
  %v1869 = vrot.slane %v1710, 5
  %v1870 = vrot.slane %v1869, 4
  %v1871 = vrot.slane %v57, 5
  %v1872 = vsel %vm1798, %v1870, %v1871
  %v1873 = vrot.slane %v1871, 4
  %v1874 = vrot.slane %v111, 5
  %v1875 = vsel %vm1798, %v1873, %v1874
  %v1876 = vrot.slane %v1711, 5
  %v1877 = vrot.slane %v1876, 4
  %v1878 = vrot.slane %v59, 5
  %v1879 = vsel %vm1798, %v1877, %v1878
  %v1880 = vrot.slane %v1878, 4
  %v1881 = vrot.slane %v112, 5
  %v1882 = vsel %vm1798, %v1880, %v1881
  %v1883 = vrot.slane %v1712, 5
  %v1884 = vrot.slane %v1883, 4
  %v1885 = vrot.slane %v61, 5
  %v1886 = vsel %vm1798, %v1884, %v1885
  %v1887 = vrot.slane %v1885, 4
  %v1888 = vrot.slane %v113, 5
  %v1889 = vsel %vm1798, %v1887, %v1888
  %v1890 = vrot.slane %v1713, 5
  %v1891 = vrot.slane %v1890, 4
  %v1892 = vrot.slane %v63, 5
  %v1893 = vsel %vm1798, %v1891, %v1892
  %v1894 = vrot.slane %v1892, 4
  %v1895 = vrot.slane %v114, 5
  %v1896 = vsel %vm1798, %v1894, %v1895
  %v1897 = vrot.slane %v1714, 5
  %v1898 = vrot.slane %v1897, 4
  %v1899 = vrot.slane %v65, 5
  %v1900 = vsel %vm1798, %v1898, %v1899
  %v1901 = vrot.slane %v1899, 4
  %v1902 = vrot.slane %v115, 5
  %v1903 = vsel %vm1798, %v1901, %v1902
  %v1904 = vrot.slane %v1715, 5
  %v1905 = vrot.slane %v1904, 4
  %v1906 = vrot.slane %v67, 5
  %v1907 = vsel %vm1798, %v1905, %v1906
  %v1908 = vrot.slane %v1906, 4
  %v1909 = vrot.slane %v116, 5
  %v1910 = vsel %vm1798, %v1908, %v1909
  %v1911 = vrot.slane %v1716, 5
  %v1912 = vrot.slane %v1911, 4
  %v1913 = vrot.slane %v69, 5
  %v1914 = vsel %vm1798, %v1912, %v1913
  %v1915 = vrot.slane %v1913, 4
  %v1916 = vrot.slane %v117, 5
  %v1917 = vsel %vm1798, %v1915, %v1916
  %v1918 = vrot.slane %v1717, 5
  %v1919 = vrot.slane %v1918, 4
  %v1920 = vrot.slane %v71, 5
  %v1921 = vsel %vm1798, %v1919, %v1920
  %v1922 = vrot.slane %v1920, 4
  %v1923 = vrot.slane %v118, 5
  %v1924 = vsel %vm1798, %v1922, %v1923
  %v1925 = vrot.slane %v1718, 5
  %v1926 = vrot.slane %v1925, 4
  %v1927 = vrot.slane %v73, 5
  %v1928 = vsel %vm1798, %v1926, %v1927
  %v1929 = vrot.slane %v1927, 4
  %v1930 = vrot.slane %v119, 5
  %v1931 = vsel %vm1798, %v1929, %v1930
  %v1932 = vrot.slane %v1719, 5
  %v1933 = vrot.slane %v1932, 4
  %v1934 = vrot.slane %v75, 5
  %v1935 = vsel %vm1798, %v1933, %v1934
  %v1936 = vrot.slane %v1934, 4
  %v1937 = vrot.slane %v120, 5
  %v1938 = vsel %vm1798, %v1936, %v1937
  %v1939 = vrot.slane %v1720, 5
  %v1940 = vrot.slane %v1939, 4
  %v1941 = vrot.slane %v77, 5
  %v1942 = vsel %vm1798, %v1940, %v1941
  %v1943 = vrot.slane %v1941, 4
  %v1944 = vrot.slane %v121, 5
  %v1945 = vsel %vm1798, %v1943, %v1944
  %v1946 = vrot.slane %v1721, 5
  %v1947 = vrot.slane %v1946, 4
  %v1948 = vrot.slane %v79, 5
  %v1949 = vsel %vm1798, %v1947, %v1948
  %v1950 = vrot.slane %v1948, 4
  %v1951 = vrot.slane %v122, 5
  %v1952 = vsel %vm1798, %v1950, %v1951
  %v1953 = vrot.slane %v1722, 5
  %v1954 = vrot.slane %v1953, 4
  %v1955 = vrot.slane %v81, 5
  %v1956 = vsel %vm1798, %v1954, %v1955
  %v1957 = vrot.slane %v1955, 4
  %v1958 = vrot.slane %v123, 5
  %v1959 = vsel %vm1798, %v1957, %v1958
  %v1960 = vrot.slane %v1723, 5
  %v1961 = vrot.slane %v1960, 4
  %v1962 = vrot.slane %v83, 5
  %v1963 = vsel %vm1798, %v1961, %v1962
  %v1964 = vrot.slane %v1962, 4
  %v1965 = vrot.slane %v124, 5
  %v1966 = vsel %vm1798, %v1964, %v1965
  %v1967 = vrot.slane %v1724, 5
  %v1968 = vrot.slane %v1967, 4
  %v1969 = vrot.slane %v85, 5
  %v1970 = vsel %vm1798, %v1968, %v1969
  %v1971 = vrot.slane %v1969, 4
  %v1972 = vrot.slane %v125, 5
  %v1973 = vsel %vm1798, %v1971, %v1972
  %v1974 = vrot.slane %v1725, 5
  %v1975 = vrot.slane %v1974, 4
  %v1976 = vrot.slane %v87, 5
  %v1977 = vsel %vm1798, %v1975, %v1976
  %v1978 = vrot.slane %v1976, 4
  %v1979 = vrot.slane %v126, 5
  %v1980 = vsel %vm1798, %v1978, %v1979
  %v1981 = vrot.slane %v1726, 5
  %v1982 = vrot.slane %v1981, 4
  %v1983 = vrot.slane %v89, 5
  %v1984 = vsel %vm1798, %v1982, %v1983
  %v1985 = vrot.slane %v1983, 4
  %v1986 = vrot.slane %v127, 5
  %v1987 = vsel %vm1798, %v1985, %v1986
  %v1988 = vrot.slane %v1727, 5
  %v1989 = vrot.slane %v1988, 4
  %v1990 = vrot.slane %v91, 5
  %v1991 = vsel %vm1798, %v1989, %v1990
  %v1992 = vrot.slane %v1990, 4
  %v1993 = vrot.slane %v128, 5
  %v1994 = vsel %vm1798, %v1992, %v1993
  %v1995 = vrot.slane %v1728, 5
  %v1996 = vrot.slane %v1995, 4
  %v1997 = vrot.slane %v93, 5
  %v1998 = vsel %vm1798, %v1996, %v1997
  %v1999 = vrot.slane %v1997, 4
  %v2000 = vrot.slane %v129, 5
  %v2001 = vsel %vm1798, %v1999, %v2000
  %v2002 = vrot.slane %v1729, 5
  %v2003 = vrot.slane %v2002, 4
  %v2004 = vrot.slane %v95, 5
  %v2005 = vsel %vm1798, %v2003, %v2004
  %v2006 = vrot.slane %v2004, 4
  %v2007 = vrot.slane %v130, 5
  %v2008 = vsel %vm1798, %v2006, %v2007
  %v2009 = vrot.slane %v1730, 5
  %v2010 = vrot.slane %v2009, 4
  %v2011 = vrot.slane %v97, 5
  %v2012 = vsel %vm1798, %v2010, %v2011
  %v2013 = vrot.slane %v2011, 4
  %v2014 = vrot.slane %v131, 5
  %v2015 = vsel %vm1798, %v2013, %v2014
  %v2016 = vrot.slane %v1731, 5
  %v2017 = vrot.slane %v2016, 4
  %v2018 = vrot.slane %v99, 5
  %v2019 = vsel %vm1798, %v2017, %v2018
  %v2020 = vrot.slane %v2018, 4
  %v2021 = vrot.slane %v132, 5
  %v2022 = vsel %vm1798, %v2020, %v2021
  %s2023 = scalar_lea.vmem %s1, 4
  %v2024 = vld [vmem:[%s2023] sm:$0x3]
  %v2025 = vunpack.c.l.b16 %v1802
  %v2026 = vunpack.c.l.b16 %v1805
  %v2027 = vunpack.c.l.b16 %v1809
  %v2028 = vunpack.c.l.b16 %v1812
  %v2029 = vunpack.c.l.b16 %v1816
  %v2030 = vunpack.c.l.b16 %v1819
  %v2031 = vunpack.c.l.b16 %v1823
  %v2032 = vunpack.c.l.b16 %v1826
  %v2033 = vunpack.c.l.b16 %v1830
  %v2034 = vunpack.c.l.b16 %v1833
  %v2035 = vunpack.c.l.b16 %v1837
  %v2036 = vunpack.c.l.b16 %v1840
  %v2037 = vunpack.c.l.b16 %v1844
  %v2038 = vunpack.c.l.b16 %v1847
  %v2039 = vunpack.c.l.b16 %v1851
  %v2040 = vunpack.c.l.b16 %v1854
  %v2041 = vunpack.c.l.b16 %v1858
  %v2042 = vunpack.c.l.b16 %v1861
  %v2043 = vunpack.c.l.b16 %v1865
  %v2044 = vunpack.c.l.b16 %v1868
  %v2045 = vunpack.c.l.b16 %v1872
  %v2046 = vunpack.c.l.b16 %v1875
  %v2047 = vunpack.c.l.b16 %v1879
  %v2048 = vunpack.c.l.b16 %v1882
  %v2049 = vunpack.c.l.b16 %v1886
  %v2050 = vunpack.c.l.b16 %v1889
  %v2051 = vunpack.c.l.b16 %v1893
  %v2052 = vunpack.c.l.b16 %v1896
  %v2053 = vunpack.c.l.b16 %v1900
  %v2054 = vunpack.c.l.b16 %v1903
  %v2055 = vunpack.c.l.b16 %v1907
  %v2056 = vunpack.c.l.b16 %v1910
  %v2057 = vunpack.c.l.b16 %v1914
  %v2058 = vunpack.c.l.b16 %v1917
  %v2059 = vunpack.c.l.b16 %v1921
  %v2060 = vunpack.c.l.b16 %v1924
  %v2061 = vunpack.c.l.b16 %v1928
  %v2062 = vunpack.c.l.b16 %v1931
  %v2063 = vunpack.c.l.b16 %v1935
  %v2064 = vunpack.c.l.b16 %v1938
  %v2065 = vunpack.c.l.b16 %v1942
  %v2066 = vunpack.c.l.b16 %v1945
  %v2067 = vunpack.c.l.b16 %v1949
  %v2068 = vunpack.c.l.b16 %v1952
  %v2069 = vunpack.c.l.b16 %v1956
  %v2070 = vunpack.c.l.b16 %v1959
  %v2071 = vunpack.c.l.b16 %v1963
  %v2072 = vunpack.c.l.b16 %v1966
  %v2073 = vunpack.c.l.b16 %v1970
  %v2074 = vunpack.c.l.b16 %v1973
  %v2075 = vunpack.c.l.b16 %v1977
  %v2076 = vunpack.c.l.b16 %v1980
  %v2077 = vunpack.c.l.b16 %v1984
  %v2078 = vunpack.c.l.b16 %v1987
  %v2079 = vunpack.c.l.b16 %v1991
  %v2080 = vunpack.c.l.b16 %v1994
  %v2081 = vunpack.c.l.b16 %v1998
  %v2082 = vunpack.c.l.b16 %v2001
  %v2083 = vunpack.c.l.b16 %v2005
  %v2084 = vunpack.c.l.b16 %v2008
  %v2085 = vunpack.c.l.b16 %v2012
  %v2086 = vunpack.c.l.b16 %v2015
  %v2087 = vunpack.c.l.b16 %v2019
  %v2088 = vunpack.c.l.b16 %v2022
  %v2089 = vpack.c.b16 %v2026, %v2025
  %v2090 = vpack.c.b16 %v2028, %v2027
  %v2091 = vpack.c.b16 %v2030, %v2029
  %v2092 = vpack.c.b16 %v2032, %v2031
  %v2093 = vpack.c.b16 %v2034, %v2033
  %v2094 = vpack.c.b16 %v2036, %v2035
  %v2095 = vpack.c.b16 %v2038, %v2037
  %v2096 = vpack.c.b16 %v2040, %v2039
  %v2097 = vpack.c.b16 %v2042, %v2041
  %v2098 = vpack.c.b16 %v2044, %v2043
  %v2099 = vpack.c.b16 %v2046, %v2045
  %v2100 = vpack.c.b16 %v2048, %v2047
  %v2101 = vpack.c.b16 %v2050, %v2049
  %v2102 = vpack.c.b16 %v2052, %v2051
  %v2103 = vpack.c.b16 %v2054, %v2053
  %v2104 = vpack.c.b16 %v2056, %v2055
  %v2105 = vpack.c.b16 %v2058, %v2057
  %v2106 = vpack.c.b16 %v2060, %v2059
  %v2107 = vpack.c.b16 %v2062, %v2061
  %v2108 = vpack.c.b16 %v2064, %v2063
  %v2109 = vpack.c.b16 %v2066, %v2065
  %v2110 = vpack.c.b16 %v2068, %v2067
  %v2111 = vpack.c.b16 %v2070, %v2069
  %v2112 = vpack.c.b16 %v2072, %v2071
  %v2113 = vpack.c.b16 %v2074, %v2073
  %v2114 = vpack.c.b16 %v2076, %v2075
  %v2115 = vpack.c.b16 %v2078, %v2077
  %v2116 = vpack.c.b16 %v2080, %v2079
  %v2117 = vpack.c.b16 %v2082, %v2081
  %v2118 = vpack.c.b16 %v2084, %v2083
  %v2119 = vpack.c.b16 %v2086, %v2085
  %v2120 = vpack.c.b16 %v2088, %v2087
  %v2122 = vsel %vm1002, %v2089, 0
  %v2125 = vsel %vm1002, %v2090, 0
  %v2128 = vsel %vm1002, %v2091, 0
  %v2131 = vsel %vm1002, %v2092, 0
  %v2134 = vsel %vm1002, %v2093, 0
  %v2137 = vsel %vm1002, %v2094, 0
  %v2140 = vsel %vm1002, %v2095, 0
  %v2143 = vsel %vm1002, %v2096, 0
  %v2146 = vsel %vm1002, %v2097, 0
  %v2149 = vsel %vm1002, %v2098, 0
  %v2152 = vsel %vm1002, %v2099, 0
  %v2155 = vsel %vm1002, %v2100, 0
  %v2158 = vsel %vm1002, %v2101, 0
  %v2161 = vsel %vm1002, %v2102, 0
  %v2164 = vsel %vm1002, %v2103, 0
  %v2167 = vsel %vm1002, %v2104, 0
  %v2170 = vsel %vm1002, %v2105, 0
  %v2173 = vsel %vm1002, %v2106, 0
  %v2176 = vsel %vm1002, %v2107, 0
  %v2179 = vsel %vm1002, %v2108, 0
  %v2182 = vsel %vm1002, %v2109, 0
  %v2185 = vsel %vm1002, %v2110, 0
  %v2188 = vsel %vm1002, %v2111, 0
  %v2191 = vsel %vm1002, %v2112, 0
  %v2194 = vsel %vm1002, %v2113, 0
  %v2197 = vsel %vm1002, %v2114, 0
  %v2200 = vsel %vm1002, %v2115, 0
  %v2203 = vsel %vm1002, %v2116, 0
  %v2206 = vsel %vm1002, %v2117, 0
  %v2209 = vsel %vm1002, %v2118, 0
  %v2212 = vsel %vm1002, %v2119, 0
  %v2215 = vsel %vm1002, %v2120, 0
  %v2218 = vsel %vm1099, %v2024, 0
  %2220 = vmatpush.bf16.msra.mxu0 0
  %2221 = vmatpush.bf16.msra.mxu0 0
  %2222 = vmatpush.bf16.msra.mxu0 0
  %2223 = vmatpush.bf16.msra.mxu0 0
  %2224 = vmatpush.bf16.msra.mxu0 0
  %2225 = vmatpush.bf16.msra.mxu0 0
  %2226 = vmatpush.bf16.msra.mxu0 0
  %2227 = vmatpush.bf16.msra.mxu0 %v2218
  %2228 = vmatmul.bf16.gmra.mxu0 %v2122
  %v2229 = vpop.f32.mrf.mxu0
  %v2230 = vadd.f32 0.0, %v2229
  %v2231 = vpop.f32.mrf.mxu0
  %v2232 = vadd.f32 0.0, %v2231
  %2233 = vmatmul.bf16.gmra.mxu0 %v2125
  %v2234 = vpop.f32.mrf.mxu0
  %v2235 = vadd.f32 0.0, %v2234
  %v2236 = vpop.f32.mrf.mxu0
  %v2237 = vadd.f32 0.0, %v2236
  %2238 = vmatmul.bf16.gmra.mxu0 %v2128
  %v2239 = vpop.f32.mrf.mxu0
  %v2240 = vadd.f32 0.0, %v2239
  %v2241 = vpop.f32.mrf.mxu0
  %v2242 = vadd.f32 0.0, %v2241
  %2243 = vmatmul.bf16.gmra.mxu0 %v2131
  %v2244 = vpop.f32.mrf.mxu0
  %v2245 = vadd.f32 0.0, %v2244
  %v2246 = vpop.f32.mrf.mxu0
  %v2247 = vadd.f32 0.0, %v2246
  %2248 = vmatmul.bf16.gmra.mxu0 %v2134
  %v2249 = vpop.f32.mrf.mxu0
  %v2250 = vadd.f32 0.0, %v2249
  %v2251 = vpop.f32.mrf.mxu0
  %v2252 = vadd.f32 0.0, %v2251
  %2253 = vmatmul.bf16.gmra.mxu0 %v2137
  %v2254 = vpop.f32.mrf.mxu0
  %v2255 = vadd.f32 0.0, %v2254
  %v2256 = vpop.f32.mrf.mxu0
  %v2257 = vadd.f32 0.0, %v2256
  %2258 = vmatmul.bf16.gmra.mxu0 %v2140
  %v2259 = vpop.f32.mrf.mxu0
  %v2260 = vadd.f32 0.0, %v2259
  %v2261 = vpop.f32.mrf.mxu0
  %v2262 = vadd.f32 0.0, %v2261
  %2263 = vmatmul.bf16.gmra.mxu0 %v2143
  %v2264 = vpop.f32.mrf.mxu0
  %v2265 = vadd.f32 0.0, %v2264
  %v2266 = vpop.f32.mrf.mxu0
  %v2267 = vadd.f32 0.0, %v2266
  %2268 = vmatmul.bf16.gmra.mxu0 %v2146
  %v2269 = vpop.f32.mrf.mxu0
  %v2270 = vadd.f32 0.0, %v2269
  %v2271 = vpop.f32.mrf.mxu0
  %v2272 = vadd.f32 0.0, %v2271
  %2273 = vmatmul.bf16.gmra.mxu0 %v2149
  %v2274 = vpop.f32.mrf.mxu0
  %v2275 = vadd.f32 0.0, %v2274
  %v2276 = vpop.f32.mrf.mxu0
  %v2277 = vadd.f32 0.0, %v2276
  %2278 = vmatmul.bf16.gmra.mxu0 %v2152
  %v2279 = vpop.f32.mrf.mxu0
  %v2280 = vadd.f32 0.0, %v2279
  %v2281 = vpop.f32.mrf.mxu0
  %v2282 = vadd.f32 0.0, %v2281
  %2283 = vmatmul.bf16.gmra.mxu0 %v2155
  %v2284 = vpop.f32.mrf.mxu0
  %v2285 = vadd.f32 0.0, %v2284
  %v2286 = vpop.f32.mrf.mxu0
  %v2287 = vadd.f32 0.0, %v2286
  %2288 = vmatmul.bf16.gmra.mxu0 %v2158
  %v2289 = vpop.f32.mrf.mxu0
  %v2290 = vadd.f32 0.0, %v2289
  %v2291 = vpop.f32.mrf.mxu0
  %v2292 = vadd.f32 0.0, %v2291
  %2293 = vmatmul.bf16.gmra.mxu0 %v2161
  %v2294 = vpop.f32.mrf.mxu0
  %v2295 = vadd.f32 0.0, %v2294
  %v2296 = vpop.f32.mrf.mxu0
  %v2297 = vadd.f32 0.0, %v2296
  %2298 = vmatmul.bf16.gmra.mxu0 %v2164
  %v2299 = vpop.f32.mrf.mxu0
  %v2300 = vadd.f32 0.0, %v2299
  %v2301 = vpop.f32.mrf.mxu0
  %v2302 = vadd.f32 0.0, %v2301
  %2303 = vmatmul.bf16.gmra.mxu0 %v2167
  %v2304 = vpop.f32.mrf.mxu0
  %v2305 = vadd.f32 0.0, %v2304
  %v2306 = vpop.f32.mrf.mxu0
  %v2307 = vadd.f32 0.0, %v2306
  %2308 = vmatmul.bf16.gmra.mxu0 %v2170
  %v2309 = vpop.f32.mrf.mxu0
  %v2310 = vadd.f32 0.0, %v2309
  %v2311 = vpop.f32.mrf.mxu0
  %v2312 = vadd.f32 0.0, %v2311
  %2313 = vmatmul.bf16.gmra.mxu0 %v2173
  %v2314 = vpop.f32.mrf.mxu0
  %v2315 = vadd.f32 0.0, %v2314
  %v2316 = vpop.f32.mrf.mxu0
  %v2317 = vadd.f32 0.0, %v2316
  %2318 = vmatmul.bf16.gmra.mxu0 %v2176
  %v2319 = vpop.f32.mrf.mxu0
  %v2320 = vadd.f32 0.0, %v2319
  %v2321 = vpop.f32.mrf.mxu0
  %v2322 = vadd.f32 0.0, %v2321
  %2323 = vmatmul.bf16.gmra.mxu0 %v2179
  %v2324 = vpop.f32.mrf.mxu0
  %v2325 = vadd.f32 0.0, %v2324
  %v2326 = vpop.f32.mrf.mxu0
  %v2327 = vadd.f32 0.0, %v2326
  %2328 = vmatmul.bf16.gmra.mxu0 %v2182
  %v2329 = vpop.f32.mrf.mxu0
  %v2330 = vadd.f32 0.0, %v2329
  %v2331 = vpop.f32.mrf.mxu0
  %v2332 = vadd.f32 0.0, %v2331
  %2333 = vmatmul.bf16.gmra.mxu0 %v2185
  %v2334 = vpop.f32.mrf.mxu0
  %v2335 = vadd.f32 0.0, %v2334
  %v2336 = vpop.f32.mrf.mxu0
  %v2337 = vadd.f32 0.0, %v2336
  %2338 = vmatmul.bf16.gmra.mxu0 %v2188
  %v2339 = vpop.f32.mrf.mxu0
  %v2340 = vadd.f32 0.0, %v2339
  %v2341 = vpop.f32.mrf.mxu0
  %v2342 = vadd.f32 0.0, %v2341
  %2343 = vmatmul.bf16.gmra.mxu0 %v2191
  %v2344 = vpop.f32.mrf.mxu0
  %v2345 = vadd.f32 0.0, %v2344
  %v2346 = vpop.f32.mrf.mxu0
  %v2347 = vadd.f32 0.0, %v2346
  %2348 = vmatmul.bf16.gmra.mxu0 %v2194
  %v2349 = vpop.f32.mrf.mxu0
  %v2350 = vadd.f32 0.0, %v2349
  %v2351 = vpop.f32.mrf.mxu0
  %v2352 = vadd.f32 0.0, %v2351
  %2353 = vmatmul.bf16.gmra.mxu0 %v2197
  %v2354 = vpop.f32.mrf.mxu0
  %v2355 = vadd.f32 0.0, %v2354
  %v2356 = vpop.f32.mrf.mxu0
  %v2357 = vadd.f32 0.0, %v2356
  %2358 = vmatmul.bf16.gmra.mxu0 %v2200
  %v2359 = vpop.f32.mrf.mxu0
  %v2360 = vadd.f32 0.0, %v2359
  %v2361 = vpop.f32.mrf.mxu0
  %v2362 = vadd.f32 0.0, %v2361
  %2363 = vmatmul.bf16.gmra.mxu0 %v2203
  %v2364 = vpop.f32.mrf.mxu0
  %v2365 = vadd.f32 0.0, %v2364
  %v2366 = vpop.f32.mrf.mxu0
  %v2367 = vadd.f32 0.0, %v2366
  %2368 = vmatmul.bf16.gmra.mxu0 %v2206
  %v2369 = vpop.f32.mrf.mxu0
  %v2370 = vadd.f32 0.0, %v2369
  %v2371 = vpop.f32.mrf.mxu0
  %v2372 = vadd.f32 0.0, %v2371
  %2373 = vmatmul.bf16.gmra.mxu0 %v2209
  %v2374 = vpop.f32.mrf.mxu0
  %v2375 = vadd.f32 0.0, %v2374
  %v2376 = vpop.f32.mrf.mxu0
  %v2377 = vadd.f32 0.0, %v2376
  %2378 = vmatmul.bf16.gmra.mxu0 %v2212
  %v2379 = vpop.f32.mrf.mxu0
  %v2380 = vadd.f32 0.0, %v2379
  %v2381 = vpop.f32.mrf.mxu0
  %v2382 = vadd.f32 0.0, %v2381
  %2383 = vmatmul.bf16.gmra.mxu0 %v2215
  %v2384 = vpop.f32.mrf.mxu0
  %v2385 = vadd.f32 0.0, %v2384
  %v2386 = vpop.f32.mrf.mxu0
  %v2387 = vadd.f32 0.0, %v2386
  %2388 = vdwg.mxu0
  %v2389 = vadd.f32 %v1541, %v2230
  %v2390 = vadd.f32 %v1543, %v2232
  %v2391 = vadd.f32 %v1546, %v2235
  %v2392 = vadd.f32 %v1548, %v2237
  %v2393 = vadd.f32 %v1551, %v2240
  %v2394 = vadd.f32 %v1553, %v2242
  %v2395 = vadd.f32 %v1556, %v2245
  %v2396 = vadd.f32 %v1558, %v2247
  %v2397 = vadd.f32 %v1561, %v2250
  %v2398 = vadd.f32 %v1563, %v2252
  %v2399 = vadd.f32 %v1566, %v2255
  %v2400 = vadd.f32 %v1568, %v2257
  %v2401 = vadd.f32 %v1571, %v2260
  %v2402 = vadd.f32 %v1573, %v2262
  %v2403 = vadd.f32 %v1576, %v2265
  %v2404 = vadd.f32 %v1578, %v2267
  %v2405 = vadd.f32 %v1581, %v2270
  %v2406 = vadd.f32 %v1583, %v2272
  %v2407 = vadd.f32 %v1586, %v2275
  %v2408 = vadd.f32 %v1588, %v2277
  %v2409 = vadd.f32 %v1591, %v2280
  %v2410 = vadd.f32 %v1593, %v2282
  %v2411 = vadd.f32 %v1596, %v2285
  %v2412 = vadd.f32 %v1598, %v2287
  %v2413 = vadd.f32 %v1601, %v2290
  %v2414 = vadd.f32 %v1603, %v2292
  %v2415 = vadd.f32 %v1606, %v2295
  %v2416 = vadd.f32 %v1608, %v2297
  %v2417 = vadd.f32 %v1611, %v2300
  %v2418 = vadd.f32 %v1613, %v2302
  %v2419 = vadd.f32 %v1616, %v2305
  %v2420 = vadd.f32 %v1618, %v2307
  %v2421 = vadd.f32 %v1621, %v2310
  %v2422 = vadd.f32 %v1623, %v2312
  %v2423 = vadd.f32 %v1626, %v2315
  %v2424 = vadd.f32 %v1628, %v2317
  %v2425 = vadd.f32 %v1631, %v2320
  %v2426 = vadd.f32 %v1633, %v2322
  %v2427 = vadd.f32 %v1636, %v2325
  %v2428 = vadd.f32 %v1638, %v2327
  %v2429 = vadd.f32 %v1641, %v2330
  %v2430 = vadd.f32 %v1643, %v2332
  %v2431 = vadd.f32 %v1646, %v2335
  %v2432 = vadd.f32 %v1648, %v2337
  %v2433 = vadd.f32 %v1651, %v2340
  %v2434 = vadd.f32 %v1653, %v2342
  %v2435 = vadd.f32 %v1656, %v2345
  %v2436 = vadd.f32 %v1658, %v2347
  %v2437 = vadd.f32 %v1661, %v2350
  %v2438 = vadd.f32 %v1663, %v2352
  %v2439 = vadd.f32 %v1666, %v2355
  %v2440 = vadd.f32 %v1668, %v2357
  %v2441 = vadd.f32 %v1671, %v2360
  %v2442 = vadd.f32 %v1673, %v2362
  %v2443 = vadd.f32 %v1676, %v2365
  %v2444 = vadd.f32 %v1678, %v2367
  %v2445 = vadd.f32 %v1681, %v2370
  %v2446 = vadd.f32 %v1683, %v2372
  %v2447 = vadd.f32 %v1686, %v2375
  %v2448 = vadd.f32 %v1688, %v2377
  %v2449 = vadd.f32 %v1691, %v2380
  %v2450 = vadd.f32 %v1693, %v2382
  %v2451 = vadd.f32 %v1696, %v2385
  %v2452 = vadd.f32 %v1698, %v2387
  %s2453 = scalar_lea.vmem %s0, 12
  %v2454 = vld [vmem:[%s2453] sm:$0xf]
  %v2455 = vld [vmem:[%s2453 + $0x4] sm:$0xf]
  %v2456 = vld [vmem:[%s2453 + $0xc] sm:$0xf]
  %v2457 = vld [vmem:[%s2453 + $0x10] sm:$0xf]
  %v2458 = vld [vmem:[%s2453 + $0x18] sm:$0xf]
  %v2459 = vld [vmem:[%s2453 + $0x1c] sm:$0xf]
  %v2460 = vld [vmem:[%s2453 + $0x24] sm:$0xf]
  %v2461 = vld [vmem:[%s2453 + $0x28] sm:$0xf]
  %v2462 = vld [vmem:[%s2453 + $0x30] sm:$0xf]
  %v2463 = vld [vmem:[%s2453 + $0x34] sm:$0xf]
  %v2464 = vld [vmem:[%s2453 + $0x3c] sm:$0xf]
  %v2465 = vld [vmem:[%s2453 + $0x40] sm:$0xf]
  %v2466 = vld [vmem:[%s2453 + $0x48] sm:$0xf]
  %v2467 = vld [vmem:[%s2453 + $0x4c] sm:$0xf]
  %v2468 = vld [vmem:[%s2453 + $0x54] sm:$0xf]
  %v2469 = vld [vmem:[%s2453 + $0x58] sm:$0xf]
  %v2470 = vld [vmem:[%s2453 + $0x60] sm:$0xf]
  %v2471 = vld [vmem:[%s2453 + $0x64] sm:$0xf]
  %v2472 = vld [vmem:[%s2453 + $0x6c] sm:$0xf]
  %v2473 = vld [vmem:[%s2453 + $0x70] sm:$0xf]
  %v2474 = vld [vmem:[%s2453 + $0x78] sm:$0xf]
  %v2475 = vld [vmem:[%s2453 + $0x7c] sm:$0xf]
  %v2476 = vld [vmem:[%s2453 + $0x84] sm:$0xf]
  %v2477 = vld [vmem:[%s2453 + $0x88] sm:$0xf]
  %v2478 = vld [vmem:[%s2453 + $0x90] sm:$0xf]
  %v2479 = vld [vmem:[%s2453 + $0x94] sm:$0xf]
  %v2480 = vld [vmem:[%s2453 + $0x9c] sm:$0xf]
  %v2481 = vld [vmem:[%s2453 + $0xa0] sm:$0xf]
  %v2482 = vld [vmem:[%s2453 + $0xa8] sm:$0xf]
  %v2483 = vld [vmem:[%s2453 + $0xac] sm:$0xf]
  %v2484 = vld [vmem:[%s2453 + $0xb4] sm:$0xf]
  %v2485 = vld [vmem:[%s2453 + $0xb8] sm:$0xf]
  %v2486 = vld [vmem:[%s2453 + $0xd8] sm:$0xf]
  %v2487 = vld [vmem:[%s2453 + $0xdc] sm:$0xf]
  %v2488 = vld [vmem:[%s2453 + $0xe4] sm:$0xf]
  %v2489 = vld [vmem:[%s2453 + $0xe8] sm:$0xf]
  %v2490 = vld [vmem:[%s2453 + $0xf0] sm:$0xf]
  %v2491 = vld [vmem:[%s2453 + $0xf4] sm:$0xf]
  %v2492 = vld [vmem:[%s2453 + $0xfc] sm:$0xf]
  %v2493 = vld [vmem:[%s2453 + $0x100] sm:$0xf]
  %v2494 = vld [vmem:[%s2453 + $0x108] sm:$0xf]
  %v2495 = vld [vmem:[%s2453 + $0x10c] sm:$0xf]
  %v2496 = vld [vmem:[%s2453 + $0x114] sm:$0xf]
  %v2497 = vld [vmem:[%s2453 + $0x118] sm:$0xf]
  %v2498 = vld [vmem:[%s2453 + $0x120] sm:$0xf]
  %v2499 = vld [vmem:[%s2453 + $0x124] sm:$0xf]
  %v2500 = vld [vmem:[%s2453 + $0x12c] sm:$0xf]
  %v2501 = vld [vmem:[%s2453 + $0x130] sm:$0xf]
  %v2502 = vld [vmem:[%s2453 + $0x138] sm:$0xf]
  %v2503 = vld [vmem:[%s2453 + $0x13c] sm:$0xf]
  %v2504 = vld [vmem:[%s2453 + $0x144] sm:$0xf]
  %v2505 = vld [vmem:[%s2453 + $0x148] sm:$0xf]
  %v2506 = vld [vmem:[%s2453 + $0x150] sm:$0xf]
  %v2507 = vld [vmem:[%s2453 + $0x154] sm:$0xf]
  %v2508 = vld [vmem:[%s2453 + $0x15c] sm:$0xf]
  %v2509 = vld [vmem:[%s2453 + $0x160] sm:$0xf]
  %v2510 = vld [vmem:[%s2453 + $0x168] sm:$0xf]
  %v2511 = vld [vmem:[%s2453 + $0x16c] sm:$0xf]
  %v2512 = vld [vmem:[%s2453 + $0x174] sm:$0xf]
  %v2513 = vld [vmem:[%s2453 + $0x178] sm:$0xf]
  %v2514 = vld [vmem:[%s2453 + $0x180] sm:$0xf]
  %v2515 = vld [vmem:[%s2453 + $0x184] sm:$0xf]
  %v2516 = vld [vmem:[%s2453 + $0x18c] sm:$0xf]
  %v2517 = vld [vmem:[%s2453 + $0x190] sm:$0xf]
  %s2518 = scalar_lea.vmem %s1, 6
  %v2519 = vld [vmem:[%s2518] sm:$0x3]
  %v2584 = vunpack.c.l.b16 %v2454
  %v2585 = vunpack.c.l.b16 %v2455
  %v2586 = vunpack.c.l.b16 %v2456
  %v2587 = vunpack.c.l.b16 %v2457
  %v2588 = vunpack.c.l.b16 %v2458
  %v2589 = vunpack.c.l.b16 %v2459
  %v2590 = vunpack.c.l.b16 %v2460
  %v2591 = vunpack.c.l.b16 %v2461
  %v2592 = vunpack.c.l.b16 %v2462
  %v2593 = vunpack.c.l.b16 %v2463
  %v2594 = vunpack.c.l.b16 %v2464
  %v2595 = vunpack.c.l.b16 %v2465
  %v2596 = vunpack.c.l.b16 %v2466
  %v2597 = vunpack.c.l.b16 %v2467
  %v2598 = vunpack.c.l.b16 %v2468
  %v2599 = vunpack.c.l.b16 %v2469
  %v2600 = vunpack.c.l.b16 %v2470
  %v2601 = vunpack.c.l.b16 %v2471
  %v2602 = vunpack.c.l.b16 %v2472
  %v2603 = vunpack.c.l.b16 %v2473
  %v2604 = vunpack.c.l.b16 %v2474
  %v2605 = vunpack.c.l.b16 %v2475
  %v2606 = vunpack.c.l.b16 %v2476
  %v2607 = vunpack.c.l.b16 %v2477
  %v2608 = vunpack.c.l.b16 %v2478
  %v2609 = vunpack.c.l.b16 %v2479
  %v2610 = vunpack.c.l.b16 %v2480
  %v2611 = vunpack.c.l.b16 %v2481
  %v2612 = vunpack.c.l.b16 %v2482
  %v2613 = vunpack.c.l.b16 %v2483
  %v2614 = vunpack.c.l.b16 %v2484
  %v2615 = vunpack.c.l.b16 %v2485
  %v2616 = vunpack.c.l.b16 %v2486
  %v2617 = vunpack.c.l.b16 %v2487
  %v2618 = vunpack.c.l.b16 %v2488
  %v2619 = vunpack.c.l.b16 %v2489
  %v2620 = vunpack.c.l.b16 %v2490
  %v2621 = vunpack.c.l.b16 %v2491
  %v2622 = vunpack.c.l.b16 %v2492
  %v2623 = vunpack.c.l.b16 %v2493
  %v2624 = vunpack.c.l.b16 %v2494
  %v2625 = vunpack.c.l.b16 %v2495
  %v2626 = vunpack.c.l.b16 %v2496
  %v2627 = vunpack.c.l.b16 %v2497
  %v2628 = vunpack.c.l.b16 %v2498
  %v2629 = vunpack.c.l.b16 %v2499
  %v2630 = vunpack.c.l.b16 %v2500
  %v2631 = vunpack.c.l.b16 %v2501
  %v2632 = vunpack.c.l.b16 %v2502
  %v2633 = vunpack.c.l.b16 %v2503
  %v2634 = vunpack.c.l.b16 %v2504
  %v2635 = vunpack.c.l.b16 %v2505
  %v2636 = vunpack.c.l.b16 %v2506
  %v2637 = vunpack.c.l.b16 %v2507
  %v2638 = vunpack.c.l.b16 %v2508
  %v2639 = vunpack.c.l.b16 %v2509
  %v2640 = vunpack.c.l.b16 %v2510
  %v2641 = vunpack.c.l.b16 %v2511
  %v2642 = vunpack.c.l.b16 %v2512
  %v2643 = vunpack.c.l.b16 %v2513
  %v2644 = vunpack.c.l.b16 %v2514
  %v2645 = vunpack.c.l.b16 %v2515
  %v2646 = vunpack.c.l.b16 %v2516
  %v2647 = vunpack.c.l.b16 %v2517
  %v2648 = vpack.c.b16 %v2585, %v2584
  %v2649 = vpack.c.b16 %v2587, %v2586
  %v2650 = vpack.c.b16 %v2589, %v2588
  %v2651 = vpack.c.b16 %v2591, %v2590
  %v2652 = vpack.c.b16 %v2593, %v2592
  %v2653 = vpack.c.b16 %v2595, %v2594
  %v2654 = vpack.c.b16 %v2597, %v2596
  %v2655 = vpack.c.b16 %v2599, %v2598
  %v2656 = vpack.c.b16 %v2601, %v2600
  %v2657 = vpack.c.b16 %v2603, %v2602
  %v2658 = vpack.c.b16 %v2605, %v2604
  %v2659 = vpack.c.b16 %v2607, %v2606
  %v2660 = vpack.c.b16 %v2609, %v2608
  %v2661 = vpack.c.b16 %v2611, %v2610
  %v2662 = vpack.c.b16 %v2613, %v2612
  %v2663 = vpack.c.b16 %v2615, %v2614
  %v2664 = vpack.c.b16 %v2617, %v2616
  %v2665 = vpack.c.b16 %v2619, %v2618
  %v2666 = vpack.c.b16 %v2621, %v2620
  %v2667 = vpack.c.b16 %v2623, %v2622
  %v2668 = vpack.c.b16 %v2625, %v2624
  %v2669 = vpack.c.b16 %v2627, %v2626
  %v2670 = vpack.c.b16 %v2629, %v2628
  %v2671 = vpack.c.b16 %v2631, %v2630
  %v2672 = vpack.c.b16 %v2633, %v2632
  %v2673 = vpack.c.b16 %v2635, %v2634
  %v2674 = vpack.c.b16 %v2637, %v2636
  %v2675 = vpack.c.b16 %v2639, %v2638
  %v2676 = vpack.c.b16 %v2641, %v2640
  %v2677 = vpack.c.b16 %v2643, %v2642
  %v2678 = vpack.c.b16 %v2645, %v2644
  %v2679 = vpack.c.b16 %v2647, %v2646
  %v2681 = vsel %vm1002, %v2648, 0
  %v2684 = vsel %vm1002, %v2649, 0
  %v2687 = vsel %vm1002, %v2650, 0
  %v2690 = vsel %vm1002, %v2651, 0
  %v2693 = vsel %vm1002, %v2652, 0
  %v2696 = vsel %vm1002, %v2653, 0
  %v2699 = vsel %vm1002, %v2654, 0
  %v2702 = vsel %vm1002, %v2655, 0
  %v2705 = vsel %vm1002, %v2656, 0
  %v2708 = vsel %vm1002, %v2657, 0
  %v2711 = vsel %vm1002, %v2658, 0
  %v2714 = vsel %vm1002, %v2659, 0
  %v2717 = vsel %vm1002, %v2660, 0
  %v2720 = vsel %vm1002, %v2661, 0
  %v2723 = vsel %vm1002, %v2662, 0
  %v2726 = vsel %vm1002, %v2663, 0
  %v2729 = vsel %vm1002, %v2664, 0
  %v2732 = vsel %vm1002, %v2665, 0
  %v2735 = vsel %vm1002, %v2666, 0
  %v2738 = vsel %vm1002, %v2667, 0
  %v2741 = vsel %vm1002, %v2668, 0
  %v2744 = vsel %vm1002, %v2669, 0
  %v2747 = vsel %vm1002, %v2670, 0
  %v2750 = vsel %vm1002, %v2671, 0
  %v2753 = vsel %vm1002, %v2672, 0
  %v2756 = vsel %vm1002, %v2673, 0
  %v2759 = vsel %vm1002, %v2674, 0
  %v2762 = vsel %vm1002, %v2675, 0
  %v2765 = vsel %vm1002, %v2676, 0
  %v2768 = vsel %vm1002, %v2677, 0
  %v2771 = vsel %vm1002, %v2678, 0
  %v2774 = vsel %vm1002, %v2679, 0
  %v2777 = vsel %vm1099, %v2519, 0
  %2779 = vmatpush.bf16.msra.mxu0 0
  %2780 = vmatpush.bf16.msra.mxu0 0
  %2781 = vmatpush.bf16.msra.mxu0 0
  %2782 = vmatpush.bf16.msra.mxu0 0
  %2783 = vmatpush.bf16.msra.mxu0 0
  %2784 = vmatpush.bf16.msra.mxu0 0
  %2785 = vmatpush.bf16.msra.mxu0 0
  %2786 = vmatpush.bf16.msra.mxu0 %v2777
  %2787 = vmatmul.bf16.gmra.mxu0 %v2681
  %v2788 = vpop.f32.mrf.mxu0
  %v2789 = vadd.f32 0.0, %v2788
  %v2790 = vpop.f32.mrf.mxu0
  %v2791 = vadd.f32 0.0, %v2790
  %2792 = vmatmul.bf16.gmra.mxu0 %v2684
  %v2793 = vpop.f32.mrf.mxu0
  %v2794 = vadd.f32 0.0, %v2793
  %v2795 = vpop.f32.mrf.mxu0
  %v2796 = vadd.f32 0.0, %v2795
  %2797 = vmatmul.bf16.gmra.mxu0 %v2687
  %v2798 = vpop.f32.mrf.mxu0
  %v2799 = vadd.f32 0.0, %v2798
  %v2800 = vpop.f32.mrf.mxu0
  %v2801 = vadd.f32 0.0, %v2800
  %2802 = vmatmul.bf16.gmra.mxu0 %v2690
  %v2803 = vpop.f32.mrf.mxu0
  %v2804 = vadd.f32 0.0, %v2803
  %v2805 = vpop.f32.mrf.mxu0
  %v2806 = vadd.f32 0.0, %v2805
  %2807 = vmatmul.bf16.gmra.mxu0 %v2693
  %v2808 = vpop.f32.mrf.mxu0
  %v2809 = vadd.f32 0.0, %v2808
  %v2810 = vpop.f32.mrf.mxu0
  %v2811 = vadd.f32 0.0, %v2810
  %2812 = vmatmul.bf16.gmra.mxu0 %v2696
  %v2813 = vpop.f32.mrf.mxu0
  %v2814 = vadd.f32 0.0, %v2813
  %v2815 = vpop.f32.mrf.mxu0
  %v2816 = vadd.f32 0.0, %v2815
  %2817 = vmatmul.bf16.gmra.mxu0 %v2699
  %v2818 = vpop.f32.mrf.mxu0
  %v2819 = vadd.f32 0.0, %v2818
  %v2820 = vpop.f32.mrf.mxu0
  %v2821 = vadd.f32 0.0, %v2820
  %2822 = vmatmul.bf16.gmra.mxu0 %v2702
  %v2823 = vpop.f32.mrf.mxu0
  %v2824 = vadd.f32 0.0, %v2823
  %v2825 = vpop.f32.mrf.mxu0
  %v2826 = vadd.f32 0.0, %v2825
  %2827 = vmatmul.bf16.gmra.mxu0 %v2705
  %v2828 = vpop.f32.mrf.mxu0
  %v2829 = vadd.f32 0.0, %v2828
  %v2830 = vpop.f32.mrf.mxu0
  %v2831 = vadd.f32 0.0, %v2830
  %2832 = vmatmul.bf16.gmra.mxu0 %v2708
  %v2833 = vpop.f32.mrf.mxu0
  %v2834 = vadd.f32 0.0, %v2833
  %v2835 = vpop.f32.mrf.mxu0
  %v2836 = vadd.f32 0.0, %v2835
  %2837 = vmatmul.bf16.gmra.mxu0 %v2711
  %v2838 = vpop.f32.mrf.mxu0
  %v2839 = vadd.f32 0.0, %v2838
  %v2840 = vpop.f32.mrf.mxu0
  %v2841 = vadd.f32 0.0, %v2840
  %2842 = vmatmul.bf16.gmra.mxu0 %v2714
  %v2843 = vpop.f32.mrf.mxu0
  %v2844 = vadd.f32 0.0, %v2843
  %v2845 = vpop.f32.mrf.mxu0
  %v2846 = vadd.f32 0.0, %v2845
  %2847 = vmatmul.bf16.gmra.mxu0 %v2717
  %v2848 = vpop.f32.mrf.mxu0
  %v2849 = vadd.f32 0.0, %v2848
  %v2850 = vpop.f32.mrf.mxu0
  %v2851 = vadd.f32 0.0, %v2850
  %2852 = vmatmul.bf16.gmra.mxu0 %v2720
  %v2853 = vpop.f32.mrf.mxu0
  %v2854 = vadd.f32 0.0, %v2853
  %v2855 = vpop.f32.mrf.mxu0
  %v2856 = vadd.f32 0.0, %v2855
  %2857 = vmatmul.bf16.gmra.mxu0 %v2723
  %v2858 = vpop.f32.mrf.mxu0
  %v2859 = vadd.f32 0.0, %v2858
  %v2860 = vpop.f32.mrf.mxu0
  %v2861 = vadd.f32 0.0, %v2860
  %2862 = vmatmul.bf16.gmra.mxu0 %v2726
  %v2863 = vpop.f32.mrf.mxu0
  %v2864 = vadd.f32 0.0, %v2863
  %v2865 = vpop.f32.mrf.mxu0
  %v2866 = vadd.f32 0.0, %v2865
  %2867 = vmatmul.bf16.gmra.mxu0 %v2729
  %v2868 = vpop.f32.mrf.mxu0
  %v2869 = vadd.f32 0.0, %v2868
  %v2870 = vpop.f32.mrf.mxu0
  %v2871 = vadd.f32 0.0, %v2870
  %2872 = vmatmul.bf16.gmra.mxu0 %v2732
  %v2873 = vpop.f32.mrf.mxu0
  %v2874 = vadd.f32 0.0, %v2873
  %v2875 = vpop.f32.mrf.mxu0
  %v2876 = vadd.f32 0.0, %v2875
  %2877 = vmatmul.bf16.gmra.mxu0 %v2735
  %v2878 = vpop.f32.mrf.mxu0
  %v2879 = vadd.f32 0.0, %v2878
  %v2880 = vpop.f32.mrf.mxu0
  %v2881 = vadd.f32 0.0, %v2880
  %2882 = vmatmul.bf16.gmra.mxu0 %v2738
  %v2883 = vpop.f32.mrf.mxu0
  %v2884 = vadd.f32 0.0, %v2883
  %v2885 = vpop.f32.mrf.mxu0
  %v2886 = vadd.f32 0.0, %v2885
  %2887 = vmatmul.bf16.gmra.mxu0 %v2741
  %v2888 = vpop.f32.mrf.mxu0
  %v2889 = vadd.f32 0.0, %v2888
  %v2890 = vpop.f32.mrf.mxu0
  %v2891 = vadd.f32 0.0, %v2890
  %2892 = vmatmul.bf16.gmra.mxu0 %v2744
  %v2893 = vpop.f32.mrf.mxu0
  %v2894 = vadd.f32 0.0, %v2893
  %v2895 = vpop.f32.mrf.mxu0
  %v2896 = vadd.f32 0.0, %v2895
  %2897 = vmatmul.bf16.gmra.mxu0 %v2747
  %v2898 = vpop.f32.mrf.mxu0
  %v2899 = vadd.f32 0.0, %v2898
  %v2900 = vpop.f32.mrf.mxu0
  %v2901 = vadd.f32 0.0, %v2900
  %2902 = vmatmul.bf16.gmra.mxu0 %v2750
  %v2903 = vpop.f32.mrf.mxu0
  %v2904 = vadd.f32 0.0, %v2903
  %v2905 = vpop.f32.mrf.mxu0
  %v2906 = vadd.f32 0.0, %v2905
  %2907 = vmatmul.bf16.gmra.mxu0 %v2753
  %v2908 = vpop.f32.mrf.mxu0
  %v2909 = vadd.f32 0.0, %v2908
  %v2910 = vpop.f32.mrf.mxu0
  %v2911 = vadd.f32 0.0, %v2910
  %2912 = vmatmul.bf16.gmra.mxu0 %v2756
  %v2913 = vpop.f32.mrf.mxu0
  %v2914 = vadd.f32 0.0, %v2913
  %v2915 = vpop.f32.mrf.mxu0
  %v2916 = vadd.f32 0.0, %v2915
  %2917 = vmatmul.bf16.gmra.mxu0 %v2759
  %v2918 = vpop.f32.mrf.mxu0
  %v2919 = vadd.f32 0.0, %v2918
  %v2920 = vpop.f32.mrf.mxu0
  %v2921 = vadd.f32 0.0, %v2920
  %2922 = vmatmul.bf16.gmra.mxu0 %v2762
  %v2923 = vpop.f32.mrf.mxu0
  %v2924 = vadd.f32 0.0, %v2923
  %v2925 = vpop.f32.mrf.mxu0
  %v2926 = vadd.f32 0.0, %v2925
  %2927 = vmatmul.bf16.gmra.mxu0 %v2765
  %v2928 = vpop.f32.mrf.mxu0
  %v2929 = vadd.f32 0.0, %v2928
  %v2930 = vpop.f32.mrf.mxu0
  %v2931 = vadd.f32 0.0, %v2930
  %2932 = vmatmul.bf16.gmra.mxu0 %v2768
  %v2933 = vpop.f32.mrf.mxu0
  %v2934 = vadd.f32 0.0, %v2933
  %v2935 = vpop.f32.mrf.mxu0
  %v2936 = vadd.f32 0.0, %v2935
  %2937 = vmatmul.bf16.gmra.mxu0 %v2771
  %v2938 = vpop.f32.mrf.mxu0
  %v2939 = vadd.f32 0.0, %v2938
  %v2940 = vpop.f32.mrf.mxu0
  %v2941 = vadd.f32 0.0, %v2940
  %2942 = vmatmul.bf16.gmra.mxu0 %v2774
  %v2943 = vpop.f32.mrf.mxu0
  %v2944 = vadd.f32 0.0, %v2943
  %v2945 = vpop.f32.mrf.mxu0
  %v2946 = vadd.f32 0.0, %v2945
  %2947 = vdwg.mxu0
  %v2948 = vadd.f32 %v2389, %v2789
  %v2949 = vadd.f32 %v2390, %v2791
  %v2950 = vadd.f32 %v2391, %v2794
  %v2951 = vadd.f32 %v2392, %v2796
  %v2952 = vadd.f32 %v2393, %v2799
  %v2953 = vadd.f32 %v2394, %v2801
  %v2954 = vadd.f32 %v2395, %v2804
  %v2955 = vadd.f32 %v2396, %v2806
  %v2956 = vadd.f32 %v2397, %v2809
  %v2957 = vadd.f32 %v2398, %v2811
  %v2958 = vadd.f32 %v2399, %v2814
  %v2959 = vadd.f32 %v2400, %v2816
  %v2960 = vadd.f32 %v2401, %v2819
  %v2961 = vadd.f32 %v2402, %v2821
  %v2962 = vadd.f32 %v2403, %v2824
  %v2963 = vadd.f32 %v2404, %v2826
  %v2964 = vadd.f32 %v2405, %v2829
  %v2965 = vadd.f32 %v2406, %v2831
  %v2966 = vadd.f32 %v2407, %v2834
  %v2967 = vadd.f32 %v2408, %v2836
  %v2968 = vadd.f32 %v2409, %v2839
  %v2969 = vadd.f32 %v2410, %v2841
  %v2970 = vadd.f32 %v2411, %v2844
  %v2971 = vadd.f32 %v2412, %v2846
  %v2972 = vadd.f32 %v2413, %v2849
  %v2973 = vadd.f32 %v2414, %v2851
  %v2974 = vadd.f32 %v2415, %v2854
  %v2975 = vadd.f32 %v2416, %v2856
  %v2976 = vadd.f32 %v2417, %v2859
  %v2977 = vadd.f32 %v2418, %v2861
  %v2978 = vadd.f32 %v2419, %v2864
  %v2979 = vadd.f32 %v2420, %v2866
  %v2980 = vadd.f32 %v2421, %v2869
  %v2981 = vadd.f32 %v2422, %v2871
  %v2982 = vadd.f32 %v2423, %v2874
  %v2983 = vadd.f32 %v2424, %v2876
  %v2984 = vadd.f32 %v2425, %v2879
  %v2985 = vadd.f32 %v2426, %v2881
  %v2986 = vadd.f32 %v2427, %v2884
  %v2987 = vadd.f32 %v2428, %v2886
  %v2988 = vadd.f32 %v2429, %v2889
  %v2989 = vadd.f32 %v2430, %v2891
  %v2990 = vadd.f32 %v2431, %v2894
  %v2991 = vadd.f32 %v2432, %v2896
  %v2992 = vadd.f32 %v2433, %v2899
  %v2993 = vadd.f32 %v2434, %v2901
  %v2994 = vadd.f32 %v2435, %v2904
  %v2995 = vadd.f32 %v2436, %v2906
  %v2996 = vadd.f32 %v2437, %v2909
  %v2997 = vadd.f32 %v2438, %v2911
  %v2998 = vadd.f32 %v2439, %v2914
  %v2999 = vadd.f32 %v2440, %v2916
  %v3000 = vadd.f32 %v2441, %v2919
  %v3001 = vadd.f32 %v2442, %v2921
  %v3002 = vadd.f32 %v2443, %v2924
  %v3003 = vadd.f32 %v2444, %v2926
  %v3004 = vadd.f32 %v2445, %v2929
  %v3005 = vadd.f32 %v2446, %v2931
  %v3006 = vadd.f32 %v2447, %v2934
  %v3007 = vadd.f32 %v2448, %v2936
  %v3008 = vadd.f32 %v2449, %v2939
  %v3009 = vadd.f32 %v2450, %v2941
  %v3010 = vadd.f32 %v2451, %v2944
  %v3011 = vadd.f32 %v2452, %v2946
  %v3012 = vld [vmem:[%s2453] sm:$0xf]
  %v3013 = vld [vmem:[%s2453 + $0x4] sm:$0xf]
  %v3014 = vld [vmem:[%s2453 + $0x8] sm:$0x1]
  %v3015 = vld [vmem:[%s2453 + $0xc] sm:$0xf]
  %v3016 = vld [vmem:[%s2453 + $0x10] sm:$0xf]
  %v3017 = vld [vmem:[%s2453 + $0x14] sm:$0x1]
  %v3018 = vld [vmem:[%s2453 + $0x18] sm:$0xf]
  %v3019 = vld [vmem:[%s2453 + $0x1c] sm:$0xf]
  %v3020 = vld [vmem:[%s2453 + $0x20] sm:$0x1]
  %v3021 = vld [vmem:[%s2453 + $0x24] sm:$0xf]
  %v3022 = vld [vmem:[%s2453 + $0x28] sm:$0xf]
  %v3023 = vld [vmem:[%s2453 + $0x2c] sm:$0x1]
  %v3024 = vld [vmem:[%s2453 + $0x30] sm:$0xf]
  %v3025 = vld [vmem:[%s2453 + $0x34] sm:$0xf]
  %v3026 = vld [vmem:[%s2453 + $0x38] sm:$0x1]
  %v3027 = vld [vmem:[%s2453 + $0x3c] sm:$0xf]
  %v3028 = vld [vmem:[%s2453 + $0x40] sm:$0xf]
  %v3029 = vld [vmem:[%s2453 + $0x44] sm:$0x1]
  %v3030 = vld [vmem:[%s2453 + $0x48] sm:$0xf]
  %v3031 = vld [vmem:[%s2453 + $0x4c] sm:$0xf]
  %v3032 = vld [vmem:[%s2453 + $0x50] sm:$0x1]
  %v3033 = vld [vmem:[%s2453 + $0x54] sm:$0xf]
  %v3034 = vld [vmem:[%s2453 + $0x58] sm:$0xf]
  %v3035 = vld [vmem:[%s2453 + $0x5c] sm:$0x1]
  %v3036 = vld [vmem:[%s2453 + $0x60] sm:$0xf]
  %v3037 = vld [vmem:[%s2453 + $0x64] sm:$0xf]
  %v3038 = vld [vmem:[%s2453 + $0x68] sm:$0x1]
  %v3039 = vld [vmem:[%s2453 + $0x6c] sm:$0xf]
  %v3040 = vld [vmem:[%s2453 + $0x70] sm:$0xf]
  %v3041 = vld [vmem:[%s2453 + $0x74] sm:$0x1]
  %v3042 = vld [vmem:[%s2453 + $0x78] sm:$0xf]
  %v3043 = vld [vmem:[%s2453 + $0x7c] sm:$0xf]
  %v3044 = vld [vmem:[%s2453 + $0x80] sm:$0x1]
  %v3045 = vld [vmem:[%s2453 + $0x84] sm:$0xf]
  %v3046 = vld [vmem:[%s2453 + $0x88] sm:$0xf]
  %v3047 = vld [vmem:[%s2453 + $0x8c] sm:$0x1]
  %v3048 = vld [vmem:[%s2453 + $0x90] sm:$0xf]
  %v3049 = vld [vmem:[%s2453 + $0x94] sm:$0xf]
  %v3050 = vld [vmem:[%s2453 + $0x98] sm:$0x1]
  %v3051 = vld [vmem:[%s2453 + $0x9c] sm:$0xf]
  %v3052 = vld [vmem:[%s2453 + $0xa0] sm:$0xf]
  %v3053 = vld [vmem:[%s2453 + $0xa4] sm:$0x1]
  %v3054 = vld [vmem:[%s2453 + $0xa8] sm:$0xf]
  %v3055 = vld [vmem:[%s2453 + $0xac] sm:$0xf]
  %v3056 = vld [vmem:[%s2453 + $0xb0] sm:$0x1]
  %v3057 = vld [vmem:[%s2453 + $0xb4] sm:$0xf]
  %v3058 = vld [vmem:[%s2453 + $0xb8] sm:$0xf]
  %v3059 = vld [vmem:[%s2453 + $0xbc] sm:$0x1]
  %v3060 = vld [vmem:[%s2453 + $0xd8] sm:$0xf]
  %v3061 = vld [vmem:[%s2453 + $0xdc] sm:$0xf]
  %v3062 = vld [vmem:[%s2453 + $0xe0] sm:$0x1]
  %v3063 = vld [vmem:[%s2453 + $0xe4] sm:$0xf]
  %v3064 = vld [vmem:[%s2453 + $0xe8] sm:$0xf]
  %v3065 = vld [vmem:[%s2453 + $0xec] sm:$0x1]
  %v3066 = vld [vmem:[%s2453 + $0xf0] sm:$0xf]
  %v3067 = vld [vmem:[%s2453 + $0xf4] sm:$0xf]
  %v3068 = vld [vmem:[%s2453 + $0xf8] sm:$0x1]
  %v3069 = vld [vmem:[%s2453 + $0xfc] sm:$0xf]
  %v3070 = vld [vmem:[%s2453 + $0x100] sm:$0xf]
  %v3071 = vld [vmem:[%s2453 + $0x104] sm:$0x1]
  %v3072 = vld [vmem:[%s2453 + $0x108] sm:$0xf]
  %v3073 = vld [vmem:[%s2453 + $0x10c] sm:$0xf]
  %v3074 = vld [vmem:[%s2453 + $0x110] sm:$0x1]
  %v3075 = vld [vmem:[%s2453 + $0x114] sm:$0xf]
  %v3076 = vld [vmem:[%s2453 + $0x118] sm:$0xf]
  %v3077 = vld [vmem:[%s2453 + $0x11c] sm:$0x1]
  %v3078 = vld [vmem:[%s2453 + $0x120] sm:$0xf]
  %v3079 = vld [vmem:[%s2453 + $0x124] sm:$0xf]
  %v3080 = vld [vmem:[%s2453 + $0x128] sm:$0x1]
  %v3081 = vld [vmem:[%s2453 + $0x12c] sm:$0xf]
  %v3082 = vld [vmem:[%s2453 + $0x130] sm:$0xf]
  %v3083 = vld [vmem:[%s2453 + $0x134] sm:$0x1]
  %v3084 = vld [vmem:[%s2453 + $0x138] sm:$0xf]
  %v3085 = vld [vmem:[%s2453 + $0x13c] sm:$0xf]
  %v3086 = vld [vmem:[%s2453 + $0x140] sm:$0x1]
  %v3087 = vld [vmem:[%s2453 + $0x144] sm:$0xf]
  %v3088 = vld [vmem:[%s2453 + $0x148] sm:$0xf]
  %v3089 = vld [vmem:[%s2453 + $0x14c] sm:$0x1]
  %v3090 = vld [vmem:[%s2453 + $0x150] sm:$0xf]
  %v3091 = vld [vmem:[%s2453 + $0x154] sm:$0xf]
  %v3092 = vld [vmem:[%s2453 + $0x158] sm:$0x1]
  %v3093 = vld [vmem:[%s2453 + $0x15c] sm:$0xf]
  %v3094 = vld [vmem:[%s2453 + $0x160] sm:$0xf]
  %v3095 = vld [vmem:[%s2453 + $0x164] sm:$0x1]
  %v3096 = vld [vmem:[%s2453 + $0x168] sm:$0xf]
  %v3097 = vld [vmem:[%s2453 + $0x16c] sm:$0xf]
  %v3098 = vld [vmem:[%s2453 + $0x170] sm:$0x1]
  %v3099 = vld [vmem:[%s2453 + $0x174] sm:$0xf]
  %v3100 = vld [vmem:[%s2453 + $0x178] sm:$0xf]
  %v3101 = vld [vmem:[%s2453 + $0x17c] sm:$0x1]
  %v3102 = vld [vmem:[%s2453 + $0x180] sm:$0xf]
  %v3103 = vld [vmem:[%s2453 + $0x184] sm:$0xf]
  %v3104 = vld [vmem:[%s2453 + $0x188] sm:$0x1]
  %v3105 = vld [vmem:[%s2453 + $0x18c] sm:$0xf]
  %v3106 = vld [vmem:[%s2453 + $0x190] sm:$0xf]
  %v3107 = vld [vmem:[%s2453 + $0x194] sm:$0x1]
  %v3109 = vshrl.u32 %v3012, 16
  %v3111 = vrot.slane %v3109, 4
  %v3112 = vshll.u32 %v3012, 16
  %v3114 = vrot.slane %v3112, 5
  %v3115 = vor.u32 %v3111, %v3114
  %v3116 = vrot.slane %v3115, 4
  %v3118 = vshll.u32 %v3013, 16
  %v3120 = vrot.slane %v3118, 5
  %v3121 = vsel %vm135, %v3116, %v3120
  %v3122 = vshrl.u32 %v3013, 16
  %v3124 = vrot.slane %v3122, 4
  %v3125 = vor.u32 %v3124, %v3120
  %v3126 = vrot.slane %v3125, 4
  %v3128 = vshll.u32 %v3014, 16
  %v3130 = vrot.slane %v3128, 5
  %v3131 = vsel %vm135, %v3126, %v3130
  %v3133 = vshrl.u32 %v3015, 16
  %v3135 = vrot.slane %v3133, 4
  %v3136 = vshll.u32 %v3015, 16
  %v3138 = vrot.slane %v3136, 5
  %v3139 = vor.u32 %v3135, %v3138
  %v3140 = vrot.slane %v3139, 4
  %v3142 = vshll.u32 %v3016, 16
  %v3144 = vrot.slane %v3142, 5
  %v3145 = vsel %vm135, %v3140, %v3144
  %v3146 = vshrl.u32 %v3016, 16
  %v3148 = vrot.slane %v3146, 4
  %v3149 = vor.u32 %v3148, %v3144
  %v3150 = vrot.slane %v3149, 4
  %v3152 = vshll.u32 %v3017, 16
  %v3154 = vrot.slane %v3152, 5
  %v3155 = vsel %vm135, %v3150, %v3154
  %v3157 = vshrl.u32 %v3018, 16
  %v3159 = vrot.slane %v3157, 4
  %v3160 = vshll.u32 %v3018, 16
  %v3162 = vrot.slane %v3160, 5
  %v3163 = vor.u32 %v3159, %v3162
  %v3164 = vrot.slane %v3163, 4
  %v3166 = vshll.u32 %v3019, 16
  %v3168 = vrot.slane %v3166, 5
  %v3169 = vsel %vm135, %v3164, %v3168
  %v3170 = vshrl.u32 %v3019, 16
  %v3172 = vrot.slane %v3170, 4
  %v3173 = vor.u32 %v3172, %v3168
  %v3174 = vrot.slane %v3173, 4
  %v3176 = vshll.u32 %v3020, 16
  %v3178 = vrot.slane %v3176, 5
  %v3179 = vsel %vm135, %v3174, %v3178
  %v3181 = vshrl.u32 %v3021, 16
  %v3183 = vrot.slane %v3181, 4
  %v3184 = vshll.u32 %v3021, 16
  %v3186 = vrot.slane %v3184, 5
  %v3187 = vor.u32 %v3183, %v3186
  %v3188 = vrot.slane %v3187, 4
  %v3190 = vshll.u32 %v3022, 16
  %v3192 = vrot.slane %v3190, 5
  %v3193 = vsel %vm135, %v3188, %v3192
  %v3194 = vshrl.u32 %v3022, 16
  %v3196 = vrot.slane %v3194, 4
  %v3197 = vor.u32 %v3196, %v3192
  %v3198 = vrot.slane %v3197, 4
  %v3200 = vshll.u32 %v3023, 16
  %v3202 = vrot.slane %v3200, 5
  %v3203 = vsel %vm135, %v3198, %v3202
  %v3205 = vshrl.u32 %v3024, 16
  %v3207 = vrot.slane %v3205, 4
  %v3208 = vshll.u32 %v3024, 16
  %v3210 = vrot.slane %v3208, 5
  %v3211 = vor.u32 %v3207, %v3210
  %v3212 = vrot.slane %v3211, 4
  %v3214 = vshll.u32 %v3025, 16
  %v3216 = vrot.slane %v3214, 5
  %v3217 = vsel %vm135, %v3212, %v3216
  %v3218 = vshrl.u32 %v3025, 16
  %v3220 = vrot.slane %v3218, 4
  %v3221 = vor.u32 %v3220, %v3216
  %v3222 = vrot.slane %v3221, 4
  %v3224 = vshll.u32 %v3026, 16
  %v3226 = vrot.slane %v3224, 5
  %v3227 = vsel %vm135, %v3222, %v3226
  %v3229 = vshrl.u32 %v3027, 16
  %v3231 = vrot.slane %v3229, 4
  %v3232 = vshll.u32 %v3027, 16
  %v3234 = vrot.slane %v3232, 5
  %v3235 = vor.u32 %v3231, %v3234
  %v3236 = vrot.slane %v3235, 4
  %v3238 = vshll.u32 %v3028, 16
  %v3240 = vrot.slane %v3238, 5
  %v3241 = vsel %vm135, %v3236, %v3240
  %v3242 = vshrl.u32 %v3028, 16
  %v3244 = vrot.slane %v3242, 4
  %v3245 = vor.u32 %v3244, %v3240
  %v3246 = vrot.slane %v3245, 4
  %v3248 = vshll.u32 %v3029, 16
  %v3250 = vrot.slane %v3248, 5
  %v3251 = vsel %vm135, %v3246, %v3250
  %v3253 = vshrl.u32 %v3030, 16
  %v3255 = vrot.slane %v3253, 4
  %v3256 = vshll.u32 %v3030, 16
  %v3258 = vrot.slane %v3256, 5
  %v3259 = vor.u32 %v3255, %v3258
  %v3260 = vrot.slane %v3259, 4
  %v3262 = vshll.u32 %v3031, 16
  %v3264 = vrot.slane %v3262, 5
  %v3265 = vsel %vm135, %v3260, %v3264
  %v3266 = vshrl.u32 %v3031, 16
  %v3268 = vrot.slane %v3266, 4
  %v3269 = vor.u32 %v3268, %v3264
  %v3270 = vrot.slane %v3269, 4
  %v3272 = vshll.u32 %v3032, 16
  %v3274 = vrot.slane %v3272, 5
  %v3275 = vsel %vm135, %v3270, %v3274
  %v3277 = vshrl.u32 %v3033, 16
  %v3279 = vrot.slane %v3277, 4
  %v3280 = vshll.u32 %v3033, 16
  %v3282 = vrot.slane %v3280, 5
  %v3283 = vor.u32 %v3279, %v3282
  %v3284 = vrot.slane %v3283, 4
  %v3286 = vshll.u32 %v3034, 16
  %v3288 = vrot.slane %v3286, 5
  %v3289 = vsel %vm135, %v3284, %v3288
  %v3290 = vshrl.u32 %v3034, 16
  %v3292 = vrot.slane %v3290, 4
  %v3293 = vor.u32 %v3292, %v3288
  %v3294 = vrot.slane %v3293, 4
  %v3296 = vshll.u32 %v3035, 16
  %v3298 = vrot.slane %v3296, 5
  %v3299 = vsel %vm135, %v3294, %v3298
  %v3301 = vshrl.u32 %v3036, 16
  %v3303 = vrot.slane %v3301, 4
  %v3304 = vshll.u32 %v3036, 16
  %v3306 = vrot.slane %v3304, 5
  %v3307 = vor.u32 %v3303, %v3306
  %v3308 = vrot.slane %v3307, 4
  %v3310 = vshll.u32 %v3037, 16
  %v3312 = vrot.slane %v3310, 5
  %v3313 = vsel %vm135, %v3308, %v3312
  %v3314 = vshrl.u32 %v3037, 16
  %v3316 = vrot.slane %v3314, 4
  %v3317 = vor.u32 %v3316, %v3312
  %v3318 = vrot.slane %v3317, 4
  %v3320 = vshll.u32 %v3038, 16
  %v3322 = vrot.slane %v3320, 5
  %v3323 = vsel %vm135, %v3318, %v3322
  %v3325 = vshrl.u32 %v3039, 16
  %v3327 = vrot.slane %v3325, 4
  %v3328 = vshll.u32 %v3039, 16
  %v3330 = vrot.slane %v3328, 5
  %v3331 = vor.u32 %v3327, %v3330
  %v3332 = vrot.slane %v3331, 4
  %v3334 = vshll.u32 %v3040, 16
  %v3336 = vrot.slane %v3334, 5
  %v3337 = vsel %vm135, %v3332, %v3336
  %v3338 = vshrl.u32 %v3040, 16
  %v3340 = vrot.slane %v3338, 4
  %v3341 = vor.u32 %v3340, %v3336
  %v3342 = vrot.slane %v3341, 4
  %v3344 = vshll.u32 %v3041, 16
  %v3346 = vrot.slane %v3344, 5
  %v3347 = vsel %vm135, %v3342, %v3346
  %v3349 = vshrl.u32 %v3042, 16
  %v3351 = vrot.slane %v3349, 4
  %v3352 = vshll.u32 %v3042, 16
  %v3354 = vrot.slane %v3352, 5
  %v3355 = vor.u32 %v3351, %v3354
  %v3356 = vrot.slane %v3355, 4
  %v3358 = vshll.u32 %v3043, 16
  %v3360 = vrot.slane %v3358, 5
  %v3361 = vsel %vm135, %v3356, %v3360
  %v3362 = vshrl.u32 %v3043, 16
  %v3364 = vrot.slane %v3362, 4
  %v3365 = vor.u32 %v3364, %v3360
  %v3366 = vrot.slane %v3365, 4
  %v3368 = vshll.u32 %v3044, 16
  %v3370 = vrot.slane %v3368, 5
  %v3371 = vsel %vm135, %v3366, %v3370
  %v3373 = vshrl.u32 %v3045, 16
  %v3375 = vrot.slane %v3373, 4
  %v3376 = vshll.u32 %v3045, 16
  %v3378 = vrot.slane %v3376, 5
  %v3379 = vor.u32 %v3375, %v3378
  %v3380 = vrot.slane %v3379, 4
  %v3382 = vshll.u32 %v3046, 16
  %v3384 = vrot.slane %v3382, 5
  %v3385 = vsel %vm135, %v3380, %v3384
  %v3386 = vshrl.u32 %v3046, 16
  %v3388 = vrot.slane %v3386, 4
  %v3389 = vor.u32 %v3388, %v3384
  %v3390 = vrot.slane %v3389, 4
  %v3392 = vshll.u32 %v3047, 16
  %v3394 = vrot.slane %v3392, 5
  %v3395 = vsel %vm135, %v3390, %v3394
  %v3397 = vshrl.u32 %v3048, 16
  %v3399 = vrot.slane %v3397, 4
  %v3400 = vshll.u32 %v3048, 16
  %v3402 = vrot.slane %v3400, 5
  %v3403 = vor.u32 %v3399, %v3402
  %v3404 = vrot.slane %v3403, 4
  %v3406 = vshll.u32 %v3049, 16
  %v3408 = vrot.slane %v3406, 5
  %v3409 = vsel %vm135, %v3404, %v3408
  %v3410 = vshrl.u32 %v3049, 16
  %v3412 = vrot.slane %v3410, 4
  %v3413 = vor.u32 %v3412, %v3408
  %v3414 = vrot.slane %v3413, 4
  %v3416 = vshll.u32 %v3050, 16
  %v3418 = vrot.slane %v3416, 5
  %v3419 = vsel %vm135, %v3414, %v3418
  %v3421 = vshrl.u32 %v3051, 16
  %v3423 = vrot.slane %v3421, 4
  %v3424 = vshll.u32 %v3051, 16
  %v3426 = vrot.slane %v3424, 5
  %v3427 = vor.u32 %v3423, %v3426
  %v3428 = vrot.slane %v3427, 4
  %v3430 = vshll.u32 %v3052, 16
  %v3432 = vrot.slane %v3430, 5
  %v3433 = vsel %vm135, %v3428, %v3432
  %v3434 = vshrl.u32 %v3052, 16
  %v3436 = vrot.slane %v3434, 4
  %v3437 = vor.u32 %v3436, %v3432
  %v3438 = vrot.slane %v3437, 4
  %v3440 = vshll.u32 %v3053, 16
  %v3442 = vrot.slane %v3440, 5
  %v3443 = vsel %vm135, %v3438, %v3442
  %v3445 = vshrl.u32 %v3054, 16
  %v3447 = vrot.slane %v3445, 4
  %v3448 = vshll.u32 %v3054, 16
  %v3450 = vrot.slane %v3448, 5
  %v3451 = vor.u32 %v3447, %v3450
  %v3452 = vrot.slane %v3451, 4
  %v3454 = vshll.u32 %v3055, 16
  %v3456 = vrot.slane %v3454, 5
  %v3457 = vsel %vm135, %v3452, %v3456
  %v3458 = vshrl.u32 %v3055, 16
  %v3460 = vrot.slane %v3458, 4
  %v3461 = vor.u32 %v3460, %v3456
  %v3462 = vrot.slane %v3461, 4
  %v3464 = vshll.u32 %v3056, 16
  %v3466 = vrot.slane %v3464, 5
  %v3467 = vsel %vm135, %v3462, %v3466
  %v3469 = vshrl.u32 %v3057, 16
  %v3471 = vrot.slane %v3469, 4
  %v3472 = vshll.u32 %v3057, 16
  %v3474 = vrot.slane %v3472, 5
  %v3475 = vor.u32 %v3471, %v3474
  %v3476 = vrot.slane %v3475, 4
  %v3478 = vshll.u32 %v3058, 16
  %v3480 = vrot.slane %v3478, 5
  %v3481 = vsel %vm135, %v3476, %v3480
  %v3482 = vshrl.u32 %v3058, 16
  %v3484 = vrot.slane %v3482, 4
  %v3485 = vor.u32 %v3484, %v3480
  %v3486 = vrot.slane %v3485, 4
  %v3488 = vshll.u32 %v3059, 16
  %v3490 = vrot.slane %v3488, 5
  %v3491 = vsel %vm135, %v3486, %v3490
  %v3493 = vshrl.u32 %v3060, 16
  %v3495 = vrot.slane %v3493, 4
  %v3496 = vshll.u32 %v3060, 16
  %v3498 = vrot.slane %v3496, 5
  %v3499 = vor.u32 %v3495, %v3498
  %v3500 = vrot.slane %v3499, 4
  %v3502 = vshll.u32 %v3061, 16
  %v3504 = vrot.slane %v3502, 5
  %v3505 = vsel %vm135, %v3500, %v3504
  %v3506 = vshrl.u32 %v3061, 16
  %v3508 = vrot.slane %v3506, 4
  %v3509 = vor.u32 %v3508, %v3504
  %v3510 = vrot.slane %v3509, 4
  %v3512 = vshll.u32 %v3062, 16
  %v3514 = vrot.slane %v3512, 5
  %v3515 = vsel %vm135, %v3510, %v3514
  %v3517 = vshrl.u32 %v3063, 16
  %v3519 = vrot.slane %v3517, 4
  %v3520 = vshll.u32 %v3063, 16
  %v3522 = vrot.slane %v3520, 5
  %v3523 = vor.u32 %v3519, %v3522
  %v3524 = vrot.slane %v3523, 4
  %v3526 = vshll.u32 %v3064, 16
  %v3528 = vrot.slane %v3526, 5
  %v3529 = vsel %vm135, %v3524, %v3528
  %v3530 = vshrl.u32 %v3064, 16
  %v3532 = vrot.slane %v3530, 4
  %v3533 = vor.u32 %v3532, %v3528
  %v3534 = vrot.slane %v3533, 4
  %v3536 = vshll.u32 %v3065, 16
  %v3538 = vrot.slane %v3536, 5
  %v3539 = vsel %vm135, %v3534, %v3538
  %v3541 = vshrl.u32 %v3066, 16
  %v3543 = vrot.slane %v3541, 4
  %v3544 = vshll.u32 %v3066, 16
  %v3546 = vrot.slane %v3544, 5
  %v3547 = vor.u32 %v3543, %v3546
  %v3548 = vrot.slane %v3547, 4
  %v3550 = vshll.u32 %v3067, 16
  %v3552 = vrot.slane %v3550, 5
  %v3553 = vsel %vm135, %v3548, %v3552
  %v3554 = vshrl.u32 %v3067, 16
  %v3556 = vrot.slane %v3554, 4
  %v3557 = vor.u32 %v3556, %v3552
  %v3558 = vrot.slane %v3557, 4
  %v3560 = vshll.u32 %v3068, 16
  %v3562 = vrot.slane %v3560, 5
  %v3563 = vsel %vm135, %v3558, %v3562
  %v3565 = vshrl.u32 %v3069, 16
  %v3567 = vrot.slane %v3565, 4
  %v3568 = vshll.u32 %v3069, 16
  %v3570 = vrot.slane %v3568, 5
  %v3571 = vor.u32 %v3567, %v3570
  %v3572 = vrot.slane %v3571, 4
  %v3574 = vshll.u32 %v3070, 16
  %v3576 = vrot.slane %v3574, 5
  %v3577 = vsel %vm135, %v3572, %v3576
  %v3578 = vshrl.u32 %v3070, 16
  %v3580 = vrot.slane %v3578, 4
  %v3581 = vor.u32 %v3580, %v3576
  %v3582 = vrot.slane %v3581, 4
  %v3584 = vshll.u32 %v3071, 16
  %v3586 = vrot.slane %v3584, 5
  %v3587 = vsel %vm135, %v3582, %v3586
  %v3589 = vshrl.u32 %v3072, 16
  %v3591 = vrot.slane %v3589, 4
  %v3592 = vshll.u32 %v3072, 16
  %v3594 = vrot.slane %v3592, 5
  %v3595 = vor.u32 %v3591, %v3594
  %v3596 = vrot.slane %v3595, 4
  %v3598 = vshll.u32 %v3073, 16
  %v3600 = vrot.slane %v3598, 5
  %v3601 = vsel %vm135, %v3596, %v3600
  %v3602 = vshrl.u32 %v3073, 16
  %v3604 = vrot.slane %v3602, 4
  %v3605 = vor.u32 %v3604, %v3600
  %v3606 = vrot.slane %v3605, 4
  %v3608 = vshll.u32 %v3074, 16
  %v3610 = vrot.slane %v3608, 5
  %v3611 = vsel %vm135, %v3606, %v3610
  %v3613 = vshrl.u32 %v3075, 16
  %v3615 = vrot.slane %v3613, 4
  %v3616 = vshll.u32 %v3075, 16
  %v3618 = vrot.slane %v3616, 5
  %v3619 = vor.u32 %v3615, %v3618
  %v3620 = vrot.slane %v3619, 4
  %v3622 = vshll.u32 %v3076, 16
  %v3624 = vrot.slane %v3622, 5
  %v3625 = vsel %vm135, %v3620, %v3624
  %v3626 = vshrl.u32 %v3076, 16
  %v3628 = vrot.slane %v3626, 4
  %v3629 = vor.u32 %v3628, %v3624
  %v3630 = vrot.slane %v3629, 4
  %v3632 = vshll.u32 %v3077, 16
  %v3634 = vrot.slane %v3632, 5
  %v3635 = vsel %vm135, %v3630, %v3634
  %v3637 = vshrl.u32 %v3078, 16
  %v3639 = vrot.slane %v3637, 4
  %v3640 = vshll.u32 %v3078, 16
  %v3642 = vrot.slane %v3640, 5
  %v3643 = vor.u32 %v3639, %v3642
  %v3644 = vrot.slane %v3643, 4
  %v3646 = vshll.u32 %v3079, 16
  %v3648 = vrot.slane %v3646, 5
  %v3649 = vsel %vm135, %v3644, %v3648
  %v3650 = vshrl.u32 %v3079, 16
  %v3652 = vrot.slane %v3650, 4
  %v3653 = vor.u32 %v3652, %v3648
  %v3654 = vrot.slane %v3653, 4
  %v3656 = vshll.u32 %v3080, 16
  %v3658 = vrot.slane %v3656, 5
  %v3659 = vsel %vm135, %v3654, %v3658
  %v3661 = vshrl.u32 %v3081, 16
  %v3663 = vrot.slane %v3661, 4
  %v3664 = vshll.u32 %v3081, 16
  %v3666 = vrot.slane %v3664, 5
  %v3667 = vor.u32 %v3663, %v3666
  %v3668 = vrot.slane %v3667, 4
  %v3670 = vshll.u32 %v3082, 16
  %v3672 = vrot.slane %v3670, 5
  %v3673 = vsel %vm135, %v3668, %v3672
  %v3674 = vshrl.u32 %v3082, 16
  %v3676 = vrot.slane %v3674, 4
  %v3677 = vor.u32 %v3676, %v3672
  %v3678 = vrot.slane %v3677, 4
  %v3680 = vshll.u32 %v3083, 16
  %v3682 = vrot.slane %v3680, 5
  %v3683 = vsel %vm135, %v3678, %v3682
  %v3685 = vshrl.u32 %v3084, 16
  %v3687 = vrot.slane %v3685, 4
  %v3688 = vshll.u32 %v3084, 16
  %v3690 = vrot.slane %v3688, 5
  %v3691 = vor.u32 %v3687, %v3690
  %v3692 = vrot.slane %v3691, 4
  %v3694 = vshll.u32 %v3085, 16
  %v3696 = vrot.slane %v3694, 5
  %v3697 = vsel %vm135, %v3692, %v3696
  %v3698 = vshrl.u32 %v3085, 16
  %v3700 = vrot.slane %v3698, 4
  %v3701 = vor.u32 %v3700, %v3696
  %v3702 = vrot.slane %v3701, 4
  %v3704 = vshll.u32 %v3086, 16
  %v3706 = vrot.slane %v3704, 5
  %v3707 = vsel %vm135, %v3702, %v3706
  %v3709 = vshrl.u32 %v3087, 16
  %v3711 = vrot.slane %v3709, 4
  %v3712 = vshll.u32 %v3087, 16
  %v3714 = vrot.slane %v3712, 5
  %v3715 = vor.u32 %v3711, %v3714
  %v3716 = vrot.slane %v3715, 4
  %v3718 = vshll.u32 %v3088, 16
  %v3720 = vrot.slane %v3718, 5
  %v3721 = vsel %vm135, %v3716, %v3720
  %v3722 = vshrl.u32 %v3088, 16
  %v3724 = vrot.slane %v3722, 4
  %v3725 = vor.u32 %v3724, %v3720
  %v3726 = vrot.slane %v3725, 4
  %v3728 = vshll.u32 %v3089, 16
  %v3730 = vrot.slane %v3728, 5
  %v3731 = vsel %vm135, %v3726, %v3730
  %v3733 = vshrl.u32 %v3090, 16
  %v3735 = vrot.slane %v3733, 4
  %v3736 = vshll.u32 %v3090, 16
  %v3738 = vrot.slane %v3736, 5
  %v3739 = vor.u32 %v3735, %v3738
  %v3740 = vrot.slane %v3739, 4
  %v3742 = vshll.u32 %v3091, 16
  %v3744 = vrot.slane %v3742, 5
  %v3745 = vsel %vm135, %v3740, %v3744
  %v3746 = vshrl.u32 %v3091, 16
  %v3748 = vrot.slane %v3746, 4
  %v3749 = vor.u32 %v3748, %v3744
  %v3750 = vrot.slane %v3749, 4
  %v3752 = vshll.u32 %v3092, 16
  %v3754 = vrot.slane %v3752, 5
  %v3755 = vsel %vm135, %v3750, %v3754
  %v3757 = vshrl.u32 %v3093, 16
  %v3759 = vrot.slane %v3757, 4
  %v3760 = vshll.u32 %v3093, 16
  %v3762 = vrot.slane %v3760, 5
  %v3763 = vor.u32 %v3759, %v3762
  %v3764 = vrot.slane %v3763, 4
  %v3766 = vshll.u32 %v3094, 16
  %v3768 = vrot.slane %v3766, 5
  %v3769 = vsel %vm135, %v3764, %v3768
  %v3770 = vshrl.u32 %v3094, 16
  %v3772 = vrot.slane %v3770, 4
  %v3773 = vor.u32 %v3772, %v3768
  %v3774 = vrot.slane %v3773, 4
  %v3776 = vshll.u32 %v3095, 16
  %v3778 = vrot.slane %v3776, 5
  %v3779 = vsel %vm135, %v3774, %v3778
  %v3781 = vshrl.u32 %v3096, 16
  %v3783 = vrot.slane %v3781, 4
  %v3784 = vshll.u32 %v3096, 16
  %v3786 = vrot.slane %v3784, 5
  %v3787 = vor.u32 %v3783, %v3786
  %v3788 = vrot.slane %v3787, 4
  %v3790 = vshll.u32 %v3097, 16
  %v3792 = vrot.slane %v3790, 5
  %v3793 = vsel %vm135, %v3788, %v3792
  %v3794 = vshrl.u32 %v3097, 16
  %v3796 = vrot.slane %v3794, 4
  %v3797 = vor.u32 %v3796, %v3792
  %v3798 = vrot.slane %v3797, 4
  %v3800 = vshll.u32 %v3098, 16
  %v3802 = vrot.slane %v3800, 5
  %v3803 = vsel %vm135, %v3798, %v3802
  %v3805 = vshrl.u32 %v3099, 16
  %v3807 = vrot.slane %v3805, 4
  %v3808 = vshll.u32 %v3099, 16
  %v3810 = vrot.slane %v3808, 5
  %v3811 = vor.u32 %v3807, %v3810
  %v3812 = vrot.slane %v3811, 4
  %v3814 = vshll.u32 %v3100, 16
  %v3816 = vrot.slane %v3814, 5
  %v3817 = vsel %vm135, %v3812, %v3816
  %v3818 = vshrl.u32 %v3100, 16
  %v3820 = vrot.slane %v3818, 4
  %v3821 = vor.u32 %v3820, %v3816
  %v3822 = vrot.slane %v3821, 4
  %v3824 = vshll.u32 %v3101, 16
  %v3826 = vrot.slane %v3824, 5
  %v3827 = vsel %vm135, %v3822, %v3826
  %v3829 = vshrl.u32 %v3102, 16
  %v3831 = vrot.slane %v3829, 4
  %v3832 = vshll.u32 %v3102, 16
  %v3834 = vrot.slane %v3832, 5
  %v3835 = vor.u32 %v3831, %v3834
  %v3836 = vrot.slane %v3835, 4
  %v3838 = vshll.u32 %v3103, 16
  %v3840 = vrot.slane %v3838, 5
  %v3841 = vsel %vm135, %v3836, %v3840
  %v3842 = vshrl.u32 %v3103, 16
  %v3844 = vrot.slane %v3842, 4
  %v3845 = vor.u32 %v3844, %v3840
  %v3846 = vrot.slane %v3845, 4
  %v3848 = vshll.u32 %v3104, 16
  %v3850 = vrot.slane %v3848, 5
  %v3851 = vsel %vm135, %v3846, %v3850
  %v3853 = vshrl.u32 %v3105, 16
  %v3855 = vrot.slane %v3853, 4
  %v3856 = vshll.u32 %v3105, 16
  %v3858 = vrot.slane %v3856, 5
  %v3859 = vor.u32 %v3855, %v3858
  %v3860 = vrot.slane %v3859, 4
  %v3862 = vshll.u32 %v3106, 16
  %v3864 = vrot.slane %v3862, 5
  %v3865 = vsel %vm135, %v3860, %v3864
  %v3866 = vshrl.u32 %v3106, 16
  %v3868 = vrot.slane %v3866, 4
  %v3869 = vor.u32 %v3868, %v3864
  %v3870 = vrot.slane %v3869, 4
  %v3872 = vshll.u32 %v3107, 16
  %v3874 = vrot.slane %v3872, 5
  %v3875 = vsel %vm135, %v3870, %v3874
  %s3876 = scalar_lea.vmem %s1, 8
  %v3877 = vld [vmem:[%s3876] sm:$0x3]
  %v3878 = vunpack.c.l.b16 %v3121
  %v3879 = vunpack.c.l.b16 %v3131
  %v3880 = vunpack.c.l.b16 %v3145
  %v3881 = vunpack.c.l.b16 %v3155
  %v3882 = vunpack.c.l.b16 %v3169
  %v3883 = vunpack.c.l.b16 %v3179
  %v3884 = vunpack.c.l.b16 %v3193
  %v3885 = vunpack.c.l.b16 %v3203
  %v3886 = vunpack.c.l.b16 %v3217
  %v3887 = vunpack.c.l.b16 %v3227
  %v3888 = vunpack.c.l.b16 %v3241
  %v3889 = vunpack.c.l.b16 %v3251
  %v3890 = vunpack.c.l.b16 %v3265
  %v3891 = vunpack.c.l.b16 %v3275
  %v3892 = vunpack.c.l.b16 %v3289
  %v3893 = vunpack.c.l.b16 %v3299
  %v3894 = vunpack.c.l.b16 %v3313
  %v3895 = vunpack.c.l.b16 %v3323
  %v3896 = vunpack.c.l.b16 %v3337
  %v3897 = vunpack.c.l.b16 %v3347
  %v3898 = vunpack.c.l.b16 %v3361
  %v3899 = vunpack.c.l.b16 %v3371
  %v3900 = vunpack.c.l.b16 %v3385
  %v3901 = vunpack.c.l.b16 %v3395
  %v3902 = vunpack.c.l.b16 %v3409
  %v3903 = vunpack.c.l.b16 %v3419
  %v3904 = vunpack.c.l.b16 %v3433
  %v3905 = vunpack.c.l.b16 %v3443
  %v3906 = vunpack.c.l.b16 %v3457
  %v3907 = vunpack.c.l.b16 %v3467
  %v3908 = vunpack.c.l.b16 %v3481
  %v3909 = vunpack.c.l.b16 %v3491
  %v3910 = vunpack.c.l.b16 %v3505
  %v3911 = vunpack.c.l.b16 %v3515
  %v3912 = vunpack.c.l.b16 %v3529
  %v3913 = vunpack.c.l.b16 %v3539
  %v3914 = vunpack.c.l.b16 %v3553
  %v3915 = vunpack.c.l.b16 %v3563
  %v3916 = vunpack.c.l.b16 %v3577
  %v3917 = vunpack.c.l.b16 %v3587
  %v3918 = vunpack.c.l.b16 %v3601
  %v3919 = vunpack.c.l.b16 %v3611
  %v3920 = vunpack.c.l.b16 %v3625
  %v3921 = vunpack.c.l.b16 %v3635
  %v3922 = vunpack.c.l.b16 %v3649
  %v3923 = vunpack.c.l.b16 %v3659
  %v3924 = vunpack.c.l.b16 %v3673
  %v3925 = vunpack.c.l.b16 %v3683
  %v3926 = vunpack.c.l.b16 %v3697
  %v3927 = vunpack.c.l.b16 %v3707
  %v3928 = vunpack.c.l.b16 %v3721
  %v3929 = vunpack.c.l.b16 %v3731
  %v3930 = vunpack.c.l.b16 %v3745
  %v3931 = vunpack.c.l.b16 %v3755
  %v3932 = vunpack.c.l.b16 %v3769
  %v3933 = vunpack.c.l.b16 %v3779
  %v3934 = vunpack.c.l.b16 %v3793
  %v3935 = vunpack.c.l.b16 %v3803
  %v3936 = vunpack.c.l.b16 %v3817
  %v3937 = vunpack.c.l.b16 %v3827
  %v3938 = vunpack.c.l.b16 %v3841
  %v3939 = vunpack.c.l.b16 %v3851
  %v3940 = vunpack.c.l.b16 %v3865
  %v3941 = vunpack.c.l.b16 %v3875
  %v3942 = vpack.c.b16 %v3879, %v3878
  %v3943 = vpack.c.b16 %v3881, %v3880
  %v3944 = vpack.c.b16 %v3883, %v3882
  %v3945 = vpack.c.b16 %v3885, %v3884
  %v3946 = vpack.c.b16 %v3887, %v3886
  %v3947 = vpack.c.b16 %v3889, %v3888
  %v3948 = vpack.c.b16 %v3891, %v3890
  %v3949 = vpack.c.b16 %v3893, %v3892
  %v3950 = vpack.c.b16 %v3895, %v3894
  %v3951 = vpack.c.b16 %v3897, %v3896
  %v3952 = vpack.c.b16 %v3899, %v3898
  %v3953 = vpack.c.b16 %v3901, %v3900
  %v3954 = vpack.c.b16 %v3903, %v3902
  %v3955 = vpack.c.b16 %v3905, %v3904
  %v3956 = vpack.c.b16 %v3907, %v3906
  %v3957 = vpack.c.b16 %v3909, %v3908
  %v3958 = vpack.c.b16 %v3911, %v3910
  %v3959 = vpack.c.b16 %v3913, %v3912
  %v3960 = vpack.c.b16 %v3915, %v3914
  %v3961 = vpack.c.b16 %v3917, %v3916
  %v3962 = vpack.c.b16 %v3919, %v3918
  %v3963 = vpack.c.b16 %v3921, %v3920
  %v3964 = vpack.c.b16 %v3923, %v3922
  %v3965 = vpack.c.b16 %v3925, %v3924
  %v3966 = vpack.c.b16 %v3927, %v3926
  %v3967 = vpack.c.b16 %v3929, %v3928
  %v3968 = vpack.c.b16 %v3931, %v3930
  %v3969 = vpack.c.b16 %v3933, %v3932
  %v3970 = vpack.c.b16 %v3935, %v3934
  %v3971 = vpack.c.b16 %v3937, %v3936
  %v3972 = vpack.c.b16 %v3939, %v3938
  %v3973 = vpack.c.b16 %v3941, %v3940
  %v3975 = vsel %vm1002, %v3942, 0
  %v3978 = vsel %vm1002, %v3943, 0
  %v3981 = vsel %vm1002, %v3944, 0
  %v3984 = vsel %vm1002, %v3945, 0
  %v3987 = vsel %vm1002, %v3946, 0
  %v3990 = vsel %vm1002, %v3947, 0
  %v3993 = vsel %vm1002, %v3948, 0
  %v3996 = vsel %vm1002, %v3949, 0
  %v3999 = vsel %vm1002, %v3950, 0
  %v4002 = vsel %vm1002, %v3951, 0
  %v4005 = vsel %vm1002, %v3952, 0
  %v4008 = vsel %vm1002, %v3953, 0
  %v4011 = vsel %vm1002, %v3954, 0
  %v4014 = vsel %vm1002, %v3955, 0
  %v4017 = vsel %vm1002, %v3956, 0
  %v4020 = vsel %vm1002, %v3957, 0
  %v4023 = vsel %vm1002, %v3958, 0
  %v4026 = vsel %vm1002, %v3959, 0
  %v4029 = vsel %vm1002, %v3960, 0
  %v4032 = vsel %vm1002, %v3961, 0
  %v4035 = vsel %vm1002, %v3962, 0
  %v4038 = vsel %vm1002, %v3963, 0
  %v4041 = vsel %vm1002, %v3964, 0
  %v4044 = vsel %vm1002, %v3965, 0
  %v4047 = vsel %vm1002, %v3966, 0
  %v4050 = vsel %vm1002, %v3967, 0
  %v4053 = vsel %vm1002, %v3968, 0
  %v4056 = vsel %vm1002, %v3969, 0
  %v4059 = vsel %vm1002, %v3970, 0
  %v4062 = vsel %vm1002, %v3971, 0
  %v4065 = vsel %vm1002, %v3972, 0
  %v4068 = vsel %vm1002, %v3973, 0
  %v4071 = vsel %vm1099, %v3877, 0
  %4073 = vmatpush.bf16.msra.mxu0 0
  %4074 = vmatpush.bf16.msra.mxu0 0
  %4075 = vmatpush.bf16.msra.mxu0 0
  %4076 = vmatpush.bf16.msra.mxu0 0
  %4077 = vmatpush.bf16.msra.mxu0 0
  %4078 = vmatpush.bf16.msra.mxu0 0
  %4079 = vmatpush.bf16.msra.mxu0 0
  %4080 = vmatpush.bf16.msra.mxu0 %v4071
  %4081 = vmatmul.bf16.gmra.mxu0 %v3975
  %v4082 = vpop.f32.mrf.mxu0
  %v4083 = vadd.f32 0.0, %v4082
  %v4084 = vpop.f32.mrf.mxu0
  %v4085 = vadd.f32 0.0, %v4084
  %4086 = vmatmul.bf16.gmra.mxu0 %v3978
  %v4087 = vpop.f32.mrf.mxu0
  %v4088 = vadd.f32 0.0, %v4087
  %v4089 = vpop.f32.mrf.mxu0
  %v4090 = vadd.f32 0.0, %v4089
  %4091 = vmatmul.bf16.gmra.mxu0 %v3981
  %v4092 = vpop.f32.mrf.mxu0
  %v4093 = vadd.f32 0.0, %v4092
  %v4094 = vpop.f32.mrf.mxu0
  %v4095 = vadd.f32 0.0, %v4094
  %4096 = vmatmul.bf16.gmra.mxu0 %v3984
  %v4097 = vpop.f32.mrf.mxu0
  %v4098 = vadd.f32 0.0, %v4097
  %v4099 = vpop.f32.mrf.mxu0
  %v4100 = vadd.f32 0.0, %v4099
  %4101 = vmatmul.bf16.gmra.mxu0 %v3987
  %v4102 = vpop.f32.mrf.mxu0
  %v4103 = vadd.f32 0.0, %v4102
  %v4104 = vpop.f32.mrf.mxu0
  %v4105 = vadd.f32 0.0, %v4104
  %4106 = vmatmul.bf16.gmra.mxu0 %v3990
  %v4107 = vpop.f32.mrf.mxu0
  %v4108 = vadd.f32 0.0, %v4107
  %v4109 = vpop.f32.mrf.mxu0
  %v4110 = vadd.f32 0.0, %v4109
  %4111 = vmatmul.bf16.gmra.mxu0 %v3993
  %v4112 = vpop.f32.mrf.mxu0
  %v4113 = vadd.f32 0.0, %v4112
  %v4114 = vpop.f32.mrf.mxu0
  %v4115 = vadd.f32 0.0, %v4114
  %4116 = vmatmul.bf16.gmra.mxu0 %v3996
  %v4117 = vpop.f32.mrf.mxu0
  %v4118 = vadd.f32 0.0, %v4117
  %v4119 = vpop.f32.mrf.mxu0
  %v4120 = vadd.f32 0.0, %v4119
  %4121 = vmatmul.bf16.gmra.mxu0 %v3999
  %v4122 = vpop.f32.mrf.mxu0
  %v4123 = vadd.f32 0.0, %v4122
  %v4124 = vpop.f32.mrf.mxu0
  %v4125 = vadd.f32 0.0, %v4124
  %4126 = vmatmul.bf16.gmra.mxu0 %v4002
  %v4127 = vpop.f32.mrf.mxu0
  %v4128 = vadd.f32 0.0, %v4127
  %v4129 = vpop.f32.mrf.mxu0
  %v4130 = vadd.f32 0.0, %v4129
  %4131 = vmatmul.bf16.gmra.mxu0 %v4005
  %v4132 = vpop.f32.mrf.mxu0
  %v4133 = vadd.f32 0.0, %v4132
  %v4134 = vpop.f32.mrf.mxu0
  %v4135 = vadd.f32 0.0, %v4134
  %4136 = vmatmul.bf16.gmra.mxu0 %v4008
  %v4137 = vpop.f32.mrf.mxu0
  %v4138 = vadd.f32 0.0, %v4137
  %v4139 = vpop.f32.mrf.mxu0
  %v4140 = vadd.f32 0.0, %v4139
  %4141 = vmatmul.bf16.gmra.mxu0 %v4011
  %v4142 = vpop.f32.mrf.mxu0
  %v4143 = vadd.f32 0.0, %v4142
  %v4144 = vpop.f32.mrf.mxu0
  %v4145 = vadd.f32 0.0, %v4144
  %4146 = vmatmul.bf16.gmra.mxu0 %v4014
  %v4147 = vpop.f32.mrf.mxu0
  %v4148 = vadd.f32 0.0, %v4147
  %v4149 = vpop.f32.mrf.mxu0
  %v4150 = vadd.f32 0.0, %v4149
  %4151 = vmatmul.bf16.gmra.mxu0 %v4017
  %v4152 = vpop.f32.mrf.mxu0
  %v4153 = vadd.f32 0.0, %v4152
  %v4154 = vpop.f32.mrf.mxu0
  %v4155 = vadd.f32 0.0, %v4154
  %4156 = vmatmul.bf16.gmra.mxu0 %v4020
  %v4157 = vpop.f32.mrf.mxu0
  %v4158 = vadd.f32 0.0, %v4157
  %v4159 = vpop.f32.mrf.mxu0
  %v4160 = vadd.f32 0.0, %v4159
  %4161 = vmatmul.bf16.gmra.mxu0 %v4023
  %v4162 = vpop.f32.mrf.mxu0
  %v4163 = vadd.f32 0.0, %v4162
  %v4164 = vpop.f32.mrf.mxu0
  %v4165 = vadd.f32 0.0, %v4164
  %4166 = vmatmul.bf16.gmra.mxu0 %v4026
  %v4167 = vpop.f32.mrf.mxu0
  %v4168 = vadd.f32 0.0, %v4167
  %v4169 = vpop.f32.mrf.mxu0
  %v4170 = vadd.f32 0.0, %v4169
  %4171 = vmatmul.bf16.gmra.mxu0 %v4029
  %v4172 = vpop.f32.mrf.mxu0
  %v4173 = vadd.f32 0.0, %v4172
  %v4174 = vpop.f32.mrf.mxu0
  %v4175 = vadd.f32 0.0, %v4174
  %4176 = vmatmul.bf16.gmra.mxu0 %v4032
  %v4177 = vpop.f32.mrf.mxu0
  %v4178 = vadd.f32 0.0, %v4177
  %v4179 = vpop.f32.mrf.mxu0
  %v4180 = vadd.f32 0.0, %v4179
  %4181 = vmatmul.bf16.gmra.mxu0 %v4035
  %v4182 = vpop.f32.mrf.mxu0
  %v4183 = vadd.f32 0.0, %v4182
  %v4184 = vpop.f32.mrf.mxu0
  %v4185 = vadd.f32 0.0, %v4184
  %4186 = vmatmul.bf16.gmra.mxu0 %v4038
  %v4187 = vpop.f32.mrf.mxu0
  %v4188 = vadd.f32 0.0, %v4187
  %v4189 = vpop.f32.mrf.mxu0
  %v4190 = vadd.f32 0.0, %v4189
  %4191 = vmatmul.bf16.gmra.mxu0 %v4041
  %v4192 = vpop.f32.mrf.mxu0
  %v4193 = vadd.f32 0.0, %v4192
  %v4194 = vpop.f32.mrf.mxu0
  %v4195 = vadd.f32 0.0, %v4194
  %4196 = vmatmul.bf16.gmra.mxu0 %v4044
  %v4197 = vpop.f32.mrf.mxu0
  %v4198 = vadd.f32 0.0, %v4197
  %v4199 = vpop.f32.mrf.mxu0
  %v4200 = vadd.f32 0.0, %v4199
  %4201 = vmatmul.bf16.gmra.mxu0 %v4047
  %v4202 = vpop.f32.mrf.mxu0
  %v4203 = vadd.f32 0.0, %v4202
  %v4204 = vpop.f32.mrf.mxu0
  %v4205 = vadd.f32 0.0, %v4204
  %4206 = vmatmul.bf16.gmra.mxu0 %v4050
  %v4207 = vpop.f32.mrf.mxu0
  %v4208 = vadd.f32 0.0, %v4207
  %v4209 = vpop.f32.mrf.mxu0
  %v4210 = vadd.f32 0.0, %v4209
  %4211 = vmatmul.bf16.gmra.mxu0 %v4053
  %v4212 = vpop.f32.mrf.mxu0
  %v4213 = vadd.f32 0.0, %v4212
  %v4214 = vpop.f32.mrf.mxu0
  %v4215 = vadd.f32 0.0, %v4214
  %4216 = vmatmul.bf16.gmra.mxu0 %v4056
  %v4217 = vpop.f32.mrf.mxu0
  %v4218 = vadd.f32 0.0, %v4217
  %v4219 = vpop.f32.mrf.mxu0
  %v4220 = vadd.f32 0.0, %v4219
  %4221 = vmatmul.bf16.gmra.mxu0 %v4059
  %v4222 = vpop.f32.mrf.mxu0
  %v4223 = vadd.f32 0.0, %v4222
  %v4224 = vpop.f32.mrf.mxu0
  %v4225 = vadd.f32 0.0, %v4224
  %4226 = vmatmul.bf16.gmra.mxu0 %v4062
  %v4227 = vpop.f32.mrf.mxu0
  %v4228 = vadd.f32 0.0, %v4227
  %v4229 = vpop.f32.mrf.mxu0
  %v4230 = vadd.f32 0.0, %v4229
  %4231 = vmatmul.bf16.gmra.mxu0 %v4065
  %v4232 = vpop.f32.mrf.mxu0
  %v4233 = vadd.f32 0.0, %v4232
  %v4234 = vpop.f32.mrf.mxu0
  %v4235 = vadd.f32 0.0, %v4234
  %4236 = vmatmul.bf16.gmra.mxu0 %v4068
  %v4237 = vpop.f32.mrf.mxu0
  %v4238 = vadd.f32 0.0, %v4237
  %v4239 = vpop.f32.mrf.mxu0
  %v4240 = vadd.f32 0.0, %v4239
  %4241 = vdwg.mxu0
  %v4242 = vadd.f32 %v2948, %v4083
  %v4243 = vadd.f32 %v2949, %v4085
  %v4244 = vadd.f32 %v2950, %v4088
  %v4245 = vadd.f32 %v2951, %v4090
  %v4246 = vadd.f32 %v2952, %v4093
  %v4247 = vadd.f32 %v2953, %v4095
  %v4248 = vadd.f32 %v2954, %v4098
  %v4249 = vadd.f32 %v2955, %v4100
  %v4250 = vadd.f32 %v2956, %v4103
  %v4251 = vadd.f32 %v2957, %v4105
  %v4252 = vadd.f32 %v2958, %v4108
  %v4253 = vadd.f32 %v2959, %v4110
  %v4254 = vadd.f32 %v2960, %v4113
  %v4255 = vadd.f32 %v2961, %v4115
  %v4256 = vadd.f32 %v2962, %v4118
  %v4257 = vadd.f32 %v2963, %v4120
  %v4258 = vadd.f32 %v2964, %v4123
  %v4259 = vadd.f32 %v2965, %v4125
  %v4260 = vadd.f32 %v2966, %v4128
  %v4261 = vadd.f32 %v2967, %v4130
  %v4262 = vadd.f32 %v2968, %v4133
  %v4263 = vadd.f32 %v2969, %v4135
  %v4264 = vadd.f32 %v2970, %v4138
  %v4265 = vadd.f32 %v2971, %v4140
  %v4266 = vadd.f32 %v2972, %v4143
  %v4267 = vadd.f32 %v2973, %v4145
  %v4268 = vadd.f32 %v2974, %v4148
  %v4269 = vadd.f32 %v2975, %v4150
  %v4270 = vadd.f32 %v2976, %v4153
  %v4271 = vadd.f32 %v2977, %v4155
  %v4272 = vadd.f32 %v2978, %v4158
  %v4273 = vadd.f32 %v2979, %v4160
  %v4274 = vadd.f32 %v2980, %v4163
  %v4275 = vadd.f32 %v2981, %v4165
  %v4276 = vadd.f32 %v2982, %v4168
  %v4277 = vadd.f32 %v2983, %v4170
  %v4278 = vadd.f32 %v2984, %v4173
  %v4279 = vadd.f32 %v2985, %v4175
  %v4280 = vadd.f32 %v2986, %v4178
  %v4281 = vadd.f32 %v2987, %v4180
  %v4282 = vadd.f32 %v2988, %v4183
  %v4283 = vadd.f32 %v2989, %v4185
  %v4284 = vadd.f32 %v2990, %v4188
  %v4285 = vadd.f32 %v2991, %v4190
  %v4286 = vadd.f32 %v2992, %v4193
  %v4287 = vadd.f32 %v2993, %v4195
  %v4288 = vadd.f32 %v2994, %v4198
  %v4289 = vadd.f32 %v2995, %v4200
  %v4290 = vadd.f32 %v2996, %v4203
  %v4291 = vadd.f32 %v2997, %v4205
  %v4292 = vadd.f32 %v2998, %v4208
  %v4293 = vadd.f32 %v2999, %v4210
  %v4294 = vadd.f32 %v3000, %v4213
  %v4295 = vadd.f32 %v3001, %v4215
  %v4296 = vadd.f32 %v3002, %v4218
  %v4297 = vadd.f32 %v3003, %v4220
  %v4298 = vadd.f32 %v3004, %v4223
  %v4299 = vadd.f32 %v3005, %v4225
  %v4300 = vadd.f32 %v3006, %v4228
  %v4301 = vadd.f32 %v3007, %v4230
  %v4302 = vadd.f32 %v3008, %v4233
  %v4303 = vadd.f32 %v3009, %v4235
  %v4304 = vadd.f32 %v3010, %v4238
  %v4305 = vadd.f32 %v3011, %v4240
  %v4306 = vld [vmem:[%s2453] sm:$0xe]
  %v4307 = vld [vmem:[%s2453 + $0xc] sm:$0xe]
  %v4308 = vld [vmem:[%s2453 + $0x18] sm:$0xe]
  %v4309 = vld [vmem:[%s2453 + $0x24] sm:$0xe]
  %v4310 = vld [vmem:[%s2453 + $0x30] sm:$0xe]
  %v4311 = vld [vmem:[%s2453 + $0x3c] sm:$0xe]
  %v4312 = vld [vmem:[%s2453 + $0x48] sm:$0xe]
  %v4313 = vld [vmem:[%s2453 + $0x54] sm:$0xe]
  %v4314 = vld [vmem:[%s2453 + $0x60] sm:$0xe]
  %v4315 = vld [vmem:[%s2453 + $0x6c] sm:$0xe]
  %v4316 = vld [vmem:[%s2453 + $0x78] sm:$0xe]
  %v4317 = vld [vmem:[%s2453 + $0x84] sm:$0xe]
  %v4318 = vld [vmem:[%s2453 + $0x90] sm:$0xe]
  %v4319 = vld [vmem:[%s2453 + $0x9c] sm:$0xe]
  %v4320 = vld [vmem:[%s2453 + $0xa8] sm:$0xe]
  %v4321 = vld [vmem:[%s2453 + $0xb4] sm:$0xe]
  %v4322 = vld [vmem:[%s2453 + $0xd8] sm:$0xe]
  %v4323 = vld [vmem:[%s2453 + $0xe4] sm:$0xe]
  %v4324 = vld [vmem:[%s2453 + $0xf0] sm:$0xe]
  %v4325 = vld [vmem:[%s2453 + $0xfc] sm:$0xe]
  %v4326 = vld [vmem:[%s2453 + $0x108] sm:$0xe]
  %v4327 = vld [vmem:[%s2453 + $0x114] sm:$0xe]
  %v4328 = vld [vmem:[%s2453 + $0x120] sm:$0xe]
  %v4329 = vld [vmem:[%s2453 + $0x12c] sm:$0xe]
  %v4330 = vld [vmem:[%s2453 + $0x138] sm:$0xe]
  %v4331 = vld [vmem:[%s2453 + $0x144] sm:$0xe]
  %v4332 = vld [vmem:[%s2453 + $0x150] sm:$0xe]
  %v4333 = vld [vmem:[%s2453 + $0x15c] sm:$0xe]
  %v4334 = vld [vmem:[%s2453 + $0x168] sm:$0xe]
  %v4335 = vld [vmem:[%s2453 + $0x174] sm:$0xe]
  %v4336 = vld [vmem:[%s2453 + $0x180] sm:$0xe]
  %v4337 = vld [vmem:[%s2453 + $0x18c] sm:$0xe]
  %v4434 = vrot.slane %v4306, 5
  %v4435 = vrot.slane %v4434, 4
  %v4436 = vrot.slane %v3013, 5
  %v4437 = vsel %vm1798, %v4435, %v4436
  %v4438 = vrot.slane %v4436, 4
  %v4439 = vrot.slane %v3014, 5
  %v4440 = vsel %vm1798, %v4438, %v4439
  %v4441 = vrot.slane %v4307, 5
  %v4442 = vrot.slane %v4441, 4
  %v4443 = vrot.slane %v3016, 5
  %v4444 = vsel %vm1798, %v4442, %v4443
  %v4445 = vrot.slane %v4443, 4
  %v4446 = vrot.slane %v3017, 5
  %v4447 = vsel %vm1798, %v4445, %v4446
  %v4448 = vrot.slane %v4308, 5
  %v4449 = vrot.slane %v4448, 4
  %v4450 = vrot.slane %v3019, 5
  %v4451 = vsel %vm1798, %v4449, %v4450
  %v4452 = vrot.slane %v4450, 4
  %v4453 = vrot.slane %v3020, 5
  %v4454 = vsel %vm1798, %v4452, %v4453
  %v4455 = vrot.slane %v4309, 5
  %v4456 = vrot.slane %v4455, 4
  %v4457 = vrot.slane %v3022, 5
  %v4458 = vsel %vm1798, %v4456, %v4457
  %v4459 = vrot.slane %v4457, 4
  %v4460 = vrot.slane %v3023, 5
  %v4461 = vsel %vm1798, %v4459, %v4460
  %v4462 = vrot.slane %v4310, 5
  %v4463 = vrot.slane %v4462, 4
  %v4464 = vrot.slane %v3025, 5
  %v4465 = vsel %vm1798, %v4463, %v4464
  %v4466 = vrot.slane %v4464, 4
  %v4467 = vrot.slane %v3026, 5
  %v4468 = vsel %vm1798, %v4466, %v4467
  %v4469 = vrot.slane %v4311, 5
  %v4470 = vrot.slane %v4469, 4
  %v4471 = vrot.slane %v3028, 5
  %v4472 = vsel %vm1798, %v4470, %v4471
  %v4473 = vrot.slane %v4471, 4
  %v4474 = vrot.slane %v3029, 5
  %v4475 = vsel %vm1798, %v4473, %v4474
  %v4476 = vrot.slane %v4312, 5
  %v4477 = vrot.slane %v4476, 4
  %v4478 = vrot.slane %v3031, 5
  %v4479 = vsel %vm1798, %v4477, %v4478
  %v4480 = vrot.slane %v4478, 4
  %v4481 = vrot.slane %v3032, 5
  %v4482 = vsel %vm1798, %v4480, %v4481
  %v4483 = vrot.slane %v4313, 5
  %v4484 = vrot.slane %v4483, 4
  %v4485 = vrot.slane %v3034, 5
  %v4486 = vsel %vm1798, %v4484, %v4485
  %v4487 = vrot.slane %v4485, 4
  %v4488 = vrot.slane %v3035, 5
  %v4489 = vsel %vm1798, %v4487, %v4488
  %v4490 = vrot.slane %v4314, 5
  %v4491 = vrot.slane %v4490, 4
  %v4492 = vrot.slane %v3037, 5
  %v4493 = vsel %vm1798, %v4491, %v4492
  %v4494 = vrot.slane %v4492, 4
  %v4495 = vrot.slane %v3038, 5
  %v4496 = vsel %vm1798, %v4494, %v4495
  %v4497 = vrot.slane %v4315, 5
  %v4498 = vrot.slane %v4497, 4
  %v4499 = vrot.slane %v3040, 5
  %v4500 = vsel %vm1798, %v4498, %v4499
  %v4501 = vrot.slane %v4499, 4
  %v4502 = vrot.slane %v3041, 5
  %v4503 = vsel %vm1798, %v4501, %v4502
  %v4504 = vrot.slane %v4316, 5
  %v4505 = vrot.slane %v4504, 4
  %v4506 = vrot.slane %v3043, 5
  %v4507 = vsel %vm1798, %v4505, %v4506
  %v4508 = vrot.slane %v4506, 4
  %v4509 = vrot.slane %v3044, 5
  %v4510 = vsel %vm1798, %v4508, %v4509
  %v4511 = vrot.slane %v4317, 5
  %v4512 = vrot.slane %v4511, 4
  %v4513 = vrot.slane %v3046, 5
  %v4514 = vsel %vm1798, %v4512, %v4513
  %v4515 = vrot.slane %v4513, 4
  %v4516 = vrot.slane %v3047, 5
  %v4517 = vsel %vm1798, %v4515, %v4516
  %v4518 = vrot.slane %v4318, 5
  %v4519 = vrot.slane %v4518, 4
  %v4520 = vrot.slane %v3049, 5
  %v4521 = vsel %vm1798, %v4519, %v4520
  %v4522 = vrot.slane %v4520, 4
  %v4523 = vrot.slane %v3050, 5
  %v4524 = vsel %vm1798, %v4522, %v4523
  %v4525 = vrot.slane %v4319, 5
  %v4526 = vrot.slane %v4525, 4
  %v4527 = vrot.slane %v3052, 5
  %v4528 = vsel %vm1798, %v4526, %v4527
  %v4529 = vrot.slane %v4527, 4
  %v4530 = vrot.slane %v3053, 5
  %v4531 = vsel %vm1798, %v4529, %v4530
  %v4532 = vrot.slane %v4320, 5
  %v4533 = vrot.slane %v4532, 4
  %v4534 = vrot.slane %v3055, 5
  %v4535 = vsel %vm1798, %v4533, %v4534
  %v4536 = vrot.slane %v4534, 4
  %v4537 = vrot.slane %v3056, 5
  %v4538 = vsel %vm1798, %v4536, %v4537
  %v4539 = vrot.slane %v4321, 5
  %v4540 = vrot.slane %v4539, 4
  %v4541 = vrot.slane %v3058, 5
  %v4542 = vsel %vm1798, %v4540, %v4541
  %v4543 = vrot.slane %v4541, 4
  %v4544 = vrot.slane %v3059, 5
  %v4545 = vsel %vm1798, %v4543, %v4544
  %v4546 = vrot.slane %v4322, 5
  %v4547 = vrot.slane %v4546, 4
  %v4548 = vrot.slane %v3061, 5
  %v4549 = vsel %vm1798, %v4547, %v4548
  %v4550 = vrot.slane %v4548, 4
  %v4551 = vrot.slane %v3062, 5
  %v4552 = vsel %vm1798, %v4550, %v4551
  %v4553 = vrot.slane %v4323, 5
  %v4554 = vrot.slane %v4553, 4
  %v4555 = vrot.slane %v3064, 5
  %v4556 = vsel %vm1798, %v4554, %v4555
  %v4557 = vrot.slane %v4555, 4
  %v4558 = vrot.slane %v3065, 5
  %v4559 = vsel %vm1798, %v4557, %v4558
  %v4560 = vrot.slane %v4324, 5
  %v4561 = vrot.slane %v4560, 4
  %v4562 = vrot.slane %v3067, 5
  %v4563 = vsel %vm1798, %v4561, %v4562
  %v4564 = vrot.slane %v4562, 4
  %v4565 = vrot.slane %v3068, 5
  %v4566 = vsel %vm1798, %v4564, %v4565
  %v4567 = vrot.slane %v4325, 5
  %v4568 = vrot.slane %v4567, 4
  %v4569 = vrot.slane %v3070, 5
  %v4570 = vsel %vm1798, %v4568, %v4569
  %v4571 = vrot.slane %v4569, 4
  %v4572 = vrot.slane %v3071, 5
  %v4573 = vsel %vm1798, %v4571, %v4572
  %v4574 = vrot.slane %v4326, 5
  %v4575 = vrot.slane %v4574, 4
  %v4576 = vrot.slane %v3073, 5
  %v4577 = vsel %vm1798, %v4575, %v4576
  %v4578 = vrot.slane %v4576, 4
  %v4579 = vrot.slane %v3074, 5
  %v4580 = vsel %vm1798, %v4578, %v4579
  %v4581 = vrot.slane %v4327, 5
  %v4582 = vrot.slane %v4581, 4
  %v4583 = vrot.slane %v3076, 5
  %v4584 = vsel %vm1798, %v4582, %v4583
  %v4585 = vrot.slane %v4583, 4
  %v4586 = vrot.slane %v3077, 5
  %v4587 = vsel %vm1798, %v4585, %v4586
  %v4588 = vrot.slane %v4328, 5
  %v4589 = vrot.slane %v4588, 4
  %v4590 = vrot.slane %v3079, 5
  %v4591 = vsel %vm1798, %v4589, %v4590
  %v4592 = vrot.slane %v4590, 4
  %v4593 = vrot.slane %v3080, 5
  %v4594 = vsel %vm1798, %v4592, %v4593
  %v4595 = vrot.slane %v4329, 5
  %v4596 = vrot.slane %v4595, 4
  %v4597 = vrot.slane %v3082, 5
  %v4598 = vsel %vm1798, %v4596, %v4597
  %v4599 = vrot.slane %v4597, 4
  %v4600 = vrot.slane %v3083, 5
  %v4601 = vsel %vm1798, %v4599, %v4600
  %v4602 = vrot.slane %v4330, 5
  %v4603 = vrot.slane %v4602, 4
  %v4604 = vrot.slane %v3085, 5
  %v4605 = vsel %vm1798, %v4603, %v4604
  %v4606 = vrot.slane %v4604, 4
  %v4607 = vrot.slane %v3086, 5
  %v4608 = vsel %vm1798, %v4606, %v4607
  %v4609 = vrot.slane %v4331, 5
  %v4610 = vrot.slane %v4609, 4
  %v4611 = vrot.slane %v3088, 5
  %v4612 = vsel %vm1798, %v4610, %v4611
  %v4613 = vrot.slane %v4611, 4
  %v4614 = vrot.slane %v3089, 5
  %v4615 = vsel %vm1798, %v4613, %v4614
  %v4616 = vrot.slane %v4332, 5
  %v4617 = vrot.slane %v4616, 4
  %v4618 = vrot.slane %v3091, 5
  %v4619 = vsel %vm1798, %v4617, %v4618
  %v4620 = vrot.slane %v4618, 4
  %v4621 = vrot.slane %v3092, 5
  %v4622 = vsel %vm1798, %v4620, %v4621
  %v4623 = vrot.slane %v4333, 5
  %v4624 = vrot.slane %v4623, 4
  %v4625 = vrot.slane %v3094, 5
  %v4626 = vsel %vm1798, %v4624, %v4625
  %v4627 = vrot.slane %v4625, 4
  %v4628 = vrot.slane %v3095, 5
  %v4629 = vsel %vm1798, %v4627, %v4628
  %v4630 = vrot.slane %v4334, 5
  %v4631 = vrot.slane %v4630, 4
  %v4632 = vrot.slane %v3097, 5
  %v4633 = vsel %vm1798, %v4631, %v4632
  %v4634 = vrot.slane %v4632, 4
  %v4635 = vrot.slane %v3098, 5
  %v4636 = vsel %vm1798, %v4634, %v4635
  %v4637 = vrot.slane %v4335, 5
  %v4638 = vrot.slane %v4637, 4
  %v4639 = vrot.slane %v3100, 5
  %v4640 = vsel %vm1798, %v4638, %v4639
  %v4641 = vrot.slane %v4639, 4
  %v4642 = vrot.slane %v3101, 5
  %v4643 = vsel %vm1798, %v4641, %v4642
  %v4644 = vrot.slane %v4336, 5
  %v4645 = vrot.slane %v4644, 4
  %v4646 = vrot.slane %v3103, 5
  %v4647 = vsel %vm1798, %v4645, %v4646
  %v4648 = vrot.slane %v4646, 4
  %v4649 = vrot.slane %v3104, 5
  %v4650 = vsel %vm1798, %v4648, %v4649
  %v4651 = vrot.slane %v4337, 5
  %v4652 = vrot.slane %v4651, 4
  %v4653 = vrot.slane %v3106, 5
  %v4654 = vsel %vm1798, %v4652, %v4653
  %v4655 = vrot.slane %v4653, 4
  %v4656 = vrot.slane %v3107, 5
  %v4657 = vsel %vm1798, %v4655, %v4656
  %s4658 = scalar_lea.vmem %s1, 10
  %v4659 = vld [vmem:[%s4658] sm:$0x3]
  %v4660 = vunpack.c.l.b16 %v4437
  %v4661 = vunpack.c.l.b16 %v4440
  %v4662 = vunpack.c.l.b16 %v4444
  %v4663 = vunpack.c.l.b16 %v4447
  %v4664 = vunpack.c.l.b16 %v4451
  %v4665 = vunpack.c.l.b16 %v4454
  %v4666 = vunpack.c.l.b16 %v4458
  %v4667 = vunpack.c.l.b16 %v4461
  %v4668 = vunpack.c.l.b16 %v4465
  %v4669 = vunpack.c.l.b16 %v4468
  %v4670 = vunpack.c.l.b16 %v4472
  %v4671 = vunpack.c.l.b16 %v4475
  %v4672 = vunpack.c.l.b16 %v4479
  %v4673 = vunpack.c.l.b16 %v4482
  %v4674 = vunpack.c.l.b16 %v4486
  %v4675 = vunpack.c.l.b16 %v4489
  %v4676 = vunpack.c.l.b16 %v4493
  %v4677 = vunpack.c.l.b16 %v4496
  %v4678 = vunpack.c.l.b16 %v4500
  %v4679 = vunpack.c.l.b16 %v4503
  %v4680 = vunpack.c.l.b16 %v4507
  %v4681 = vunpack.c.l.b16 %v4510
  %v4682 = vunpack.c.l.b16 %v4514
  %v4683 = vunpack.c.l.b16 %v4517
  %v4684 = vunpack.c.l.b16 %v4521
  %v4685 = vunpack.c.l.b16 %v4524
  %v4686 = vunpack.c.l.b16 %v4528
  %v4687 = vunpack.c.l.b16 %v4531
  %v4688 = vunpack.c.l.b16 %v4535
  %v4689 = vunpack.c.l.b16 %v4538
  %v4690 = vunpack.c.l.b16 %v4542
  %v4691 = vunpack.c.l.b16 %v4545
  %v4692 = vunpack.c.l.b16 %v4549
  %v4693 = vunpack.c.l.b16 %v4552
  %v4694 = vunpack.c.l.b16 %v4556
  %v4695 = vunpack.c.l.b16 %v4559
  %v4696 = vunpack.c.l.b16 %v4563
  %v4697 = vunpack.c.l.b16 %v4566
  %v4698 = vunpack.c.l.b16 %v4570
  %v4699 = vunpack.c.l.b16 %v4573
  %v4700 = vunpack.c.l.b16 %v4577
  %v4701 = vunpack.c.l.b16 %v4580
  %v4702 = vunpack.c.l.b16 %v4584
  %v4703 = vunpack.c.l.b16 %v4587
  %v4704 = vunpack.c.l.b16 %v4591
  %v4705 = vunpack.c.l.b16 %v4594
  %v4706 = vunpack.c.l.b16 %v4598
  %v4707 = vunpack.c.l.b16 %v4601
  %v4708 = vunpack.c.l.b16 %v4605
  %v4709 = vunpack.c.l.b16 %v4608
  %v4710 = vunpack.c.l.b16 %v4612
  %v4711 = vunpack.c.l.b16 %v4615
  %v4712 = vunpack.c.l.b16 %v4619
  %v4713 = vunpack.c.l.b16 %v4622
  %v4714 = vunpack.c.l.b16 %v4626
  %v4715 = vunpack.c.l.b16 %v4629
  %v4716 = vunpack.c.l.b16 %v4633
  %v4717 = vunpack.c.l.b16 %v4636
  %v4718 = vunpack.c.l.b16 %v4640
  %v4719 = vunpack.c.l.b16 %v4643
  %v4720 = vunpack.c.l.b16 %v4647
  %v4721 = vunpack.c.l.b16 %v4650
  %v4722 = vunpack.c.l.b16 %v4654
  %v4723 = vunpack.c.l.b16 %v4657
  %v4724 = vpack.c.b16 %v4661, %v4660
  %v4725 = vpack.c.b16 %v4663, %v4662
  %v4726 = vpack.c.b16 %v4665, %v4664
  %v4727 = vpack.c.b16 %v4667, %v4666
  %v4728 = vpack.c.b16 %v4669, %v4668
  %v4729 = vpack.c.b16 %v4671, %v4670
  %v4730 = vpack.c.b16 %v4673, %v4672
  %v4731 = vpack.c.b16 %v4675, %v4674
  %v4732 = vpack.c.b16 %v4677, %v4676
  %v4733 = vpack.c.b16 %v4679, %v4678
  %v4734 = vpack.c.b16 %v4681, %v4680
  %v4735 = vpack.c.b16 %v4683, %v4682
  %v4736 = vpack.c.b16 %v4685, %v4684
  %v4737 = vpack.c.b16 %v4687, %v4686
  %v4738 = vpack.c.b16 %v4689, %v4688
  %v4739 = vpack.c.b16 %v4691, %v4690
  %v4740 = vpack.c.b16 %v4693, %v4692
  %v4741 = vpack.c.b16 %v4695, %v4694
  %v4742 = vpack.c.b16 %v4697, %v4696
  %v4743 = vpack.c.b16 %v4699, %v4698
  %v4744 = vpack.c.b16 %v4701, %v4700
  %v4745 = vpack.c.b16 %v4703, %v4702
  %v4746 = vpack.c.b16 %v4705, %v4704
  %v4747 = vpack.c.b16 %v4707, %v4706
  %v4748 = vpack.c.b16 %v4709, %v4708
  %v4749 = vpack.c.b16 %v4711, %v4710
  %v4750 = vpack.c.b16 %v4713, %v4712
  %v4751 = vpack.c.b16 %v4715, %v4714
  %v4752 = vpack.c.b16 %v4717, %v4716
  %v4753 = vpack.c.b16 %v4719, %v4718
  %v4754 = vpack.c.b16 %v4721, %v4720
  %v4755 = vpack.c.b16 %v4723, %v4722
  %v4757 = vsel %vm1002, %v4724, 0
  %v4760 = vsel %vm1002, %v4725, 0
  %v4763 = vsel %vm1002, %v4726, 0
  %v4766 = vsel %vm1002, %v4727, 0
  %v4769 = vsel %vm1002, %v4728, 0
  %v4772 = vsel %vm1002, %v4729, 0
  %v4775 = vsel %vm1002, %v4730, 0
  %v4778 = vsel %vm1002, %v4731, 0
  %v4781 = vsel %vm1002, %v4732, 0
  %v4784 = vsel %vm1002, %v4733, 0
  %v4787 = vsel %vm1002, %v4734, 0
  %v4790 = vsel %vm1002, %v4735, 0
  %v4793 = vsel %vm1002, %v4736, 0
  %v4796 = vsel %vm1002, %v4737, 0
  %v4799 = vsel %vm1002, %v4738, 0
  %v4802 = vsel %vm1002, %v4739, 0
  %v4805 = vsel %vm1002, %v4740, 0
  %v4808 = vsel %vm1002, %v4741, 0
  %v4811 = vsel %vm1002, %v4742, 0
  %v4814 = vsel %vm1002, %v4743, 0
  %v4817 = vsel %vm1002, %v4744, 0
  %v4820 = vsel %vm1002, %v4745, 0
  %v4823 = vsel %vm1002, %v4746, 0
  %v4826 = vsel %vm1002, %v4747, 0
  %v4829 = vsel %vm1002, %v4748, 0
  %v4832 = vsel %vm1002, %v4749, 0
  %v4835 = vsel %vm1002, %v4750, 0
  %v4838 = vsel %vm1002, %v4751, 0
  %v4841 = vsel %vm1002, %v4752, 0
  %v4844 = vsel %vm1002, %v4753, 0
  %v4847 = vsel %vm1002, %v4754, 0
  %v4850 = vsel %vm1002, %v4755, 0
  %v4853 = vsel %vm1099, %v4659, 0
  %4855 = vmatpush.bf16.msra.mxu0 0
  %4856 = vmatpush.bf16.msra.mxu0 0
  %4857 = vmatpush.bf16.msra.mxu0 0
  %4858 = vmatpush.bf16.msra.mxu0 0
  %4859 = vmatpush.bf16.msra.mxu0 0
  %4860 = vmatpush.bf16.msra.mxu0 0
  %4861 = vmatpush.bf16.msra.mxu0 0
  %4862 = vmatpush.bf16.msra.mxu0 %v4853
  %4863 = vmatmul.bf16.gmra.mxu0 %v4757
  %v4864 = vpop.f32.mrf.mxu0
  %v4865 = vadd.f32 0.0, %v4864
  %v4866 = vpop.f32.mrf.mxu0
  %v4867 = vadd.f32 0.0, %v4866
  %4868 = vmatmul.bf16.gmra.mxu0 %v4760
  %v4869 = vpop.f32.mrf.mxu0
  %v4870 = vadd.f32 0.0, %v4869
  %v4871 = vpop.f32.mrf.mxu0
  %v4872 = vadd.f32 0.0, %v4871
  %4873 = vmatmul.bf16.gmra.mxu0 %v4763
  %v4874 = vpop.f32.mrf.mxu0
  %v4875 = vadd.f32 0.0, %v4874
  %v4876 = vpop.f32.mrf.mxu0
  %v4877 = vadd.f32 0.0, %v4876
  %4878 = vmatmul.bf16.gmra.mxu0 %v4766
  %v4879 = vpop.f32.mrf.mxu0
  %v4880 = vadd.f32 0.0, %v4879
  %v4881 = vpop.f32.mrf.mxu0
  %v4882 = vadd.f32 0.0, %v4881
  %4883 = vmatmul.bf16.gmra.mxu0 %v4769
  %v4884 = vpop.f32.mrf.mxu0
  %v4885 = vadd.f32 0.0, %v4884
  %v4886 = vpop.f32.mrf.mxu0
  %v4887 = vadd.f32 0.0, %v4886
  %4888 = vmatmul.bf16.gmra.mxu0 %v4772
  %v4889 = vpop.f32.mrf.mxu0
  %v4890 = vadd.f32 0.0, %v4889
  %v4891 = vpop.f32.mrf.mxu0
  %v4892 = vadd.f32 0.0, %v4891
  %4893 = vmatmul.bf16.gmra.mxu0 %v4775
  %v4894 = vpop.f32.mrf.mxu0
  %v4895 = vadd.f32 0.0, %v4894
  %v4896 = vpop.f32.mrf.mxu0
  %v4897 = vadd.f32 0.0, %v4896
  %4898 = vmatmul.bf16.gmra.mxu0 %v4778
  %v4899 = vpop.f32.mrf.mxu0
  %v4900 = vadd.f32 0.0, %v4899
  %v4901 = vpop.f32.mrf.mxu0
  %v4902 = vadd.f32 0.0, %v4901
  %4903 = vmatmul.bf16.gmra.mxu0 %v4781
  %v4904 = vpop.f32.mrf.mxu0
  %v4905 = vadd.f32 0.0, %v4904
  %v4906 = vpop.f32.mrf.mxu0
  %v4907 = vadd.f32 0.0, %v4906
  %4908 = vmatmul.bf16.gmra.mxu0 %v4784
  %v4909 = vpop.f32.mrf.mxu0
  %v4910 = vadd.f32 0.0, %v4909
  %v4911 = vpop.f32.mrf.mxu0
  %v4912 = vadd.f32 0.0, %v4911
  %4913 = vmatmul.bf16.gmra.mxu0 %v4787
  %v4914 = vpop.f32.mrf.mxu0
  %v4915 = vadd.f32 0.0, %v4914
  %v4916 = vpop.f32.mrf.mxu0
  %v4917 = vadd.f32 0.0, %v4916
  %4918 = vmatmul.bf16.gmra.mxu0 %v4790
  %v4919 = vpop.f32.mrf.mxu0
  %v4920 = vadd.f32 0.0, %v4919
  %v4921 = vpop.f32.mrf.mxu0
  %v4922 = vadd.f32 0.0, %v4921
  %4923 = vmatmul.bf16.gmra.mxu0 %v4793
  %v4924 = vpop.f32.mrf.mxu0
  %v4925 = vadd.f32 0.0, %v4924
  %v4926 = vpop.f32.mrf.mxu0
  %v4927 = vadd.f32 0.0, %v4926
  %4928 = vmatmul.bf16.gmra.mxu0 %v4796
  %v4929 = vpop.f32.mrf.mxu0
  %v4930 = vadd.f32 0.0, %v4929
  %v4931 = vpop.f32.mrf.mxu0
  %v4932 = vadd.f32 0.0, %v4931
  %4933 = vmatmul.bf16.gmra.mxu0 %v4799
  %v4934 = vpop.f32.mrf.mxu0
  %v4935 = vadd.f32 0.0, %v4934
  %v4936 = vpop.f32.mrf.mxu0
  %v4937 = vadd.f32 0.0, %v4936
  %4938 = vmatmul.bf16.gmra.mxu0 %v4802
  %v4939 = vpop.f32.mrf.mxu0
  %v4940 = vadd.f32 0.0, %v4939
  %v4941 = vpop.f32.mrf.mxu0
  %v4942 = vadd.f32 0.0, %v4941
  %4943 = vmatmul.bf16.gmra.mxu0 %v4805
  %v4944 = vpop.f32.mrf.mxu0
  %v4945 = vadd.f32 0.0, %v4944
  %v4946 = vpop.f32.mrf.mxu0
  %v4947 = vadd.f32 0.0, %v4946
  %4948 = vmatmul.bf16.gmra.mxu0 %v4808
  %v4949 = vpop.f32.mrf.mxu0
  %v4950 = vadd.f32 0.0, %v4949
  %v4951 = vpop.f32.mrf.mxu0
  %v4952 = vadd.f32 0.0, %v4951
  %4953 = vmatmul.bf16.gmra.mxu0 %v4811
  %v4954 = vpop.f32.mrf.mxu0
  %v4955 = vadd.f32 0.0, %v4954
  %v4956 = vpop.f32.mrf.mxu0
  %v4957 = vadd.f32 0.0, %v4956
  %4958 = vmatmul.bf16.gmra.mxu0 %v4814
  %v4959 = vpop.f32.mrf.mxu0
  %v4960 = vadd.f32 0.0, %v4959
  %v4961 = vpop.f32.mrf.mxu0
  %v4962 = vadd.f32 0.0, %v4961
  %4963 = vmatmul.bf16.gmra.mxu0 %v4817
  %v4964 = vpop.f32.mrf.mxu0
  %v4965 = vadd.f32 0.0, %v4964
  %v4966 = vpop.f32.mrf.mxu0
  %v4967 = vadd.f32 0.0, %v4966
  %4968 = vmatmul.bf16.gmra.mxu0 %v4820
  %v4969 = vpop.f32.mrf.mxu0
  %v4970 = vadd.f32 0.0, %v4969
  %v4971 = vpop.f32.mrf.mxu0
  %v4972 = vadd.f32 0.0, %v4971
  %4973 = vmatmul.bf16.gmra.mxu0 %v4823
  %v4974 = vpop.f32.mrf.mxu0
  %v4975 = vadd.f32 0.0, %v4974
  %v4976 = vpop.f32.mrf.mxu0
  %v4977 = vadd.f32 0.0, %v4976
  %4978 = vmatmul.bf16.gmra.mxu0 %v4826
  %v4979 = vpop.f32.mrf.mxu0
  %v4980 = vadd.f32 0.0, %v4979
  %v4981 = vpop.f32.mrf.mxu0
  %v4982 = vadd.f32 0.0, %v4981
  %4983 = vmatmul.bf16.gmra.mxu0 %v4829
  %v4984 = vpop.f32.mrf.mxu0
  %v4985 = vadd.f32 0.0, %v4984
  %v4986 = vpop.f32.mrf.mxu0
  %v4987 = vadd.f32 0.0, %v4986
  %4988 = vmatmul.bf16.gmra.mxu0 %v4832
  %v4989 = vpop.f32.mrf.mxu0
  %v4990 = vadd.f32 0.0, %v4989
  %v4991 = vpop.f32.mrf.mxu0
  %v4992 = vadd.f32 0.0, %v4991
  %4993 = vmatmul.bf16.gmra.mxu0 %v4835
  %v4994 = vpop.f32.mrf.mxu0
  %v4995 = vadd.f32 0.0, %v4994
  %v4996 = vpop.f32.mrf.mxu0
  %v4997 = vadd.f32 0.0, %v4996
  %4998 = vmatmul.bf16.gmra.mxu0 %v4838
  %v4999 = vpop.f32.mrf.mxu0
  %v5000 = vadd.f32 0.0, %v4999
  %v5001 = vpop.f32.mrf.mxu0
  %v5002 = vadd.f32 0.0, %v5001
  %5003 = vmatmul.bf16.gmra.mxu0 %v4841
  %v5004 = vpop.f32.mrf.mxu0
  %v5005 = vadd.f32 0.0, %v5004
  %v5006 = vpop.f32.mrf.mxu0
  %v5007 = vadd.f32 0.0, %v5006
  %5008 = vmatmul.bf16.gmra.mxu0 %v4844
  %v5009 = vpop.f32.mrf.mxu0
  %v5010 = vadd.f32 0.0, %v5009
  %v5011 = vpop.f32.mrf.mxu0
  %v5012 = vadd.f32 0.0, %v5011
  %5013 = vmatmul.bf16.gmra.mxu0 %v4847
  %v5014 = vpop.f32.mrf.mxu0
  %v5015 = vadd.f32 0.0, %v5014
  %v5016 = vpop.f32.mrf.mxu0
  %v5017 = vadd.f32 0.0, %v5016
  %5018 = vmatmul.bf16.gmra.mxu0 %v4850
  %v5019 = vpop.f32.mrf.mxu0
  %v5020 = vadd.f32 0.0, %v5019
  %v5021 = vpop.f32.mrf.mxu0
  %v5022 = vadd.f32 0.0, %v5021
  %5023 = vdwg.mxu0
  %v5024 = vadd.f32 %v4242, %v4865
  %v5025 = vadd.f32 %v4243, %v4867
  %v5026 = vadd.f32 %v4244, %v4870
  %v5027 = vadd.f32 %v4245, %v4872
  %v5028 = vadd.f32 %v4246, %v4875
  %v5029 = vadd.f32 %v4247, %v4877
  %v5030 = vadd.f32 %v4248, %v4880
  %v5031 = vadd.f32 %v4249, %v4882
  %v5032 = vadd.f32 %v4250, %v4885
  %v5033 = vadd.f32 %v4251, %v4887
  %v5034 = vadd.f32 %v4252, %v4890
  %v5035 = vadd.f32 %v4253, %v4892
  %v5036 = vadd.f32 %v4254, %v4895
  %v5037 = vadd.f32 %v4255, %v4897
  %v5038 = vadd.f32 %v4256, %v4900
  %v5039 = vadd.f32 %v4257, %v4902
  %v5040 = vadd.f32 %v4258, %v4905
  %v5041 = vadd.f32 %v4259, %v4907
  %v5042 = vadd.f32 %v4260, %v4910
  %v5043 = vadd.f32 %v4261, %v4912
  %v5044 = vadd.f32 %v4262, %v4915
  %v5045 = vadd.f32 %v4263, %v4917
  %v5046 = vadd.f32 %v4264, %v4920
  %v5047 = vadd.f32 %v4265, %v4922
  %v5048 = vadd.f32 %v4266, %v4925
  %v5049 = vadd.f32 %v4267, %v4927
  %v5050 = vadd.f32 %v4268, %v4930
  %v5051 = vadd.f32 %v4269, %v4932
  %v5052 = vadd.f32 %v4270, %v4935
  %v5053 = vadd.f32 %v4271, %v4937
  %v5054 = vadd.f32 %v4272, %v4940
  %v5055 = vadd.f32 %v4273, %v4942
  %v5056 = vadd.f32 %v4274, %v4945
  %v5057 = vadd.f32 %v4275, %v4947
  %v5058 = vadd.f32 %v4276, %v4950
  %v5059 = vadd.f32 %v4277, %v4952
  %v5060 = vadd.f32 %v4278, %v4955
  %v5061 = vadd.f32 %v4279, %v4957
  %v5062 = vadd.f32 %v4280, %v4960
  %v5063 = vadd.f32 %v4281, %v4962
  %v5064 = vadd.f32 %v4282, %v4965
  %v5065 = vadd.f32 %v4283, %v4967
  %v5066 = vadd.f32 %v4284, %v4970
  %v5067 = vadd.f32 %v4285, %v4972
  %v5068 = vadd.f32 %v4286, %v4975
  %v5069 = vadd.f32 %v4287, %v4977
  %v5070 = vadd.f32 %v4288, %v4980
  %v5071 = vadd.f32 %v4289, %v4982
  %v5072 = vadd.f32 %v4290, %v4985
  %v5073 = vadd.f32 %v4291, %v4987
  %v5074 = vadd.f32 %v4292, %v4990
  %v5075 = vadd.f32 %v4293, %v4992
  %v5076 = vadd.f32 %v4294, %v4995
  %v5077 = vadd.f32 %v4295, %v4997
  %v5078 = vadd.f32 %v4296, %v5000
  %v5079 = vadd.f32 %v4297, %v5002
  %v5080 = vadd.f32 %v4298, %v5005
  %v5081 = vadd.f32 %v4299, %v5007
  %v5082 = vadd.f32 %v4300, %v5010
  %v5083 = vadd.f32 %v4301, %v5012
  %v5084 = vadd.f32 %v4302, %v5015
  %v5085 = vadd.f32 %v4303, %v5017
  %v5086 = vadd.f32 %v4304, %v5020
  %v5087 = vadd.f32 %v4305, %v5022
  %s5088 = scalar_lea.vmem %s0, 24
  %v5089 = vld [vmem:[%s5088] sm:$0xf]
  %v5090 = vld [vmem:[%s5088 + $0x4] sm:$0xf]
  %v5091 = vld [vmem:[%s5088 + $0xc] sm:$0xf]
  %v5092 = vld [vmem:[%s5088 + $0x10] sm:$0xf]
  %v5093 = vld [vmem:[%s5088 + $0x18] sm:$0xf]
  %v5094 = vld [vmem:[%s5088 + $0x1c] sm:$0xf]
  %v5095 = vld [vmem:[%s5088 + $0x24] sm:$0xf]
  %v5096 = vld [vmem:[%s5088 + $0x28] sm:$0xf]
  %v5097 = vld [vmem:[%s5088 + $0x30] sm:$0xf]
  %v5098 = vld [vmem:[%s5088 + $0x34] sm:$0xf]
  %v5099 = vld [vmem:[%s5088 + $0x3c] sm:$0xf]
  %v5100 = vld [vmem:[%s5088 + $0x40] sm:$0xf]
  %v5101 = vld [vmem:[%s5088 + $0x48] sm:$0xf]
  %v5102 = vld [vmem:[%s5088 + $0x4c] sm:$0xf]
  %v5103 = vld [vmem:[%s5088 + $0x54] sm:$0xf]
  %v5104 = vld [vmem:[%s5088 + $0x58] sm:$0xf]
  %v5105 = vld [vmem:[%s5088 + $0x60] sm:$0xf]
  %v5106 = vld [vmem:[%s5088 + $0x64] sm:$0xf]
  %v5107 = vld [vmem:[%s5088 + $0x6c] sm:$0xf]
  %v5108 = vld [vmem:[%s5088 + $0x70] sm:$0xf]
  %v5109 = vld [vmem:[%s5088 + $0x78] sm:$0xf]
  %v5110 = vld [vmem:[%s5088 + $0x7c] sm:$0xf]
  %v5111 = vld [vmem:[%s5088 + $0x84] sm:$0xf]
  %v5112 = vld [vmem:[%s5088 + $0x88] sm:$0xf]
  %v5113 = vld [vmem:[%s5088 + $0x90] sm:$0xf]
  %v5114 = vld [vmem:[%s5088 + $0x94] sm:$0xf]
  %v5115 = vld [vmem:[%s5088 + $0x9c] sm:$0xf]
  %v5116 = vld [vmem:[%s5088 + $0xa0] sm:$0xf]
  %v5117 = vld [vmem:[%s5088 + $0xa8] sm:$0xf]
  %v5118 = vld [vmem:[%s5088 + $0xac] sm:$0xf]
  %v5119 = vld [vmem:[%s5088 + $0xb4] sm:$0xf]
  %v5120 = vld [vmem:[%s5088 + $0xb8] sm:$0xf]
  %v5121 = vld [vmem:[%s5088 + $0xd8] sm:$0xf]
  %v5122 = vld [vmem:[%s5088 + $0xdc] sm:$0xf]
  %v5123 = vld [vmem:[%s5088 + $0xe4] sm:$0xf]
  %v5124 = vld [vmem:[%s5088 + $0xe8] sm:$0xf]
  %v5125 = vld [vmem:[%s5088 + $0xf0] sm:$0xf]
  %v5126 = vld [vmem:[%s5088 + $0xf4] sm:$0xf]
  %v5127 = vld [vmem:[%s5088 + $0xfc] sm:$0xf]
  %v5128 = vld [vmem:[%s5088 + $0x100] sm:$0xf]
  %v5129 = vld [vmem:[%s5088 + $0x108] sm:$0xf]
  %v5130 = vld [vmem:[%s5088 + $0x10c] sm:$0xf]
  %v5131 = vld [vmem:[%s5088 + $0x114] sm:$0xf]
  %v5132 = vld [vmem:[%s5088 + $0x118] sm:$0xf]
  %v5133 = vld [vmem:[%s5088 + $0x120] sm:$0xf]
  %v5134 = vld [vmem:[%s5088 + $0x124] sm:$0xf]
  %v5135 = vld [vmem:[%s5088 + $0x12c] sm:$0xf]
  %v5136 = vld [vmem:[%s5088 + $0x130] sm:$0xf]
  %v5137 = vld [vmem:[%s5088 + $0x138] sm:$0xf]
  %v5138 = vld [vmem:[%s5088 + $0x13c] sm:$0xf]
  %v5139 = vld [vmem:[%s5088 + $0x144] sm:$0xf]
  %v5140 = vld [vmem:[%s5088 + $0x148] sm:$0xf]
  %v5141 = vld [vmem:[%s5088 + $0x150] sm:$0xf]
  %v5142 = vld [vmem:[%s5088 + $0x154] sm:$0xf]
  %v5143 = vld [vmem:[%s5088 + $0x15c] sm:$0xf]
  %v5144 = vld [vmem:[%s5088 + $0x160] sm:$0xf]
  %v5145 = vld [vmem:[%s5088 + $0x168] sm:$0xf]
  %v5146 = vld [vmem:[%s5088 + $0x16c] sm:$0xf]
  %v5147 = vld [vmem:[%s5088 + $0x174] sm:$0xf]
  %v5148 = vld [vmem:[%s5088 + $0x178] sm:$0xf]
  %v5149 = vld [vmem:[%s5088 + $0x180] sm:$0xf]
  %v5150 = vld [vmem:[%s5088 + $0x184] sm:$0xf]
  %v5151 = vld [vmem:[%s5088 + $0x18c] sm:$0xf]
  %v5152 = vld [vmem:[%s5088 + $0x190] sm:$0xf]
  %s5153 = scalar_lea.vmem %s1, 12
  %v5154 = vld [vmem:[%s5153] sm:$0x3]
  %v5219 = vunpack.c.l.b16 %v5089
  %v5220 = vunpack.c.l.b16 %v5090
  %v5221 = vunpack.c.l.b16 %v5091
  %v5222 = vunpack.c.l.b16 %v5092
  %v5223 = vunpack.c.l.b16 %v5093
  %v5224 = vunpack.c.l.b16 %v5094
  %v5225 = vunpack.c.l.b16 %v5095
  %v5226 = vunpack.c.l.b16 %v5096
  %v5227 = vunpack.c.l.b16 %v5097
  %v5228 = vunpack.c.l.b16 %v5098
  %v5229 = vunpack.c.l.b16 %v5099
  %v5230 = vunpack.c.l.b16 %v5100
  %v5231 = vunpack.c.l.b16 %v5101
  %v5232 = vunpack.c.l.b16 %v5102
  %v5233 = vunpack.c.l.b16 %v5103
  %v5234 = vunpack.c.l.b16 %v5104
  %v5235 = vunpack.c.l.b16 %v5105
  %v5236 = vunpack.c.l.b16 %v5106
  %v5237 = vunpack.c.l.b16 %v5107
  %v5238 = vunpack.c.l.b16 %v5108
  %v5239 = vunpack.c.l.b16 %v5109
  %v5240 = vunpack.c.l.b16 %v5110
  %v5241 = vunpack.c.l.b16 %v5111
  %v5242 = vunpack.c.l.b16 %v5112
  %v5243 = vunpack.c.l.b16 %v5113
  %v5244 = vunpack.c.l.b16 %v5114
  %v5245 = vunpack.c.l.b16 %v5115
  %v5246 = vunpack.c.l.b16 %v5116
  %v5247 = vunpack.c.l.b16 %v5117
  %v5248 = vunpack.c.l.b16 %v5118
  %v5249 = vunpack.c.l.b16 %v5119
  %v5250 = vunpack.c.l.b16 %v5120
  %v5251 = vunpack.c.l.b16 %v5121
  %v5252 = vunpack.c.l.b16 %v5122
  %v5253 = vunpack.c.l.b16 %v5123
  %v5254 = vunpack.c.l.b16 %v5124
  %v5255 = vunpack.c.l.b16 %v5125
  %v5256 = vunpack.c.l.b16 %v5126
  %v5257 = vunpack.c.l.b16 %v5127
  %v5258 = vunpack.c.l.b16 %v5128
  %v5259 = vunpack.c.l.b16 %v5129
  %v5260 = vunpack.c.l.b16 %v5130
  %v5261 = vunpack.c.l.b16 %v5131
  %v5262 = vunpack.c.l.b16 %v5132
  %v5263 = vunpack.c.l.b16 %v5133
  %v5264 = vunpack.c.l.b16 %v5134
  %v5265 = vunpack.c.l.b16 %v5135
  %v5266 = vunpack.c.l.b16 %v5136
  %v5267 = vunpack.c.l.b16 %v5137
  %v5268 = vunpack.c.l.b16 %v5138
  %v5269 = vunpack.c.l.b16 %v5139
  %v5270 = vunpack.c.l.b16 %v5140
  %v5271 = vunpack.c.l.b16 %v5141
  %v5272 = vunpack.c.l.b16 %v5142
  %v5273 = vunpack.c.l.b16 %v5143
  %v5274 = vunpack.c.l.b16 %v5144
  %v5275 = vunpack.c.l.b16 %v5145
  %v5276 = vunpack.c.l.b16 %v5146
  %v5277 = vunpack.c.l.b16 %v5147
  %v5278 = vunpack.c.l.b16 %v5148
  %v5279 = vunpack.c.l.b16 %v5149
  %v5280 = vunpack.c.l.b16 %v5150
  %v5281 = vunpack.c.l.b16 %v5151
  %v5282 = vunpack.c.l.b16 %v5152
  %v5283 = vpack.c.b16 %v5220, %v5219
  %v5284 = vpack.c.b16 %v5222, %v5221
  %v5285 = vpack.c.b16 %v5224, %v5223
  %v5286 = vpack.c.b16 %v5226, %v5225
  %v5287 = vpack.c.b16 %v5228, %v5227
  %v5288 = vpack.c.b16 %v5230, %v5229
  %v5289 = vpack.c.b16 %v5232, %v5231
  %v5290 = vpack.c.b16 %v5234, %v5233
  %v5291 = vpack.c.b16 %v5236, %v5235
  %v5292 = vpack.c.b16 %v5238, %v5237
  %v5293 = vpack.c.b16 %v5240, %v5239
  %v5294 = vpack.c.b16 %v5242, %v5241
  %v5295 = vpack.c.b16 %v5244, %v5243
  %v5296 = vpack.c.b16 %v5246, %v5245
  %v5297 = vpack.c.b16 %v5248, %v5247
  %v5298 = vpack.c.b16 %v5250, %v5249
  %v5299 = vpack.c.b16 %v5252, %v5251
  %v5300 = vpack.c.b16 %v5254, %v5253
  %v5301 = vpack.c.b16 %v5256, %v5255
  %v5302 = vpack.c.b16 %v5258, %v5257
  %v5303 = vpack.c.b16 %v5260, %v5259
  %v5304 = vpack.c.b16 %v5262, %v5261
  %v5305 = vpack.c.b16 %v5264, %v5263
  %v5306 = vpack.c.b16 %v5266, %v5265
  %v5307 = vpack.c.b16 %v5268, %v5267
  %v5308 = vpack.c.b16 %v5270, %v5269
  %v5309 = vpack.c.b16 %v5272, %v5271
  %v5310 = vpack.c.b16 %v5274, %v5273
  %v5311 = vpack.c.b16 %v5276, %v5275
  %v5312 = vpack.c.b16 %v5278, %v5277
  %v5313 = vpack.c.b16 %v5280, %v5279
  %v5314 = vpack.c.b16 %v5282, %v5281
  %v5316 = vsel %vm1002, %v5283, 0
  %v5319 = vsel %vm1002, %v5284, 0
  %v5322 = vsel %vm1002, %v5285, 0
  %v5325 = vsel %vm1002, %v5286, 0
  %v5328 = vsel %vm1002, %v5287, 0
  %v5331 = vsel %vm1002, %v5288, 0
  %v5334 = vsel %vm1002, %v5289, 0
  %v5337 = vsel %vm1002, %v5290, 0
  %v5340 = vsel %vm1002, %v5291, 0
  %v5343 = vsel %vm1002, %v5292, 0
  %v5346 = vsel %vm1002, %v5293, 0
  %v5349 = vsel %vm1002, %v5294, 0
  %v5352 = vsel %vm1002, %v5295, 0
  %v5355 = vsel %vm1002, %v5296, 0
  %v5358 = vsel %vm1002, %v5297, 0
  %v5361 = vsel %vm1002, %v5298, 0
  %v5364 = vsel %vm1002, %v5299, 0
  %v5367 = vsel %vm1002, %v5300, 0
  %v5370 = vsel %vm1002, %v5301, 0
  %v5373 = vsel %vm1002, %v5302, 0
  %v5376 = vsel %vm1002, %v5303, 0
  %v5379 = vsel %vm1002, %v5304, 0
  %v5382 = vsel %vm1002, %v5305, 0
  %v5385 = vsel %vm1002, %v5306, 0
  %v5388 = vsel %vm1002, %v5307, 0
  %v5391 = vsel %vm1002, %v5308, 0
  %v5394 = vsel %vm1002, %v5309, 0
  %v5397 = vsel %vm1002, %v5310, 0
  %v5400 = vsel %vm1002, %v5311, 0
  %v5403 = vsel %vm1002, %v5312, 0
  %v5406 = vsel %vm1002, %v5313, 0
  %v5409 = vsel %vm1002, %v5314, 0
  %v5412 = vsel %vm1099, %v5154, 0
  %5414 = vmatpush.bf16.msra.mxu0 0
  %5415 = vmatpush.bf16.msra.mxu0 0
  %5416 = vmatpush.bf16.msra.mxu0 0
  %5417 = vmatpush.bf16.msra.mxu0 0
  %5418 = vmatpush.bf16.msra.mxu0 0
  %5419 = vmatpush.bf16.msra.mxu0 0
  %5420 = vmatpush.bf16.msra.mxu0 0
  %5421 = vmatpush.bf16.msra.mxu0 %v5412
  %5422 = vmatmul.bf16.gmra.mxu0 %v5316
  %v5423 = vpop.f32.mrf.mxu0
  %v5424 = vadd.f32 0.0, %v5423
  %v5425 = vpop.f32.mrf.mxu0
  %v5426 = vadd.f32 0.0, %v5425
  %5427 = vmatmul.bf16.gmra.mxu0 %v5319
  %v5428 = vpop.f32.mrf.mxu0
  %v5429 = vadd.f32 0.0, %v5428
  %v5430 = vpop.f32.mrf.mxu0
  %v5431 = vadd.f32 0.0, %v5430
  %5432 = vmatmul.bf16.gmra.mxu0 %v5322
  %v5433 = vpop.f32.mrf.mxu0
  %v5434 = vadd.f32 0.0, %v5433
  %v5435 = vpop.f32.mrf.mxu0
  %v5436 = vadd.f32 0.0, %v5435
  %5437 = vmatmul.bf16.gmra.mxu0 %v5325
  %v5438 = vpop.f32.mrf.mxu0
  %v5439 = vadd.f32 0.0, %v5438
  %v5440 = vpop.f32.mrf.mxu0
  %v5441 = vadd.f32 0.0, %v5440
  %5442 = vmatmul.bf16.gmra.mxu0 %v5328
  %v5443 = vpop.f32.mrf.mxu0
  %v5444 = vadd.f32 0.0, %v5443
  %v5445 = vpop.f32.mrf.mxu0
  %v5446 = vadd.f32 0.0, %v5445
  %5447 = vmatmul.bf16.gmra.mxu0 %v5331
  %v5448 = vpop.f32.mrf.mxu0
  %v5449 = vadd.f32 0.0, %v5448
  %v5450 = vpop.f32.mrf.mxu0
  %v5451 = vadd.f32 0.0, %v5450
  %5452 = vmatmul.bf16.gmra.mxu0 %v5334
  %v5453 = vpop.f32.mrf.mxu0
  %v5454 = vadd.f32 0.0, %v5453
  %v5455 = vpop.f32.mrf.mxu0
  %v5456 = vadd.f32 0.0, %v5455
  %5457 = vmatmul.bf16.gmra.mxu0 %v5337
  %v5458 = vpop.f32.mrf.mxu0
  %v5459 = vadd.f32 0.0, %v5458
  %v5460 = vpop.f32.mrf.mxu0
  %v5461 = vadd.f32 0.0, %v5460
  %5462 = vmatmul.bf16.gmra.mxu0 %v5340
  %v5463 = vpop.f32.mrf.mxu0
  %v5464 = vadd.f32 0.0, %v5463
  %v5465 = vpop.f32.mrf.mxu0
  %v5466 = vadd.f32 0.0, %v5465
  %5467 = vmatmul.bf16.gmra.mxu0 %v5343
  %v5468 = vpop.f32.mrf.mxu0
  %v5469 = vadd.f32 0.0, %v5468
  %v5470 = vpop.f32.mrf.mxu0
  %v5471 = vadd.f32 0.0, %v5470
  %5472 = vmatmul.bf16.gmra.mxu0 %v5346
  %v5473 = vpop.f32.mrf.mxu0
  %v5474 = vadd.f32 0.0, %v5473
  %v5475 = vpop.f32.mrf.mxu0
  %v5476 = vadd.f32 0.0, %v5475
  %5477 = vmatmul.bf16.gmra.mxu0 %v5349
  %v5478 = vpop.f32.mrf.mxu0
  %v5479 = vadd.f32 0.0, %v5478
  %v5480 = vpop.f32.mrf.mxu0
  %v5481 = vadd.f32 0.0, %v5480
  %5482 = vmatmul.bf16.gmra.mxu0 %v5352
  %v5483 = vpop.f32.mrf.mxu0
  %v5484 = vadd.f32 0.0, %v5483
  %v5485 = vpop.f32.mrf.mxu0
  %v5486 = vadd.f32 0.0, %v5485
  %5487 = vmatmul.bf16.gmra.mxu0 %v5355
  %v5488 = vpop.f32.mrf.mxu0
  %v5489 = vadd.f32 0.0, %v5488
  %v5490 = vpop.f32.mrf.mxu0
  %v5491 = vadd.f32 0.0, %v5490
  %5492 = vmatmul.bf16.gmra.mxu0 %v5358
  %v5493 = vpop.f32.mrf.mxu0
  %v5494 = vadd.f32 0.0, %v5493
  %v5495 = vpop.f32.mrf.mxu0
  %v5496 = vadd.f32 0.0, %v5495
  %5497 = vmatmul.bf16.gmra.mxu0 %v5361
  %v5498 = vpop.f32.mrf.mxu0
  %v5499 = vadd.f32 0.0, %v5498
  %v5500 = vpop.f32.mrf.mxu0
  %v5501 = vadd.f32 0.0, %v5500
  %5502 = vmatmul.bf16.gmra.mxu0 %v5364
  %v5503 = vpop.f32.mrf.mxu0
  %v5504 = vadd.f32 0.0, %v5503
  %v5505 = vpop.f32.mrf.mxu0
  %v5506 = vadd.f32 0.0, %v5505
  %5507 = vmatmul.bf16.gmra.mxu0 %v5367
  %v5508 = vpop.f32.mrf.mxu0
  %v5509 = vadd.f32 0.0, %v5508
  %v5510 = vpop.f32.mrf.mxu0
  %v5511 = vadd.f32 0.0, %v5510
  %5512 = vmatmul.bf16.gmra.mxu0 %v5370
  %v5513 = vpop.f32.mrf.mxu0
  %v5514 = vadd.f32 0.0, %v5513
  %v5515 = vpop.f32.mrf.mxu0
  %v5516 = vadd.f32 0.0, %v5515
  %5517 = vmatmul.bf16.gmra.mxu0 %v5373
  %v5518 = vpop.f32.mrf.mxu0
  %v5519 = vadd.f32 0.0, %v5518
  %v5520 = vpop.f32.mrf.mxu0
  %v5521 = vadd.f32 0.0, %v5520
  %5522 = vmatmul.bf16.gmra.mxu0 %v5376
  %v5523 = vpop.f32.mrf.mxu0
  %v5524 = vadd.f32 0.0, %v5523
  %v5525 = vpop.f32.mrf.mxu0
  %v5526 = vadd.f32 0.0, %v5525
  %5527 = vmatmul.bf16.gmra.mxu0 %v5379
  %v5528 = vpop.f32.mrf.mxu0
  %v5529 = vadd.f32 0.0, %v5528
  %v5530 = vpop.f32.mrf.mxu0
  %v5531 = vadd.f32 0.0, %v5530
  %5532 = vmatmul.bf16.gmra.mxu0 %v5382
  %v5533 = vpop.f32.mrf.mxu0
  %v5534 = vadd.f32 0.0, %v5533
  %v5535 = vpop.f32.mrf.mxu0
  %v5536 = vadd.f32 0.0, %v5535
  %5537 = vmatmul.bf16.gmra.mxu0 %v5385
  %v5538 = vpop.f32.mrf.mxu0
  %v5539 = vadd.f32 0.0, %v5538
  %v5540 = vpop.f32.mrf.mxu0
  %v5541 = vadd.f32 0.0, %v5540
  %5542 = vmatmul.bf16.gmra.mxu0 %v5388
  %v5543 = vpop.f32.mrf.mxu0
  %v5544 = vadd.f32 0.0, %v5543
  %v5545 = vpop.f32.mrf.mxu0
  %v5546 = vadd.f32 0.0, %v5545
  %5547 = vmatmul.bf16.gmra.mxu0 %v5391
  %v5548 = vpop.f32.mrf.mxu0
  %v5549 = vadd.f32 0.0, %v5548
  %v5550 = vpop.f32.mrf.mxu0
  %v5551 = vadd.f32 0.0, %v5550
  %5552 = vmatmul.bf16.gmra.mxu0 %v5394
  %v5553 = vpop.f32.mrf.mxu0
  %v5554 = vadd.f32 0.0, %v5553
  %v5555 = vpop.f32.mrf.mxu0
  %v5556 = vadd.f32 0.0, %v5555
  %5557 = vmatmul.bf16.gmra.mxu0 %v5397
  %v5558 = vpop.f32.mrf.mxu0
  %v5559 = vadd.f32 0.0, %v5558
  %v5560 = vpop.f32.mrf.mxu0
  %v5561 = vadd.f32 0.0, %v5560
  %5562 = vmatmul.bf16.gmra.mxu0 %v5400
  %v5563 = vpop.f32.mrf.mxu0
  %v5564 = vadd.f32 0.0, %v5563
  %v5565 = vpop.f32.mrf.mxu0
  %v5566 = vadd.f32 0.0, %v5565
  %5567 = vmatmul.bf16.gmra.mxu0 %v5403
  %v5568 = vpop.f32.mrf.mxu0
  %v5569 = vadd.f32 0.0, %v5568
  %v5570 = vpop.f32.mrf.mxu0
  %v5571 = vadd.f32 0.0, %v5570
  %5572 = vmatmul.bf16.gmra.mxu0 %v5406
  %v5573 = vpop.f32.mrf.mxu0
  %v5574 = vadd.f32 0.0, %v5573
  %v5575 = vpop.f32.mrf.mxu0
  %v5576 = vadd.f32 0.0, %v5575
  %5577 = vmatmul.bf16.gmra.mxu0 %v5409
  %v5578 = vpop.f32.mrf.mxu0
  %v5579 = vadd.f32 0.0, %v5578
  %v5580 = vpop.f32.mrf.mxu0
  %v5581 = vadd.f32 0.0, %v5580
  %5582 = vdwg.mxu0
  %v5583 = vadd.f32 %v5024, %v5424
  %v5584 = vadd.f32 %v5025, %v5426
  %v5585 = vadd.f32 %v5026, %v5429
  %v5586 = vadd.f32 %v5027, %v5431
  %v5587 = vadd.f32 %v5028, %v5434
  %v5588 = vadd.f32 %v5029, %v5436
  %v5589 = vadd.f32 %v5030, %v5439
  %v5590 = vadd.f32 %v5031, %v5441
  %v5591 = vadd.f32 %v5032, %v5444
  %v5592 = vadd.f32 %v5033, %v5446
  %v5593 = vadd.f32 %v5034, %v5449
  %v5594 = vadd.f32 %v5035, %v5451
  %v5595 = vadd.f32 %v5036, %v5454
  %v5596 = vadd.f32 %v5037, %v5456
  %v5597 = vadd.f32 %v5038, %v5459
  %v5598 = vadd.f32 %v5039, %v5461
  %v5599 = vadd.f32 %v5040, %v5464
  %v5600 = vadd.f32 %v5041, %v5466
  %v5601 = vadd.f32 %v5042, %v5469
  %v5602 = vadd.f32 %v5043, %v5471
  %v5603 = vadd.f32 %v5044, %v5474
  %v5604 = vadd.f32 %v5045, %v5476
  %v5605 = vadd.f32 %v5046, %v5479
  %v5606 = vadd.f32 %v5047, %v5481
  %v5607 = vadd.f32 %v5048, %v5484
  %v5608 = vadd.f32 %v5049, %v5486
  %v5609 = vadd.f32 %v5050, %v5489
  %v5610 = vadd.f32 %v5051, %v5491
  %v5611 = vadd.f32 %v5052, %v5494
  %v5612 = vadd.f32 %v5053, %v5496
  %v5613 = vadd.f32 %v5054, %v5499
  %v5614 = vadd.f32 %v5055, %v5501
  %v5615 = vadd.f32 %v5056, %v5504
  %v5616 = vadd.f32 %v5057, %v5506
  %v5617 = vadd.f32 %v5058, %v5509
  %v5618 = vadd.f32 %v5059, %v5511
  %v5619 = vadd.f32 %v5060, %v5514
  %v5620 = vadd.f32 %v5061, %v5516
  %v5621 = vadd.f32 %v5062, %v5519
  %v5622 = vadd.f32 %v5063, %v5521
  %v5623 = vadd.f32 %v5064, %v5524
  %v5624 = vadd.f32 %v5065, %v5526
  %v5625 = vadd.f32 %v5066, %v5529
  %v5626 = vadd.f32 %v5067, %v5531
  %v5627 = vadd.f32 %v5068, %v5534
  %v5628 = vadd.f32 %v5069, %v5536
  %v5629 = vadd.f32 %v5070, %v5539
  %v5630 = vadd.f32 %v5071, %v5541
  %v5631 = vadd.f32 %v5072, %v5544
  %v5632 = vadd.f32 %v5073, %v5546
  %v5633 = vadd.f32 %v5074, %v5549
  %v5634 = vadd.f32 %v5075, %v5551
  %v5635 = vadd.f32 %v5076, %v5554
  %v5636 = vadd.f32 %v5077, %v5556
  %v5637 = vadd.f32 %v5078, %v5559
  %v5638 = vadd.f32 %v5079, %v5561
  %v5639 = vadd.f32 %v5080, %v5564
  %v5640 = vadd.f32 %v5081, %v5566
  %v5641 = vadd.f32 %v5082, %v5569
  %v5642 = vadd.f32 %v5083, %v5571
  %v5643 = vadd.f32 %v5084, %v5574
  %v5644 = vadd.f32 %v5085, %v5576
  %v5645 = vadd.f32 %v5086, %v5579
  %v5646 = vadd.f32 %v5087, %v5581
  %v5647 = vld [vmem:[%s5088] sm:$0xf]
  %v5648 = vld [vmem:[%s5088 + $0x4] sm:$0xf]
  %v5649 = vld [vmem:[%s5088 + $0x8] sm:$0x1]
  %v5650 = vld [vmem:[%s5088 + $0xc] sm:$0xf]
  %v5651 = vld [vmem:[%s5088 + $0x10] sm:$0xf]
  %v5652 = vld [vmem:[%s5088 + $0x14] sm:$0x1]
  %v5653 = vld [vmem:[%s5088 + $0x18] sm:$0xf]
  %v5654 = vld [vmem:[%s5088 + $0x1c] sm:$0xf]
  %v5655 = vld [vmem:[%s5088 + $0x20] sm:$0x1]
  %v5656 = vld [vmem:[%s5088 + $0x24] sm:$0xf]
  %v5657 = vld [vmem:[%s5088 + $0x28] sm:$0xf]
  %v5658 = vld [vmem:[%s5088 + $0x2c] sm:$0x1]
  %v5659 = vld [vmem:[%s5088 + $0x30] sm:$0xf]
  %v5660 = vld [vmem:[%s5088 + $0x34] sm:$0xf]
  %v5661 = vld [vmem:[%s5088 + $0x38] sm:$0x1]
  %v5662 = vld [vmem:[%s5088 + $0x3c] sm:$0xf]
  %v5663 = vld [vmem:[%s5088 + $0x40] sm:$0xf]
  %v5664 = vld [vmem:[%s5088 + $0x44] sm:$0x1]
  %v5665 = vld [vmem:[%s5088 + $0x48] sm:$0xf]
  %v5666 = vld [vmem:[%s5088 + $0x4c] sm:$0xf]
  %v5667 = vld [vmem:[%s5088 + $0x50] sm:$0x1]
  %v5668 = vld [vmem:[%s5088 + $0x54] sm:$0xf]
  %v5669 = vld [vmem:[%s5088 + $0x58] sm:$0xf]
  %v5670 = vld [vmem:[%s5088 + $0x5c] sm:$0x1]
  %v5671 = vld [vmem:[%s5088 + $0x60] sm:$0xf]
  %v5672 = vld [vmem:[%s5088 + $0x64] sm:$0xf]
  %v5673 = vld [vmem:[%s5088 + $0x68] sm:$0x1]
  %v5674 = vld [vmem:[%s5088 + $0x6c] sm:$0xf]
  %v5675 = vld [vmem:[%s5088 + $0x70] sm:$0xf]
  %v5676 = vld [vmem:[%s5088 + $0x74] sm:$0x1]
  %v5677 = vld [vmem:[%s5088 + $0x78] sm:$0xf]
  %v5678 = vld [vmem:[%s5088 + $0x7c] sm:$0xf]
  %v5679 = vld [vmem:[%s5088 + $0x80] sm:$0x1]
  %v5680 = vld [vmem:[%s5088 + $0x84] sm:$0xf]
  %v5681 = vld [vmem:[%s5088 + $0x88] sm:$0xf]
  %v5682 = vld [vmem:[%s5088 + $0x8c] sm:$0x1]
  %v5683 = vld [vmem:[%s5088 + $0x90] sm:$0xf]
  %v5684 = vld [vmem:[%s5088 + $0x94] sm:$0xf]
  %v5685 = vld [vmem:[%s5088 + $0x98] sm:$0x1]
  %v5686 = vld [vmem:[%s5088 + $0x9c] sm:$0xf]
  %v5687 = vld [vmem:[%s5088 + $0xa0] sm:$0xf]
  %v5688 = vld [vmem:[%s5088 + $0xa4] sm:$0x1]
  %v5689 = vld [vmem:[%s5088 + $0xa8] sm:$0xf]
  %v5690 = vld [vmem:[%s5088 + $0xac] sm:$0xf]
  %v5691 = vld [vmem:[%s5088 + $0xb0] sm:$0x1]
  %v5692 = vld [vmem:[%s5088 + $0xb4] sm:$0xf]
  %v5693 = vld [vmem:[%s5088 + $0xb8] sm:$0xf]
  %v5694 = vld [vmem:[%s5088 + $0xbc] sm:$0x1]
  %v5695 = vld [vmem:[%s5088 + $0xd8] sm:$0xf]
  %v5696 = vld [vmem:[%s5088 + $0xdc] sm:$0xf]
  %v5697 = vld [vmem:[%s5088 + $0xe0] sm:$0x1]
  %v5698 = vld [vmem:[%s5088 + $0xe4] sm:$0xf]
  %v5699 = vld [vmem:[%s5088 + $0xe8] sm:$0xf]
  %v5700 = vld [vmem:[%s5088 + $0xec] sm:$0x1]
  %v5701 = vld [vmem:[%s5088 + $0xf0] sm:$0xf]
  %v5702 = vld [vmem:[%s5088 + $0xf4] sm:$0xf]
  %v5703 = vld [vmem:[%s5088 + $0xf8] sm:$0x1]
  %v5704 = vld [vmem:[%s5088 + $0xfc] sm:$0xf]
  %v5705 = vld [vmem:[%s5088 + $0x100] sm:$0xf]
  %v5706 = vld [vmem:[%s5088 + $0x104] sm:$0x1]
  %v5707 = vld [vmem:[%s5088 + $0x108] sm:$0xf]
  %v5708 = vld [vmem:[%s5088 + $0x10c] sm:$0xf]
  %v5709 = vld [vmem:[%s5088 + $0x110] sm:$0x1]
  %v5710 = vld [vmem:[%s5088 + $0x114] sm:$0xf]
  %v5711 = vld [vmem:[%s5088 + $0x118] sm:$0xf]
  %v5712 = vld [vmem:[%s5088 + $0x11c] sm:$0x1]
  %v5713 = vld [vmem:[%s5088 + $0x120] sm:$0xf]
  %v5714 = vld [vmem:[%s5088 + $0x124] sm:$0xf]
  %v5715 = vld [vmem:[%s5088 + $0x128] sm:$0x1]
  %v5716 = vld [vmem:[%s5088 + $0x12c] sm:$0xf]
  %v5717 = vld [vmem:[%s5088 + $0x130] sm:$0xf]
  %v5718 = vld [vmem:[%s5088 + $0x134] sm:$0x1]
  %v5719 = vld [vmem:[%s5088 + $0x138] sm:$0xf]
  %v5720 = vld [vmem:[%s5088 + $0x13c] sm:$0xf]
  %v5721 = vld [vmem:[%s5088 + $0x140] sm:$0x1]
  %v5722 = vld [vmem:[%s5088 + $0x144] sm:$0xf]
  %v5723 = vld [vmem:[%s5088 + $0x148] sm:$0xf]
  %v5724 = vld [vmem:[%s5088 + $0x14c] sm:$0x1]
  %v5725 = vld [vmem:[%s5088 + $0x150] sm:$0xf]
  %v5726 = vld [vmem:[%s5088 + $0x154] sm:$0xf]
  %v5727 = vld [vmem:[%s5088 + $0x158] sm:$0x1]
  %v5728 = vld [vmem:[%s5088 + $0x15c] sm:$0xf]
  %v5729 = vld [vmem:[%s5088 + $0x160] sm:$0xf]
  %v5730 = vld [vmem:[%s5088 + $0x164] sm:$0x1]
  %v5731 = vld [vmem:[%s5088 + $0x168] sm:$0xf]
  %v5732 = vld [vmem:[%s5088 + $0x16c] sm:$0xf]
  %v5733 = vld [vmem:[%s5088 + $0x170] sm:$0x1]
  %v5734 = vld [vmem:[%s5088 + $0x174] sm:$0xf]
  %v5735 = vld [vmem:[%s5088 + $0x178] sm:$0xf]
  %v5736 = vld [vmem:[%s5088 + $0x17c] sm:$0x1]
  %v5737 = vld [vmem:[%s5088 + $0x180] sm:$0xf]
  %v5738 = vld [vmem:[%s5088 + $0x184] sm:$0xf]
  %v5739 = vld [vmem:[%s5088 + $0x188] sm:$0x1]
  %v5740 = vld [vmem:[%s5088 + $0x18c] sm:$0xf]
  %v5741 = vld [vmem:[%s5088 + $0x190] sm:$0xf]
  %v5742 = vld [vmem:[%s5088 + $0x194] sm:$0x1]
  %v5744 = vshrl.u32 %v5647, 16
  %v5746 = vrot.slane %v5744, 4
  %v5747 = vshll.u32 %v5647, 16
  %v5749 = vrot.slane %v5747, 5
  %v5750 = vor.u32 %v5746, %v5749
  %v5751 = vrot.slane %v5750, 4
  %v5753 = vshll.u32 %v5648, 16
  %v5755 = vrot.slane %v5753, 5
  %v5756 = vsel %vm135, %v5751, %v5755
  %v5757 = vshrl.u32 %v5648, 16
  %v5759 = vrot.slane %v5757, 4
  %v5760 = vor.u32 %v5759, %v5755
  %v5761 = vrot.slane %v5760, 4
  %v5763 = vshll.u32 %v5649, 16
  %v5765 = vrot.slane %v5763, 5
  %v5766 = vsel %vm135, %v5761, %v5765
  %v5768 = vshrl.u32 %v5650, 16
  %v5770 = vrot.slane %v5768, 4
  %v5771 = vshll.u32 %v5650, 16
  %v5773 = vrot.slane %v5771, 5
  %v5774 = vor.u32 %v5770, %v5773
  %v5775 = vrot.slane %v5774, 4
  %v5777 = vshll.u32 %v5651, 16
  %v5779 = vrot.slane %v5777, 5
  %v5780 = vsel %vm135, %v5775, %v5779
  %v5781 = vshrl.u32 %v5651, 16
  %v5783 = vrot.slane %v5781, 4
  %v5784 = vor.u32 %v5783, %v5779
  %v5785 = vrot.slane %v5784, 4
  %v5787 = vshll.u32 %v5652, 16
  %v5789 = vrot.slane %v5787, 5
  %v5790 = vsel %vm135, %v5785, %v5789
  %v5792 = vshrl.u32 %v5653, 16
  %v5794 = vrot.slane %v5792, 4
  %v5795 = vshll.u32 %v5653, 16
  %v5797 = vrot.slane %v5795, 5
  %v5798 = vor.u32 %v5794, %v5797
  %v5799 = vrot.slane %v5798, 4
  %v5801 = vshll.u32 %v5654, 16
  %v5803 = vrot.slane %v5801, 5
  %v5804 = vsel %vm135, %v5799, %v5803
  %v5805 = vshrl.u32 %v5654, 16
  %v5807 = vrot.slane %v5805, 4
  %v5808 = vor.u32 %v5807, %v5803
  %v5809 = vrot.slane %v5808, 4
  %v5811 = vshll.u32 %v5655, 16
  %v5813 = vrot.slane %v5811, 5
  %v5814 = vsel %vm135, %v5809, %v5813
  %v5816 = vshrl.u32 %v5656, 16
  %v5818 = vrot.slane %v5816, 4
  %v5819 = vshll.u32 %v5656, 16
  %v5821 = vrot.slane %v5819, 5
  %v5822 = vor.u32 %v5818, %v5821
  %v5823 = vrot.slane %v5822, 4
  %v5825 = vshll.u32 %v5657, 16
  %v5827 = vrot.slane %v5825, 5
  %v5828 = vsel %vm135, %v5823, %v5827
  %v5829 = vshrl.u32 %v5657, 16
  %v5831 = vrot.slane %v5829, 4
  %v5832 = vor.u32 %v5831, %v5827
  %v5833 = vrot.slane %v5832, 4
  %v5835 = vshll.u32 %v5658, 16
  %v5837 = vrot.slane %v5835, 5
  %v5838 = vsel %vm135, %v5833, %v5837
  %v5840 = vshrl.u32 %v5659, 16
  %v5842 = vrot.slane %v5840, 4
  %v5843 = vshll.u32 %v5659, 16
  %v5845 = vrot.slane %v5843, 5
  %v5846 = vor.u32 %v5842, %v5845
  %v5847 = vrot.slane %v5846, 4
  %v5849 = vshll.u32 %v5660, 16
  %v5851 = vrot.slane %v5849, 5
  %v5852 = vsel %vm135, %v5847, %v5851
  %v5853 = vshrl.u32 %v5660, 16
  %v5855 = vrot.slane %v5853, 4
  %v5856 = vor.u32 %v5855, %v5851
  %v5857 = vrot.slane %v5856, 4
  %v5859 = vshll.u32 %v5661, 16
  %v5861 = vrot.slane %v5859, 5
  %v5862 = vsel %vm135, %v5857, %v5861
  %v5864 = vshrl.u32 %v5662, 16
  %v5866 = vrot.slane %v5864, 4
  %v5867 = vshll.u32 %v5662, 16
  %v5869 = vrot.slane %v5867, 5
  %v5870 = vor.u32 %v5866, %v5869
  %v5871 = vrot.slane %v5870, 4
  %v5873 = vshll.u32 %v5663, 16
  %v5875 = vrot.slane %v5873, 5
  %v5876 = vsel %vm135, %v5871, %v5875
  %v5877 = vshrl.u32 %v5663, 16
  %v5879 = vrot.slane %v5877, 4
  %v5880 = vor.u32 %v5879, %v5875
  %v5881 = vrot.slane %v5880, 4
  %v5883 = vshll.u32 %v5664, 16
  %v5885 = vrot.slane %v5883, 5
  %v5886 = vsel %vm135, %v5881, %v5885
  %v5888 = vshrl.u32 %v5665, 16
  %v5890 = vrot.slane %v5888, 4
  %v5891 = vshll.u32 %v5665, 16
  %v5893 = vrot.slane %v5891, 5
  %v5894 = vor.u32 %v5890, %v5893
  %v5895 = vrot.slane %v5894, 4
  %v5897 = vshll.u32 %v5666, 16
  %v5899 = vrot.slane %v5897, 5
  %v5900 = vsel %vm135, %v5895, %v5899
  %v5901 = vshrl.u32 %v5666, 16
  %v5903 = vrot.slane %v5901, 4
  %v5904 = vor.u32 %v5903, %v5899
  %v5905 = vrot.slane %v5904, 4
  %v5907 = vshll.u32 %v5667, 16
  %v5909 = vrot.slane %v5907, 5
  %v5910 = vsel %vm135, %v5905, %v5909
  %v5912 = vshrl.u32 %v5668, 16
  %v5914 = vrot.slane %v5912, 4
  %v5915 = vshll.u32 %v5668, 16
  %v5917 = vrot.slane %v5915, 5
  %v5918 = vor.u32 %v5914, %v5917
  %v5919 = vrot.slane %v5918, 4
  %v5921 = vshll.u32 %v5669, 16
  %v5923 = vrot.slane %v5921, 5
  %v5924 = vsel %vm135, %v5919, %v5923
  %v5925 = vshrl.u32 %v5669, 16
  %v5927 = vrot.slane %v5925, 4
  %v5928 = vor.u32 %v5927, %v5923
  %v5929 = vrot.slane %v5928, 4
  %v5931 = vshll.u32 %v5670, 16
  %v5933 = vrot.slane %v5931, 5
  %v5934 = vsel %vm135, %v5929, %v5933
  %v5936 = vshrl.u32 %v5671, 16
  %v5938 = vrot.slane %v5936, 4
  %v5939 = vshll.u32 %v5671, 16
  %v5941 = vrot.slane %v5939, 5
  %v5942 = vor.u32 %v5938, %v5941
  %v5943 = vrot.slane %v5942, 4
  %v5945 = vshll.u32 %v5672, 16
  %v5947 = vrot.slane %v5945, 5
  %v5948 = vsel %vm135, %v5943, %v5947
  %v5949 = vshrl.u32 %v5672, 16
  %v5951 = vrot.slane %v5949, 4
  %v5952 = vor.u32 %v5951, %v5947
  %v5953 = vrot.slane %v5952, 4
  %v5955 = vshll.u32 %v5673, 16
  %v5957 = vrot.slane %v5955, 5
  %v5958 = vsel %vm135, %v5953, %v5957
  %v5960 = vshrl.u32 %v5674, 16
  %v5962 = vrot.slane %v5960, 4
  %v5963 = vshll.u32 %v5674, 16
  %v5965 = vrot.slane %v5963, 5
  %v5966 = vor.u32 %v5962, %v5965
  %v5967 = vrot.slane %v5966, 4
  %v5969 = vshll.u32 %v5675, 16
  %v5971 = vrot.slane %v5969, 5
  %v5972 = vsel %vm135, %v5967, %v5971
  %v5973 = vshrl.u32 %v5675, 16
  %v5975 = vrot.slane %v5973, 4
  %v5976 = vor.u32 %v5975, %v5971
  %v5977 = vrot.slane %v5976, 4
  %v5979 = vshll.u32 %v5676, 16
  %v5981 = vrot.slane %v5979, 5
  %v5982 = vsel %vm135, %v5977, %v5981
  %v5984 = vshrl.u32 %v5677, 16
  %v5986 = vrot.slane %v5984, 4
  %v5987 = vshll.u32 %v5677, 16
  %v5989 = vrot.slane %v5987, 5
  %v5990 = vor.u32 %v5986, %v5989
  %v5991 = vrot.slane %v5990, 4
  %v5993 = vshll.u32 %v5678, 16
  %v5995 = vrot.slane %v5993, 5
  %v5996 = vsel %vm135, %v5991, %v5995
  %v5997 = vshrl.u32 %v5678, 16
  %v5999 = vrot.slane %v5997, 4
  %v6000 = vor.u32 %v5999, %v5995
  %v6001 = vrot.slane %v6000, 4
  %v6003 = vshll.u32 %v5679, 16
  %v6005 = vrot.slane %v6003, 5
  %v6006 = vsel %vm135, %v6001, %v6005
  %v6008 = vshrl.u32 %v5680, 16
  %v6010 = vrot.slane %v6008, 4
  %v6011 = vshll.u32 %v5680, 16
  %v6013 = vrot.slane %v6011, 5
  %v6014 = vor.u32 %v6010, %v6013
  %v6015 = vrot.slane %v6014, 4
  %v6017 = vshll.u32 %v5681, 16
  %v6019 = vrot.slane %v6017, 5
  %v6020 = vsel %vm135, %v6015, %v6019
  %v6021 = vshrl.u32 %v5681, 16
  %v6023 = vrot.slane %v6021, 4
  %v6024 = vor.u32 %v6023, %v6019
  %v6025 = vrot.slane %v6024, 4
  %v6027 = vshll.u32 %v5682, 16
  %v6029 = vrot.slane %v6027, 5
  %v6030 = vsel %vm135, %v6025, %v6029
  %v6032 = vshrl.u32 %v5683, 16
  %v6034 = vrot.slane %v6032, 4
  %v6035 = vshll.u32 %v5683, 16
  %v6037 = vrot.slane %v6035, 5
  %v6038 = vor.u32 %v6034, %v6037
  %v6039 = vrot.slane %v6038, 4
  %v6041 = vshll.u32 %v5684, 16
  %v6043 = vrot.slane %v6041, 5
  %v6044 = vsel %vm135, %v6039, %v6043
  %v6045 = vshrl.u32 %v5684, 16
  %v6047 = vrot.slane %v6045, 4
  %v6048 = vor.u32 %v6047, %v6043
  %v6049 = vrot.slane %v6048, 4
  %v6051 = vshll.u32 %v5685, 16
  %v6053 = vrot.slane %v6051, 5
  %v6054 = vsel %vm135, %v6049, %v6053
  %v6056 = vshrl.u32 %v5686, 16
  %v6058 = vrot.slane %v6056, 4
  %v6059 = vshll.u32 %v5686, 16
  %v6061 = vrot.slane %v6059, 5
  %v6062 = vor.u32 %v6058, %v6061
  %v6063 = vrot.slane %v6062, 4
  %v6065 = vshll.u32 %v5687, 16
  %v6067 = vrot.slane %v6065, 5
  %v6068 = vsel %vm135, %v6063, %v6067
  %v6069 = vshrl.u32 %v5687, 16
  %v6071 = vrot.slane %v6069, 4
  %v6072 = vor.u32 %v6071, %v6067
  %v6073 = vrot.slane %v6072, 4
  %v6075 = vshll.u32 %v5688, 16
  %v6077 = vrot.slane %v6075, 5
  %v6078 = vsel %vm135, %v6073, %v6077
  %v6080 = vshrl.u32 %v5689, 16
  %v6082 = vrot.slane %v6080, 4
  %v6083 = vshll.u32 %v5689, 16
  %v6085 = vrot.slane %v6083, 5
  %v6086 = vor.u32 %v6082, %v6085
  %v6087 = vrot.slane %v6086, 4
  %v6089 = vshll.u32 %v5690, 16
  %v6091 = vrot.slane %v6089, 5
  %v6092 = vsel %vm135, %v6087, %v6091
  %v6093 = vshrl.u32 %v5690, 16
  %v6095 = vrot.slane %v6093, 4
  %v6096 = vor.u32 %v6095, %v6091
  %v6097 = vrot.slane %v6096, 4
  %v6099 = vshll.u32 %v5691, 16
  %v6101 = vrot.slane %v6099, 5
  %v6102 = vsel %vm135, %v6097, %v6101
  %v6104 = vshrl.u32 %v5692, 16
  %v6106 = vrot.slane %v6104, 4
  %v6107 = vshll.u32 %v5692, 16
  %v6109 = vrot.slane %v6107, 5
  %v6110 = vor.u32 %v6106, %v6109
  %v6111 = vrot.slane %v6110, 4
  %v6113 = vshll.u32 %v5693, 16
  %v6115 = vrot.slane %v6113, 5
  %v6116 = vsel %vm135, %v6111, %v6115
  %v6117 = vshrl.u32 %v5693, 16
  %v6119 = vrot.slane %v6117, 4
  %v6120 = vor.u32 %v6119, %v6115
  %v6121 = vrot.slane %v6120, 4
  %v6123 = vshll.u32 %v5694, 16
  %v6125 = vrot.slane %v6123, 5
  %v6126 = vsel %vm135, %v6121, %v6125
  %v6128 = vshrl.u32 %v5695, 16
  %v6130 = vrot.slane %v6128, 4
  %v6131 = vshll.u32 %v5695, 16
  %v6133 = vrot.slane %v6131, 5
  %v6134 = vor.u32 %v6130, %v6133
  %v6135 = vrot.slane %v6134, 4
  %v6137 = vshll.u32 %v5696, 16
  %v6139 = vrot.slane %v6137, 5
  %v6140 = vsel %vm135, %v6135, %v6139
  %v6141 = vshrl.u32 %v5696, 16
  %v6143 = vrot.slane %v6141, 4
  %v6144 = vor.u32 %v6143, %v6139
  %v6145 = vrot.slane %v6144, 4
  %v6147 = vshll.u32 %v5697, 16
  %v6149 = vrot.slane %v6147, 5
  %v6150 = vsel %vm135, %v6145, %v6149
  %v6152 = vshrl.u32 %v5698, 16
  %v6154 = vrot.slane %v6152, 4
  %v6155 = vshll.u32 %v5698, 16
  %v6157 = vrot.slane %v6155, 5
  %v6158 = vor.u32 %v6154, %v6157
  %v6159 = vrot.slane %v6158, 4
  %v6161 = vshll.u32 %v5699, 16
  %v6163 = vrot.slane %v6161, 5
  %v6164 = vsel %vm135, %v6159, %v6163
  %v6165 = vshrl.u32 %v5699, 16
  %v6167 = vrot.slane %v6165, 4
  %v6168 = vor.u32 %v6167, %v6163
  %v6169 = vrot.slane %v6168, 4
  %v6171 = vshll.u32 %v5700, 16
  %v6173 = vrot.slane %v6171, 5
  %v6174 = vsel %vm135, %v6169, %v6173
  %v6176 = vshrl.u32 %v5701, 16
  %v6178 = vrot.slane %v6176, 4
  %v6179 = vshll.u32 %v5701, 16
  %v6181 = vrot.slane %v6179, 5
  %v6182 = vor.u32 %v6178, %v6181
  %v6183 = vrot.slane %v6182, 4
  %v6185 = vshll.u32 %v5702, 16
  %v6187 = vrot.slane %v6185, 5
  %v6188 = vsel %vm135, %v6183, %v6187
  %v6189 = vshrl.u32 %v5702, 16
  %v6191 = vrot.slane %v6189, 4
  %v6192 = vor.u32 %v6191, %v6187
  %v6193 = vrot.slane %v6192, 4
  %v6195 = vshll.u32 %v5703, 16
  %v6197 = vrot.slane %v6195, 5
  %v6198 = vsel %vm135, %v6193, %v6197
  %v6200 = vshrl.u32 %v5704, 16
  %v6202 = vrot.slane %v6200, 4
  %v6203 = vshll.u32 %v5704, 16
  %v6205 = vrot.slane %v6203, 5
  %v6206 = vor.u32 %v6202, %v6205
  %v6207 = vrot.slane %v6206, 4
  %v6209 = vshll.u32 %v5705, 16
  %v6211 = vrot.slane %v6209, 5
  %v6212 = vsel %vm135, %v6207, %v6211
  %v6213 = vshrl.u32 %v5705, 16
  %v6215 = vrot.slane %v6213, 4
  %v6216 = vor.u32 %v6215, %v6211
  %v6217 = vrot.slane %v6216, 4
  %v6219 = vshll.u32 %v5706, 16
  %v6221 = vrot.slane %v6219, 5
  %v6222 = vsel %vm135, %v6217, %v6221
  %v6224 = vshrl.u32 %v5707, 16
  %v6226 = vrot.slane %v6224, 4
  %v6227 = vshll.u32 %v5707, 16
  %v6229 = vrot.slane %v6227, 5
  %v6230 = vor.u32 %v6226, %v6229
  %v6231 = vrot.slane %v6230, 4
  %v6233 = vshll.u32 %v5708, 16
  %v6235 = vrot.slane %v6233, 5
  %v6236 = vsel %vm135, %v6231, %v6235
  %v6237 = vshrl.u32 %v5708, 16
  %v6239 = vrot.slane %v6237, 4
  %v6240 = vor.u32 %v6239, %v6235
  %v6241 = vrot.slane %v6240, 4
  %v6243 = vshll.u32 %v5709, 16
  %v6245 = vrot.slane %v6243, 5
  %v6246 = vsel %vm135, %v6241, %v6245
  %v6248 = vshrl.u32 %v5710, 16
  %v6250 = vrot.slane %v6248, 4
  %v6251 = vshll.u32 %v5710, 16
  %v6253 = vrot.slane %v6251, 5
  %v6254 = vor.u32 %v6250, %v6253
  %v6255 = vrot.slane %v6254, 4
  %v6257 = vshll.u32 %v5711, 16
  %v6259 = vrot.slane %v6257, 5
  %v6260 = vsel %vm135, %v6255, %v6259
  %v6261 = vshrl.u32 %v5711, 16
  %v6263 = vrot.slane %v6261, 4
  %v6264 = vor.u32 %v6263, %v6259
  %v6265 = vrot.slane %v6264, 4
  %v6267 = vshll.u32 %v5712, 16
  %v6269 = vrot.slane %v6267, 5
  %v6270 = vsel %vm135, %v6265, %v6269
  %v6272 = vshrl.u32 %v5713, 16
  %v6274 = vrot.slane %v6272, 4
  %v6275 = vshll.u32 %v5713, 16
  %v6277 = vrot.slane %v6275, 5
  %v6278 = vor.u32 %v6274, %v6277
  %v6279 = vrot.slane %v6278, 4
  %v6281 = vshll.u32 %v5714, 16
  %v6283 = vrot.slane %v6281, 5
  %v6284 = vsel %vm135, %v6279, %v6283
  %v6285 = vshrl.u32 %v5714, 16
  %v6287 = vrot.slane %v6285, 4
  %v6288 = vor.u32 %v6287, %v6283
  %v6289 = vrot.slane %v6288, 4
  %v6291 = vshll.u32 %v5715, 16
  %v6293 = vrot.slane %v6291, 5
  %v6294 = vsel %vm135, %v6289, %v6293
  %v6296 = vshrl.u32 %v5716, 16
  %v6298 = vrot.slane %v6296, 4
  %v6299 = vshll.u32 %v5716, 16
  %v6301 = vrot.slane %v6299, 5
  %v6302 = vor.u32 %v6298, %v6301
  %v6303 = vrot.slane %v6302, 4
  %v6305 = vshll.u32 %v5717, 16
  %v6307 = vrot.slane %v6305, 5
  %v6308 = vsel %vm135, %v6303, %v6307
  %v6309 = vshrl.u32 %v5717, 16
  %v6311 = vrot.slane %v6309, 4
  %v6312 = vor.u32 %v6311, %v6307
  %v6313 = vrot.slane %v6312, 4
  %v6315 = vshll.u32 %v5718, 16
  %v6317 = vrot.slane %v6315, 5
  %v6318 = vsel %vm135, %v6313, %v6317
  %v6320 = vshrl.u32 %v5719, 16
  %v6322 = vrot.slane %v6320, 4
  %v6323 = vshll.u32 %v5719, 16
  %v6325 = vrot.slane %v6323, 5
  %v6326 = vor.u32 %v6322, %v6325
  %v6327 = vrot.slane %v6326, 4
  %v6329 = vshll.u32 %v5720, 16
  %v6331 = vrot.slane %v6329, 5
  %v6332 = vsel %vm135, %v6327, %v6331
  %v6333 = vshrl.u32 %v5720, 16
  %v6335 = vrot.slane %v6333, 4
  %v6336 = vor.u32 %v6335, %v6331
  %v6337 = vrot.slane %v6336, 4
  %v6339 = vshll.u32 %v5721, 16
  %v6341 = vrot.slane %v6339, 5
  %v6342 = vsel %vm135, %v6337, %v6341
  %v6344 = vshrl.u32 %v5722, 16
  %v6346 = vrot.slane %v6344, 4
  %v6347 = vshll.u32 %v5722, 16
  %v6349 = vrot.slane %v6347, 5
  %v6350 = vor.u32 %v6346, %v6349
  %v6351 = vrot.slane %v6350, 4
  %v6353 = vshll.u32 %v5723, 16
  %v6355 = vrot.slane %v6353, 5
  %v6356 = vsel %vm135, %v6351, %v6355
  %v6357 = vshrl.u32 %v5723, 16
  %v6359 = vrot.slane %v6357, 4
  %v6360 = vor.u32 %v6359, %v6355
  %v6361 = vrot.slane %v6360, 4
  %v6363 = vshll.u32 %v5724, 16
  %v6365 = vrot.slane %v6363, 5
  %v6366 = vsel %vm135, %v6361, %v6365
  %v6368 = vshrl.u32 %v5725, 16
  %v6370 = vrot.slane %v6368, 4
  %v6371 = vshll.u32 %v5725, 16
  %v6373 = vrot.slane %v6371, 5
  %v6374 = vor.u32 %v6370, %v6373
  %v6375 = vrot.slane %v6374, 4
  %v6377 = vshll.u32 %v5726, 16
  %v6379 = vrot.slane %v6377, 5
  %v6380 = vsel %vm135, %v6375, %v6379
  %v6381 = vshrl.u32 %v5726, 16
  %v6383 = vrot.slane %v6381, 4
  %v6384 = vor.u32 %v6383, %v6379
  %v6385 = vrot.slane %v6384, 4
  %v6387 = vshll.u32 %v5727, 16
  %v6389 = vrot.slane %v6387, 5
  %v6390 = vsel %vm135, %v6385, %v6389
  %v6392 = vshrl.u32 %v5728, 16
  %v6394 = vrot.slane %v6392, 4
  %v6395 = vshll.u32 %v5728, 16
  %v6397 = vrot.slane %v6395, 5
  %v6398 = vor.u32 %v6394, %v6397
  %v6399 = vrot.slane %v6398, 4
  %v6401 = vshll.u32 %v5729, 16
  %v6403 = vrot.slane %v6401, 5
  %v6404 = vsel %vm135, %v6399, %v6403
  %v6405 = vshrl.u32 %v5729, 16
  %v6407 = vrot.slane %v6405, 4
  %v6408 = vor.u32 %v6407, %v6403
  %v6409 = vrot.slane %v6408, 4
  %v6411 = vshll.u32 %v5730, 16
  %v6413 = vrot.slane %v6411, 5
  %v6414 = vsel %vm135, %v6409, %v6413
  %v6416 = vshrl.u32 %v5731, 16
  %v6418 = vrot.slane %v6416, 4
  %v6419 = vshll.u32 %v5731, 16
  %v6421 = vrot.slane %v6419, 5
  %v6422 = vor.u32 %v6418, %v6421
  %v6423 = vrot.slane %v6422, 4
  %v6425 = vshll.u32 %v5732, 16
  %v6427 = vrot.slane %v6425, 5
  %v6428 = vsel %vm135, %v6423, %v6427
  %v6429 = vshrl.u32 %v5732, 16
  %v6431 = vrot.slane %v6429, 4
  %v6432 = vor.u32 %v6431, %v6427
  %v6433 = vrot.slane %v6432, 4
  %v6435 = vshll.u32 %v5733, 16
  %v6437 = vrot.slane %v6435, 5
  %v6438 = vsel %vm135, %v6433, %v6437
  %v6440 = vshrl.u32 %v5734, 16
  %v6442 = vrot.slane %v6440, 4
  %v6443 = vshll.u32 %v5734, 16
  %v6445 = vrot.slane %v6443, 5
  %v6446 = vor.u32 %v6442, %v6445
  %v6447 = vrot.slane %v6446, 4
  %v6449 = vshll.u32 %v5735, 16
  %v6451 = vrot.slane %v6449, 5
  %v6452 = vsel %vm135, %v6447, %v6451
  %v6453 = vshrl.u32 %v5735, 16
  %v6455 = vrot.slane %v6453, 4
  %v6456 = vor.u32 %v6455, %v6451
  %v6457 = vrot.slane %v6456, 4
  %v6459 = vshll.u32 %v5736, 16
  %v6461 = vrot.slane %v6459, 5
  %v6462 = vsel %vm135, %v6457, %v6461
  %v6464 = vshrl.u32 %v5737, 16
  %v6466 = vrot.slane %v6464, 4
  %v6467 = vshll.u32 %v5737, 16
  %v6469 = vrot.slane %v6467, 5
  %v6470 = vor.u32 %v6466, %v6469
  %v6471 = vrot.slane %v6470, 4
  %v6473 = vshll.u32 %v5738, 16
  %v6475 = vrot.slane %v6473, 5
  %v6476 = vsel %vm135, %v6471, %v6475
  %v6477 = vshrl.u32 %v5738, 16
  %v6479 = vrot.slane %v6477, 4
  %v6480 = vor.u32 %v6479, %v6475
  %v6481 = vrot.slane %v6480, 4
  %v6483 = vshll.u32 %v5739, 16
  %v6485 = vrot.slane %v6483, 5
  %v6486 = vsel %vm135, %v6481, %v6485
  %v6488 = vshrl.u32 %v5740, 16
  %v6490 = vrot.slane %v6488, 4
  %v6491 = vshll.u32 %v5740, 16
  %v6493 = vrot.slane %v6491, 5
  %v6494 = vor.u32 %v6490, %v6493
  %v6495 = vrot.slane %v6494, 4
  %v6497 = vshll.u32 %v5741, 16
  %v6499 = vrot.slane %v6497, 5
  %v6500 = vsel %vm135, %v6495, %v6499
  %v6501 = vshrl.u32 %v5741, 16
  %v6503 = vrot.slane %v6501, 4
  %v6504 = vor.u32 %v6503, %v6499
  %v6505 = vrot.slane %v6504, 4
  %v6507 = vshll.u32 %v5742, 16
  %v6509 = vrot.slane %v6507, 5
  %v6510 = vsel %vm135, %v6505, %v6509
  %s6511 = scalar_lea.vmem %s1, 14
  %v6512 = vld [vmem:[%s6511] sm:$0x3]
  %v6513 = vunpack.c.l.b16 %v5756
  %v6514 = vunpack.c.l.b16 %v5766
  %v6515 = vunpack.c.l.b16 %v5780
  %v6516 = vunpack.c.l.b16 %v5790
  %v6517 = vunpack.c.l.b16 %v5804
  %v6518 = vunpack.c.l.b16 %v5814
  %v6519 = vunpack.c.l.b16 %v5828
  %v6520 = vunpack.c.l.b16 %v5838
  %v6521 = vunpack.c.l.b16 %v5852
  %v6522 = vunpack.c.l.b16 %v5862
  %v6523 = vunpack.c.l.b16 %v5876
  %v6524 = vunpack.c.l.b16 %v5886
  %v6525 = vunpack.c.l.b16 %v5900
  %v6526 = vunpack.c.l.b16 %v5910
  %v6527 = vunpack.c.l.b16 %v5924
  %v6528 = vunpack.c.l.b16 %v5934
  %v6529 = vunpack.c.l.b16 %v5948
  %v6530 = vunpack.c.l.b16 %v5958
  %v6531 = vunpack.c.l.b16 %v5972
  %v6532 = vunpack.c.l.b16 %v5982
  %v6533 = vunpack.c.l.b16 %v5996
  %v6534 = vunpack.c.l.b16 %v6006
  %v6535 = vunpack.c.l.b16 %v6020
  %v6536 = vunpack.c.l.b16 %v6030
  %v6537 = vunpack.c.l.b16 %v6044
  %v6538 = vunpack.c.l.b16 %v6054
  %v6539 = vunpack.c.l.b16 %v6068
  %v6540 = vunpack.c.l.b16 %v6078
  %v6541 = vunpack.c.l.b16 %v6092
  %v6542 = vunpack.c.l.b16 %v6102
  %v6543 = vunpack.c.l.b16 %v6116
  %v6544 = vunpack.c.l.b16 %v6126
  %v6545 = vunpack.c.l.b16 %v6140
  %v6546 = vunpack.c.l.b16 %v6150
  %v6547 = vunpack.c.l.b16 %v6164
  %v6548 = vunpack.c.l.b16 %v6174
  %v6549 = vunpack.c.l.b16 %v6188
  %v6550 = vunpack.c.l.b16 %v6198
  %v6551 = vunpack.c.l.b16 %v6212
  %v6552 = vunpack.c.l.b16 %v6222
  %v6553 = vunpack.c.l.b16 %v6236
  %v6554 = vunpack.c.l.b16 %v6246
  %v6555 = vunpack.c.l.b16 %v6260
  %v6556 = vunpack.c.l.b16 %v6270
  %v6557 = vunpack.c.l.b16 %v6284
  %v6558 = vunpack.c.l.b16 %v6294
  %v6559 = vunpack.c.l.b16 %v6308
  %v6560 = vunpack.c.l.b16 %v6318
  %v6561 = vunpack.c.l.b16 %v6332
  %v6562 = vunpack.c.l.b16 %v6342
  %v6563 = vunpack.c.l.b16 %v6356
  %v6564 = vunpack.c.l.b16 %v6366
  %v6565 = vunpack.c.l.b16 %v6380
  %v6566 = vunpack.c.l.b16 %v6390
  %v6567 = vunpack.c.l.b16 %v6404
  %v6568 = vunpack.c.l.b16 %v6414
  %v6569 = vunpack.c.l.b16 %v6428
  %v6570 = vunpack.c.l.b16 %v6438
  %v6571 = vunpack.c.l.b16 %v6452
  %v6572 = vunpack.c.l.b16 %v6462
  %v6573 = vunpack.c.l.b16 %v6476
  %v6574 = vunpack.c.l.b16 %v6486
  %v6575 = vunpack.c.l.b16 %v6500
  %v6576 = vunpack.c.l.b16 %v6510
  %v6577 = vpack.c.b16 %v6514, %v6513
  %v6578 = vpack.c.b16 %v6516, %v6515
  %v6579 = vpack.c.b16 %v6518, %v6517
  %v6580 = vpack.c.b16 %v6520, %v6519
  %v6581 = vpack.c.b16 %v6522, %v6521
  %v6582 = vpack.c.b16 %v6524, %v6523
  %v6583 = vpack.c.b16 %v6526, %v6525
  %v6584 = vpack.c.b16 %v6528, %v6527
  %v6585 = vpack.c.b16 %v6530, %v6529
  %v6586 = vpack.c.b16 %v6532, %v6531
  %v6587 = vpack.c.b16 %v6534, %v6533
  %v6588 = vpack.c.b16 %v6536, %v6535
  %v6589 = vpack.c.b16 %v6538, %v6537
  %v6590 = vpack.c.b16 %v6540, %v6539
  %v6591 = vpack.c.b16 %v6542, %v6541
  %v6592 = vpack.c.b16 %v6544, %v6543
  %v6593 = vpack.c.b16 %v6546, %v6545
  %v6594 = vpack.c.b16 %v6548, %v6547
  %v6595 = vpack.c.b16 %v6550, %v6549
  %v6596 = vpack.c.b16 %v6552, %v6551
  %v6597 = vpack.c.b16 %v6554, %v6553
  %v6598 = vpack.c.b16 %v6556, %v6555
  %v6599 = vpack.c.b16 %v6558, %v6557
  %v6600 = vpack.c.b16 %v6560, %v6559
  %v6601 = vpack.c.b16 %v6562, %v6561
  %v6602 = vpack.c.b16 %v6564, %v6563
  %v6603 = vpack.c.b16 %v6566, %v6565
  %v6604 = vpack.c.b16 %v6568, %v6567
  %v6605 = vpack.c.b16 %v6570, %v6569
  %v6606 = vpack.c.b16 %v6572, %v6571
  %v6607 = vpack.c.b16 %v6574, %v6573
  %v6608 = vpack.c.b16 %v6576, %v6575
  %v6610 = vsel %vm1002, %v6577, 0
  %v6613 = vsel %vm1002, %v6578, 0
  %v6616 = vsel %vm1002, %v6579, 0
  %v6619 = vsel %vm1002, %v6580, 0
  %v6622 = vsel %vm1002, %v6581, 0
  %v6625 = vsel %vm1002, %v6582, 0
  %v6628 = vsel %vm1002, %v6583, 0
  %v6631 = vsel %vm1002, %v6584, 0
  %v6634 = vsel %vm1002, %v6585, 0
  %v6637 = vsel %vm1002, %v6586, 0
  %v6640 = vsel %vm1002, %v6587, 0
  %v6643 = vsel %vm1002, %v6588, 0
  %v6646 = vsel %vm1002, %v6589, 0
  %v6649 = vsel %vm1002, %v6590, 0
  %v6652 = vsel %vm1002, %v6591, 0
  %v6655 = vsel %vm1002, %v6592, 0
  %v6658 = vsel %vm1002, %v6593, 0
  %v6661 = vsel %vm1002, %v6594, 0
  %v6664 = vsel %vm1002, %v6595, 0
  %v6667 = vsel %vm1002, %v6596, 0
  %v6670 = vsel %vm1002, %v6597, 0
  %v6673 = vsel %vm1002, %v6598, 0
  %v6676 = vsel %vm1002, %v6599, 0
  %v6679 = vsel %vm1002, %v6600, 0
  %v6682 = vsel %vm1002, %v6601, 0
  %v6685 = vsel %vm1002, %v6602, 0
  %v6688 = vsel %vm1002, %v6603, 0
  %v6691 = vsel %vm1002, %v6604, 0
  %v6694 = vsel %vm1002, %v6605, 0
  %v6697 = vsel %vm1002, %v6606, 0
  %v6700 = vsel %vm1002, %v6607, 0
  %v6703 = vsel %vm1002, %v6608, 0
  %v6706 = vsel %vm1099, %v6512, 0
  %6708 = vmatpush.bf16.msra.mxu0 0
  %6709 = vmatpush.bf16.msra.mxu0 0
  %6710 = vmatpush.bf16.msra.mxu0 0
  %6711 = vmatpush.bf16.msra.mxu0 0
  %6712 = vmatpush.bf16.msra.mxu0 0
  %6713 = vmatpush.bf16.msra.mxu0 0
  %6714 = vmatpush.bf16.msra.mxu0 0
  %6715 = vmatpush.bf16.msra.mxu0 %v6706
  %6716 = vmatmul.bf16.gmra.mxu0 %v6610
  %v6717 = vpop.f32.mrf.mxu0
  %v6718 = vadd.f32 0.0, %v6717
  %v6719 = vpop.f32.mrf.mxu0
  %v6720 = vadd.f32 0.0, %v6719
  %6721 = vmatmul.bf16.gmra.mxu0 %v6613
  %v6722 = vpop.f32.mrf.mxu0
  %v6723 = vadd.f32 0.0, %v6722
  %v6724 = vpop.f32.mrf.mxu0
  %v6725 = vadd.f32 0.0, %v6724
  %6726 = vmatmul.bf16.gmra.mxu0 %v6616
  %v6727 = vpop.f32.mrf.mxu0
  %v6728 = vadd.f32 0.0, %v6727
  %v6729 = vpop.f32.mrf.mxu0
  %v6730 = vadd.f32 0.0, %v6729
  %6731 = vmatmul.bf16.gmra.mxu0 %v6619
  %v6732 = vpop.f32.mrf.mxu0
  %v6733 = vadd.f32 0.0, %v6732
  %v6734 = vpop.f32.mrf.mxu0
  %v6735 = vadd.f32 0.0, %v6734
  %6736 = vmatmul.bf16.gmra.mxu0 %v6622
  %v6737 = vpop.f32.mrf.mxu0
  %v6738 = vadd.f32 0.0, %v6737
  %v6739 = vpop.f32.mrf.mxu0
  %v6740 = vadd.f32 0.0, %v6739
  %6741 = vmatmul.bf16.gmra.mxu0 %v6625
  %v6742 = vpop.f32.mrf.mxu0
  %v6743 = vadd.f32 0.0, %v6742
  %v6744 = vpop.f32.mrf.mxu0
  %v6745 = vadd.f32 0.0, %v6744
  %6746 = vmatmul.bf16.gmra.mxu0 %v6628
  %v6747 = vpop.f32.mrf.mxu0
  %v6748 = vadd.f32 0.0, %v6747
  %v6749 = vpop.f32.mrf.mxu0
  %v6750 = vadd.f32 0.0, %v6749
  %6751 = vmatmul.bf16.gmra.mxu0 %v6631
  %v6752 = vpop.f32.mrf.mxu0
  %v6753 = vadd.f32 0.0, %v6752
  %v6754 = vpop.f32.mrf.mxu0
  %v6755 = vadd.f32 0.0, %v6754
  %6756 = vmatmul.bf16.gmra.mxu0 %v6634
  %v6757 = vpop.f32.mrf.mxu0
  %v6758 = vadd.f32 0.0, %v6757
  %v6759 = vpop.f32.mrf.mxu0
  %v6760 = vadd.f32 0.0, %v6759
  %6761 = vmatmul.bf16.gmra.mxu0 %v6637
  %v6762 = vpop.f32.mrf.mxu0
  %v6763 = vadd.f32 0.0, %v6762
  %v6764 = vpop.f32.mrf.mxu0
  %v6765 = vadd.f32 0.0, %v6764
  %6766 = vmatmul.bf16.gmra.mxu0 %v6640
  %v6767 = vpop.f32.mrf.mxu0
  %v6768 = vadd.f32 0.0, %v6767
  %v6769 = vpop.f32.mrf.mxu0
  %v6770 = vadd.f32 0.0, %v6769
  %6771 = vmatmul.bf16.gmra.mxu0 %v6643
  %v6772 = vpop.f32.mrf.mxu0
  %v6773 = vadd.f32 0.0, %v6772
  %v6774 = vpop.f32.mrf.mxu0
  %v6775 = vadd.f32 0.0, %v6774
  %6776 = vmatmul.bf16.gmra.mxu0 %v6646
  %v6777 = vpop.f32.mrf.mxu0
  %v6778 = vadd.f32 0.0, %v6777
  %v6779 = vpop.f32.mrf.mxu0
  %v6780 = vadd.f32 0.0, %v6779
  %6781 = vmatmul.bf16.gmra.mxu0 %v6649
  %v6782 = vpop.f32.mrf.mxu0
  %v6783 = vadd.f32 0.0, %v6782
  %v6784 = vpop.f32.mrf.mxu0
  %v6785 = vadd.f32 0.0, %v6784
  %6786 = vmatmul.bf16.gmra.mxu0 %v6652
  %v6787 = vpop.f32.mrf.mxu0
  %v6788 = vadd.f32 0.0, %v6787
  %v6789 = vpop.f32.mrf.mxu0
  %v6790 = vadd.f32 0.0, %v6789
  %6791 = vmatmul.bf16.gmra.mxu0 %v6655
  %v6792 = vpop.f32.mrf.mxu0
  %v6793 = vadd.f32 0.0, %v6792
  %v6794 = vpop.f32.mrf.mxu0
  %v6795 = vadd.f32 0.0, %v6794
  %6796 = vmatmul.bf16.gmra.mxu0 %v6658
  %v6797 = vpop.f32.mrf.mxu0
  %v6798 = vadd.f32 0.0, %v6797
  %v6799 = vpop.f32.mrf.mxu0
  %v6800 = vadd.f32 0.0, %v6799
  %6801 = vmatmul.bf16.gmra.mxu0 %v6661
  %v6802 = vpop.f32.mrf.mxu0
  %v6803 = vadd.f32 0.0, %v6802
  %v6804 = vpop.f32.mrf.mxu0
  %v6805 = vadd.f32 0.0, %v6804
  %6806 = vmatmul.bf16.gmra.mxu0 %v6664
  %v6807 = vpop.f32.mrf.mxu0
  %v6808 = vadd.f32 0.0, %v6807
  %v6809 = vpop.f32.mrf.mxu0
  %v6810 = vadd.f32 0.0, %v6809
  %6811 = vmatmul.bf16.gmra.mxu0 %v6667
  %v6812 = vpop.f32.mrf.mxu0
  %v6813 = vadd.f32 0.0, %v6812
  %v6814 = vpop.f32.mrf.mxu0
  %v6815 = vadd.f32 0.0, %v6814
  %6816 = vmatmul.bf16.gmra.mxu0 %v6670
  %v6817 = vpop.f32.mrf.mxu0
  %v6818 = vadd.f32 0.0, %v6817
  %v6819 = vpop.f32.mrf.mxu0
  %v6820 = vadd.f32 0.0, %v6819
  %6821 = vmatmul.bf16.gmra.mxu0 %v6673
  %v6822 = vpop.f32.mrf.mxu0
  %v6823 = vadd.f32 0.0, %v6822
  %v6824 = vpop.f32.mrf.mxu0
  %v6825 = vadd.f32 0.0, %v6824
  %6826 = vmatmul.bf16.gmra.mxu0 %v6676
  %v6827 = vpop.f32.mrf.mxu0
  %v6828 = vadd.f32 0.0, %v6827
  %v6829 = vpop.f32.mrf.mxu0
  %v6830 = vadd.f32 0.0, %v6829
  %6831 = vmatmul.bf16.gmra.mxu0 %v6679
  %v6832 = vpop.f32.mrf.mxu0
  %v6833 = vadd.f32 0.0, %v6832
  %v6834 = vpop.f32.mrf.mxu0
  %v6835 = vadd.f32 0.0, %v6834
  %6836 = vmatmul.bf16.gmra.mxu0 %v6682
  %v6837 = vpop.f32.mrf.mxu0
  %v6838 = vadd.f32 0.0, %v6837
  %v6839 = vpop.f32.mrf.mxu0
  %v6840 = vadd.f32 0.0, %v6839
  %6841 = vmatmul.bf16.gmra.mxu0 %v6685
  %v6842 = vpop.f32.mrf.mxu0
  %v6843 = vadd.f32 0.0, %v6842
  %v6844 = vpop.f32.mrf.mxu0
  %v6845 = vadd.f32 0.0, %v6844
  %6846 = vmatmul.bf16.gmra.mxu0 %v6688
  %v6847 = vpop.f32.mrf.mxu0
  %v6848 = vadd.f32 0.0, %v6847
  %v6849 = vpop.f32.mrf.mxu0
  %v6850 = vadd.f32 0.0, %v6849
  %6851 = vmatmul.bf16.gmra.mxu0 %v6691
  %v6852 = vpop.f32.mrf.mxu0
  %v6853 = vadd.f32 0.0, %v6852
  %v6854 = vpop.f32.mrf.mxu0
  %v6855 = vadd.f32 0.0, %v6854
  %6856 = vmatmul.bf16.gmra.mxu0 %v6694
  %v6857 = vpop.f32.mrf.mxu0
  %v6858 = vadd.f32 0.0, %v6857
  %v6859 = vpop.f32.mrf.mxu0
  %v6860 = vadd.f32 0.0, %v6859
  %6861 = vmatmul.bf16.gmra.mxu0 %v6697
  %v6862 = vpop.f32.mrf.mxu0
  %v6863 = vadd.f32 0.0, %v6862
  %v6864 = vpop.f32.mrf.mxu0
  %v6865 = vadd.f32 0.0, %v6864
  %6866 = vmatmul.bf16.gmra.mxu0 %v6700
  %v6867 = vpop.f32.mrf.mxu0
  %v6868 = vadd.f32 0.0, %v6867
  %v6869 = vpop.f32.mrf.mxu0
  %v6870 = vadd.f32 0.0, %v6869
  %6871 = vmatmul.bf16.gmra.mxu0 %v6703
  %v6872 = vpop.f32.mrf.mxu0
  %v6873 = vadd.f32 0.0, %v6872
  %v6874 = vpop.f32.mrf.mxu0
  %v6875 = vadd.f32 0.0, %v6874
  %6876 = vdwg.mxu0
  %v6877 = vadd.f32 %v5583, %v6718
  %v6878 = vadd.f32 %v5584, %v6720
  %v6879 = vadd.f32 %v5585, %v6723
  %v6880 = vadd.f32 %v5586, %v6725
  %v6881 = vadd.f32 %v5587, %v6728
  %v6882 = vadd.f32 %v5588, %v6730
  %v6883 = vadd.f32 %v5589, %v6733
  %v6884 = vadd.f32 %v5590, %v6735
  %v6885 = vadd.f32 %v5591, %v6738
  %v6886 = vadd.f32 %v5592, %v6740
  %v6887 = vadd.f32 %v5593, %v6743
  %v6888 = vadd.f32 %v5594, %v6745
  %v6889 = vadd.f32 %v5595, %v6748
  %v6890 = vadd.f32 %v5596, %v6750
  %v6891 = vadd.f32 %v5597, %v6753
  %v6892 = vadd.f32 %v5598, %v6755
  %v6893 = vadd.f32 %v5599, %v6758
  %v6894 = vadd.f32 %v5600, %v6760
  %v6895 = vadd.f32 %v5601, %v6763
  %v6896 = vadd.f32 %v5602, %v6765
  %v6897 = vadd.f32 %v5603, %v6768
  %v6898 = vadd.f32 %v5604, %v6770
  %v6899 = vadd.f32 %v5605, %v6773
  %v6900 = vadd.f32 %v5606, %v6775
  %v6901 = vadd.f32 %v5607, %v6778
  %v6902 = vadd.f32 %v5608, %v6780
  %v6903 = vadd.f32 %v5609, %v6783
  %v6904 = vadd.f32 %v5610, %v6785
  %v6905 = vadd.f32 %v5611, %v6788
  %v6906 = vadd.f32 %v5612, %v6790
  %v6907 = vadd.f32 %v5613, %v6793
  %v6908 = vadd.f32 %v5614, %v6795
  %v6909 = vadd.f32 %v5615, %v6798
  %v6910 = vadd.f32 %v5616, %v6800
  %v6911 = vadd.f32 %v5617, %v6803
  %v6912 = vadd.f32 %v5618, %v6805
  %v6913 = vadd.f32 %v5619, %v6808
  %v6914 = vadd.f32 %v5620, %v6810
  %v6915 = vadd.f32 %v5621, %v6813
  %v6916 = vadd.f32 %v5622, %v6815
  %v6917 = vadd.f32 %v5623, %v6818
  %v6918 = vadd.f32 %v5624, %v6820
  %v6919 = vadd.f32 %v5625, %v6823
  %v6920 = vadd.f32 %v5626, %v6825
  %v6921 = vadd.f32 %v5627, %v6828
  %v6922 = vadd.f32 %v5628, %v6830
  %v6923 = vadd.f32 %v5629, %v6833
  %v6924 = vadd.f32 %v5630, %v6835
  %v6925 = vadd.f32 %v5631, %v6838
  %v6926 = vadd.f32 %v5632, %v6840
  %v6927 = vadd.f32 %v5633, %v6843
  %v6928 = vadd.f32 %v5634, %v6845
  %v6929 = vadd.f32 %v5635, %v6848
  %v6930 = vadd.f32 %v5636, %v6850
  %v6931 = vadd.f32 %v5637, %v6853
  %v6932 = vadd.f32 %v5638, %v6855
  %v6933 = vadd.f32 %v5639, %v6858
  %v6934 = vadd.f32 %v5640, %v6860
  %v6935 = vadd.f32 %v5641, %v6863
  %v6936 = vadd.f32 %v5642, %v6865
  %v6937 = vadd.f32 %v5643, %v6868
  %v6938 = vadd.f32 %v5644, %v6870
  %v6939 = vadd.f32 %v5645, %v6873
  %v6940 = vadd.f32 %v5646, %v6875
  %v6941 = vld [vmem:[%s5088] sm:$0xe]
  %v6942 = vld [vmem:[%s5088 + $0xc] sm:$0xe]
  %v6943 = vld [vmem:[%s5088 + $0x18] sm:$0xe]
  %v6944 = vld [vmem:[%s5088 + $0x24] sm:$0xe]
  %v6945 = vld [vmem:[%s5088 + $0x30] sm:$0xe]
  %v6946 = vld [vmem:[%s5088 + $0x3c] sm:$0xe]
  %v6947 = vld [vmem:[%s5088 + $0x48] sm:$0xe]
  %v6948 = vld [vmem:[%s5088 + $0x54] sm:$0xe]
  %v6949 = vld [vmem:[%s5088 + $0x60] sm:$0xe]
  %v6950 = vld [vmem:[%s5088 + $0x6c] sm:$0xe]
  %v6951 = vld [vmem:[%s5088 + $0x78] sm:$0xe]
  %v6952 = vld [vmem:[%s5088 + $0x84] sm:$0xe]
  %v6953 = vld [vmem:[%s5088 + $0x90] sm:$0xe]
  %v6954 = vld [vmem:[%s5088 + $0x9c] sm:$0xe]
  %v6955 = vld [vmem:[%s5088 + $0xa8] sm:$0xe]
  %v6956 = vld [vmem:[%s5088 + $0xb4] sm:$0xe]
  %v6957 = vld [vmem:[%s5088 + $0xd8] sm:$0xe]
  %v6958 = vld [vmem:[%s5088 + $0xe4] sm:$0xe]
  %v6959 = vld [vmem:[%s5088 + $0xf0] sm:$0xe]
  %v6960 = vld [vmem:[%s5088 + $0xfc] sm:$0xe]
  %v6961 = vld [vmem:[%s5088 + $0x108] sm:$0xe]
  %v6962 = vld [vmem:[%s5088 + $0x114] sm:$0xe]
  %v6963 = vld [vmem:[%s5088 + $0x120] sm:$0xe]
  %v6964 = vld [vmem:[%s5088 + $0x12c] sm:$0xe]
  %v6965 = vld [vmem:[%s5088 + $0x138] sm:$0xe]
  %v6966 = vld [vmem:[%s5088 + $0x144] sm:$0xe]
  %v6967 = vld [vmem:[%s5088 + $0x150] sm:$0xe]
  %v6968 = vld [vmem:[%s5088 + $0x15c] sm:$0xe]
  %v6969 = vld [vmem:[%s5088 + $0x168] sm:$0xe]
  %v6970 = vld [vmem:[%s5088 + $0x174] sm:$0xe]
  %v6971 = vld [vmem:[%s5088 + $0x180] sm:$0xe]
  %v6972 = vld [vmem:[%s5088 + $0x18c] sm:$0xe]
  %v7069 = vrot.slane %v6941, 5
  %v7070 = vrot.slane %v7069, 4
  %v7071 = vrot.slane %v5648, 5
  %v7072 = vsel %vm1798, %v7070, %v7071
  %v7073 = vrot.slane %v7071, 4
  %v7074 = vrot.slane %v5649, 5
  %v7075 = vsel %vm1798, %v7073, %v7074
  %v7076 = vrot.slane %v6942, 5
  %v7077 = vrot.slane %v7076, 4
  %v7078 = vrot.slane %v5651, 5
  %v7079 = vsel %vm1798, %v7077, %v7078
  %v7080 = vrot.slane %v7078, 4
  %v7081 = vrot.slane %v5652, 5
  %v7082 = vsel %vm1798, %v7080, %v7081
  %v7083 = vrot.slane %v6943, 5
  %v7084 = vrot.slane %v7083, 4
  %v7085 = vrot.slane %v5654, 5
  %v7086 = vsel %vm1798, %v7084, %v7085
  %v7087 = vrot.slane %v7085, 4
  %v7088 = vrot.slane %v5655, 5
  %v7089 = vsel %vm1798, %v7087, %v7088
  %v7090 = vrot.slane %v6944, 5
  %v7091 = vrot.slane %v7090, 4
  %v7092 = vrot.slane %v5657, 5
  %v7093 = vsel %vm1798, %v7091, %v7092
  %v7094 = vrot.slane %v7092, 4
  %v7095 = vrot.slane %v5658, 5
  %v7096 = vsel %vm1798, %v7094, %v7095
  %v7097 = vrot.slane %v6945, 5
  %v7098 = vrot.slane %v7097, 4
  %v7099 = vrot.slane %v5660, 5
  %v7100 = vsel %vm1798, %v7098, %v7099
  %v7101 = vrot.slane %v7099, 4
  %v7102 = vrot.slane %v5661, 5
  %v7103 = vsel %vm1798, %v7101, %v7102
  %v7104 = vrot.slane %v6946, 5
  %v7105 = vrot.slane %v7104, 4
  %v7106 = vrot.slane %v5663, 5
  %v7107 = vsel %vm1798, %v7105, %v7106
  %v7108 = vrot.slane %v7106, 4
  %v7109 = vrot.slane %v5664, 5
  %v7110 = vsel %vm1798, %v7108, %v7109
  %v7111 = vrot.slane %v6947, 5
  %v7112 = vrot.slane %v7111, 4
  %v7113 = vrot.slane %v5666, 5
  %v7114 = vsel %vm1798, %v7112, %v7113
  %v7115 = vrot.slane %v7113, 4
  %v7116 = vrot.slane %v5667, 5
  %v7117 = vsel %vm1798, %v7115, %v7116
  %v7118 = vrot.slane %v6948, 5
  %v7119 = vrot.slane %v7118, 4
  %v7120 = vrot.slane %v5669, 5
  %v7121 = vsel %vm1798, %v7119, %v7120
  %v7122 = vrot.slane %v7120, 4
  %v7123 = vrot.slane %v5670, 5
  %v7124 = vsel %vm1798, %v7122, %v7123
  %v7125 = vrot.slane %v6949, 5
  %v7126 = vrot.slane %v7125, 4
  %v7127 = vrot.slane %v5672, 5
  %v7128 = vsel %vm1798, %v7126, %v7127
  %v7129 = vrot.slane %v7127, 4
  %v7130 = vrot.slane %v5673, 5
  %v7131 = vsel %vm1798, %v7129, %v7130
  %v7132 = vrot.slane %v6950, 5
  %v7133 = vrot.slane %v7132, 4
  %v7134 = vrot.slane %v5675, 5
  %v7135 = vsel %vm1798, %v7133, %v7134
  %v7136 = vrot.slane %v7134, 4
  %v7137 = vrot.slane %v5676, 5
  %v7138 = vsel %vm1798, %v7136, %v7137
  %v7139 = vrot.slane %v6951, 5
  %v7140 = vrot.slane %v7139, 4
  %v7141 = vrot.slane %v5678, 5
  %v7142 = vsel %vm1798, %v7140, %v7141
  %v7143 = vrot.slane %v7141, 4
  %v7144 = vrot.slane %v5679, 5
  %v7145 = vsel %vm1798, %v7143, %v7144
  %v7146 = vrot.slane %v6952, 5
  %v7147 = vrot.slane %v7146, 4
  %v7148 = vrot.slane %v5681, 5
  %v7149 = vsel %vm1798, %v7147, %v7148
  %v7150 = vrot.slane %v7148, 4
  %v7151 = vrot.slane %v5682, 5
  %v7152 = vsel %vm1798, %v7150, %v7151
  %v7153 = vrot.slane %v6953, 5
  %v7154 = vrot.slane %v7153, 4
  %v7155 = vrot.slane %v5684, 5
  %v7156 = vsel %vm1798, %v7154, %v7155
  %v7157 = vrot.slane %v7155, 4
  %v7158 = vrot.slane %v5685, 5
  %v7159 = vsel %vm1798, %v7157, %v7158
  %v7160 = vrot.slane %v6954, 5
  %v7161 = vrot.slane %v7160, 4
  %v7162 = vrot.slane %v5687, 5
  %v7163 = vsel %vm1798, %v7161, %v7162
  %v7164 = vrot.slane %v7162, 4
  %v7165 = vrot.slane %v5688, 5
  %v7166 = vsel %vm1798, %v7164, %v7165
  %v7167 = vrot.slane %v6955, 5
  %v7168 = vrot.slane %v7167, 4
  %v7169 = vrot.slane %v5690, 5
  %v7170 = vsel %vm1798, %v7168, %v7169
  %v7171 = vrot.slane %v7169, 4
  %v7172 = vrot.slane %v5691, 5
  %v7173 = vsel %vm1798, %v7171, %v7172
  %v7174 = vrot.slane %v6956, 5
  %v7175 = vrot.slane %v7174, 4
  %v7176 = vrot.slane %v5693, 5
  %v7177 = vsel %vm1798, %v7175, %v7176
  %v7178 = vrot.slane %v7176, 4
  %v7179 = vrot.slane %v5694, 5
  %v7180 = vsel %vm1798, %v7178, %v7179
  %v7181 = vrot.slane %v6957, 5
  %v7182 = vrot.slane %v7181, 4
  %v7183 = vrot.slane %v5696, 5
  %v7184 = vsel %vm1798, %v7182, %v7183
  %v7185 = vrot.slane %v7183, 4
  %v7186 = vrot.slane %v5697, 5
  %v7187 = vsel %vm1798, %v7185, %v7186
  %v7188 = vrot.slane %v6958, 5
  %v7189 = vrot.slane %v7188, 4
  %v7190 = vrot.slane %v5699, 5
  %v7191 = vsel %vm1798, %v7189, %v7190
  %v7192 = vrot.slane %v7190, 4
  %v7193 = vrot.slane %v5700, 5
  %v7194 = vsel %vm1798, %v7192, %v7193
  %v7195 = vrot.slane %v6959, 5
  %v7196 = vrot.slane %v7195, 4
  %v7197 = vrot.slane %v5702, 5
  %v7198 = vsel %vm1798, %v7196, %v7197
  %v7199 = vrot.slane %v7197, 4
  %v7200 = vrot.slane %v5703, 5
  %v7201 = vsel %vm1798, %v7199, %v7200
  %v7202 = vrot.slane %v6960, 5
  %v7203 = vrot.slane %v7202, 4
  %v7204 = vrot.slane %v5705, 5
  %v7205 = vsel %vm1798, %v7203, %v7204
  %v7206 = vrot.slane %v7204, 4
  %v7207 = vrot.slane %v5706, 5
  %v7208 = vsel %vm1798, %v7206, %v7207
  %v7209 = vrot.slane %v6961, 5
  %v7210 = vrot.slane %v7209, 4
  %v7211 = vrot.slane %v5708, 5
  %v7212 = vsel %vm1798, %v7210, %v7211
  %v7213 = vrot.slane %v7211, 4
  %v7214 = vrot.slane %v5709, 5
  %v7215 = vsel %vm1798, %v7213, %v7214
  %v7216 = vrot.slane %v6962, 5
  %v7217 = vrot.slane %v7216, 4
  %v7218 = vrot.slane %v5711, 5
  %v7219 = vsel %vm1798, %v7217, %v7218
  %v7220 = vrot.slane %v7218, 4
  %v7221 = vrot.slane %v5712, 5
  %v7222 = vsel %vm1798, %v7220, %v7221
  %v7223 = vrot.slane %v6963, 5
  %v7224 = vrot.slane %v7223, 4
  %v7225 = vrot.slane %v5714, 5
  %v7226 = vsel %vm1798, %v7224, %v7225
  %v7227 = vrot.slane %v7225, 4
  %v7228 = vrot.slane %v5715, 5
  %v7229 = vsel %vm1798, %v7227, %v7228
  %v7230 = vrot.slane %v6964, 5
  %v7231 = vrot.slane %v7230, 4
  %v7232 = vrot.slane %v5717, 5
  %v7233 = vsel %vm1798, %v7231, %v7232
  %v7234 = vrot.slane %v7232, 4
  %v7235 = vrot.slane %v5718, 5
  %v7236 = vsel %vm1798, %v7234, %v7235
  %v7237 = vrot.slane %v6965, 5
  %v7238 = vrot.slane %v7237, 4
  %v7239 = vrot.slane %v5720, 5
  %v7240 = vsel %vm1798, %v7238, %v7239
  %v7241 = vrot.slane %v7239, 4
  %v7242 = vrot.slane %v5721, 5
  %v7243 = vsel %vm1798, %v7241, %v7242
  %v7244 = vrot.slane %v6966, 5
  %v7245 = vrot.slane %v7244, 4
  %v7246 = vrot.slane %v5723, 5
  %v7247 = vsel %vm1798, %v7245, %v7246
  %v7248 = vrot.slane %v7246, 4
  %v7249 = vrot.slane %v5724, 5
  %v7250 = vsel %vm1798, %v7248, %v7249
  %v7251 = vrot.slane %v6967, 5
  %v7252 = vrot.slane %v7251, 4
  %v7253 = vrot.slane %v5726, 5
  %v7254 = vsel %vm1798, %v7252, %v7253
  %v7255 = vrot.slane %v7253, 4
  %v7256 = vrot.slane %v5727, 5
  %v7257 = vsel %vm1798, %v7255, %v7256
  %v7258 = vrot.slane %v6968, 5
  %v7259 = vrot.slane %v7258, 4
  %v7260 = vrot.slane %v5729, 5
  %v7261 = vsel %vm1798, %v7259, %v7260
  %v7262 = vrot.slane %v7260, 4
  %v7263 = vrot.slane %v5730, 5
  %v7264 = vsel %vm1798, %v7262, %v7263
  %v7265 = vrot.slane %v6969, 5
  %v7266 = vrot.slane %v7265, 4
  %v7267 = vrot.slane %v5732, 5
  %v7268 = vsel %vm1798, %v7266, %v7267
  %v7269 = vrot.slane %v7267, 4
  %v7270 = vrot.slane %v5733, 5
  %v7271 = vsel %vm1798, %v7269, %v7270
  %v7272 = vrot.slane %v6970, 5
  %v7273 = vrot.slane %v7272, 4
  %v7274 = vrot.slane %v5735, 5
  %v7275 = vsel %vm1798, %v7273, %v7274
  %v7276 = vrot.slane %v7274, 4
  %v7277 = vrot.slane %v5736, 5
  %v7278 = vsel %vm1798, %v7276, %v7277
  %v7279 = vrot.slane %v6971, 5
  %v7280 = vrot.slane %v7279, 4
  %v7281 = vrot.slane %v5738, 5
  %v7282 = vsel %vm1798, %v7280, %v7281
  %v7283 = vrot.slane %v7281, 4
  %v7284 = vrot.slane %v5739, 5
  %v7285 = vsel %vm1798, %v7283, %v7284
  %v7286 = vrot.slane %v6972, 5
  %v7287 = vrot.slane %v7286, 4
  %v7288 = vrot.slane %v5741, 5
  %v7289 = vsel %vm1798, %v7287, %v7288
  %v7290 = vrot.slane %v7288, 4
  %v7291 = vrot.slane %v5742, 5
  %v7292 = vsel %vm1798, %v7290, %v7291
  %s7293 = scalar_lea.vmem %s1, 16
  %v7294 = vld [vmem:[%s7293] sm:$0x3]
  %v7295 = vunpack.c.l.b16 %v7072
  %v7296 = vunpack.c.l.b16 %v7075
  %v7297 = vunpack.c.l.b16 %v7079
  %v7298 = vunpack.c.l.b16 %v7082
  %v7299 = vunpack.c.l.b16 %v7086
  %v7300 = vunpack.c.l.b16 %v7089
  %v7301 = vunpack.c.l.b16 %v7093
  %v7302 = vunpack.c.l.b16 %v7096
  %v7303 = vunpack.c.l.b16 %v7100
  %v7304 = vunpack.c.l.b16 %v7103
  %v7305 = vunpack.c.l.b16 %v7107
  %v7306 = vunpack.c.l.b16 %v7110
  %v7307 = vunpack.c.l.b16 %v7114
  %v7308 = vunpack.c.l.b16 %v7117
  %v7309 = vunpack.c.l.b16 %v7121
  %v7310 = vunpack.c.l.b16 %v7124
  %v7311 = vunpack.c.l.b16 %v7128
  %v7312 = vunpack.c.l.b16 %v7131
  %v7313 = vunpack.c.l.b16 %v7135
  %v7314 = vunpack.c.l.b16 %v7138
  %v7315 = vunpack.c.l.b16 %v7142
  %v7316 = vunpack.c.l.b16 %v7145
  %v7317 = vunpack.c.l.b16 %v7149
  %v7318 = vunpack.c.l.b16 %v7152
  %v7319 = vunpack.c.l.b16 %v7156
  %v7320 = vunpack.c.l.b16 %v7159
  %v7321 = vunpack.c.l.b16 %v7163
  %v7322 = vunpack.c.l.b16 %v7166
  %v7323 = vunpack.c.l.b16 %v7170
  %v7324 = vunpack.c.l.b16 %v7173
  %v7325 = vunpack.c.l.b16 %v7177
  %v7326 = vunpack.c.l.b16 %v7180
  %v7327 = vunpack.c.l.b16 %v7184
  %v7328 = vunpack.c.l.b16 %v7187
  %v7329 = vunpack.c.l.b16 %v7191
  %v7330 = vunpack.c.l.b16 %v7194
  %v7331 = vunpack.c.l.b16 %v7198
  %v7332 = vunpack.c.l.b16 %v7201
  %v7333 = vunpack.c.l.b16 %v7205
  %v7334 = vunpack.c.l.b16 %v7208
  %v7335 = vunpack.c.l.b16 %v7212
  %v7336 = vunpack.c.l.b16 %v7215
  %v7337 = vunpack.c.l.b16 %v7219
  %v7338 = vunpack.c.l.b16 %v7222
  %v7339 = vunpack.c.l.b16 %v7226
  %v7340 = vunpack.c.l.b16 %v7229
  %v7341 = vunpack.c.l.b16 %v7233
  %v7342 = vunpack.c.l.b16 %v7236
  %v7343 = vunpack.c.l.b16 %v7240
  %v7344 = vunpack.c.l.b16 %v7243
  %v7345 = vunpack.c.l.b16 %v7247
  %v7346 = vunpack.c.l.b16 %v7250
  %v7347 = vunpack.c.l.b16 %v7254
  %v7348 = vunpack.c.l.b16 %v7257
  %v7349 = vunpack.c.l.b16 %v7261
  %v7350 = vunpack.c.l.b16 %v7264
  %v7351 = vunpack.c.l.b16 %v7268
  %v7352 = vunpack.c.l.b16 %v7271
  %v7353 = vunpack.c.l.b16 %v7275
  %v7354 = vunpack.c.l.b16 %v7278
  %v7355 = vunpack.c.l.b16 %v7282
  %v7356 = vunpack.c.l.b16 %v7285
  %v7357 = vunpack.c.l.b16 %v7289
  %v7358 = vunpack.c.l.b16 %v7292
  %v7359 = vpack.c.b16 %v7296, %v7295
  %v7360 = vpack.c.b16 %v7298, %v7297
  %v7361 = vpack.c.b16 %v7300, %v7299
  %v7362 = vpack.c.b16 %v7302, %v7301
  %v7363 = vpack.c.b16 %v7304, %v7303
  %v7364 = vpack.c.b16 %v7306, %v7305
  %v7365 = vpack.c.b16 %v7308, %v7307
  %v7366 = vpack.c.b16 %v7310, %v7309
  %v7367 = vpack.c.b16 %v7312, %v7311
  %v7368 = vpack.c.b16 %v7314, %v7313
  %v7369 = vpack.c.b16 %v7316, %v7315
  %v7370 = vpack.c.b16 %v7318, %v7317
  %v7371 = vpack.c.b16 %v7320, %v7319
  %v7372 = vpack.c.b16 %v7322, %v7321
  %v7373 = vpack.c.b16 %v7324, %v7323
  %v7374 = vpack.c.b16 %v7326, %v7325
  %v7375 = vpack.c.b16 %v7328, %v7327
  %v7376 = vpack.c.b16 %v7330, %v7329
  %v7377 = vpack.c.b16 %v7332, %v7331
  %v7378 = vpack.c.b16 %v7334, %v7333
  %v7379 = vpack.c.b16 %v7336, %v7335
  %v7380 = vpack.c.b16 %v7338, %v7337
  %v7381 = vpack.c.b16 %v7340, %v7339
  %v7382 = vpack.c.b16 %v7342, %v7341
  %v7383 = vpack.c.b16 %v7344, %v7343
  %v7384 = vpack.c.b16 %v7346, %v7345
  %v7385 = vpack.c.b16 %v7348, %v7347
  %v7386 = vpack.c.b16 %v7350, %v7349
  %v7387 = vpack.c.b16 %v7352, %v7351
  %v7388 = vpack.c.b16 %v7354, %v7353
  %v7389 = vpack.c.b16 %v7356, %v7355
  %v7390 = vpack.c.b16 %v7358, %v7357
  %v7392 = vsel %vm1002, %v7359, 0
  %v7395 = vsel %vm1002, %v7360, 0
  %v7398 = vsel %vm1002, %v7361, 0
  %v7401 = vsel %vm1002, %v7362, 0
  %v7404 = vsel %vm1002, %v7363, 0
  %v7407 = vsel %vm1002, %v7364, 0
  %v7410 = vsel %vm1002, %v7365, 0
  %v7413 = vsel %vm1002, %v7366, 0
  %v7416 = vsel %vm1002, %v7367, 0
  %v7419 = vsel %vm1002, %v7368, 0
  %v7422 = vsel %vm1002, %v7369, 0
  %v7425 = vsel %vm1002, %v7370, 0
  %v7428 = vsel %vm1002, %v7371, 0
  %v7431 = vsel %vm1002, %v7372, 0
  %v7434 = vsel %vm1002, %v7373, 0
  %v7437 = vsel %vm1002, %v7374, 0
  %v7440 = vsel %vm1002, %v7375, 0
  %v7443 = vsel %vm1002, %v7376, 0
  %v7446 = vsel %vm1002, %v7377, 0
  %v7449 = vsel %vm1002, %v7378, 0
  %v7452 = vsel %vm1002, %v7379, 0
  %v7455 = vsel %vm1002, %v7380, 0
  %v7458 = vsel %vm1002, %v7381, 0
  %v7461 = vsel %vm1002, %v7382, 0
  %v7464 = vsel %vm1002, %v7383, 0
  %v7467 = vsel %vm1002, %v7384, 0
  %v7470 = vsel %vm1002, %v7385, 0
  %v7473 = vsel %vm1002, %v7386, 0
  %v7476 = vsel %vm1002, %v7387, 0
  %v7479 = vsel %vm1002, %v7388, 0
  %v7482 = vsel %vm1002, %v7389, 0
  %v7485 = vsel %vm1002, %v7390, 0
  %v7488 = vsel %vm1099, %v7294, 0
  %7490 = vmatpush.bf16.msra.mxu0 0
  %7491 = vmatpush.bf16.msra.mxu0 0
  %7492 = vmatpush.bf16.msra.mxu0 0
  %7493 = vmatpush.bf16.msra.mxu0 0
  %7494 = vmatpush.bf16.msra.mxu0 0
  %7495 = vmatpush.bf16.msra.mxu0 0
  %7496 = vmatpush.bf16.msra.mxu0 0
  %7497 = vmatpush.bf16.msra.mxu0 %v7488
  %7498 = vmatmul.bf16.gmra.mxu0 %v7392
  %v7499 = vpop.f32.mrf.mxu0
  %v7500 = vadd.f32 0.0, %v7499
  %v7501 = vpop.f32.mrf.mxu0
  %v7502 = vadd.f32 0.0, %v7501
  %7503 = vmatmul.bf16.gmra.mxu0 %v7395
  %v7504 = vpop.f32.mrf.mxu0
  %v7505 = vadd.f32 0.0, %v7504
  %v7506 = vpop.f32.mrf.mxu0
  %v7507 = vadd.f32 0.0, %v7506
  %7508 = vmatmul.bf16.gmra.mxu0 %v7398
  %v7509 = vpop.f32.mrf.mxu0
  %v7510 = vadd.f32 0.0, %v7509
  %v7511 = vpop.f32.mrf.mxu0
  %v7512 = vadd.f32 0.0, %v7511
  %7513 = vmatmul.bf16.gmra.mxu0 %v7401
  %v7514 = vpop.f32.mrf.mxu0
  %v7515 = vadd.f32 0.0, %v7514
  %v7516 = vpop.f32.mrf.mxu0
  %v7517 = vadd.f32 0.0, %v7516
  %7518 = vmatmul.bf16.gmra.mxu0 %v7404
  %v7519 = vpop.f32.mrf.mxu0
  %v7520 = vadd.f32 0.0, %v7519
  %v7521 = vpop.f32.mrf.mxu0
  %v7522 = vadd.f32 0.0, %v7521
  %7523 = vmatmul.bf16.gmra.mxu0 %v7407
  %v7524 = vpop.f32.mrf.mxu0
  %v7525 = vadd.f32 0.0, %v7524
  %v7526 = vpop.f32.mrf.mxu0
  %v7527 = vadd.f32 0.0, %v7526
  %7528 = vmatmul.bf16.gmra.mxu0 %v7410
  %v7529 = vpop.f32.mrf.mxu0
  %v7530 = vadd.f32 0.0, %v7529
  %v7531 = vpop.f32.mrf.mxu0
  %v7532 = vadd.f32 0.0, %v7531
  %7533 = vmatmul.bf16.gmra.mxu0 %v7413
  %v7534 = vpop.f32.mrf.mxu0
  %v7535 = vadd.f32 0.0, %v7534
  %v7536 = vpop.f32.mrf.mxu0
  %v7537 = vadd.f32 0.0, %v7536
  %7538 = vmatmul.bf16.gmra.mxu0 %v7416
  %v7539 = vpop.f32.mrf.mxu0
  %v7540 = vadd.f32 0.0, %v7539
  %v7541 = vpop.f32.mrf.mxu0
  %v7542 = vadd.f32 0.0, %v7541
  %7543 = vmatmul.bf16.gmra.mxu0 %v7419
  %v7544 = vpop.f32.mrf.mxu0
  %v7545 = vadd.f32 0.0, %v7544
  %v7546 = vpop.f32.mrf.mxu0
  %v7547 = vadd.f32 0.0, %v7546
  %7548 = vmatmul.bf16.gmra.mxu0 %v7422
  %v7549 = vpop.f32.mrf.mxu0
  %v7550 = vadd.f32 0.0, %v7549
  %v7551 = vpop.f32.mrf.mxu0
  %v7552 = vadd.f32 0.0, %v7551
  %7553 = vmatmul.bf16.gmra.mxu0 %v7425
  %v7554 = vpop.f32.mrf.mxu0
  %v7555 = vadd.f32 0.0, %v7554
  %v7556 = vpop.f32.mrf.mxu0
  %v7557 = vadd.f32 0.0, %v7556
  %7558 = vmatmul.bf16.gmra.mxu0 %v7428
  %v7559 = vpop.f32.mrf.mxu0
  %v7560 = vadd.f32 0.0, %v7559
  %v7561 = vpop.f32.mrf.mxu0
  %v7562 = vadd.f32 0.0, %v7561
  %7563 = vmatmul.bf16.gmra.mxu0 %v7431
  %v7564 = vpop.f32.mrf.mxu0
  %v7565 = vadd.f32 0.0, %v7564
  %v7566 = vpop.f32.mrf.mxu0
  %v7567 = vadd.f32 0.0, %v7566
  %7568 = vmatmul.bf16.gmra.mxu0 %v7434
  %v7569 = vpop.f32.mrf.mxu0
  %v7570 = vadd.f32 0.0, %v7569
  %v7571 = vpop.f32.mrf.mxu0
  %v7572 = vadd.f32 0.0, %v7571
  %7573 = vmatmul.bf16.gmra.mxu0 %v7437
  %v7574 = vpop.f32.mrf.mxu0
  %v7575 = vadd.f32 0.0, %v7574
  %v7576 = vpop.f32.mrf.mxu0
  %v7577 = vadd.f32 0.0, %v7576
  %7578 = vmatmul.bf16.gmra.mxu0 %v7440
  %v7579 = vpop.f32.mrf.mxu0
  %v7580 = vadd.f32 0.0, %v7579
  %v7581 = vpop.f32.mrf.mxu0
  %v7582 = vadd.f32 0.0, %v7581
  %7583 = vmatmul.bf16.gmra.mxu0 %v7443
  %v7584 = vpop.f32.mrf.mxu0
  %v7585 = vadd.f32 0.0, %v7584
  %v7586 = vpop.f32.mrf.mxu0
  %v7587 = vadd.f32 0.0, %v7586
  %7588 = vmatmul.bf16.gmra.mxu0 %v7446
  %v7589 = vpop.f32.mrf.mxu0
  %v7590 = vadd.f32 0.0, %v7589
  %v7591 = vpop.f32.mrf.mxu0
  %v7592 = vadd.f32 0.0, %v7591
  %7593 = vmatmul.bf16.gmra.mxu0 %v7449
  %v7594 = vpop.f32.mrf.mxu0
  %v7595 = vadd.f32 0.0, %v7594
  %v7596 = vpop.f32.mrf.mxu0
  %v7597 = vadd.f32 0.0, %v7596
  %7598 = vmatmul.bf16.gmra.mxu0 %v7452
  %v7599 = vpop.f32.mrf.mxu0
  %v7600 = vadd.f32 0.0, %v7599
  %v7601 = vpop.f32.mrf.mxu0
  %v7602 = vadd.f32 0.0, %v7601
  %7603 = vmatmul.bf16.gmra.mxu0 %v7455
  %v7604 = vpop.f32.mrf.mxu0
  %v7605 = vadd.f32 0.0, %v7604
  %v7606 = vpop.f32.mrf.mxu0
  %v7607 = vadd.f32 0.0, %v7606
  %7608 = vmatmul.bf16.gmra.mxu0 %v7458
  %v7609 = vpop.f32.mrf.mxu0
  %v7610 = vadd.f32 0.0, %v7609
  %v7611 = vpop.f32.mrf.mxu0
  %v7612 = vadd.f32 0.0, %v7611
  %7613 = vmatmul.bf16.gmra.mxu0 %v7461
  %v7614 = vpop.f32.mrf.mxu0
  %v7615 = vadd.f32 0.0, %v7614
  %v7616 = vpop.f32.mrf.mxu0
  %v7617 = vadd.f32 0.0, %v7616
  %7618 = vmatmul.bf16.gmra.mxu0 %v7464
  %v7619 = vpop.f32.mrf.mxu0
  %v7620 = vadd.f32 0.0, %v7619
  %v7621 = vpop.f32.mrf.mxu0
  %v7622 = vadd.f32 0.0, %v7621
  %7623 = vmatmul.bf16.gmra.mxu0 %v7467
  %v7624 = vpop.f32.mrf.mxu0
  %v7625 = vadd.f32 0.0, %v7624
  %v7626 = vpop.f32.mrf.mxu0
  %v7627 = vadd.f32 0.0, %v7626
  %7628 = vmatmul.bf16.gmra.mxu0 %v7470
  %v7629 = vpop.f32.mrf.mxu0
  %v7630 = vadd.f32 0.0, %v7629
  %v7631 = vpop.f32.mrf.mxu0
  %v7632 = vadd.f32 0.0, %v7631
  %7633 = vmatmul.bf16.gmra.mxu0 %v7473
  %v7634 = vpop.f32.mrf.mxu0
  %v7635 = vadd.f32 0.0, %v7634
  %v7636 = vpop.f32.mrf.mxu0
  %v7637 = vadd.f32 0.0, %v7636
  %7638 = vmatmul.bf16.gmra.mxu0 %v7476
  %v7639 = vpop.f32.mrf.mxu0
  %v7640 = vadd.f32 0.0, %v7639
  %v7641 = vpop.f32.mrf.mxu0
  %v7642 = vadd.f32 0.0, %v7641
  %7643 = vmatmul.bf16.gmra.mxu0 %v7479
  %v7644 = vpop.f32.mrf.mxu0
  %v7645 = vadd.f32 0.0, %v7644
  %v7646 = vpop.f32.mrf.mxu0
  %v7647 = vadd.f32 0.0, %v7646
  %7648 = vmatmul.bf16.gmra.mxu0 %v7482
  %v7649 = vpop.f32.mrf.mxu0
  %v7650 = vadd.f32 0.0, %v7649
  %v7651 = vpop.f32.mrf.mxu0
  %v7652 = vadd.f32 0.0, %v7651
  %7653 = vmatmul.bf16.gmra.mxu0 %v7485
  %v7654 = vpop.f32.mrf.mxu0
  %v7655 = vadd.f32 0.0, %v7654
  %v7656 = vpop.f32.mrf.mxu0
  %v7657 = vadd.f32 0.0, %v7656
  %7658 = vdwg.mxu0
  %v7659 = vadd.f32 %v6877, %v7500
  %v7660 = vadd.f32 %v6878, %v7502
  %v7661 = vadd.f32 %v6879, %v7505
  %v7662 = vadd.f32 %v6880, %v7507
  %v7663 = vadd.f32 %v6881, %v7510
  %v7664 = vadd.f32 %v6882, %v7512
  %v7665 = vadd.f32 %v6883, %v7515
  %v7666 = vadd.f32 %v6884, %v7517
  %v7667 = vadd.f32 %v6885, %v7520
  %v7668 = vadd.f32 %v6886, %v7522
  %v7669 = vadd.f32 %v6887, %v7525
  %v7670 = vadd.f32 %v6888, %v7527
  %v7671 = vadd.f32 %v6889, %v7530
  %v7672 = vadd.f32 %v6890, %v7532
  %v7673 = vadd.f32 %v6891, %v7535
  %v7674 = vadd.f32 %v6892, %v7537
  %v7675 = vadd.f32 %v6893, %v7540
  %v7676 = vadd.f32 %v6894, %v7542
  %v7677 = vadd.f32 %v6895, %v7545
  %v7678 = vadd.f32 %v6896, %v7547
  %v7679 = vadd.f32 %v6897, %v7550
  %v7680 = vadd.f32 %v6898, %v7552
  %v7681 = vadd.f32 %v6899, %v7555
  %v7682 = vadd.f32 %v6900, %v7557
  %v7683 = vadd.f32 %v6901, %v7560
  %v7684 = vadd.f32 %v6902, %v7562
  %v7685 = vadd.f32 %v6903, %v7565
  %v7686 = vadd.f32 %v6904, %v7567
  %v7687 = vadd.f32 %v6905, %v7570
  %v7688 = vadd.f32 %v6906, %v7572
  %v7689 = vadd.f32 %v6907, %v7575
  %v7690 = vadd.f32 %v6908, %v7577
  %v7691 = vadd.f32 %v6909, %v7580
  %v7692 = vadd.f32 %v6910, %v7582
  %v7693 = vadd.f32 %v6911, %v7585
  %v7694 = vadd.f32 %v6912, %v7587
  %v7695 = vadd.f32 %v6913, %v7590
  %v7696 = vadd.f32 %v6914, %v7592
  %v7697 = vadd.f32 %v6915, %v7595
  %v7698 = vadd.f32 %v6916, %v7597
  %v7699 = vadd.f32 %v6917, %v7600
  %v7700 = vadd.f32 %v6918, %v7602
  %v7701 = vadd.f32 %v6919, %v7605
  %v7702 = vadd.f32 %v6920, %v7607
  %v7703 = vadd.f32 %v6921, %v7610
  %v7704 = vadd.f32 %v6922, %v7612
  %v7705 = vadd.f32 %v6923, %v7615
  %v7706 = vadd.f32 %v6924, %v7617
  %v7707 = vadd.f32 %v6925, %v7620
  %v7708 = vadd.f32 %v6926, %v7622
  %v7709 = vadd.f32 %v6927, %v7625
  %v7710 = vadd.f32 %v6928, %v7627
  %v7711 = vadd.f32 %v6929, %v7630
  %v7712 = vadd.f32 %v6930, %v7632
  %v7713 = vadd.f32 %v6931, %v7635
  %v7714 = vadd.f32 %v6932, %v7637
  %v7715 = vadd.f32 %v6933, %v7640
  %v7716 = vadd.f32 %v6934, %v7642
  %v7717 = vadd.f32 %v6935, %v7645
  %v7718 = vadd.f32 %v6936, %v7647
  %v7719 = vadd.f32 %v6937, %v7650
  %v7720 = vadd.f32 %v6938, %v7652
  %v7721 = vadd.f32 %v6939, %v7655
  %v7722 = vadd.f32 %v6940, %v7657
  %v7723 = vld [vmem:[%s2] sm:$0x1]
  %v7724 = vld [vmem:[%s3] sm:$0x1]
  %vm7725 = vcmask 64512
  %v7726 = vsel %vm7725, %v7659, 0.0
  %v7727 = vsel %vm7725, %v7660, 0.0
  %v7728 = vadd.f32 %v7726, %v7727
  %v7729 = vsel %vm7725, %v7661, 0.0
  %v7730 = vadd.f32 %v7728, %v7729
  %v7731 = vsel %vm7725, %v7662, 0.0
  %v7732 = vadd.f32 %v7730, %v7731
  %v7733 = vsel %vm7725, %v7663, 0.0
  %v7734 = vadd.f32 %v7732, %v7733
  %v7735 = vsel %vm7725, %v7664, 0.0
  %v7736 = vadd.f32 %v7734, %v7735
  %v7737 = vsel %vm7725, %v7665, 0.0
  %v7738 = vadd.f32 %v7736, %v7737
  %v7739 = vsel %vm7725, %v7666, 0.0
  %v7740 = vadd.f32 %v7738, %v7739
  %v7741 = vsel %vm7725, %v7667, 0.0
  %v7742 = vadd.f32 %v7740, %v7741
  %v7743 = vsel %vm7725, %v7668, 0.0
  %v7744 = vadd.f32 %v7742, %v7743
  %v7745 = vsel %vm7725, %v7669, 0.0
  %v7746 = vadd.f32 %v7744, %v7745
  %v7747 = vsel %vm7725, %v7670, 0.0
  %v7748 = vadd.f32 %v7746, %v7747
  %v7749 = vsel %vm7725, %v7671, 0.0
  %v7750 = vadd.f32 %v7748, %v7749
  %v7751 = vsel %vm7725, %v7672, 0.0
  %v7752 = vadd.f32 %v7750, %v7751
  %v7753 = vsel %vm7725, %v7673, 0.0
  %v7754 = vadd.f32 %v7752, %v7753
  %v7755 = vsel %vm7725, %v7674, 0.0
  %v7756 = vadd.f32 %v7754, %v7755
  %v7757 = vsel %vm7725, %v7675, 0.0
  %v7758 = vadd.f32 %v7756, %v7757
  %v7759 = vsel %vm7725, %v7676, 0.0
  %v7760 = vadd.f32 %v7758, %v7759
  %v7761 = vsel %vm7725, %v7677, 0.0
  %v7762 = vadd.f32 %v7760, %v7761
  %v7763 = vsel %vm7725, %v7678, 0.0
  %v7764 = vadd.f32 %v7762, %v7763
  %v7765 = vsel %vm7725, %v7679, 0.0
  %v7766 = vadd.f32 %v7764, %v7765
  %v7767 = vsel %vm7725, %v7680, 0.0
  %v7768 = vadd.f32 %v7766, %v7767
  %v7769 = vsel %vm7725, %v7681, 0.0
  %v7770 = vadd.f32 %v7768, %v7769
  %v7771 = vsel %vm7725, %v7682, 0.0
  %v7772 = vadd.f32 %v7770, %v7771
  %v7773 = vsel %vm7725, %v7683, 0.0
  %v7774 = vadd.f32 %v7772, %v7773
  %v7775 = vsel %vm7725, %v7684, 0.0
  %v7776 = vadd.f32 %v7774, %v7775
  %v7777 = vsel %vm7725, %v7685, 0.0
  %v7778 = vadd.f32 %v7776, %v7777
  %v7779 = vsel %vm7725, %v7686, 0.0
  %v7780 = vadd.f32 %v7778, %v7779
  %v7781 = vsel %vm7725, %v7687, 0.0
  %v7782 = vadd.f32 %v7780, %v7781
  %v7783 = vsel %vm7725, %v7688, 0.0
  %v7784 = vadd.f32 %v7782, %v7783
  %v7785 = vsel %vm7725, %v7689, 0.0
  %v7786 = vadd.f32 %v7784, %v7785
  %v7787 = vsel %vm7725, %v7690, 0.0
  %v7788 = vadd.f32 %v7786, %v7787
  %v7789 = vsel %vm7725, %v7691, 0.0
  %v7790 = vadd.f32 %v7788, %v7789
  %v7791 = vsel %vm7725, %v7692, 0.0
  %v7792 = vadd.f32 %v7790, %v7791
  %v7793 = vsel %vm7725, %v7693, 0.0
  %v7794 = vadd.f32 %v7792, %v7793
  %v7795 = vsel %vm7725, %v7694, 0.0
  %v7796 = vadd.f32 %v7794, %v7795
  %v7797 = vsel %vm7725, %v7695, 0.0
  %v7798 = vadd.f32 %v7796, %v7797
  %v7799 = vsel %vm7725, %v7696, 0.0
  %v7800 = vadd.f32 %v7798, %v7799
  %v7801 = vsel %vm7725, %v7697, 0.0
  %v7802 = vadd.f32 %v7800, %v7801
  %v7803 = vsel %vm7725, %v7698, 0.0
  %v7804 = vadd.f32 %v7802, %v7803
  %v7805 = vsel %vm7725, %v7699, 0.0
  %v7806 = vadd.f32 %v7804, %v7805
  %v7807 = vsel %vm7725, %v7700, 0.0
  %v7808 = vadd.f32 %v7806, %v7807
  %v7809 = vsel %vm7725, %v7701, 0.0
  %v7810 = vadd.f32 %v7808, %v7809
  %v7811 = vsel %vm7725, %v7702, 0.0
  %v7812 = vadd.f32 %v7810, %v7811
  %v7813 = vsel %vm7725, %v7703, 0.0
  %v7814 = vadd.f32 %v7812, %v7813
  %v7815 = vsel %vm7725, %v7704, 0.0
  %v7816 = vadd.f32 %v7814, %v7815
  %v7817 = vsel %vm7725, %v7705, 0.0
  %v7818 = vadd.f32 %v7816, %v7817
  %v7819 = vsel %vm7725, %v7706, 0.0
  %v7820 = vadd.f32 %v7818, %v7819
  %v7821 = vsel %vm7725, %v7707, 0.0
  %v7822 = vadd.f32 %v7820, %v7821
  %v7823 = vsel %vm7725, %v7708, 0.0
  %v7824 = vadd.f32 %v7822, %v7823
  %v7825 = vsel %vm7725, %v7709, 0.0
  %v7826 = vadd.f32 %v7824, %v7825
  %v7827 = vsel %vm7725, %v7710, 0.0
  %v7828 = vadd.f32 %v7826, %v7827
  %v7829 = vsel %vm7725, %v7711, 0.0
  %v7830 = vadd.f32 %v7828, %v7829
  %v7831 = vsel %vm7725, %v7712, 0.0
  %v7832 = vadd.f32 %v7830, %v7831
  %v7833 = vsel %vm7725, %v7713, 0.0
  %v7834 = vadd.f32 %v7832, %v7833
  %v7835 = vsel %vm7725, %v7714, 0.0
  %v7836 = vadd.f32 %v7834, %v7835
  %v7837 = vsel %vm7725, %v7715, 0.0
  %v7838 = vadd.f32 %v7836, %v7837
  %v7839 = vsel %vm7725, %v7716, 0.0
  %v7840 = vadd.f32 %v7838, %v7839
  %v7841 = vsel %vm7725, %v7717, 0.0
  %v7842 = vadd.f32 %v7840, %v7841
  %v7843 = vsel %vm7725, %v7718, 0.0
  %v7844 = vadd.f32 %v7842, %v7843
  %v7845 = vsel %vm7725, %v7719, 0.0
  %v7846 = vadd.f32 %v7844, %v7845
  %v7847 = vsel %vm7725, %v7720, 0.0
  %v7848 = vadd.f32 %v7846, %v7847
  %v7849 = vsel %vm7725, %v7721, 0.0
  %v7850 = vadd.f32 %v7848, %v7849
  %v7851 = vsel %vm7725, %v7722, 0.0
  %v7852 = vadd.f32 %v7850, %v7851
  %v7853 = vrot.slane %v7852, 4
  %v7854 = vadd.f32 %v7852, %v7853
  %v7855 = vrot.slane %v7854, 2
  %v7856 = vadd.f32 %v7854, %v7855
  %v7857 = vrot.slane %v7856, 1
  %v7858 = vadd.f32 %v7856, %v7857
  %v7859 = vmul.f32 %v7858, 0.001953125
  %v7860 = vsub.f32 %v7659, %v7859
  %v7861 = vsub.f32 %v7660, %v7859
  %v7862 = vsub.f32 %v7661, %v7859
  %v7863 = vsub.f32 %v7662, %v7859
  %v7864 = vsub.f32 %v7663, %v7859
  %v7865 = vsub.f32 %v7664, %v7859
  %v7866 = vsub.f32 %v7665, %v7859
  %v7867 = vsub.f32 %v7666, %v7859
  %v7868 = vsub.f32 %v7667, %v7859
  %v7869 = vsub.f32 %v7668, %v7859
  %v7870 = vsub.f32 %v7669, %v7859
  %v7871 = vsub.f32 %v7670, %v7859
  %v7872 = vsub.f32 %v7671, %v7859
  %v7873 = vsub.f32 %v7672, %v7859
  %v7874 = vsub.f32 %v7673, %v7859
  %v7875 = vsub.f32 %v7674, %v7859
  %v7876 = vsub.f32 %v7675, %v7859
  %v7877 = vsub.f32 %v7676, %v7859
  %v7878 = vsub.f32 %v7677, %v7859
  %v7879 = vsub.f32 %v7678, %v7859
  %v7880 = vsub.f32 %v7679, %v7859
  %v7881 = vsub.f32 %v7680, %v7859
  %v7882 = vsub.f32 %v7681, %v7859
  %v7883 = vsub.f32 %v7682, %v7859
  %v7884 = vsub.f32 %v7683, %v7859
  %v7885 = vsub.f32 %v7684, %v7859
  %v7886 = vsub.f32 %v7685, %v7859
  %v7887 = vsub.f32 %v7686, %v7859
  %v7888 = vsub.f32 %v7687, %v7859
  %v7889 = vsub.f32 %v7688, %v7859
  %v7890 = vsub.f32 %v7689, %v7859
  %v7891 = vsub.f32 %v7690, %v7859
  %v7892 = vsub.f32 %v7691, %v7859
  %v7893 = vsub.f32 %v7692, %v7859
  %v7894 = vsub.f32 %v7693, %v7859
  %v7895 = vsub.f32 %v7694, %v7859
  %v7896 = vsub.f32 %v7695, %v7859
  %v7897 = vsub.f32 %v7696, %v7859
  %v7898 = vsub.f32 %v7697, %v7859
  %v7899 = vsub.f32 %v7698, %v7859
  %v7900 = vsub.f32 %v7699, %v7859
  %v7901 = vsub.f32 %v7700, %v7859
  %v7902 = vsub.f32 %v7701, %v7859
  %v7903 = vsub.f32 %v7702, %v7859
  %v7904 = vsub.f32 %v7703, %v7859
  %v7905 = vsub.f32 %v7704, %v7859
  %v7906 = vsub.f32 %v7705, %v7859
  %v7907 = vsub.f32 %v7706, %v7859
  %v7908 = vsub.f32 %v7707, %v7859
  %v7909 = vsub.f32 %v7708, %v7859
  %v7910 = vsub.f32 %v7709, %v7859
  %v7911 = vsub.f32 %v7710, %v7859
  %v7912 = vsub.f32 %v7711, %v7859
  %v7913 = vsub.f32 %v7712, %v7859
  %v7914 = vsub.f32 %v7713, %v7859
  %v7915 = vsub.f32 %v7714, %v7859
  %v7916 = vsub.f32 %v7715, %v7859
  %v7917 = vsub.f32 %v7716, %v7859
  %v7918 = vsub.f32 %v7717, %v7859
  %v7919 = vsub.f32 %v7718, %v7859
  %v7920 = vsub.f32 %v7719, %v7859
  %v7921 = vsub.f32 %v7720, %v7859
  %v7922 = vsub.f32 %v7721, %v7859
  %v7923 = vsub.f32 %v7722, %v7859
  %v7924 = vmul.f32 %v7860, %v7860
  %v7925 = vmul.f32 %v7861, %v7861
  %v7926 = vmul.f32 %v7862, %v7862
  %v7927 = vmul.f32 %v7863, %v7863
  %v7928 = vmul.f32 %v7864, %v7864
  %v7929 = vmul.f32 %v7865, %v7865
  %v7930 = vmul.f32 %v7866, %v7866
  %v7931 = vmul.f32 %v7867, %v7867
  %v7932 = vmul.f32 %v7868, %v7868
  %v7933 = vmul.f32 %v7869, %v7869
  %v7934 = vmul.f32 %v7870, %v7870
  %v7935 = vmul.f32 %v7871, %v7871
  %v7936 = vmul.f32 %v7872, %v7872
  %v7937 = vmul.f32 %v7873, %v7873
  %v7938 = vmul.f32 %v7874, %v7874
  %v7939 = vmul.f32 %v7875, %v7875
  %v7940 = vmul.f32 %v7876, %v7876
  %v7941 = vmul.f32 %v7877, %v7877
  %v7942 = vmul.f32 %v7878, %v7878
  %v7943 = vmul.f32 %v7879, %v7879
  %v7944 = vmul.f32 %v7880, %v7880
  %v7945 = vmul.f32 %v7881, %v7881
  %v7946 = vmul.f32 %v7882, %v7882
  %v7947 = vmul.f32 %v7883, %v7883
  %v7948 = vmul.f32 %v7884, %v7884
  %v7949 = vmul.f32 %v7885, %v7885
  %v7950 = vmul.f32 %v7886, %v7886
  %v7951 = vmul.f32 %v7887, %v7887
  %v7952 = vmul.f32 %v7888, %v7888
  %v7953 = vmul.f32 %v7889, %v7889
  %v7954 = vmul.f32 %v7890, %v7890
  %v7955 = vmul.f32 %v7891, %v7891
  %v7956 = vmul.f32 %v7892, %v7892
  %v7957 = vmul.f32 %v7893, %v7893
  %v7958 = vmul.f32 %v7894, %v7894
  %v7959 = vmul.f32 %v7895, %v7895
  %v7960 = vmul.f32 %v7896, %v7896
  %v7961 = vmul.f32 %v7897, %v7897
  %v7962 = vmul.f32 %v7898, %v7898
  %v7963 = vmul.f32 %v7899, %v7899
  %v7964 = vmul.f32 %v7900, %v7900
  %v7965 = vmul.f32 %v7901, %v7901
  %v7966 = vmul.f32 %v7902, %v7902
  %v7967 = vmul.f32 %v7903, %v7903
  %v7968 = vmul.f32 %v7904, %v7904
  %v7969 = vmul.f32 %v7905, %v7905
  %v7970 = vmul.f32 %v7906, %v7906
  %v7971 = vmul.f32 %v7907, %v7907
  %v7972 = vmul.f32 %v7908, %v7908
  %v7973 = vmul.f32 %v7909, %v7909
  %v7974 = vmul.f32 %v7910, %v7910
  %v7975 = vmul.f32 %v7911, %v7911
  %v7976 = vmul.f32 %v7912, %v7912
  %v7977 = vmul.f32 %v7913, %v7913
  %v7978 = vmul.f32 %v7914, %v7914
  %v7979 = vmul.f32 %v7915, %v7915
  %v7980 = vmul.f32 %v7916, %v7916
  %v7981 = vmul.f32 %v7917, %v7917
  %v7982 = vmul.f32 %v7918, %v7918
  %v7983 = vmul.f32 %v7919, %v7919
  %v7984 = vmul.f32 %v7920, %v7920
  %v7985 = vmul.f32 %v7921, %v7921
  %v7986 = vmul.f32 %v7922, %v7922
  %v7987 = vmul.f32 %v7923, %v7923
  %v7988 = vsel %vm7725, %v7924, 0.0
  %v7989 = vsel %vm7725, %v7925, 0.0
  %v7990 = vadd.f32 %v7988, %v7989
  %v7991 = vsel %vm7725, %v7926, 0.0
  %v7992 = vadd.f32 %v7990, %v7991
  %v7993 = vsel %vm7725, %v7927, 0.0
  %v7994 = vadd.f32 %v7992, %v7993
  %v7995 = vsel %vm7725, %v7928, 0.0
  %v7996 = vadd.f32 %v7994, %v7995
  %v7997 = vsel %vm7725, %v7929, 0.0
  %v7998 = vadd.f32 %v7996, %v7997
  %v7999 = vsel %vm7725, %v7930, 0.0
  %v8000 = vadd.f32 %v7998, %v7999
  %v8001 = vsel %vm7725, %v7931, 0.0
  %v8002 = vadd.f32 %v8000, %v8001
  %v8003 = vsel %vm7725, %v7932, 0.0
  %v8004 = vadd.f32 %v8002, %v8003
  %v8005 = vsel %vm7725, %v7933, 0.0
  %v8006 = vadd.f32 %v8004, %v8005
  %v8007 = vsel %vm7725, %v7934, 0.0
  %v8008 = vadd.f32 %v8006, %v8007
  %v8009 = vsel %vm7725, %v7935, 0.0
  %v8010 = vadd.f32 %v8008, %v8009
  %v8011 = vsel %vm7725, %v7936, 0.0
  %v8012 = vadd.f32 %v8010, %v8011
  %v8013 = vsel %vm7725, %v7937, 0.0
  %v8014 = vadd.f32 %v8012, %v8013
  %v8015 = vsel %vm7725, %v7938, 0.0
  %v8016 = vadd.f32 %v8014, %v8015
  %v8017 = vsel %vm7725, %v7939, 0.0
  %v8018 = vadd.f32 %v8016, %v8017
  %v8019 = vsel %vm7725, %v7940, 0.0
  %v8020 = vadd.f32 %v8018, %v8019
  %v8021 = vsel %vm7725, %v7941, 0.0
  %v8022 = vadd.f32 %v8020, %v8021
  %v8023 = vsel %vm7725, %v7942, 0.0
  %v8024 = vadd.f32 %v8022, %v8023
  %v8025 = vsel %vm7725, %v7943, 0.0
  %v8026 = vadd.f32 %v8024, %v8025
  %v8027 = vsel %vm7725, %v7944, 0.0
  %v8028 = vadd.f32 %v8026, %v8027
  %v8029 = vsel %vm7725, %v7945, 0.0
  %v8030 = vadd.f32 %v8028, %v8029
  %v8031 = vsel %vm7725, %v7946, 0.0
  %v8032 = vadd.f32 %v8030, %v8031
  %v8033 = vsel %vm7725, %v7947, 0.0
  %v8034 = vadd.f32 %v8032, %v8033
  %v8035 = vsel %vm7725, %v7948, 0.0
  %v8036 = vadd.f32 %v8034, %v8035
  %v8037 = vsel %vm7725, %v7949, 0.0
  %v8038 = vadd.f32 %v8036, %v8037
  %v8039 = vsel %vm7725, %v7950, 0.0
  %v8040 = vadd.f32 %v8038, %v8039
  %v8041 = vsel %vm7725, %v7951, 0.0
  %v8042 = vadd.f32 %v8040, %v8041
  %v8043 = vsel %vm7725, %v7952, 0.0
  %v8044 = vadd.f32 %v8042, %v8043
  %v8045 = vsel %vm7725, %v7953, 0.0
  %v8046 = vadd.f32 %v8044, %v8045
  %v8047 = vsel %vm7725, %v7954, 0.0
  %v8048 = vadd.f32 %v8046, %v8047
  %v8049 = vsel %vm7725, %v7955, 0.0
  %v8050 = vadd.f32 %v8048, %v8049
  %v8051 = vsel %vm7725, %v7956, 0.0
  %v8052 = vadd.f32 %v8050, %v8051
  %v8053 = vsel %vm7725, %v7957, 0.0
  %v8054 = vadd.f32 %v8052, %v8053
  %v8055 = vsel %vm7725, %v7958, 0.0
  %v8056 = vadd.f32 %v8054, %v8055
  %v8057 = vsel %vm7725, %v7959, 0.0
  %v8058 = vadd.f32 %v8056, %v8057
  %v8059 = vsel %vm7725, %v7960, 0.0
  %v8060 = vadd.f32 %v8058, %v8059
  %v8061 = vsel %vm7725, %v7961, 0.0
  %v8062 = vadd.f32 %v8060, %v8061
  %v8063 = vsel %vm7725, %v7962, 0.0
  %v8064 = vadd.f32 %v8062, %v8063
  %v8065 = vsel %vm7725, %v7963, 0.0
  %v8066 = vadd.f32 %v8064, %v8065
  %v8067 = vsel %vm7725, %v7964, 0.0
  %v8068 = vadd.f32 %v8066, %v8067
  %v8069 = vsel %vm7725, %v7965, 0.0
  %v8070 = vadd.f32 %v8068, %v8069
  %v8071 = vsel %vm7725, %v7966, 0.0
  %v8072 = vadd.f32 %v8070, %v8071
  %v8073 = vsel %vm7725, %v7967, 0.0
  %v8074 = vadd.f32 %v8072, %v8073
  %v8075 = vsel %vm7725, %v7968, 0.0
  %v8076 = vadd.f32 %v8074, %v8075
  %v8077 = vsel %vm7725, %v7969, 0.0
  %v8078 = vadd.f32 %v8076, %v8077
  %v8079 = vsel %vm7725, %v7970, 0.0
  %v8080 = vadd.f32 %v8078, %v8079
  %v8081 = vsel %vm7725, %v7971, 0.0
  %v8082 = vadd.f32 %v8080, %v8081
  %v8083 = vsel %vm7725, %v7972, 0.0
  %v8084 = vadd.f32 %v8082, %v8083
  %v8085 = vsel %vm7725, %v7973, 0.0
  %v8086 = vadd.f32 %v8084, %v8085
  %v8087 = vsel %vm7725, %v7974, 0.0
  %v8088 = vadd.f32 %v8086, %v8087
  %v8089 = vsel %vm7725, %v7975, 0.0
  %v8090 = vadd.f32 %v8088, %v8089
  %v8091 = vsel %vm7725, %v7976, 0.0
  %v8092 = vadd.f32 %v8090, %v8091
  %v8093 = vsel %vm7725, %v7977, 0.0
  %v8094 = vadd.f32 %v8092, %v8093
  %v8095 = vsel %vm7725, %v7978, 0.0
  %v8096 = vadd.f32 %v8094, %v8095
  %v8097 = vsel %vm7725, %v7979, 0.0
  %v8098 = vadd.f32 %v8096, %v8097
  %v8099 = vsel %vm7725, %v7980, 0.0
  %v8100 = vadd.f32 %v8098, %v8099
  %v8101 = vsel %vm7725, %v7981, 0.0
  %v8102 = vadd.f32 %v8100, %v8101
  %v8103 = vsel %vm7725, %v7982, 0.0
  %v8104 = vadd.f32 %v8102, %v8103
  %v8105 = vsel %vm7725, %v7983, 0.0
  %v8106 = vadd.f32 %v8104, %v8105
  %v8107 = vsel %vm7725, %v7984, 0.0
  %v8108 = vadd.f32 %v8106, %v8107
  %v8109 = vsel %vm7725, %v7985, 0.0
  %v8110 = vadd.f32 %v8108, %v8109
  %v8111 = vsel %vm7725, %v7986, 0.0
  %v8112 = vadd.f32 %v8110, %v8111
  %v8113 = vsel %vm7725, %v7987, 0.0
  %v8114 = vadd.f32 %v8112, %v8113
  %v8115 = vrot.slane %v8114, 4
  %v8116 = vadd.f32 %v8114, %v8115
  %v8117 = vrot.slane %v8116, 2
  %v8118 = vadd.f32 %v8116, %v8117
  %v8119 = vrot.slane %v8118, 1
  %v8120 = vadd.f32 %v8118, %v8119
  %v8121 = vmul.f32 %v8120, 0.001953125
  %v8122 = vadd.f32 %v8121, 1e-05
  %v8123 = vrsqrt.pop %v8122
  %v8124 = vmul.f32 %v8123, %v8122
  %v8125 = vmul.f32 %v8124, %v8123
  %v8126 = vmul.f32 0.5, %v8125
  %v8127 = vsub.f32 1.5, %v8126
  %v8128 = vmul.f32 %v8123, %v8127
  %vm8129 = vweird.f32 %v8122
  %vm8130 = vweird.f32 %v8123
  %vm8131 = vmor %vm8129, %vm8130
  %v8132 = vsel %vm8131, %v8123, %v8128
  %v8133 = vmul.f32 %v7860, %v8132
  %v8134 = vmul.f32 %v7861, %v8132
  %v8135 = vmul.f32 %v7862, %v8132
  %v8136 = vmul.f32 %v7863, %v8132
  %v8137 = vmul.f32 %v7864, %v8132
  %v8138 = vmul.f32 %v7865, %v8132
  %v8139 = vmul.f32 %v7866, %v8132
  %v8140 = vmul.f32 %v7867, %v8132
  %v8141 = vmul.f32 %v7868, %v8132
  %v8142 = vmul.f32 %v7869, %v8132
  %v8143 = vmul.f32 %v7870, %v8132
  %v8144 = vmul.f32 %v7871, %v8132
  %v8145 = vmul.f32 %v7872, %v8132
  %v8146 = vmul.f32 %v7873, %v8132
  %v8147 = vmul.f32 %v7874, %v8132
  %v8148 = vmul.f32 %v7875, %v8132
  %v8149 = vmul.f32 %v7876, %v8132
  %v8150 = vmul.f32 %v7877, %v8132
  %v8151 = vmul.f32 %v7878, %v8132
  %v8152 = vmul.f32 %v7879, %v8132
  %v8153 = vmul.f32 %v7880, %v8132
  %v8154 = vmul.f32 %v7881, %v8132
  %v8155 = vmul.f32 %v7882, %v8132
  %v8156 = vmul.f32 %v7883, %v8132
  %v8157 = vmul.f32 %v7884, %v8132
  %v8158 = vmul.f32 %v7885, %v8132
  %v8159 = vmul.f32 %v7886, %v8132
  %v8160 = vmul.f32 %v7887, %v8132
  %v8161 = vmul.f32 %v7888, %v8132
  %v8162 = vmul.f32 %v7889, %v8132
  %v8163 = vmul.f32 %v7890, %v8132
  %v8164 = vmul.f32 %v7891, %v8132
  %v8165 = vmul.f32 %v7892, %v8132
  %v8166 = vmul.f32 %v7893, %v8132
  %v8167 = vmul.f32 %v7894, %v8132
  %v8168 = vmul.f32 %v7895, %v8132
  %v8169 = vmul.f32 %v7896, %v8132
  %v8170 = vmul.f32 %v7897, %v8132
  %v8171 = vmul.f32 %v7898, %v8132
  %v8172 = vmul.f32 %v7899, %v8132
  %v8173 = vmul.f32 %v7900, %v8132
  %v8174 = vmul.f32 %v7901, %v8132
  %v8175 = vmul.f32 %v7902, %v8132
  %v8176 = vmul.f32 %v7903, %v8132
  %v8177 = vmul.f32 %v7904, %v8132
  %v8178 = vmul.f32 %v7905, %v8132
  %v8179 = vmul.f32 %v7906, %v8132
  %v8180 = vmul.f32 %v7907, %v8132
  %v8181 = vmul.f32 %v7908, %v8132
  %v8182 = vmul.f32 %v7909, %v8132
  %v8183 = vmul.f32 %v7910, %v8132
  %v8184 = vmul.f32 %v7911, %v8132
  %v8185 = vmul.f32 %v7912, %v8132
  %v8186 = vmul.f32 %v7913, %v8132
  %v8187 = vmul.f32 %v7914, %v8132
  %v8188 = vmul.f32 %v7915, %v8132
  %v8189 = vmul.f32 %v7916, %v8132
  %v8190 = vmul.f32 %v7917, %v8132
  %v8191 = vmul.f32 %v7918, %v8132
  %v8192 = vmul.f32 %v7919, %v8132
  %v8193 = vmul.f32 %v7920, %v8132
  %v8194 = vmul.f32 %v7921, %v8132
  %v8195 = vmul.f32 %v7922, %v8132
  %v8196 = vmul.f32 %v7923, %v8132
  %v8198 = vperm.slane %v7723, 0
  %v8200 = vmul.f32 %v8133, %v8198
  %v8201 = vmul.f32 %v8134, %v8198
  %v8202 = vmul.f32 %v8135, %v8198
  %v8203 = vmul.f32 %v8136, %v8198
  %v8204 = vmul.f32 %v8137, %v8198
  %v8205 = vmul.f32 %v8138, %v8198
  %v8206 = vmul.f32 %v8139, %v8198
  %v8207 = vmul.f32 %v8140, %v8198
  %v8208 = vmul.f32 %v8141, %v8198
  %v8209 = vmul.f32 %v8142, %v8198
  %v8210 = vmul.f32 %v8143, %v8198
  %v8211 = vmul.f32 %v8144, %v8198
  %v8212 = vmul.f32 %v8145, %v8198
  %v8213 = vmul.f32 %v8146, %v8198
  %v8214 = vmul.f32 %v8147, %v8198
  %v8215 = vmul.f32 %v8148, %v8198
  %v8216 = vmul.f32 %v8149, %v8198
  %v8217 = vmul.f32 %v8150, %v8198
  %v8218 = vmul.f32 %v8151, %v8198
  %v8219 = vmul.f32 %v8152, %v8198
  %v8220 = vmul.f32 %v8153, %v8198
  %v8221 = vmul.f32 %v8154, %v8198
  %v8222 = vmul.f32 %v8155, %v8198
  %v8223 = vmul.f32 %v8156, %v8198
  %v8224 = vmul.f32 %v8157, %v8198
  %v8225 = vmul.f32 %v8158, %v8198
  %v8226 = vmul.f32 %v8159, %v8198
  %v8227 = vmul.f32 %v8160, %v8198
  %v8228 = vmul.f32 %v8161, %v8198
  %v8229 = vmul.f32 %v8162, %v8198
  %v8230 = vmul.f32 %v8163, %v8198
  %v8231 = vmul.f32 %v8164, %v8198
  %v8232 = vmul.f32 %v8165, %v8198
  %v8233 = vmul.f32 %v8166, %v8198
  %v8234 = vmul.f32 %v8167, %v8198
  %v8235 = vmul.f32 %v8168, %v8198
  %v8236 = vmul.f32 %v8169, %v8198
  %v8237 = vmul.f32 %v8170, %v8198
  %v8238 = vmul.f32 %v8171, %v8198
  %v8239 = vmul.f32 %v8172, %v8198
  %v8240 = vmul.f32 %v8173, %v8198
  %v8241 = vmul.f32 %v8174, %v8198
  %v8242 = vmul.f32 %v8175, %v8198
  %v8243 = vmul.f32 %v8176, %v8198
  %v8244 = vmul.f32 %v8177, %v8198
  %v8245 = vmul.f32 %v8178, %v8198
  %v8246 = vmul.f32 %v8179, %v8198
  %v8247 = vmul.f32 %v8180, %v8198
  %v8248 = vmul.f32 %v8181, %v8198
  %v8249 = vmul.f32 %v8182, %v8198
  %v8250 = vmul.f32 %v8183, %v8198
  %v8251 = vmul.f32 %v8184, %v8198
  %v8252 = vmul.f32 %v8185, %v8198
  %v8253 = vmul.f32 %v8186, %v8198
  %v8254 = vmul.f32 %v8187, %v8198
  %v8255 = vmul.f32 %v8188, %v8198
  %v8256 = vmul.f32 %v8189, %v8198
  %v8257 = vmul.f32 %v8190, %v8198
  %v8258 = vmul.f32 %v8191, %v8198
  %v8259 = vmul.f32 %v8192, %v8198
  %v8260 = vmul.f32 %v8193, %v8198
  %v8261 = vmul.f32 %v8194, %v8198
  %v8262 = vmul.f32 %v8195, %v8198
  %v8263 = vmul.f32 %v8196, %v8198
  %v8265 = vperm.slane %v7724, 0
  %v8267 = vadd.f32 %v8200, %v8265
  %v8268 = vadd.f32 %v8201, %v8265
  %v8269 = vadd.f32 %v8202, %v8265
  %v8270 = vadd.f32 %v8203, %v8265
  %v8271 = vadd.f32 %v8204, %v8265
  %v8272 = vadd.f32 %v8205, %v8265
  %v8273 = vadd.f32 %v8206, %v8265
  %v8274 = vadd.f32 %v8207, %v8265
  %v8275 = vadd.f32 %v8208, %v8265
  %v8276 = vadd.f32 %v8209, %v8265
  %v8277 = vadd.f32 %v8210, %v8265
  %v8278 = vadd.f32 %v8211, %v8265
  %v8279 = vadd.f32 %v8212, %v8265
  %v8280 = vadd.f32 %v8213, %v8265
  %v8281 = vadd.f32 %v8214, %v8265
  %v8282 = vadd.f32 %v8215, %v8265
  %v8283 = vadd.f32 %v8216, %v8265
  %v8284 = vadd.f32 %v8217, %v8265
  %v8285 = vadd.f32 %v8218, %v8265
  %v8286 = vadd.f32 %v8219, %v8265
  %v8287 = vadd.f32 %v8220, %v8265
  %v8288 = vadd.f32 %v8221, %v8265
  %v8289 = vadd.f32 %v8222, %v8265
  %v8290 = vadd.f32 %v8223, %v8265
  %v8291 = vadd.f32 %v8224, %v8265
  %v8292 = vadd.f32 %v8225, %v8265
  %v8293 = vadd.f32 %v8226, %v8265
  %v8294 = vadd.f32 %v8227, %v8265
  %v8295 = vadd.f32 %v8228, %v8265
  %v8296 = vadd.f32 %v8229, %v8265
  %v8297 = vadd.f32 %v8230, %v8265
  %v8298 = vadd.f32 %v8231, %v8265
  %v8299 = vadd.f32 %v8232, %v8265
  %v8300 = vadd.f32 %v8233, %v8265
  %v8301 = vadd.f32 %v8234, %v8265
  %v8302 = vadd.f32 %v8235, %v8265
  %v8303 = vadd.f32 %v8236, %v8265
  %v8304 = vadd.f32 %v8237, %v8265
  %v8305 = vadd.f32 %v8238, %v8265
  %v8306 = vadd.f32 %v8239, %v8265
  %v8307 = vadd.f32 %v8240, %v8265
  %v8308 = vadd.f32 %v8241, %v8265
  %v8309 = vadd.f32 %v8242, %v8265
  %v8310 = vadd.f32 %v8243, %v8265
  %v8311 = vadd.f32 %v8244, %v8265
  %v8312 = vadd.f32 %v8245, %v8265
  %v8313 = vadd.f32 %v8246, %v8265
  %v8314 = vadd.f32 %v8247, %v8265
  %v8315 = vadd.f32 %v8248, %v8265
  %v8316 = vadd.f32 %v8249, %v8265
  %v8317 = vadd.f32 %v8250, %v8265
  %v8318 = vadd.f32 %v8251, %v8265
  %v8319 = vadd.f32 %v8252, %v8265
  %v8320 = vadd.f32 %v8253, %v8265
  %v8321 = vadd.f32 %v8254, %v8265
  %v8322 = vadd.f32 %v8255, %v8265
  %v8323 = vadd.f32 %v8256, %v8265
  %v8324 = vadd.f32 %v8257, %v8265
  %v8325 = vadd.f32 %v8258, %v8265
  %v8326 = vadd.f32 %v8259, %v8265
  %v8327 = vadd.f32 %v8260, %v8265
  %v8328 = vadd.f32 %v8261, %v8265
  %v8329 = vadd.f32 %v8262, %v8265
  %v8330 = vadd.f32 %v8263, %v8265
  %v8331 = vmax.f32 %v8267, 0.0
  %v8332 = vmax.f32 %v8268, 0.0
  %v8333 = vmax.f32 %v8269, 0.0
  %v8334 = vmax.f32 %v8270, 0.0
  %v8335 = vmax.f32 %v8271, 0.0
  %v8336 = vmax.f32 %v8272, 0.0
  %v8337 = vmax.f32 %v8273, 0.0
  %v8338 = vmax.f32 %v8274, 0.0
  %v8339 = vmax.f32 %v8275, 0.0
  %v8340 = vmax.f32 %v8276, 0.0
  %v8341 = vmax.f32 %v8277, 0.0
  %v8342 = vmax.f32 %v8278, 0.0
  %v8343 = vmax.f32 %v8279, 0.0
  %v8344 = vmax.f32 %v8280, 0.0
  %v8345 = vmax.f32 %v8281, 0.0
  %v8346 = vmax.f32 %v8282, 0.0
  %v8347 = vmax.f32 %v8283, 0.0
  %v8348 = vmax.f32 %v8284, 0.0
  %v8349 = vmax.f32 %v8285, 0.0
  %v8350 = vmax.f32 %v8286, 0.0
  %v8351 = vmax.f32 %v8287, 0.0
  %v8352 = vmax.f32 %v8288, 0.0
  %v8353 = vmax.f32 %v8289, 0.0
  %v8354 = vmax.f32 %v8290, 0.0
  %v8355 = vmax.f32 %v8291, 0.0
  %v8356 = vmax.f32 %v8292, 0.0
  %v8357 = vmax.f32 %v8293, 0.0
  %v8358 = vmax.f32 %v8294, 0.0
  %v8359 = vmax.f32 %v8295, 0.0
  %v8360 = vmax.f32 %v8296, 0.0
  %v8361 = vmax.f32 %v8297, 0.0
  %v8362 = vmax.f32 %v8298, 0.0
  %v8363 = vmax.f32 %v8299, 0.0
  %v8364 = vmax.f32 %v8300, 0.0
  %v8365 = vmax.f32 %v8301, 0.0
  %v8366 = vmax.f32 %v8302, 0.0
  %v8367 = vmax.f32 %v8303, 0.0
  %v8368 = vmax.f32 %v8304, 0.0
  %v8369 = vmax.f32 %v8305, 0.0
  %v8370 = vmax.f32 %v8306, 0.0
  %v8371 = vmax.f32 %v8307, 0.0
  %v8372 = vmax.f32 %v8308, 0.0
  %v8373 = vmax.f32 %v8309, 0.0
  %v8374 = vmax.f32 %v8310, 0.0
  %v8375 = vmax.f32 %v8311, 0.0
  %v8376 = vmax.f32 %v8312, 0.0
  %v8377 = vmax.f32 %v8313, 0.0
  %v8378 = vmax.f32 %v8314, 0.0
  %v8379 = vmax.f32 %v8315, 0.0
  %v8380 = vmax.f32 %v8316, 0.0
  %v8381 = vmax.f32 %v8317, 0.0
  %v8382 = vmax.f32 %v8318, 0.0
  %v8383 = vmax.f32 %v8319, 0.0
  %v8384 = vmax.f32 %v8320, 0.0
  %v8385 = vmax.f32 %v8321, 0.0
  %v8386 = vmax.f32 %v8322, 0.0
  %v8387 = vmax.f32 %v8323, 0.0
  %v8388 = vmax.f32 %v8324, 0.0
  %v8389 = vmax.f32 %v8325, 0.0
  %v8390 = vmax.f32 %v8326, 0.0
  %v8391 = vmax.f32 %v8327, 0.0
  %v8392 = vmax.f32 %v8328, 0.0
  %v8393 = vmax.f32 %v8329, 0.0
  %v8394 = vmax.f32 %v8330, 0.0
  %8395 = vst.msk [vmem:[#allocation2] sm:$0xff] %vm7725, 0.0
  %8396 = vst.msk [vmem:[#allocation2 + $0x8] sm:$0xff] %vm7725, 0.0
  %vm8397 = vcmask 58368
  %8398 = vst.msk [vmem:[#allocation2 + $0x10] sm:$0x3] %vm8397, 0.0
  %8399 = vst.msk [vmem:[#allocation2 + $0x18] sm:$0xff] %vm7725, 0.0
  %8400 = vst.msk [vmem:[#allocation2 + $0x20] sm:$0xff] %vm7725, 0.0
  %8401 = vst.msk [vmem:[#allocation2 + $0x28] sm:$0x3] %vm8397, 0.0
  %8402 = vst.msk [vmem:[#allocation2 + $0x30] sm:$0xff] %vm7725, 0.0
  %8403 = vst.msk [vmem:[#allocation2 + $0x38] sm:$0xff] %vm7725, 0.0
  %8404 = vst.msk [vmem:[#allocation2 + $0x40] sm:$0x3] %vm8397, 0.0
  %8405 = vst.msk [vmem:[#allocation2 + $0x48] sm:$0xff] %vm7725, 0.0
  %8406 = vst.msk [vmem:[#allocation2 + $0x50] sm:$0xff] %vm7725, 0.0
  %8407 = vst.msk [vmem:[#allocation2 + $0x58] sm:$0x3] %vm8397, 0.0
  %8408 = vst.msk [vmem:[#allocation2 + $0x60] sm:$0xff] %vm7725, 0.0
  %8409 = vst.msk [vmem:[#allocation2 + $0x68] sm:$0xff] %vm7725, 0.0
  %8410 = vst.msk [vmem:[#allocation2 + $0x70] sm:$0x3] %vm8397, 0.0
  %8411 = vst.msk [vmem:[#allocation2 + $0x78] sm:$0xff] %vm7725, 0.0
  %8412 = vst.msk [vmem:[#allocation2 + $0x80] sm:$0xff] %vm7725, 0.0
  %8413 = vst.msk [vmem:[#allocation2 + $0x88] sm:$0x3] %vm8397, 0.0
  %8414 = vst.msk [vmem:[#allocation2 + $0x90] sm:$0xff] %vm7725, 0.0
  %8415 = vst.msk [vmem:[#allocation2 + $0x98] sm:$0xff] %vm7725, 0.0
  %8416 = vst.msk [vmem:[#allocation2 + $0xa0] sm:$0x3] %vm8397, 0.0
  %8417 = vst.msk [vmem:[#allocation2 + $0xa8] sm:$0xff] %vm7725, 0.0
  %8418 = vst.msk [vmem:[#allocation2 + $0xb0] sm:$0xff] %vm7725, 0.0
  %8419 = vst.msk [vmem:[#allocation2 + $0xb8] sm:$0x3] %vm8397, 0.0
  %8420 = vst.msk [vmem:[#allocation2 + $0xc0] sm:$0xff] %vm7725, 0.0
  %8421 = vst.msk [vmem:[#allocation2 + $0xc8] sm:$0xff] %vm7725, 0.0
  %8422 = vst.msk [vmem:[#allocation2 + $0xd0] sm:$0x3] %vm8397, 0.0
  %8423 = vst.msk [vmem:[#allocation2 + $0xd8] sm:$0xff] %vm7725, 0.0
  %8424 = vst.msk [vmem:[#allocation2 + $0xe0] sm:$0xff] %vm7725, 0.0
  %8425 = vst.msk [vmem:[#allocation2 + $0xe8] sm:$0x3] %vm8397, 0.0
  %8426 = vst.msk [vmem:[#allocation2 + $0xf0] sm:$0xff] %vm7725, 0.0
  %8427 = vst.msk [vmem:[#allocation2 + $0xf8] sm:$0xff] %vm7725, 0.0
  %8428 = vst.msk [vmem:[#allocation2 + $0x100] sm:$0x3] %vm8397, 0.0
  %8429 = vst.msk [vmem:[#allocation2 + $0x108] sm:$0xff] %vm7725, 0.0
  %8430 = vst.msk [vmem:[#allocation2 + $0x110] sm:$0xff] %vm7725, 0.0
  %8431 = vst.msk [vmem:[#allocation2 + $0x118] sm:$0x3] %vm8397, 0.0
  %8432 = vst.msk [vmem:[#allocation2 + $0x120] sm:$0xff] %vm7725, 0.0
  %8433 = vst.msk [vmem:[#allocation2 + $0x128] sm:$0xff] %vm7725, 0.0
  %8434 = vst.msk [vmem:[#allocation2 + $0x130] sm:$0x3] %vm8397, 0.0
  %8435 = vst.msk [vmem:[#allocation2 + $0x138] sm:$0xff] %vm7725, 0.0
  %8436 = vst.msk [vmem:[#allocation2 + $0x140] sm:$0xff] %vm7725, 0.0
  %8437 = vst.msk [vmem:[#allocation2 + $0x148] sm:$0x3] %vm8397, 0.0
  %8438 = vst.msk [vmem:[#allocation2 + $0x150] sm:$0xff] %vm7725, 0.0
  %8439 = vst.msk [vmem:[#allocation2 + $0x158] sm:$0xff] %vm7725, 0.0
  %8440 = vst.msk [vmem:[#allocation2 + $0x160] sm:$0x3] %vm8397, 0.0
  %8441 = vst.msk [vmem:[#allocation2 + $0x168] sm:$0xff] %vm7725, 0.0
  %8442 = vst.msk [vmem:[#allocation2 + $0x170] sm:$0xff] %vm7725, 0.0
  %8443 = vst.msk [vmem:[#allocation2 + $0x178] sm:$0x3] %vm8397, 0.0
  %8444 = vst.msk [vmem:[#allocation2 + $0x180] sm:$0xff] %vm7725, 0.0
  %8445 = vst.msk [vmem:[#allocation2 + $0x188] sm:$0xff] %vm7725, 0.0
  %8446 = vst.msk [vmem:[#allocation2 + $0x190] sm:$0x3] %vm8397, 0.0
  %8447 = vst.msk [vmem:[#allocation2 + $0x198] sm:$0xff] %vm7725, 0.0
  %8448 = vst.msk [vmem:[#allocation2 + $0x1a0] sm:$0xff] %vm7725, 0.0
  %8449 = vst.msk [vmem:[#allocation2 + $0x1a8] sm:$0x3] %vm8397, 0.0
  %8450 = vst.msk [vmem:[#allocation2 + $0x1b0] sm:$0xff] %vm7725, 0.0
  %8451 = vst.msk [vmem:[#allocation2 + $0x1b8] sm:$0xff] %vm7725, 0.0
  %8452 = vst.msk [vmem:[#allocation2 + $0x1c0] sm:$0x3] %vm8397, 0.0
  %8453 = vst.msk [vmem:[#allocation2 + $0x1c8] sm:$0xff] %vm7725, 0.0
  %8454 = vst.msk [vmem:[#allocation2 + $0x1d0] sm:$0xff] %vm7725, 0.0
  %8455 = vst.msk [vmem:[#allocation2 + $0x1d8] sm:$0x3] %vm8397, 0.0
  %8456 = vst.msk [vmem:[#allocation2 + $0x1e0] sm:$0xff] %vm7725, 0.0
  %8457 = vst.msk [vmem:[#allocation2 + $0x1e8] sm:$0xff] %vm7725, 0.0
  %8458 = vst.msk [vmem:[#allocation2 + $0x1f0] sm:$0x3] %vm8397, 0.0
  %8459 = vst.msk [vmem:[#allocation2 + $0x1f8] sm:$0xff] %vm7725, 0.0
  %8460 = vst.msk [vmem:[#allocation2 + $0x200] sm:$0xff] %vm7725, 0.0
  %8461 = vst.msk [vmem:[#allocation2 + $0x208] sm:$0x3] %vm8397, 0.0
  %8462 = vst.msk [vmem:[#allocation2 + $0x210] sm:$0xff] %vm7725, 0.0
  %8463 = vst.msk [vmem:[#allocation2 + $0x218] sm:$0xff] %vm7725, 0.0
  %8464 = vst.msk [vmem:[#allocation2 + $0x220] sm:$0x3] %vm8397, 0.0
  %8465 = vst.msk [vmem:[#allocation2 + $0x228] sm:$0xff] %vm7725, 0.0
  %8466 = vst.msk [vmem:[#allocation2 + $0x230] sm:$0xff] %vm7725, 0.0
  %8467 = vst.msk [vmem:[#allocation2 + $0x238] sm:$0x3] %vm8397, 0.0
  %8468 = vst.msk [vmem:[#allocation2 + $0x240] sm:$0xff] %vm7725, 0.0
  %8469 = vst.msk [vmem:[#allocation2 + $0x248] sm:$0xff] %vm7725, 0.0
  %8470 = vst.msk [vmem:[#allocation2 + $0x250] sm:$0x3] %vm8397, 0.0
  %8471 = vst.msk [vmem:[#allocation2 + $0x258] sm:$0xff] %vm7725, 0.0
  %8472 = vst.msk [vmem:[#allocation2 + $0x260] sm:$0xff] %vm7725, 0.0
  %8473 = vst.msk [vmem:[#allocation2 + $0x268] sm:$0x3] %vm8397, 0.0
  %8474 = vst.msk [vmem:[#allocation2 + $0x270] sm:$0xff] %vm7725, 0.0
  %8475 = vst.msk [vmem:[#allocation2 + $0x278] sm:$0xff] %vm7725, 0.0
  %8476 = vst.msk [vmem:[#allocation2 + $0x280] sm:$0x3] %vm8397, 0.0
  %8477 = vst.msk [vmem:[#allocation2 + $0x288] sm:$0xff] %vm7725, 0.0
  %8478 = vst.msk [vmem:[#allocation2 + $0x290] sm:$0xff] %vm7725, 0.0
  %8479 = vst.msk [vmem:[#allocation2 + $0x298] sm:$0x3] %vm8397, 0.0
  %8480 = vst.msk [vmem:[#allocation2 + $0x2a0] sm:$0xff] %vm7725, 0.0
  %8481 = vst.msk [vmem:[#allocation2 + $0x2a8] sm:$0xff] %vm7725, 0.0
  %8482 = vst.msk [vmem:[#allocation2 + $0x2b0] sm:$0x3] %vm8397, 0.0
  %8483 = vst.msk [vmem:[#allocation2 + $0x2b8] sm:$0xff] %vm7725, 0.0
  %8484 = vst.msk [vmem:[#allocation2 + $0x2c0] sm:$0xff] %vm7725, 0.0
  %8485 = vst.msk [vmem:[#allocation2 + $0x2c8] sm:$0x3] %vm8397, 0.0
  %8486 = vst.msk [vmem:[#allocation2 + $0x2d0] sm:$0xff] %vm7725, 0.0
  %8487 = vst.msk [vmem:[#allocation2 + $0x2d8] sm:$0xff] %vm7725, 0.0
  %8488 = vst.msk [vmem:[#allocation2 + $0x2e0] sm:$0x3] %vm8397, 0.0
  %8489 = vst.msk [vmem:[#allocation2 + $0x2e8] sm:$0xff] %vm7725, 0.0
  %8490 = vst.msk [vmem:[#allocation2 + $0x2f0] sm:$0xff] %vm7725, 0.0
  %8491 = vst.msk [vmem:[#allocation2 + $0x2f8] sm:$0x3] %vm8397, 0.0
  %8492 = vst.msk [vmem:[#allocation2 + $0x300] sm:$0xff] %vm7725, 0.0
  %8493 = vst.msk [vmem:[#allocation2 + $0x308] sm:$0xff] %vm7725, 0.0
  %8494 = vst.msk [vmem:[#allocation2 + $0x310] sm:$0x3] %vm8397, 0.0
  %8495 = vst.msk [vmem:[#allocation2 + $0x318] sm:$0xff] %vm7725, 0.0
  %8496 = vst.msk [vmem:[#allocation2 + $0x320] sm:$0xff] %vm7725, 0.0
  %8497 = vst.msk [vmem:[#allocation2 + $0x328] sm:$0x3] %vm8397, 0.0
  %8498 = vst.msk [vmem:[#allocation2 + $0x330] sm:$0xff] %vm7725, 0.0
  %8499 = vst.msk [vmem:[#allocation2 + $0x338] sm:$0xff] %vm7725, 0.0
  %8500 = vst.msk [vmem:[#allocation2 + $0x340] sm:$0x3] %vm8397, 0.0
  %8501 = vst.msk [vmem:[#allocation2 + $0x348] sm:$0xff] %vm7725, 0.0
  %8502 = vst.msk [vmem:[#allocation2 + $0x350] sm:$0xff] %vm7725, 0.0
  %8503 = vst.msk [vmem:[#allocation2 + $0x358] sm:$0x3] %vm8397, 0.0
  %s8504 = scalar_lea.vmem [#allocation2], 24
  %8505 = vst.msk [vmem:[%s8504 + $0x1] sm:$0xff] %vm7725, %v8331
  %8506 = vst.msk [vmem:[%s8504 + $0x9] sm:$0xff] %vm7725, %v8332
  %8507 = vst.msk [vmem:[%s8504 + $0x19] sm:$0xff] %vm7725, %v8333
  %8508 = vst.msk [vmem:[%s8504 + $0x21] sm:$0xff] %vm7725, %v8334
  %8509 = vst.msk [vmem:[%s8504 + $0x31] sm:$0xff] %vm7725, %v8335
  %8510 = vst.msk [vmem:[%s8504 + $0x39] sm:$0xff] %vm7725, %v8336
  %8511 = vst.msk [vmem:[%s8504 + $0x49] sm:$0xff] %vm7725, %v8337
  %8512 = vst.msk [vmem:[%s8504 + $0x51] sm:$0xff] %vm7725, %v8338
  %8513 = vst.msk [vmem:[%s8504 + $0x61] sm:$0xff] %vm7725, %v8339
  %8514 = vst.msk [vmem:[%s8504 + $0x69] sm:$0xff] %vm7725, %v8340
  %8515 = vst.msk [vmem:[%s8504 + $0x79] sm:$0xff] %vm7725, %v8341
  %8516 = vst.msk [vmem:[%s8504 + $0x81] sm:$0xff] %vm7725, %v8342
  %8517 = vst.msk [vmem:[%s8504 + $0x91] sm:$0xff] %vm7725, %v8343
  %8518 = vst.msk [vmem:[%s8504 + $0x99] sm:$0xff] %vm7725, %v8344
  %8519 = vst.msk [vmem:[%s8504 + $0xa9] sm:$0xff] %vm7725, %v8345
  %8520 = vst.msk [vmem:[%s8504 + $0xb1] sm:$0xff] %vm7725, %v8346
  %8521 = vst.msk [vmem:[%s8504 + $0xc1] sm:$0xff] %vm7725, %v8347
  %8522 = vst.msk [vmem:[%s8504 + $0xc9] sm:$0xff] %vm7725, %v8348
  %8523 = vst.msk [vmem:[%s8504 + $0xd9] sm:$0xff] %vm7725, %v8349
  %8524 = vst.msk [vmem:[%s8504 + $0xe1] sm:$0xff] %vm7725, %v8350
  %8525 = vst.msk [vmem:[%s8504 + $0xf1] sm:$0xff] %vm7725, %v8351
  %8526 = vst.msk [vmem:[%s8504 + $0xf9] sm:$0xff] %vm7725, %v8352
  %8527 = vst.msk [vmem:[%s8504 + $0x109] sm:$0xff] %vm7725, %v8353
  %8528 = vst.msk [vmem:[%s8504 + $0x111] sm:$0xff] %vm7725, %v8354
  %8529 = vst.msk [vmem:[%s8504 + $0x121] sm:$0xff] %vm7725, %v8355
  %8530 = vst.msk [vmem:[%s8504 + $0x129] sm:$0xff] %vm7725, %v8356
  %8531 = vst.msk [vmem:[%s8504 + $0x139] sm:$0xff] %vm7725, %v8357
  %8532 = vst.msk [vmem:[%s8504 + $0x141] sm:$0xff] %vm7725, %v8358
  %8533 = vst.msk [vmem:[%s8504 + $0x151] sm:$0xff] %vm7725, %v8359
  %8534 = vst.msk [vmem:[%s8504 + $0x159] sm:$0xff] %vm7725, %v8360
  %8535 = vst.msk [vmem:[%s8504 + $0x169] sm:$0xff] %vm7725, %v8361
  %8536 = vst.msk [vmem:[%s8504 + $0x171] sm:$0xff] %vm7725, %v8362
  %8537 = vst.msk [vmem:[%s8504 + $0x1b1] sm:$0xff] %vm7725, %v8363
  %8538 = vst.msk [vmem:[%s8504 + $0x1b9] sm:$0xff] %vm7725, %v8364
  %8539 = vst.msk [vmem:[%s8504 + $0x1c9] sm:$0xff] %vm7725, %v8365
  %8540 = vst.msk [vmem:[%s8504 + $0x1d1] sm:$0xff] %vm7725, %v8366
  %8541 = vst.msk [vmem:[%s8504 + $0x1e1] sm:$0xff] %vm7725, %v8367
  %8542 = vst.msk [vmem:[%s8504 + $0x1e9] sm:$0xff] %vm7725, %v8368
  %8543 = vst.msk [vmem:[%s8504 + $0x1f9] sm:$0xff] %vm7725, %v8369
  %8544 = vst.msk [vmem:[%s8504 + $0x201] sm:$0xff] %vm7725, %v8370
  %8545 = vst.msk [vmem:[%s8504 + $0x211] sm:$0xff] %vm7725, %v8371
  %8546 = vst.msk [vmem:[%s8504 + $0x219] sm:$0xff] %vm7725, %v8372
  %8547 = vst.msk [vmem:[%s8504 + $0x229] sm:$0xff] %vm7725, %v8373
  %8548 = vst.msk [vmem:[%s8504 + $0x231] sm:$0xff] %vm7725, %v8374
  %8549 = vst.msk [vmem:[%s8504 + $0x241] sm:$0xff] %vm7725, %v8375
  %8550 = vst.msk [vmem:[%s8504 + $0x249] sm:$0xff] %vm7725, %v8376
  %8551 = vst.msk [vmem:[%s8504 + $0x259] sm:$0xff] %vm7725, %v8377
  %8552 = vst.msk [vmem:[%s8504 + $0x261] sm:$0xff] %vm7725, %v8378
  %8553 = vst.msk [vmem:[%s8504 + $0x271] sm:$0xff] %vm7725, %v8379
  %8554 = vst.msk [vmem:[%s8504 + $0x279] sm:$0xff] %vm7725, %v8380
  %8555 = vst.msk [vmem:[%s8504 + $0x289] sm:$0xff] %vm7725, %v8381
  %8556 = vst.msk [vmem:[%s8504 + $0x291] sm:$0xff] %vm7725, %v8382
  %8557 = vst.msk [vmem:[%s8504 + $0x2a1] sm:$0xff] %vm7725, %v8383
  %8558 = vst.msk [vmem:[%s8504 + $0x2a9] sm:$0xff] %vm7725, %v8384
  %8559 = vst.msk [vmem:[%s8504 + $0x2b9] sm:$0xff] %vm7725, %v8385
  %8560 = vst.msk [vmem:[%s8504 + $0x2c1] sm:$0xff] %vm7725, %v8386
  %8561 = vst.msk [vmem:[%s8504 + $0x2d1] sm:$0xff] %vm7725, %v8387
  %8562 = vst.msk [vmem:[%s8504 + $0x2d9] sm:$0xff] %vm7725, %v8388
  %8563 = vst.msk [vmem:[%s8504 + $0x2e9] sm:$0xff] %vm7725, %v8389
  %8564 = vst.msk [vmem:[%s8504 + $0x2f1] sm:$0xff] %vm7725, %v8390
  %8565 = vst.msk [vmem:[%s8504 + $0x301] sm:$0xff] %vm7725, %v8391
  %8566 = vst.msk [vmem:[%s8504 + $0x309] sm:$0xff] %vm7725, %v8392
  %8567 = vst.msk [vmem:[%s8504 + $0x319] sm:$0xff] %vm7725, %v8393
  %8568 = vst.msk [vmem:[%s8504 + $0x321] sm:$0xff] %vm7725, %v8394
  %v8569 = vld [vmem:[#allocation2] sm:$0xff]
  %v8570 = vld [vmem:[#allocation2 + $0x8] sm:$0xff]
  %v8571 = vld [vmem:[#allocation2 + $0x18] sm:$0xff]
  %v8572 = vld [vmem:[#allocation2 + $0x20] sm:$0xff]
  %v8573 = vld [vmem:[#allocation2 + $0x30] sm:$0xff]
  %v8574 = vld [vmem:[#allocation2 + $0x38] sm:$0xff]
  %v8575 = vld [vmem:[#allocation2 + $0x48] sm:$0xff]
  %v8576 = vld [vmem:[#allocation2 + $0x50] sm:$0xff]
  %v8577 = vld [vmem:[#allocation2 + $0x60] sm:$0xff]
  %v8578 = vld [vmem:[#allocation2 + $0x68] sm:$0xff]
  %v8579 = vld [vmem:[#allocation2 + $0x78] sm:$0xff]
  %v8580 = vld [vmem:[#allocation2 + $0x80] sm:$0xff]
  %v8581 = vld [vmem:[#allocation2 + $0x90] sm:$0xff]
  %v8582 = vld [vmem:[#allocation2 + $0x98] sm:$0xff]
  %v8583 = vld [vmem:[#allocation2 + $0xa8] sm:$0xff]
  %v8584 = vld [vmem:[#allocation2 + $0xb0] sm:$0xff]
  %v8585 = vld [vmem:[#allocation2 + $0xc0] sm:$0xff]
  %v8586 = vld [vmem:[#allocation2 + $0xc8] sm:$0xff]
  %v8587 = vld [vmem:[#allocation2 + $0xd8] sm:$0xff]
  %v8588 = vld [vmem:[#allocation2 + $0xe0] sm:$0xff]
  %v8589 = vld [vmem:[#allocation2 + $0xf0] sm:$0xff]
  %v8590 = vld [vmem:[#allocation2 + $0xf8] sm:$0xff]
  %v8591 = vld [vmem:[#allocation2 + $0x108] sm:$0xff]
  %v8592 = vld [vmem:[#allocation2 + $0x110] sm:$0xff]
  %v8593 = vld [vmem:[#allocation2 + $0x120] sm:$0xff]
  %v8594 = vld [vmem:[#allocation2 + $0x128] sm:$0xff]
  %v8595 = vld [vmem:[#allocation2 + $0x138] sm:$0xff]
  %v8596 = vld [vmem:[#allocation2 + $0x140] sm:$0xff]
  %v8597 = vld [vmem:[#allocation2 + $0x150] sm:$0xff]
  %v8598 = vld [vmem:[#allocation2 + $0x158] sm:$0xff]
  %v8599 = vld [vmem:[#allocation2 + $0x168] sm:$0xff]
  %v8600 = vld [vmem:[#allocation2 + $0x170] sm:$0xff]
  %v8601 = vld [vmem:[#allocation2 + $0x1b0] sm:$0xff]
  %v8602 = vld [vmem:[#allocation2 + $0x1b8] sm:$0xff]
  %v8603 = vld [vmem:[#allocation2 + $0x1c8] sm:$0xff]
  %v8604 = vld [vmem:[#allocation2 + $0x1d0] sm:$0xff]
  %v8605 = vld [vmem:[#allocation2 + $0x1e0] sm:$0xff]
  %v8606 = vld [vmem:[#allocation2 + $0x1e8] sm:$0xff]
  %v8607 = vld [vmem:[#allocation2 + $0x1f8] sm:$0xff]
  %v8608 = vld [vmem:[#allocation2 + $0x200] sm:$0xff]
  %v8609 = vld [vmem:[#allocation2 + $0x210] sm:$0xff]
  %v8610 = vld [vmem:[#allocation2 + $0x218] sm:$0xff]
  %v8611 = vld [vmem:[#allocation2 + $0x228] sm:$0xff]
  %v8612 = vld [vmem:[#allocation2 + $0x230] sm:$0xff]
  %v8613 = vld [vmem:[#allocation2 + $0x240] sm:$0xff]
  %v8614 = vld [vmem:[#allocation2 + $0x248] sm:$0xff]
  %v8615 = vld [vmem:[#allocation2 + $0x258] sm:$0xff]
  %v8616 = vld [vmem:[#allocation2 + $0x260] sm:$0xff]
  %v8617 = vld [vmem:[#allocation2 + $0x270] sm:$0xff]
  %v8618 = vld [vmem:[#allocation2 + $0x278] sm:$0xff]
  %v8619 = vld [vmem:[#allocation2 + $0x288] sm:$0xff]
  %v8620 = vld [vmem:[#allocation2 + $0x290] sm:$0xff]
  %v8621 = vld [vmem:[#allocation2 + $0x2a0] sm:$0xff]
  %v8622 = vld [vmem:[#allocation2 + $0x2a8] sm:$0xff]
  %v8623 = vld [vmem:[#allocation2 + $0x2b8] sm:$0xff]
  %v8624 = vld [vmem:[#allocation2 + $0x2c0] sm:$0xff]
  %v8625 = vld [vmem:[#allocation2 + $0x2d0] sm:$0xff]
  %v8626 = vld [vmem:[#allocation2 + $0x2d8] sm:$0xff]
  %v8627 = vld [vmem:[#allocation2 + $0x2e8] sm:$0xff]
  %v8628 = vld [vmem:[#allocation2 + $0x2f0] sm:$0xff]
  %v8629 = vld [vmem:[#allocation2 + $0x300] sm:$0xff]
  %v8630 = vld [vmem:[#allocation2 + $0x308] sm:$0xff]
  %v8631 = vld [vmem:[#allocation2 + $0x318] sm:$0xff]
  %v8632 = vld [vmem:[#allocation2 + $0x320] sm:$0xff]
  %v8633 = vpack.c.bf16 %v8570, %v8569
  %v8634 = vpack.c.bf16 %v8572, %v8571
  %v8635 = vpack.c.bf16 %v8574, %v8573
  %v8636 = vpack.c.bf16 %v8576, %v8575
  %v8637 = vpack.c.bf16 %v8578, %v8577
  %v8638 = vpack.c.bf16 %v8580, %v8579
  %v8639 = vpack.c.bf16 %v8582, %v8581
  %v8640 = vpack.c.bf16 %v8584, %v8583
  %v8641 = vpack.c.bf16 %v8586, %v8585
  %v8642 = vpack.c.bf16 %v8588, %v8587
  %v8643 = vpack.c.bf16 %v8590, %v8589
  %v8644 = vpack.c.bf16 %v8592, %v8591
  %v8645 = vpack.c.bf16 %v8594, %v8593
  %v8646 = vpack.c.bf16 %v8596, %v8595
  %v8647 = vpack.c.bf16 %v8598, %v8597
  %v8648 = vpack.c.bf16 %v8600, %v8599
  %v8649 = vpack.c.bf16 %v8602, %v8601
  %v8650 = vpack.c.bf16 %v8604, %v8603
  %v8651 = vpack.c.bf16 %v8606, %v8605
  %v8652 = vpack.c.bf16 %v8608, %v8607
  %v8653 = vpack.c.bf16 %v8610, %v8609
  %v8654 = vpack.c.bf16 %v8612, %v8611
  %v8655 = vpack.c.bf16 %v8614, %v8613
  %v8656 = vpack.c.bf16 %v8616, %v8615
  %v8657 = vpack.c.bf16 %v8618, %v8617
  %v8658 = vpack.c.bf16 %v8620, %v8619
  %v8659 = vpack.c.bf16 %v8622, %v8621
  %v8660 = vpack.c.bf16 %v8624, %v8623
  %v8661 = vpack.c.bf16 %v8626, %v8625
  %v8662 = vpack.c.bf16 %v8628, %v8627
  %v8663 = vpack.c.bf16 %v8630, %v8629
  %v8664 = vpack.c.bf16 %v8632, %v8631
  %v8665 = vld [vmem:[%s4] sm:$0xf]
  %v8666 = vld [vmem:[#allocation2 + $0x1] sm:$0xff]
  %v8667 = vld [vmem:[#allocation2 + $0x9] sm:$0xff]
  %v8668 = vld [vmem:[#allocation2 + $0x19] sm:$0xff]
  %v8669 = vld [vmem:[#allocation2 + $0x21] sm:$0xff]
  %v8670 = vld [vmem:[#allocation2 + $0x31] sm:$0xff]
  %v8671 = vld [vmem:[#allocation2 + $0x39] sm:$0xff]
  %v8672 = vld [vmem:[#allocation2 + $0x49] sm:$0xff]
  %v8673 = vld [vmem:[#allocation2 + $0x51] sm:$0xff]
  %v8674 = vld [vmem:[#allocation2 + $0x61] sm:$0xff]
  %v8675 = vld [vmem:[#allocation2 + $0x69] sm:$0xff]
  %v8676 = vld [vmem:[#allocation2 + $0x79] sm:$0xff]
  %v8677 = vld [vmem:[#allocation2 + $0x81] sm:$0xff]
  %v8678 = vld [vmem:[#allocation2 + $0x91] sm:$0xff]
  %v8679 = vld [vmem:[#allocation2 + $0x99] sm:$0xff]
  %v8680 = vld [vmem:[#allocation2 + $0xa9] sm:$0xff]
  %v8681 = vld [vmem:[#allocation2 + $0xb1] sm:$0xff]
  %v8682 = vld [vmem:[#allocation2 + $0xc1] sm:$0xff]
  %v8683 = vld [vmem:[#allocation2 + $0xc9] sm:$0xff]
  %v8684 = vld [vmem:[#allocation2 + $0xd9] sm:$0xff]
  %v8685 = vld [vmem:[#allocation2 + $0xe1] sm:$0xff]
  %v8686 = vld [vmem:[#allocation2 + $0xf1] sm:$0xff]
  %v8687 = vld [vmem:[#allocation2 + $0xf9] sm:$0xff]
  %v8688 = vld [vmem:[#allocation2 + $0x109] sm:$0xff]
  %v8689 = vld [vmem:[#allocation2 + $0x111] sm:$0xff]
  %v8690 = vld [vmem:[#allocation2 + $0x121] sm:$0xff]
  %v8691 = vld [vmem:[#allocation2 + $0x129] sm:$0xff]
  %v8692 = vld [vmem:[#allocation2 + $0x139] sm:$0xff]
  %v8693 = vld [vmem:[#allocation2 + $0x141] sm:$0xff]
  %v8694 = vld [vmem:[#allocation2 + $0x151] sm:$0xff]
  %v8695 = vld [vmem:[#allocation2 + $0x159] sm:$0xff]
  %v8696 = vld [vmem:[#allocation2 + $0x169] sm:$0xff]
  %v8697 = vld [vmem:[#allocation2 + $0x171] sm:$0xff]
  %v8698 = vld [vmem:[#allocation2 + $0x1b1] sm:$0xff]
  %v8699 = vld [vmem:[#allocation2 + $0x1b9] sm:$0xff]
  %v8700 = vld [vmem:[#allocation2 + $0x1c9] sm:$0xff]
  %v8701 = vld [vmem:[#allocation2 + $0x1d1] sm:$0xff]
  %v8702 = vld [vmem:[#allocation2 + $0x1e1] sm:$0xff]
  %v8703 = vld [vmem:[#allocation2 + $0x1e9] sm:$0xff]
  %v8704 = vld [vmem:[#allocation2 + $0x1f9] sm:$0xff]
  %v8705 = vld [vmem:[#allocation2 + $0x201] sm:$0xff]
  %v8706 = vld [vmem:[#allocation2 + $0x211] sm:$0xff]
  %v8707 = vld [vmem:[#allocation2 + $0x219] sm:$0xff]
  %v8708 = vld [vmem:[#allocation2 + $0x229] sm:$0xff]
  %v8709 = vld [vmem:[#allocation2 + $0x231] sm:$0xff]
  %v8710 = vld [vmem:[#allocation2 + $0x241] sm:$0xff]
  %v8711 = vld [vmem:[#allocation2 + $0x249] sm:$0xff]
  %v8712 = vld [vmem:[#allocation2 + $0x259] sm:$0xff]
  %v8713 = vld [vmem:[#allocation2 + $0x261] sm:$0xff]
  %v8714 = vld [vmem:[#allocation2 + $0x271] sm:$0xff]
  %v8715 = vld [vmem:[#allocation2 + $0x279] sm:$0xff]
  %v8716 = vld [vmem:[#allocation2 + $0x289] sm:$0xff]
  %v8717 = vld [vmem:[#allocation2 + $0x291] sm:$0xff]
  %v8718 = vld [vmem:[#allocation2 + $0x2a1] sm:$0xff]
  %v8719 = vld [vmem:[#allocation2 + $0x2a9] sm:$0xff]
  %v8720 = vld [vmem:[#allocation2 + $0x2b9] sm:$0xff]
  %v8721 = vld [vmem:[#allocation2 + $0x2c1] sm:$0xff]
  %v8722 = vld [vmem:[#allocation2 + $0x2d1] sm:$0xff]
  %v8723 = vld [vmem:[#allocation2 + $0x2d9] sm:$0xff]
  %v8724 = vld [vmem:[#allocation2 + $0x2e9] sm:$0xff]
  %v8725 = vld [vmem:[#allocation2 + $0x2f1] sm:$0xff]
  %v8726 = vld [vmem:[#allocation2 + $0x301] sm:$0xff]
  %v8727 = vld [vmem:[#allocation2 + $0x309] sm:$0xff]
  %v8728 = vld [vmem:[#allocation2 + $0x319] sm:$0xff]
  %v8729 = vld [vmem:[#allocation2 + $0x321] sm:$0xff]
  %v8730 = vpack.c.bf16 %v8667, %v8666
  %v8731 = vpack.c.bf16 %v8669, %v8668
  %v8732 = vpack.c.bf16 %v8671, %v8670
  %v8733 = vpack.c.bf16 %v8673, %v8672
  %v8734 = vpack.c.bf16 %v8675, %v8674
  %v8735 = vpack.c.bf16 %v8677, %v8676
  %v8736 = vpack.c.bf16 %v8679, %v8678
  %v8737 = vpack.c.bf16 %v8681, %v8680
  %v8738 = vpack.c.bf16 %v8683, %v8682
  %v8739 = vpack.c.bf16 %v8685, %v8684
  %v8740 = vpack.c.bf16 %v8687, %v8686
  %v8741 = vpack.c.bf16 %v8689, %v8688
  %v8742 = vpack.c.bf16 %v8691, %v8690
  %v8743 = vpack.c.bf16 %v8693, %v8692
  %v8744 = vpack.c.bf16 %v8695, %v8694
  %v8745 = vpack.c.bf16 %v8697, %v8696
  %v8746 = vpack.c.bf16 %v8699, %v8698
  %v8747 = vpack.c.bf16 %v8701, %v8700
  %v8748 = vpack.c.bf16 %v8703, %v8702
  %v8749 = vpack.c.bf16 %v8705, %v8704
  %v8750 = vpack.c.bf16 %v8707, %v8706
  %v8751 = vpack.c.bf16 %v8709, %v8708
  %v8752 = vpack.c.bf16 %v8711, %v8710
  %v8753 = vpack.c.bf16 %v8713, %v8712
  %v8754 = vpack.c.bf16 %v8715, %v8714
  %v8755 = vpack.c.bf16 %v8717, %v8716
  %v8756 = vpack.c.bf16 %v8719, %v8718
  %v8757 = vpack.c.bf16 %v8721, %v8720
  %v8758 = vpack.c.bf16 %v8723, %v8722
  %v8759 = vpack.c.bf16 %v8725, %v8724
  %v8760 = vpack.c.bf16 %v8727, %v8726
  %v8761 = vpack.c.bf16 %v8729, %v8728
  %s8762 = scalar_lea.vmem %s4, 4
  %v8763 = vld [vmem:[%s8762] sm:$0xf]
  %v8765 = vsel %vm7725, %v8730, 0
  %v8768 = vsel %vm7725, %v8731, 0
  %v8771 = vsel %vm7725, %v8732, 0
  %v8774 = vsel %vm7725, %v8733, 0
  %v8777 = vsel %vm7725, %v8734, 0
  %v8780 = vsel %vm7725, %v8735, 0
  %v8783 = vsel %vm7725, %v8736, 0
  %v8786 = vsel %vm7725, %v8737, 0
  %v8789 = vsel %vm7725, %v8738, 0
  %v8792 = vsel %vm7725, %v8739, 0
  %v8795 = vsel %vm7725, %v8740, 0
  %v8798 = vsel %vm7725, %v8741, 0
  %v8801 = vsel %vm7725, %v8742, 0
  %v8804 = vsel %vm7725, %v8743, 0
  %v8807 = vsel %vm7725, %v8744, 0
  %v8810 = vsel %vm7725, %v8745, 0
  %v8813 = vsel %vm7725, %v8746, 0
  %v8816 = vsel %vm7725, %v8747, 0
  %v8819 = vsel %vm7725, %v8748, 0
  %v8822 = vsel %vm7725, %v8749, 0
  %v8825 = vsel %vm7725, %v8750, 0
  %v8828 = vsel %vm7725, %v8751, 0
  %v8831 = vsel %vm7725, %v8752, 0
  %v8834 = vsel %vm7725, %v8753, 0
  %v8837 = vsel %vm7725, %v8754, 0
  %v8840 = vsel %vm7725, %v8755, 0
  %v8843 = vsel %vm7725, %v8756, 0
  %v8846 = vsel %vm7725, %v8757, 0
  %v8849 = vsel %vm7725, %v8758, 0
  %v8852 = vsel %vm7725, %v8759, 0
  %v8855 = vsel %vm7725, %v8760, 0
  %v8858 = vsel %vm7725, %v8761, 0
  %vm8860 = vcmask 1043456
  %v8862 = vsel %vm8860, %v8763, 0
  %8864 = vmatpush.bf16.msra.mxu0 0
  %8865 = vmatpush.bf16.msra.mxu0 0
  %8866 = vmatpush.bf16.msra.mxu0 0
  %8867 = vmatpush.bf16.msra.mxu0 0
  %8868 = vmatpush.bf16.msra.mxu0 0
  %8869 = vmatpush.bf16.msra.mxu0 0
  %8870 = vmatpush.bf16.msra.mxu0 0
  %8871 = vmatpush.bf16.msra.mxu0 %v8862
  %8872 = vmatmul.bf16.gmra.mxu0 %v8765
  %v8873 = vpop.f32.mrf.mxu0
  %v8874 = vadd.f32 0.0, %v8873
  %v8875 = vpop.f32.mrf.mxu0
  %v8876 = vadd.f32 0.0, %v8875
  %8877 = vmatmul.bf16.gmra.mxu0 %v8768
  %v8878 = vpop.f32.mrf.mxu0
  %v8879 = vadd.f32 0.0, %v8878
  %v8880 = vpop.f32.mrf.mxu0
  %v8881 = vadd.f32 0.0, %v8880
  %8882 = vmatmul.bf16.gmra.mxu0 %v8771
  %v8883 = vpop.f32.mrf.mxu0
  %v8884 = vadd.f32 0.0, %v8883
  %v8885 = vpop.f32.mrf.mxu0
  %v8886 = vadd.f32 0.0, %v8885
  %8887 = vmatmul.bf16.gmra.mxu0 %v8774
  %v8888 = vpop.f32.mrf.mxu0
  %v8889 = vadd.f32 0.0, %v8888
  %v8890 = vpop.f32.mrf.mxu0
  %v8891 = vadd.f32 0.0, %v8890
  %8892 = vmatmul.bf16.gmra.mxu0 %v8777
  %v8893 = vpop.f32.mrf.mxu0
  %v8894 = vadd.f32 0.0, %v8893
  %v8895 = vpop.f32.mrf.mxu0
  %v8896 = vadd.f32 0.0, %v8895
  %8897 = vmatmul.bf16.gmra.mxu0 %v8780
  %v8898 = vpop.f32.mrf.mxu0
  %v8899 = vadd.f32 0.0, %v8898
  %v8900 = vpop.f32.mrf.mxu0
  %v8901 = vadd.f32 0.0, %v8900
  %8902 = vmatmul.bf16.gmra.mxu0 %v8783
  %v8903 = vpop.f32.mrf.mxu0
  %v8904 = vadd.f32 0.0, %v8903
  %v8905 = vpop.f32.mrf.mxu0
  %v8906 = vadd.f32 0.0, %v8905
  %8907 = vmatmul.bf16.gmra.mxu0 %v8786
  %v8908 = vpop.f32.mrf.mxu0
  %v8909 = vadd.f32 0.0, %v8908
  %v8910 = vpop.f32.mrf.mxu0
  %v8911 = vadd.f32 0.0, %v8910
  %8912 = vmatmul.bf16.gmra.mxu0 %v8789
  %v8913 = vpop.f32.mrf.mxu0
  %v8914 = vadd.f32 0.0, %v8913
  %v8915 = vpop.f32.mrf.mxu0
  %v8916 = vadd.f32 0.0, %v8915
  %8917 = vmatmul.bf16.gmra.mxu0 %v8792
  %v8918 = vpop.f32.mrf.mxu0
  %v8919 = vadd.f32 0.0, %v8918
  %v8920 = vpop.f32.mrf.mxu0
  %v8921 = vadd.f32 0.0, %v8920
  %8922 = vmatmul.bf16.gmra.mxu0 %v8795
  %v8923 = vpop.f32.mrf.mxu0
  %v8924 = vadd.f32 0.0, %v8923
  %v8925 = vpop.f32.mrf.mxu0
  %v8926 = vadd.f32 0.0, %v8925
  %8927 = vmatmul.bf16.gmra.mxu0 %v8798
  %v8928 = vpop.f32.mrf.mxu0
  %v8929 = vadd.f32 0.0, %v8928
  %v8930 = vpop.f32.mrf.mxu0
  %v8931 = vadd.f32 0.0, %v8930
  %8932 = vmatmul.bf16.gmra.mxu0 %v8801
  %v8933 = vpop.f32.mrf.mxu0
  %v8934 = vadd.f32 0.0, %v8933
  %v8935 = vpop.f32.mrf.mxu0
  %v8936 = vadd.f32 0.0, %v8935
  %8937 = vmatmul.bf16.gmra.mxu0 %v8804
  %v8938 = vpop.f32.mrf.mxu0
  %v8939 = vadd.f32 0.0, %v8938
  %v8940 = vpop.f32.mrf.mxu0
  %v8941 = vadd.f32 0.0, %v8940
  %8942 = vmatmul.bf16.gmra.mxu0 %v8807
  %v8943 = vpop.f32.mrf.mxu0
  %v8944 = vadd.f32 0.0, %v8943
  %v8945 = vpop.f32.mrf.mxu0
  %v8946 = vadd.f32 0.0, %v8945
  %8947 = vmatmul.bf16.gmra.mxu0 %v8810
  %v8948 = vpop.f32.mrf.mxu0
  %v8949 = vadd.f32 0.0, %v8948
  %v8950 = vpop.f32.mrf.mxu0
  %v8951 = vadd.f32 0.0, %v8950
  %8952 = vmatmul.bf16.gmra.mxu0 %v8813
  %v8953 = vpop.f32.mrf.mxu0
  %v8954 = vadd.f32 0.0, %v8953
  %v8955 = vpop.f32.mrf.mxu0
  %v8956 = vadd.f32 0.0, %v8955
  %8957 = vmatmul.bf16.gmra.mxu0 %v8816
  %v8958 = vpop.f32.mrf.mxu0
  %v8959 = vadd.f32 0.0, %v8958
  %v8960 = vpop.f32.mrf.mxu0
  %v8961 = vadd.f32 0.0, %v8960
  %8962 = vmatmul.bf16.gmra.mxu0 %v8819
  %v8963 = vpop.f32.mrf.mxu0
  %v8964 = vadd.f32 0.0, %v8963
  %v8965 = vpop.f32.mrf.mxu0
  %v8966 = vadd.f32 0.0, %v8965
  %8967 = vmatmul.bf16.gmra.mxu0 %v8822
  %v8968 = vpop.f32.mrf.mxu0
  %v8969 = vadd.f32 0.0, %v8968
  %v8970 = vpop.f32.mrf.mxu0
  %v8971 = vadd.f32 0.0, %v8970
  %8972 = vmatmul.bf16.gmra.mxu0 %v8825
  %v8973 = vpop.f32.mrf.mxu0
  %v8974 = vadd.f32 0.0, %v8973
  %v8975 = vpop.f32.mrf.mxu0
  %v8976 = vadd.f32 0.0, %v8975
  %8977 = vmatmul.bf16.gmra.mxu0 %v8828
  %v8978 = vpop.f32.mrf.mxu0
  %v8979 = vadd.f32 0.0, %v8978
  %v8980 = vpop.f32.mrf.mxu0
  %v8981 = vadd.f32 0.0, %v8980
  %8982 = vmatmul.bf16.gmra.mxu0 %v8831
  %v8983 = vpop.f32.mrf.mxu0
  %v8984 = vadd.f32 0.0, %v8983
  %v8985 = vpop.f32.mrf.mxu0
  %v8986 = vadd.f32 0.0, %v8985
  %8987 = vmatmul.bf16.gmra.mxu0 %v8834
  %v8988 = vpop.f32.mrf.mxu0
  %v8989 = vadd.f32 0.0, %v8988
  %v8990 = vpop.f32.mrf.mxu0
  %v8991 = vadd.f32 0.0, %v8990
  %8992 = vmatmul.bf16.gmra.mxu0 %v8837
  %v8993 = vpop.f32.mrf.mxu0
  %v8994 = vadd.f32 0.0, %v8993
  %v8995 = vpop.f32.mrf.mxu0
  %v8996 = vadd.f32 0.0, %v8995
  %8997 = vmatmul.bf16.gmra.mxu0 %v8840
  %v8998 = vpop.f32.mrf.mxu0
  %v8999 = vadd.f32 0.0, %v8998
  %v9000 = vpop.f32.mrf.mxu0
  %v9001 = vadd.f32 0.0, %v9000
  %9002 = vmatmul.bf16.gmra.mxu0 %v8843
  %v9003 = vpop.f32.mrf.mxu0
  %v9004 = vadd.f32 0.0, %v9003
  %v9005 = vpop.f32.mrf.mxu0
  %v9006 = vadd.f32 0.0, %v9005
  %9007 = vmatmul.bf16.gmra.mxu0 %v8846
  %v9008 = vpop.f32.mrf.mxu0
  %v9009 = vadd.f32 0.0, %v9008
  %v9010 = vpop.f32.mrf.mxu0
  %v9011 = vadd.f32 0.0, %v9010
  %9012 = vmatmul.bf16.gmra.mxu0 %v8849
  %v9013 = vpop.f32.mrf.mxu0
  %v9014 = vadd.f32 0.0, %v9013
  %v9015 = vpop.f32.mrf.mxu0
  %v9016 = vadd.f32 0.0, %v9015
  %9017 = vmatmul.bf16.gmra.mxu0 %v8852
  %v9018 = vpop.f32.mrf.mxu0
  %v9019 = vadd.f32 0.0, %v9018
  %v9020 = vpop.f32.mrf.mxu0
  %v9021 = vadd.f32 0.0, %v9020
  %9022 = vmatmul.bf16.gmra.mxu0 %v8855
  %v9023 = vpop.f32.mrf.mxu0
  %v9024 = vadd.f32 0.0, %v9023
  %v9025 = vpop.f32.mrf.mxu0
  %v9026 = vadd.f32 0.0, %v9025
  %9027 = vmatmul.bf16.gmra.mxu0 %v8858
  %v9028 = vpop.f32.mrf.mxu0
  %v9029 = vadd.f32 0.0, %v9028
  %v9030 = vpop.f32.mrf.mxu0
  %v9031 = vadd.f32 0.0, %v9030
  %9032 = vdwg.mxu0
  %v9034 = vsel %vm7725, %v8633, 0
  %v9037 = vsel %vm7725, %v8634, 0
  %v9040 = vsel %vm7725, %v8635, 0
  %v9043 = vsel %vm7725, %v8636, 0
  %v9046 = vsel %vm7725, %v8637, 0
  %v9049 = vsel %vm7725, %v8638, 0
  %v9052 = vsel %vm7725, %v8639, 0
  %v9055 = vsel %vm7725, %v8640, 0
  %v9058 = vsel %vm7725, %v8641, 0
  %v9061 = vsel %vm7725, %v8642, 0
  %v9064 = vsel %vm7725, %v8643, 0
  %v9067 = vsel %vm7725, %v8644, 0
  %v9070 = vsel %vm7725, %v8645, 0
  %v9073 = vsel %vm7725, %v8646, 0
  %v9076 = vsel %vm7725, %v8647, 0
  %v9079 = vsel %vm7725, %v8648, 0
  %v9082 = vsel %vm7725, %v8649, 0
  %v9085 = vsel %vm7725, %v8650, 0
  %v9088 = vsel %vm7725, %v8651, 0
  %v9091 = vsel %vm7725, %v8652, 0
  %v9094 = vsel %vm7725, %v8653, 0
  %v9097 = vsel %vm7725, %v8654, 0
  %v9100 = vsel %vm7725, %v8655, 0
  %v9103 = vsel %vm7725, %v8656, 0
  %v9106 = vsel %vm7725, %v8657, 0
  %v9109 = vsel %vm7725, %v8658, 0
  %v9112 = vsel %vm7725, %v8659, 0
  %v9115 = vsel %vm7725, %v8660, 0
  %v9118 = vsel %vm7725, %v8661, 0
  %v9121 = vsel %vm7725, %v8662, 0
  %v9124 = vsel %vm7725, %v8663, 0
  %v9127 = vsel %vm7725, %v8664, 0
  %v9130 = vsel %vm8860, %v8665, 0
  %9132 = vmatpush.bf16.msra.mxu0 0
  %9133 = vmatpush.bf16.msra.mxu0 0
  %9134 = vmatpush.bf16.msra.mxu0 0
  %9135 = vmatpush.bf16.msra.mxu0 0
  %9136 = vmatpush.bf16.msra.mxu0 0
  %9137 = vmatpush.bf16.msra.mxu0 0
  %9138 = vmatpush.bf16.msra.mxu0 0
  %9139 = vmatpush.bf16.msra.mxu0 %v9130
  %9140 = vmatmul.bf16.gmra.mxu0 %v9034
  %v9141 = vpop.f32.mrf.mxu0
  %v9142 = vadd.f32 %v8874, %v9141
  %v9143 = vpop.f32.mrf.mxu0
  %v9144 = vadd.f32 %v8876, %v9143
  %9145 = vmatmul.bf16.gmra.mxu0 %v9037
  %v9146 = vpop.f32.mrf.mxu0
  %v9147 = vadd.f32 %v8879, %v9146
  %v9148 = vpop.f32.mrf.mxu0
  %v9149 = vadd.f32 %v8881, %v9148
  %9150 = vmatmul.bf16.gmra.mxu0 %v9040
  %v9151 = vpop.f32.mrf.mxu0
  %v9152 = vadd.f32 %v8884, %v9151
  %v9153 = vpop.f32.mrf.mxu0
  %v9154 = vadd.f32 %v8886, %v9153
  %9155 = vmatmul.bf16.gmra.mxu0 %v9043
  %v9156 = vpop.f32.mrf.mxu0
  %v9157 = vadd.f32 %v8889, %v9156
  %v9158 = vpop.f32.mrf.mxu0
  %v9159 = vadd.f32 %v8891, %v9158
  %9160 = vmatmul.bf16.gmra.mxu0 %v9046
  %v9161 = vpop.f32.mrf.mxu0
  %v9162 = vadd.f32 %v8894, %v9161
  %v9163 = vpop.f32.mrf.mxu0
  %v9164 = vadd.f32 %v8896, %v9163
  %9165 = vmatmul.bf16.gmra.mxu0 %v9049
  %v9166 = vpop.f32.mrf.mxu0
  %v9167 = vadd.f32 %v8899, %v9166
  %v9168 = vpop.f32.mrf.mxu0
  %v9169 = vadd.f32 %v8901, %v9168
  %9170 = vmatmul.bf16.gmra.mxu0 %v9052
  %v9171 = vpop.f32.mrf.mxu0
  %v9172 = vadd.f32 %v8904, %v9171
  %v9173 = vpop.f32.mrf.mxu0
  %v9174 = vadd.f32 %v8906, %v9173
  %9175 = vmatmul.bf16.gmra.mxu0 %v9055
  %v9176 = vpop.f32.mrf.mxu0
  %v9177 = vadd.f32 %v8909, %v9176
  %v9178 = vpop.f32.mrf.mxu0
  %v9179 = vadd.f32 %v8911, %v9178
  %9180 = vmatmul.bf16.gmra.mxu0 %v9058
  %v9181 = vpop.f32.mrf.mxu0
  %v9182 = vadd.f32 %v8914, %v9181
  %v9183 = vpop.f32.mrf.mxu0
  %v9184 = vadd.f32 %v8916, %v9183
  %9185 = vmatmul.bf16.gmra.mxu0 %v9061
  %v9186 = vpop.f32.mrf.mxu0
  %v9187 = vadd.f32 %v8919, %v9186
  %v9188 = vpop.f32.mrf.mxu0
  %v9189 = vadd.f32 %v8921, %v9188
  %9190 = vmatmul.bf16.gmra.mxu0 %v9064
  %v9191 = vpop.f32.mrf.mxu0
  %v9192 = vadd.f32 %v8924, %v9191
  %v9193 = vpop.f32.mrf.mxu0
  %v9194 = vadd.f32 %v8926, %v9193
  %9195 = vmatmul.bf16.gmra.mxu0 %v9067
  %v9196 = vpop.f32.mrf.mxu0
  %v9197 = vadd.f32 %v8929, %v9196
  %v9198 = vpop.f32.mrf.mxu0
  %v9199 = vadd.f32 %v8931, %v9198
  %9200 = vmatmul.bf16.gmra.mxu0 %v9070
  %v9201 = vpop.f32.mrf.mxu0
  %v9202 = vadd.f32 %v8934, %v9201
  %v9203 = vpop.f32.mrf.mxu0
  %v9204 = vadd.f32 %v8936, %v9203
  %9205 = vmatmul.bf16.gmra.mxu0 %v9073
  %v9206 = vpop.f32.mrf.mxu0
  %v9207 = vadd.f32 %v8939, %v9206
  %v9208 = vpop.f32.mrf.mxu0
  %v9209 = vadd.f32 %v8941, %v9208
  %9210 = vmatmul.bf16.gmra.mxu0 %v9076
  %v9211 = vpop.f32.mrf.mxu0
  %v9212 = vadd.f32 %v8944, %v9211
  %v9213 = vpop.f32.mrf.mxu0
  %v9214 = vadd.f32 %v8946, %v9213
  %9215 = vmatmul.bf16.gmra.mxu0 %v9079
  %v9216 = vpop.f32.mrf.mxu0
  %v9217 = vadd.f32 %v8949, %v9216
  %v9218 = vpop.f32.mrf.mxu0
  %v9219 = vadd.f32 %v8951, %v9218
  %9220 = vmatmul.bf16.gmra.mxu0 %v9082
  %v9221 = vpop.f32.mrf.mxu0
  %v9222 = vadd.f32 %v8954, %v9221
  %v9223 = vpop.f32.mrf.mxu0
  %v9224 = vadd.f32 %v8956, %v9223
  %9225 = vmatmul.bf16.gmra.mxu0 %v9085
  %v9226 = vpop.f32.mrf.mxu0
  %v9227 = vadd.f32 %v8959, %v9226
  %v9228 = vpop.f32.mrf.mxu0
  %v9229 = vadd.f32 %v8961, %v9228
  %9230 = vmatmul.bf16.gmra.mxu0 %v9088
  %v9231 = vpop.f32.mrf.mxu0
  %v9232 = vadd.f32 %v8964, %v9231
  %v9233 = vpop.f32.mrf.mxu0
  %v9234 = vadd.f32 %v8966, %v9233
  %9235 = vmatmul.bf16.gmra.mxu0 %v9091
  %v9236 = vpop.f32.mrf.mxu0
  %v9237 = vadd.f32 %v8969, %v9236
  %v9238 = vpop.f32.mrf.mxu0
  %v9239 = vadd.f32 %v8971, %v9238
  %9240 = vmatmul.bf16.gmra.mxu0 %v9094
  %v9241 = vpop.f32.mrf.mxu0
  %v9242 = vadd.f32 %v8974, %v9241
  %v9243 = vpop.f32.mrf.mxu0
  %v9244 = vadd.f32 %v8976, %v9243
  %9245 = vmatmul.bf16.gmra.mxu0 %v9097
  %v9246 = vpop.f32.mrf.mxu0
  %v9247 = vadd.f32 %v8979, %v9246
  %v9248 = vpop.f32.mrf.mxu0
  %v9249 = vadd.f32 %v8981, %v9248
  %9250 = vmatmul.bf16.gmra.mxu0 %v9100
  %v9251 = vpop.f32.mrf.mxu0
  %v9252 = vadd.f32 %v8984, %v9251
  %v9253 = vpop.f32.mrf.mxu0
  %v9254 = vadd.f32 %v8986, %v9253
  %9255 = vmatmul.bf16.gmra.mxu0 %v9103
  %v9256 = vpop.f32.mrf.mxu0
  %v9257 = vadd.f32 %v8989, %v9256
  %v9258 = vpop.f32.mrf.mxu0
  %v9259 = vadd.f32 %v8991, %v9258
  %9260 = vmatmul.bf16.gmra.mxu0 %v9106
  %v9261 = vpop.f32.mrf.mxu0
  %v9262 = vadd.f32 %v8994, %v9261
  %v9263 = vpop.f32.mrf.mxu0
  %v9264 = vadd.f32 %v8996, %v9263
  %9265 = vmatmul.bf16.gmra.mxu0 %v9109
  %v9266 = vpop.f32.mrf.mxu0
  %v9267 = vadd.f32 %v8999, %v9266
  %v9268 = vpop.f32.mrf.mxu0
  %v9269 = vadd.f32 %v9001, %v9268
  %9270 = vmatmul.bf16.gmra.mxu0 %v9112
  %v9271 = vpop.f32.mrf.mxu0
  %v9272 = vadd.f32 %v9004, %v9271
  %v9273 = vpop.f32.mrf.mxu0
  %v9274 = vadd.f32 %v9006, %v9273
  %9275 = vmatmul.bf16.gmra.mxu0 %v9115
  %v9276 = vpop.f32.mrf.mxu0
  %v9277 = vadd.f32 %v9009, %v9276
  %v9278 = vpop.f32.mrf.mxu0
  %v9279 = vadd.f32 %v9011, %v9278
  %9280 = vmatmul.bf16.gmra.mxu0 %v9118
  %v9281 = vpop.f32.mrf.mxu0
  %v9282 = vadd.f32 %v9014, %v9281
  %v9283 = vpop.f32.mrf.mxu0
  %v9284 = vadd.f32 %v9016, %v9283
  %9285 = vmatmul.bf16.gmra.mxu0 %v9121
  %v9286 = vpop.f32.mrf.mxu0
  %v9287 = vadd.f32 %v9019, %v9286
  %v9288 = vpop.f32.mrf.mxu0
  %v9289 = vadd.f32 %v9021, %v9288
  %9290 = vmatmul.bf16.gmra.mxu0 %v9124
  %v9291 = vpop.f32.mrf.mxu0
  %v9292 = vadd.f32 %v9024, %v9291
  %v9293 = vpop.f32.mrf.mxu0
  %v9294 = vadd.f32 %v9026, %v9293
  %9295 = vmatmul.bf16.gmra.mxu0 %v9127
  %v9296 = vpop.f32.mrf.mxu0
  %v9297 = vadd.f32 %v9029, %v9296
  %v9298 = vpop.f32.mrf.mxu0
  %v9299 = vadd.f32 %v9031, %v9298
  %9300 = vdwg.mxu0
  %v9301 = vld [vmem:[#allocation2 + $0x2] sm:$0xff]
  %v9302 = vld [vmem:[#allocation2 + $0xa] sm:$0xff]
  %v9303 = vld [vmem:[#allocation2 + $0x1a] sm:$0xff]
  %v9304 = vld [vmem:[#allocation2 + $0x22] sm:$0xff]
  %v9305 = vld [vmem:[#allocation2 + $0x32] sm:$0xff]
  %v9306 = vld [vmem:[#allocation2 + $0x3a] sm:$0xff]
  %v9307 = vld [vmem:[#allocation2 + $0x4a] sm:$0xff]
  %v9308 = vld [vmem:[#allocation2 + $0x52] sm:$0xff]
  %v9309 = vld [vmem:[#allocation2 + $0x62] sm:$0xff]
  %v9310 = vld [vmem:[#allocation2 + $0x6a] sm:$0xff]
  %v9311 = vld [vmem:[#allocation2 + $0x7a] sm:$0xff]
  %v9312 = vld [vmem:[#allocation2 + $0x82] sm:$0xff]
  %v9313 = vld [vmem:[#allocation2 + $0x92] sm:$0xff]
  %v9314 = vld [vmem:[#allocation2 + $0x9a] sm:$0xff]
  %v9315 = vld [vmem:[#allocation2 + $0xaa] sm:$0xff]
  %v9316 = vld [vmem:[#allocation2 + $0xb2] sm:$0xff]
  %v9317 = vld [vmem:[#allocation2 + $0xc2] sm:$0xff]
  %v9318 = vld [vmem:[#allocation2 + $0xca] sm:$0xff]
  %v9319 = vld [vmem:[#allocation2 + $0xda] sm:$0xff]
  %v9320 = vld [vmem:[#allocation2 + $0xe2] sm:$0xff]
  %v9321 = vld [vmem:[#allocation2 + $0xf2] sm:$0xff]
  %v9322 = vld [vmem:[#allocation2 + $0xfa] sm:$0xff]
  %v9323 = vld [vmem:[#allocation2 + $0x10a] sm:$0xff]
  %v9324 = vld [vmem:[#allocation2 + $0x112] sm:$0xff]
  %v9325 = vld [vmem:[#allocation2 + $0x122] sm:$0xff]
  %v9326 = vld [vmem:[#allocation2 + $0x12a] sm:$0xff]
  %v9327 = vld [vmem:[#allocation2 + $0x13a] sm:$0xff]
  %v9328 = vld [vmem:[#allocation2 + $0x142] sm:$0xff]
  %v9329 = vld [vmem:[#allocation2 + $0x152] sm:$0xff]
  %v9330 = vld [vmem:[#allocation2 + $0x15a] sm:$0xff]
  %v9331 = vld [vmem:[#allocation2 + $0x16a] sm:$0xff]
  %v9332 = vld [vmem:[#allocation2 + $0x172] sm:$0xff]
  %v9333 = vld [vmem:[#allocation2 + $0x1b2] sm:$0xff]
  %v9334 = vld [vmem:[#allocation2 + $0x1ba] sm:$0xff]
  %v9335 = vld [vmem:[#allocation2 + $0x1ca] sm:$0xff]
  %v9336 = vld [vmem:[#allocation2 + $0x1d2] sm:$0xff]
  %v9337 = vld [vmem:[#allocation2 + $0x1e2] sm:$0xff]
  %v9338 = vld [vmem:[#allocation2 + $0x1ea] sm:$0xff]
  %v9339 = vld [vmem:[#allocation2 + $0x1fa] sm:$0xff]
  %v9340 = vld [vmem:[#allocation2 + $0x202] sm:$0xff]
  %v9341 = vld [vmem:[#allocation2 + $0x212] sm:$0xff]
  %v9342 = vld [vmem:[#allocation2 + $0x21a] sm:$0xff]
  %v9343 = vld [vmem:[#allocation2 + $0x22a] sm:$0xff]
  %v9344 = vld [vmem:[#allocation2 + $0x232] sm:$0xff]
  %v9345 = vld [vmem:[#allocation2 + $0x242] sm:$0xff]
  %v9346 = vld [vmem:[#allocation2 + $0x24a] sm:$0xff]
  %v9347 = vld [vmem:[#allocation2 + $0x25a] sm:$0xff]
  %v9348 = vld [vmem:[#allocation2 + $0x262] sm:$0xff]
  %v9349 = vld [vmem:[#allocation2 + $0x272] sm:$0xff]
  %v9350 = vld [vmem:[#allocation2 + $0x27a] sm:$0xff]
  %v9351 = vld [vmem:[#allocation2 + $0x28a] sm:$0xff]
  %v9352 = vld [vmem:[#allocation2 + $0x292] sm:$0xff]
  %v9353 = vld [vmem:[#allocation2 + $0x2a2] sm:$0xff]
  %v9354 = vld [vmem:[#allocation2 + $0x2aa] sm:$0xff]
  %v9355 = vld [vmem:[#allocation2 + $0x2ba] sm:$0xff]
  %v9356 = vld [vmem:[#allocation2 + $0x2c2] sm:$0xff]
  %v9357 = vld [vmem:[#allocation2 + $0x2d2] sm:$0xff]
  %v9358 = vld [vmem:[#allocation2 + $0x2da] sm:$0xff]
  %v9359 = vld [vmem:[#allocation2 + $0x2ea] sm:$0xff]
  %v9360 = vld [vmem:[#allocation2 + $0x2f2] sm:$0xff]
  %v9361 = vld [vmem:[#allocation2 + $0x302] sm:$0xff]
  %v9362 = vld [vmem:[#allocation2 + $0x30a] sm:$0xff]
  %v9363 = vld [vmem:[#allocation2 + $0x31a] sm:$0xff]
  %v9364 = vld [vmem:[#allocation2 + $0x322] sm:$0xff]
  %v9365 = vpack.c.bf16 %v9302, %v9301
  %v9366 = vpack.c.bf16 %v9304, %v9303
  %v9367 = vpack.c.bf16 %v9306, %v9305
  %v9368 = vpack.c.bf16 %v9308, %v9307
  %v9369 = vpack.c.bf16 %v9310, %v9309
  %v9370 = vpack.c.bf16 %v9312, %v9311
  %v9371 = vpack.c.bf16 %v9314, %v9313
  %v9372 = vpack.c.bf16 %v9316, %v9315
  %v9373 = vpack.c.bf16 %v9318, %v9317
  %v9374 = vpack.c.bf16 %v9320, %v9319
  %v9375 = vpack.c.bf16 %v9322, %v9321
  %v9376 = vpack.c.bf16 %v9324, %v9323
  %v9377 = vpack.c.bf16 %v9326, %v9325
  %v9378 = vpack.c.bf16 %v9328, %v9327
  %v9379 = vpack.c.bf16 %v9330, %v9329
  %v9380 = vpack.c.bf16 %v9332, %v9331
  %v9381 = vpack.c.bf16 %v9334, %v9333
  %v9382 = vpack.c.bf16 %v9336, %v9335
  %v9383 = vpack.c.bf16 %v9338, %v9337
  %v9384 = vpack.c.bf16 %v9340, %v9339
  %v9385 = vpack.c.bf16 %v9342, %v9341
  %v9386 = vpack.c.bf16 %v9344, %v9343
  %v9387 = vpack.c.bf16 %v9346, %v9345
  %v9388 = vpack.c.bf16 %v9348, %v9347
  %v9389 = vpack.c.bf16 %v9350, %v9349
  %v9390 = vpack.c.bf16 %v9352, %v9351
  %v9391 = vpack.c.bf16 %v9354, %v9353
  %v9392 = vpack.c.bf16 %v9356, %v9355
  %v9393 = vpack.c.bf16 %v9358, %v9357
  %v9394 = vpack.c.bf16 %v9360, %v9359
  %v9395 = vpack.c.bf16 %v9362, %v9361
  %v9396 = vpack.c.bf16 %v9364, %v9363
  %s9397 = scalar_lea.vmem %s4, 8
  %v9398 = vld [vmem:[%s9397] sm:$0xf]
  %v9400 = vsel %vm7725, %v9365, 0
  %v9403 = vsel %vm7725, %v9366, 0
  %v9406 = vsel %vm7725, %v9367, 0
  %v9409 = vsel %vm7725, %v9368, 0
  %v9412 = vsel %vm7725, %v9369, 0
  %v9415 = vsel %vm7725, %v9370, 0
  %v9418 = vsel %vm7725, %v9371, 0
  %v9421 = vsel %vm7725, %v9372, 0
  %v9424 = vsel %vm7725, %v9373, 0
  %v9427 = vsel %vm7725, %v9374, 0
  %v9430 = vsel %vm7725, %v9375, 0
  %v9433 = vsel %vm7725, %v9376, 0
  %v9436 = vsel %vm7725, %v9377, 0
  %v9439 = vsel %vm7725, %v9378, 0
  %v9442 = vsel %vm7725, %v9379, 0
  %v9445 = vsel %vm7725, %v9380, 0
  %v9448 = vsel %vm7725, %v9381, 0
  %v9451 = vsel %vm7725, %v9382, 0
  %v9454 = vsel %vm7725, %v9383, 0
  %v9457 = vsel %vm7725, %v9384, 0
  %v9460 = vsel %vm7725, %v9385, 0
  %v9463 = vsel %vm7725, %v9386, 0
  %v9466 = vsel %vm7725, %v9387, 0
  %v9469 = vsel %vm7725, %v9388, 0
  %v9472 = vsel %vm7725, %v9389, 0
  %v9475 = vsel %vm7725, %v9390, 0
  %v9478 = vsel %vm7725, %v9391, 0
  %v9481 = vsel %vm7725, %v9392, 0
  %v9484 = vsel %vm7725, %v9393, 0
  %v9487 = vsel %vm7725, %v9394, 0
  %v9490 = vsel %vm7725, %v9395, 0
  %v9493 = vsel %vm7725, %v9396, 0
  %v9496 = vsel %vm8860, %v9398, 0
  %9498 = vmatpush.bf16.msra.mxu0 0
  %9499 = vmatpush.bf16.msra.mxu0 0
  %9500 = vmatpush.bf16.msra.mxu0 0
  %9501 = vmatpush.bf16.msra.mxu0 0
  %9502 = vmatpush.bf16.msra.mxu0 0
  %9503 = vmatpush.bf16.msra.mxu0 0
  %9504 = vmatpush.bf16.msra.mxu0 0
  %9505 = vmatpush.bf16.msra.mxu0 %v9496
  %9506 = vmatmul.bf16.gmra.mxu0 %v9400
  %v9507 = vpop.f32.mrf.mxu0
  %v9508 = vadd.f32 0.0, %v9507
  %v9509 = vpop.f32.mrf.mxu0
  %v9510 = vadd.f32 0.0, %v9509
  %9511 = vmatmul.bf16.gmra.mxu0 %v9403
  %v9512 = vpop.f32.mrf.mxu0
  %v9513 = vadd.f32 0.0, %v9512
  %v9514 = vpop.f32.mrf.mxu0
  %v9515 = vadd.f32 0.0, %v9514
  %9516 = vmatmul.bf16.gmra.mxu0 %v9406
  %v9517 = vpop.f32.mrf.mxu0
  %v9518 = vadd.f32 0.0, %v9517
  %v9519 = vpop.f32.mrf.mxu0
  %v9520 = vadd.f32 0.0, %v9519
  %9521 = vmatmul.bf16.gmra.mxu0 %v9409
  %v9522 = vpop.f32.mrf.mxu0
  %v9523 = vadd.f32 0.0, %v9522
  %v9524 = vpop.f32.mrf.mxu0
  %v9525 = vadd.f32 0.0, %v9524
  %9526 = vmatmul.bf16.gmra.mxu0 %v9412
  %v9527 = vpop.f32.mrf.mxu0
  %v9528 = vadd.f32 0.0, %v9527
  %v9529 = vpop.f32.mrf.mxu0
  %v9530 = vadd.f32 0.0, %v9529
  %9531 = vmatmul.bf16.gmra.mxu0 %v9415
  %v9532 = vpop.f32.mrf.mxu0
  %v9533 = vadd.f32 0.0, %v9532
  %v9534 = vpop.f32.mrf.mxu0
  %v9535 = vadd.f32 0.0, %v9534
  %9536 = vmatmul.bf16.gmra.mxu0 %v9418
  %v9537 = vpop.f32.mrf.mxu0
  %v9538 = vadd.f32 0.0, %v9537
  %v9539 = vpop.f32.mrf.mxu0
  %v9540 = vadd.f32 0.0, %v9539
  %9541 = vmatmul.bf16.gmra.mxu0 %v9421
  %v9542 = vpop.f32.mrf.mxu0
  %v9543 = vadd.f32 0.0, %v9542
  %v9544 = vpop.f32.mrf.mxu0
  %v9545 = vadd.f32 0.0, %v9544
  %9546 = vmatmul.bf16.gmra.mxu0 %v9424
  %v9547 = vpop.f32.mrf.mxu0
  %v9548 = vadd.f32 0.0, %v9547
  %v9549 = vpop.f32.mrf.mxu0
  %v9550 = vadd.f32 0.0, %v9549
  %9551 = vmatmul.bf16.gmra.mxu0 %v9427
  %v9552 = vpop.f32.mrf.mxu0
  %v9553 = vadd.f32 0.0, %v9552
  %v9554 = vpop.f32.mrf.mxu0
  %v9555 = vadd.f32 0.0, %v9554
  %9556 = vmatmul.bf16.gmra.mxu0 %v9430
  %v9557 = vpop.f32.mrf.mxu0
  %v9558 = vadd.f32 0.0, %v9557
  %v9559 = vpop.f32.mrf.mxu0
  %v9560 = vadd.f32 0.0, %v9559
  %9561 = vmatmul.bf16.gmra.mxu0 %v9433
  %v9562 = vpop.f32.mrf.mxu0
  %v9563 = vadd.f32 0.0, %v9562
  %v9564 = vpop.f32.mrf.mxu0
  %v9565 = vadd.f32 0.0, %v9564
  %9566 = vmatmul.bf16.gmra.mxu0 %v9436
  %v9567 = vpop.f32.mrf.mxu0
  %v9568 = vadd.f32 0.0, %v9567
  %v9569 = vpop.f32.mrf.mxu0
  %v9570 = vadd.f32 0.0, %v9569
  %9571 = vmatmul.bf16.gmra.mxu0 %v9439
  %v9572 = vpop.f32.mrf.mxu0
  %v9573 = vadd.f32 0.0, %v9572
  %v9574 = vpop.f32.mrf.mxu0
  %v9575 = vadd.f32 0.0, %v9574
  %9576 = vmatmul.bf16.gmra.mxu0 %v9442
  %v9577 = vpop.f32.mrf.mxu0
  %v9578 = vadd.f32 0.0, %v9577
  %v9579 = vpop.f32.mrf.mxu0
  %v9580 = vadd.f32 0.0, %v9579
  %9581 = vmatmul.bf16.gmra.mxu0 %v9445
  %v9582 = vpop.f32.mrf.mxu0
  %v9583 = vadd.f32 0.0, %v9582
  %v9584 = vpop.f32.mrf.mxu0
  %v9585 = vadd.f32 0.0, %v9584
  %9586 = vmatmul.bf16.gmra.mxu0 %v9448
  %v9587 = vpop.f32.mrf.mxu0
  %v9588 = vadd.f32 0.0, %v9587
  %v9589 = vpop.f32.mrf.mxu0
  %v9590 = vadd.f32 0.0, %v9589
  %9591 = vmatmul.bf16.gmra.mxu0 %v9451
  %v9592 = vpop.f32.mrf.mxu0
  %v9593 = vadd.f32 0.0, %v9592
  %v9594 = vpop.f32.mrf.mxu0
  %v9595 = vadd.f32 0.0, %v9594
  %9596 = vmatmul.bf16.gmra.mxu0 %v9454
  %v9597 = vpop.f32.mrf.mxu0
  %v9598 = vadd.f32 0.0, %v9597
  %v9599 = vpop.f32.mrf.mxu0
  %v9600 = vadd.f32 0.0, %v9599
  %9601 = vmatmul.bf16.gmra.mxu0 %v9457
  %v9602 = vpop.f32.mrf.mxu0
  %v9603 = vadd.f32 0.0, %v9602
  %v9604 = vpop.f32.mrf.mxu0
  %v9605 = vadd.f32 0.0, %v9604
  %9606 = vmatmul.bf16.gmra.mxu0 %v9460
  %v9607 = vpop.f32.mrf.mxu0
  %v9608 = vadd.f32 0.0, %v9607
  %v9609 = vpop.f32.mrf.mxu0
  %v9610 = vadd.f32 0.0, %v9609
  %9611 = vmatmul.bf16.gmra.mxu0 %v9463
  %v9612 = vpop.f32.mrf.mxu0
  %v9613 = vadd.f32 0.0, %v9612
  %v9614 = vpop.f32.mrf.mxu0
  %v9615 = vadd.f32 0.0, %v9614
  %9616 = vmatmul.bf16.gmra.mxu0 %v9466
  %v9617 = vpop.f32.mrf.mxu0
  %v9618 = vadd.f32 0.0, %v9617
  %v9619 = vpop.f32.mrf.mxu0
  %v9620 = vadd.f32 0.0, %v9619
  %9621 = vmatmul.bf16.gmra.mxu0 %v9469
  %v9622 = vpop.f32.mrf.mxu0
  %v9623 = vadd.f32 0.0, %v9622
  %v9624 = vpop.f32.mrf.mxu0
  %v9625 = vadd.f32 0.0, %v9624
  %9626 = vmatmul.bf16.gmra.mxu0 %v9472
  %v9627 = vpop.f32.mrf.mxu0
  %v9628 = vadd.f32 0.0, %v9627
  %v9629 = vpop.f32.mrf.mxu0
  %v9630 = vadd.f32 0.0, %v9629
  %9631 = vmatmul.bf16.gmra.mxu0 %v9475
  %v9632 = vpop.f32.mrf.mxu0
  %v9633 = vadd.f32 0.0, %v9632
  %v9634 = vpop.f32.mrf.mxu0
  %v9635 = vadd.f32 0.0, %v9634
  %9636 = vmatmul.bf16.gmra.mxu0 %v9478
  %v9637 = vpop.f32.mrf.mxu0
  %v9638 = vadd.f32 0.0, %v9637
  %v9639 = vpop.f32.mrf.mxu0
  %v9640 = vadd.f32 0.0, %v9639
  %9641 = vmatmul.bf16.gmra.mxu0 %v9481
  %v9642 = vpop.f32.mrf.mxu0
  %v9643 = vadd.f32 0.0, %v9642
  %v9644 = vpop.f32.mrf.mxu0
  %v9645 = vadd.f32 0.0, %v9644
  %9646 = vmatmul.bf16.gmra.mxu0 %v9484
  %v9647 = vpop.f32.mrf.mxu0
  %v9648 = vadd.f32 0.0, %v9647
  %v9649 = vpop.f32.mrf.mxu0
  %v9650 = vadd.f32 0.0, %v9649
  %9651 = vmatmul.bf16.gmra.mxu0 %v9487
  %v9652 = vpop.f32.mrf.mxu0
  %v9653 = vadd.f32 0.0, %v9652
  %v9654 = vpop.f32.mrf.mxu0
  %v9655 = vadd.f32 0.0, %v9654
  %9656 = vmatmul.bf16.gmra.mxu0 %v9490
  %v9657 = vpop.f32.mrf.mxu0
  %v9658 = vadd.f32 0.0, %v9657
  %v9659 = vpop.f32.mrf.mxu0
  %v9660 = vadd.f32 0.0, %v9659
  %9661 = vmatmul.bf16.gmra.mxu0 %v9493
  %v9662 = vpop.f32.mrf.mxu0
  %v9663 = vadd.f32 0.0, %v9662
  %v9664 = vpop.f32.mrf.mxu0
  %v9665 = vadd.f32 0.0, %v9664
  %9666 = vdwg.mxu0
  %v9667 = vadd.f32 %v9142, %v9508
  %v9668 = vadd.f32 %v9144, %v9510
  %v9669 = vadd.f32 %v9147, %v9513
  %v9670 = vadd.f32 %v9149, %v9515
  %v9671 = vadd.f32 %v9152, %v9518
  %v9672 = vadd.f32 %v9154, %v9520
  %v9673 = vadd.f32 %v9157, %v9523
  %v9674 = vadd.f32 %v9159, %v9525
  %v9675 = vadd.f32 %v9162, %v9528
  %v9676 = vadd.f32 %v9164, %v9530
  %v9677 = vadd.f32 %v9167, %v9533
  %v9678 = vadd.f32 %v9169, %v9535
  %v9679 = vadd.f32 %v9172, %v9538
  %v9680 = vadd.f32 %v9174, %v9540
  %v9681 = vadd.f32 %v9177, %v9543
  %v9682 = vadd.f32 %v9179, %v9545
  %v9683 = vadd.f32 %v9182, %v9548
  %v9684 = vadd.f32 %v9184, %v9550
  %v9685 = vadd.f32 %v9187, %v9553
  %v9686 = vadd.f32 %v9189, %v9555
  %v9687 = vadd.f32 %v9192, %v9558
  %v9688 = vadd.f32 %v9194, %v9560
  %v9689 = vadd.f32 %v9197, %v9563
  %v9690 = vadd.f32 %v9199, %v9565
  %v9691 = vadd.f32 %v9202, %v9568
  %v9692 = vadd.f32 %v9204, %v9570
  %v9693 = vadd.f32 %v9207, %v9573
  %v9694 = vadd.f32 %v9209, %v9575
  %v9695 = vadd.f32 %v9212, %v9578
  %v9696 = vadd.f32 %v9214, %v9580
  %v9697 = vadd.f32 %v9217, %v9583
  %v9698 = vadd.f32 %v9219, %v9585
  %v9699 = vadd.f32 %v9222, %v9588
  %v9700 = vadd.f32 %v9224, %v9590
  %v9701 = vadd.f32 %v9227, %v9593
  %v9702 = vadd.f32 %v9229, %v9595
  %v9703 = vadd.f32 %v9232, %v9598
  %v9704 = vadd.f32 %v9234, %v9600
  %v9705 = vadd.f32 %v9237, %v9603
  %v9706 = vadd.f32 %v9239, %v9605
  %v9707 = vadd.f32 %v9242, %v9608
  %v9708 = vadd.f32 %v9244, %v9610
  %v9709 = vadd.f32 %v9247, %v9613
  %v9710 = vadd.f32 %v9249, %v9615
  %v9711 = vadd.f32 %v9252, %v9618
  %v9712 = vadd.f32 %v9254, %v9620
  %v9713 = vadd.f32 %v9257, %v9623
  %v9714 = vadd.f32 %v9259, %v9625
  %v9715 = vadd.f32 %v9262, %v9628
  %v9716 = vadd.f32 %v9264, %v9630
  %v9717 = vadd.f32 %v9267, %v9633
  %v9718 = vadd.f32 %v9269, %v9635
  %v9719 = vadd.f32 %v9272, %v9638
  %v9720 = vadd.f32 %v9274, %v9640
  %v9721 = vadd.f32 %v9277, %v9643
  %v9722 = vadd.f32 %v9279, %v9645
  %v9723 = vadd.f32 %v9282, %v9648
  %v9724 = vadd.f32 %v9284, %v9650
  %v9725 = vadd.f32 %v9287, %v9653
  %v9726 = vadd.f32 %v9289, %v9655
  %v9727 = vadd.f32 %v9292, %v9658
  %v9728 = vadd.f32 %v9294, %v9660
  %v9729 = vadd.f32 %v9297, %v9663
  %v9730 = vadd.f32 %v9299, %v9665
  %v9731 = vld [vmem:[%s8504] sm:$0xff]
  %v9732 = vld [vmem:[%s8504 + $0x8] sm:$0xff]
  %v9733 = vld [vmem:[%s8504 + $0x18] sm:$0xff]
  %v9734 = vld [vmem:[%s8504 + $0x20] sm:$0xff]
  %v9735 = vld [vmem:[%s8504 + $0x30] sm:$0xff]
  %v9736 = vld [vmem:[%s8504 + $0x38] sm:$0xff]
  %v9737 = vld [vmem:[%s8504 + $0x48] sm:$0xff]
  %v9738 = vld [vmem:[%s8504 + $0x50] sm:$0xff]
  %v9739 = vld [vmem:[%s8504 + $0x60] sm:$0xff]
  %v9740 = vld [vmem:[%s8504 + $0x68] sm:$0xff]
  %v9741 = vld [vmem:[%s8504 + $0x78] sm:$0xff]
  %v9742 = vld [vmem:[%s8504 + $0x80] sm:$0xff]
  %v9743 = vld [vmem:[%s8504 + $0x90] sm:$0xff]
  %v9744 = vld [vmem:[%s8504 + $0x98] sm:$0xff]
  %v9745 = vld [vmem:[%s8504 + $0xa8] sm:$0xff]
  %v9746 = vld [vmem:[%s8504 + $0xb0] sm:$0xff]
  %v9747 = vld [vmem:[%s8504 + $0xc0] sm:$0xff]
  %v9748 = vld [vmem:[%s8504 + $0xc8] sm:$0xff]
  %v9749 = vld [vmem:[%s8504 + $0xd8] sm:$0xff]
  %v9750 = vld [vmem:[%s8504 + $0xe0] sm:$0xff]
  %v9751 = vld [vmem:[%s8504 + $0xf0] sm:$0xff]
  %v9752 = vld [vmem:[%s8504 + $0xf8] sm:$0xff]
  %v9753 = vld [vmem:[%s8504 + $0x108] sm:$0xff]
  %v9754 = vld [vmem:[%s8504 + $0x110] sm:$0xff]
  %v9755 = vld [vmem:[%s8504 + $0x120] sm:$0xff]
  %v9756 = vld [vmem:[%s8504 + $0x128] sm:$0xff]
  %v9757 = vld [vmem:[%s8504 + $0x138] sm:$0xff]
  %v9758 = vld [vmem:[%s8504 + $0x140] sm:$0xff]
  %v9759 = vld [vmem:[%s8504 + $0x150] sm:$0xff]
  %v9760 = vld [vmem:[%s8504 + $0x158] sm:$0xff]
  %v9761 = vld [vmem:[%s8504 + $0x168] sm:$0xff]
  %v9762 = vld [vmem:[%s8504 + $0x170] sm:$0xff]
  %v9763 = vld [vmem:[%s8504 + $0x1b0] sm:$0xff]
  %v9764 = vld [vmem:[%s8504 + $0x1b8] sm:$0xff]
  %v9765 = vld [vmem:[%s8504 + $0x1c8] sm:$0xff]
  %v9766 = vld [vmem:[%s8504 + $0x1d0] sm:$0xff]
  %v9767 = vld [vmem:[%s8504 + $0x1e0] sm:$0xff]
  %v9768 = vld [vmem:[%s8504 + $0x1e8] sm:$0xff]
  %v9769 = vld [vmem:[%s8504 + $0x1f8] sm:$0xff]
  %v9770 = vld [vmem:[%s8504 + $0x200] sm:$0xff]
  %v9771 = vld [vmem:[%s8504 + $0x210] sm:$0xff]
  %v9772 = vld [vmem:[%s8504 + $0x218] sm:$0xff]
  %v9773 = vld [vmem:[%s8504 + $0x228] sm:$0xff]
  %v9774 = vld [vmem:[%s8504 + $0x230] sm:$0xff]
  %v9775 = vld [vmem:[%s8504 + $0x240] sm:$0xff]
  %v9776 = vld [vmem:[%s8504 + $0x248] sm:$0xff]
  %v9777 = vld [vmem:[%s8504 + $0x258] sm:$0xff]
  %v9778 = vld [vmem:[%s8504 + $0x260] sm:$0xff]
  %v9779 = vld [vmem:[%s8504 + $0x270] sm:$0xff]
  %v9780 = vld [vmem:[%s8504 + $0x278] sm:$0xff]
  %v9781 = vld [vmem:[%s8504 + $0x288] sm:$0xff]
  %v9782 = vld [vmem:[%s8504 + $0x290] sm:$0xff]
  %v9783 = vld [vmem:[%s8504 + $0x2a0] sm:$0xff]
  %v9784 = vld [vmem:[%s8504 + $0x2a8] sm:$0xff]
  %v9785 = vld [vmem:[%s8504 + $0x2b8] sm:$0xff]
  %v9786 = vld [vmem:[%s8504 + $0x2c0] sm:$0xff]
  %v9787 = vld [vmem:[%s8504 + $0x2d0] sm:$0xff]
  %v9788 = vld [vmem:[%s8504 + $0x2d8] sm:$0xff]
  %v9789 = vld [vmem:[%s8504 + $0x2e8] sm:$0xff]
  %v9790 = vld [vmem:[%s8504 + $0x2f0] sm:$0xff]
  %v9791 = vld [vmem:[%s8504 + $0x300] sm:$0xff]
  %v9792 = vld [vmem:[%s8504 + $0x308] sm:$0xff]
  %v9793 = vld [vmem:[%s8504 + $0x318] sm:$0xff]
  %v9794 = vld [vmem:[%s8504 + $0x320] sm:$0xff]
  %v9795 = vpack.c.bf16 %v9732, %v9731
  %v9796 = vpack.c.bf16 %v9734, %v9733
  %v9797 = vpack.c.bf16 %v9736, %v9735
  %v9798 = vpack.c.bf16 %v9738, %v9737
  %v9799 = vpack.c.bf16 %v9740, %v9739
  %v9800 = vpack.c.bf16 %v9742, %v9741
  %v9801 = vpack.c.bf16 %v9744, %v9743
  %v9802 = vpack.c.bf16 %v9746, %v9745
  %v9803 = vpack.c.bf16 %v9748, %v9747
  %v9804 = vpack.c.bf16 %v9750, %v9749
  %v9805 = vpack.c.bf16 %v9752, %v9751
  %v9806 = vpack.c.bf16 %v9754, %v9753
  %v9807 = vpack.c.bf16 %v9756, %v9755
  %v9808 = vpack.c.bf16 %v9758, %v9757
  %v9809 = vpack.c.bf16 %v9760, %v9759
  %v9810 = vpack.c.bf16 %v9762, %v9761
  %v9811 = vpack.c.bf16 %v9764, %v9763
  %v9812 = vpack.c.bf16 %v9766, %v9765
  %v9813 = vpack.c.bf16 %v9768, %v9767
  %v9814 = vpack.c.bf16 %v9770, %v9769
  %v9815 = vpack.c.bf16 %v9772, %v9771
  %v9816 = vpack.c.bf16 %v9774, %v9773
  %v9817 = vpack.c.bf16 %v9776, %v9775
  %v9818 = vpack.c.bf16 %v9778, %v9777
  %v9819 = vpack.c.bf16 %v9780, %v9779
  %v9820 = vpack.c.bf16 %v9782, %v9781
  %v9821 = vpack.c.bf16 %v9784, %v9783
  %v9822 = vpack.c.bf16 %v9786, %v9785
  %v9823 = vpack.c.bf16 %v9788, %v9787
  %v9824 = vpack.c.bf16 %v9790, %v9789
  %v9825 = vpack.c.bf16 %v9792, %v9791
  %v9826 = vpack.c.bf16 %v9794, %v9793
  %s9827 = scalar_lea.vmem %s4, 12
  %v9828 = vld [vmem:[%s9827] sm:$0xf]
  %v9830 = vsel %vm7725, %v9795, 0
  %v9833 = vsel %vm7725, %v9796, 0
  %v9836 = vsel %vm7725, %v9797, 0
  %v9839 = vsel %vm7725, %v9798, 0
  %v9842 = vsel %vm7725, %v9799, 0
  %v9845 = vsel %vm7725, %v9800, 0
  %v9848 = vsel %vm7725, %v9801, 0
  %v9851 = vsel %vm7725, %v9802, 0
  %v9854 = vsel %vm7725, %v9803, 0
  %v9857 = vsel %vm7725, %v9804, 0
  %v9860 = vsel %vm7725, %v9805, 0
  %v9863 = vsel %vm7725, %v9806, 0
  %v9866 = vsel %vm7725, %v9807, 0
  %v9869 = vsel %vm7725, %v9808, 0
  %v9872 = vsel %vm7725, %v9809, 0
  %v9875 = vsel %vm7725, %v9810, 0
  %v9878 = vsel %vm7725, %v9811, 0
  %v9881 = vsel %vm7725, %v9812, 0
  %v9884 = vsel %vm7725, %v9813, 0
  %v9887 = vsel %vm7725, %v9814, 0
  %v9890 = vsel %vm7725, %v9815, 0
  %v9893 = vsel %vm7725, %v9816, 0
  %v9896 = vsel %vm7725, %v9817, 0
  %v9899 = vsel %vm7725, %v9818, 0
  %v9902 = vsel %vm7725, %v9819, 0
  %v9905 = vsel %vm7725, %v9820, 0
  %v9908 = vsel %vm7725, %v9821, 0
  %v9911 = vsel %vm7725, %v9822, 0
  %v9914 = vsel %vm7725, %v9823, 0
  %v9917 = vsel %vm7725, %v9824, 0
  %v9920 = vsel %vm7725, %v9825, 0
  %v9923 = vsel %vm7725, %v9826, 0
  %v9926 = vsel %vm8860, %v9828, 0
  %9928 = vmatpush.bf16.msra.mxu0 0
  %9929 = vmatpush.bf16.msra.mxu0 0
  %9930 = vmatpush.bf16.msra.mxu0 0
  %9931 = vmatpush.bf16.msra.mxu0 0
  %9932 = vmatpush.bf16.msra.mxu0 0
  %9933 = vmatpush.bf16.msra.mxu0 0
  %9934 = vmatpush.bf16.msra.mxu0 0
  %9935 = vmatpush.bf16.msra.mxu0 %v9926
  %9936 = vmatmul.bf16.gmra.mxu0 %v9830
  %v9937 = vpop.f32.mrf.mxu0
  %v9938 = vadd.f32 0.0, %v9937
  %v9939 = vpop.f32.mrf.mxu0
  %v9940 = vadd.f32 0.0, %v9939
  %9941 = vmatmul.bf16.gmra.mxu0 %v9833
  %v9942 = vpop.f32.mrf.mxu0
  %v9943 = vadd.f32 0.0, %v9942
  %v9944 = vpop.f32.mrf.mxu0
  %v9945 = vadd.f32 0.0, %v9944
  %9946 = vmatmul.bf16.gmra.mxu0 %v9836
  %v9947 = vpop.f32.mrf.mxu0
  %v9948 = vadd.f32 0.0, %v9947
  %v9949 = vpop.f32.mrf.mxu0
  %v9950 = vadd.f32 0.0, %v9949
  %9951 = vmatmul.bf16.gmra.mxu0 %v9839
  %v9952 = vpop.f32.mrf.mxu0
  %v9953 = vadd.f32 0.0, %v9952
  %v9954 = vpop.f32.mrf.mxu0
  %v9955 = vadd.f32 0.0, %v9954
  %9956 = vmatmul.bf16.gmra.mxu0 %v9842
  %v9957 = vpop.f32.mrf.mxu0
  %v9958 = vadd.f32 0.0, %v9957
  %v9959 = vpop.f32.mrf.mxu0
  %v9960 = vadd.f32 0.0, %v9959
  %9961 = vmatmul.bf16.gmra.mxu0 %v9845
  %v9962 = vpop.f32.mrf.mxu0
  %v9963 = vadd.f32 0.0, %v9962
  %v9964 = vpop.f32.mrf.mxu0
  %v9965 = vadd.f32 0.0, %v9964
  %9966 = vmatmul.bf16.gmra.mxu0 %v9848
  %v9967 = vpop.f32.mrf.mxu0
  %v9968 = vadd.f32 0.0, %v9967
  %v9969 = vpop.f32.mrf.mxu0
  %v9970 = vadd.f32 0.0, %v9969
  %9971 = vmatmul.bf16.gmra.mxu0 %v9851
  %v9972 = vpop.f32.mrf.mxu0
  %v9973 = vadd.f32 0.0, %v9972
  %v9974 = vpop.f32.mrf.mxu0
  %v9975 = vadd.f32 0.0, %v9974
  %9976 = vmatmul.bf16.gmra.mxu0 %v9854
  %v9977 = vpop.f32.mrf.mxu0
  %v9978 = vadd.f32 0.0, %v9977
  %v9979 = vpop.f32.mrf.mxu0
  %v9980 = vadd.f32 0.0, %v9979
  %9981 = vmatmul.bf16.gmra.mxu0 %v9857
  %v9982 = vpop.f32.mrf.mxu0
  %v9983 = vadd.f32 0.0, %v9982
  %v9984 = vpop.f32.mrf.mxu0
  %v9985 = vadd.f32 0.0, %v9984
  %9986 = vmatmul.bf16.gmra.mxu0 %v9860
  %v9987 = vpop.f32.mrf.mxu0
  %v9988 = vadd.f32 0.0, %v9987
  %v9989 = vpop.f32.mrf.mxu0
  %v9990 = vadd.f32 0.0, %v9989
  %9991 = vmatmul.bf16.gmra.mxu0 %v9863
  %v9992 = vpop.f32.mrf.mxu0
  %v9993 = vadd.f32 0.0, %v9992
  %v9994 = vpop.f32.mrf.mxu0
  %v9995 = vadd.f32 0.0, %v9994
  %9996 = vmatmul.bf16.gmra.mxu0 %v9866
  %v9997 = vpop.f32.mrf.mxu0
  %v9998 = vadd.f32 0.0, %v9997
  %v9999 = vpop.f32.mrf.mxu0
  %v10000 = vadd.f32 0.0, %v9999
  %10001 = vmatmul.bf16.gmra.mxu0 %v9869
  %v10002 = vpop.f32.mrf.mxu0
  %v10003 = vadd.f32 0.0, %v10002
  %v10004 = vpop.f32.mrf.mxu0
  %v10005 = vadd.f32 0.0, %v10004
  %10006 = vmatmul.bf16.gmra.mxu0 %v9872
  %v10007 = vpop.f32.mrf.mxu0
  %v10008 = vadd.f32 0.0, %v10007
  %v10009 = vpop.f32.mrf.mxu0
  %v10010 = vadd.f32 0.0, %v10009
  %10011 = vmatmul.bf16.gmra.mxu0 %v9875
  %v10012 = vpop.f32.mrf.mxu0
  %v10013 = vadd.f32 0.0, %v10012
  %v10014 = vpop.f32.mrf.mxu0
  %v10015 = vadd.f32 0.0, %v10014
  %10016 = vmatmul.bf16.gmra.mxu0 %v9878
  %v10017 = vpop.f32.mrf.mxu0
  %v10018 = vadd.f32 0.0, %v10017
  %v10019 = vpop.f32.mrf.mxu0
  %v10020 = vadd.f32 0.0, %v10019
  %10021 = vmatmul.bf16.gmra.mxu0 %v9881
  %v10022 = vpop.f32.mrf.mxu0
  %v10023 = vadd.f32 0.0, %v10022
  %v10024 = vpop.f32.mrf.mxu0
  %v10025 = vadd.f32 0.0, %v10024
  %10026 = vmatmul.bf16.gmra.mxu0 %v9884
  %v10027 = vpop.f32.mrf.mxu0
  %v10028 = vadd.f32 0.0, %v10027
  %v10029 = vpop.f32.mrf.mxu0
  %v10030 = vadd.f32 0.0, %v10029
  %10031 = vmatmul.bf16.gmra.mxu0 %v9887
  %v10032 = vpop.f32.mrf.mxu0
  %v10033 = vadd.f32 0.0, %v10032
  %v10034 = vpop.f32.mrf.mxu0
  %v10035 = vadd.f32 0.0, %v10034
  %10036 = vmatmul.bf16.gmra.mxu0 %v9890
  %v10037 = vpop.f32.mrf.mxu0
  %v10038 = vadd.f32 0.0, %v10037
  %v10039 = vpop.f32.mrf.mxu0
  %v10040 = vadd.f32 0.0, %v10039
  %10041 = vmatmul.bf16.gmra.mxu0 %v9893
  %v10042 = vpop.f32.mrf.mxu0
  %v10043 = vadd.f32 0.0, %v10042
  %v10044 = vpop.f32.mrf.mxu0
  %v10045 = vadd.f32 0.0, %v10044
  %10046 = vmatmul.bf16.gmra.mxu0 %v9896
  %v10047 = vpop.f32.mrf.mxu0
  %v10048 = vadd.f32 0.0, %v10047
  %v10049 = vpop.f32.mrf.mxu0
  %v10050 = vadd.f32 0.0, %v10049
  %10051 = vmatmul.bf16.gmra.mxu0 %v9899
  %v10052 = vpop.f32.mrf.mxu0
  %v10053 = vadd.f32 0.0, %v10052
  %v10054 = vpop.f32.mrf.mxu0
  %v10055 = vadd.f32 0.0, %v10054
  %10056 = vmatmul.bf16.gmra.mxu0 %v9902
  %v10057 = vpop.f32.mrf.mxu0
  %v10058 = vadd.f32 0.0, %v10057
  %v10059 = vpop.f32.mrf.mxu0
  %v10060 = vadd.f32 0.0, %v10059
  %10061 = vmatmul.bf16.gmra.mxu0 %v9905
  %v10062 = vpop.f32.mrf.mxu0
  %v10063 = vadd.f32 0.0, %v10062
  %v10064 = vpop.f32.mrf.mxu0
  %v10065 = vadd.f32 0.0, %v10064
  %10066 = vmatmul.bf16.gmra.mxu0 %v9908
  %v10067 = vpop.f32.mrf.mxu0
  %v10068 = vadd.f32 0.0, %v10067
  %v10069 = vpop.f32.mrf.mxu0
  %v10070 = vadd.f32 0.0, %v10069
  %10071 = vmatmul.bf16.gmra.mxu0 %v9911
  %v10072 = vpop.f32.mrf.mxu0
  %v10073 = vadd.f32 0.0, %v10072
  %v10074 = vpop.f32.mrf.mxu0
  %v10075 = vadd.f32 0.0, %v10074
  %10076 = vmatmul.bf16.gmra.mxu0 %v9914
  %v10077 = vpop.f32.mrf.mxu0
  %v10078 = vadd.f32 0.0, %v10077
  %v10079 = vpop.f32.mrf.mxu0
  %v10080 = vadd.f32 0.0, %v10079
  %10081 = vmatmul.bf16.gmra.mxu0 %v9917
  %v10082 = vpop.f32.mrf.mxu0
  %v10083 = vadd.f32 0.0, %v10082
  %v10084 = vpop.f32.mrf.mxu0
  %v10085 = vadd.f32 0.0, %v10084
  %10086 = vmatmul.bf16.gmra.mxu0 %v9920
  %v10087 = vpop.f32.mrf.mxu0
  %v10088 = vadd.f32 0.0, %v10087
  %v10089 = vpop.f32.mrf.mxu0
  %v10090 = vadd.f32 0.0, %v10089
  %10091 = vmatmul.bf16.gmra.mxu0 %v9923
  %v10092 = vpop.f32.mrf.mxu0
  %v10093 = vadd.f32 0.0, %v10092
  %v10094 = vpop.f32.mrf.mxu0
  %v10095 = vadd.f32 0.0, %v10094
  %10096 = vdwg.mxu0
  %v10097 = vadd.f32 %v9667, %v9938
  %v10098 = vadd.f32 %v9668, %v9940
  %v10099 = vadd.f32 %v9669, %v9943
  %v10100 = vadd.f32 %v9670, %v9945
  %v10101 = vadd.f32 %v9671, %v9948
  %v10102 = vadd.f32 %v9672, %v9950
  %v10103 = vadd.f32 %v9673, %v9953
  %v10104 = vadd.f32 %v9674, %v9955
  %v10105 = vadd.f32 %v9675, %v9958
  %v10106 = vadd.f32 %v9676, %v9960
  %v10107 = vadd.f32 %v9677, %v9963
  %v10108 = vadd.f32 %v9678, %v9965
  %v10109 = vadd.f32 %v9679, %v9968
  %v10110 = vadd.f32 %v9680, %v9970
  %v10111 = vadd.f32 %v9681, %v9973
  %v10112 = vadd.f32 %v9682, %v9975
  %v10113 = vadd.f32 %v9683, %v9978
  %v10114 = vadd.f32 %v9684, %v9980
  %v10115 = vadd.f32 %v9685, %v9983
  %v10116 = vadd.f32 %v9686, %v9985
  %v10117 = vadd.f32 %v9687, %v9988
  %v10118 = vadd.f32 %v9688, %v9990
  %v10119 = vadd.f32 %v9689, %v9993
  %v10120 = vadd.f32 %v9690, %v9995
  %v10121 = vadd.f32 %v9691, %v9998
  %v10122 = vadd.f32 %v9692, %v10000
  %v10123 = vadd.f32 %v9693, %v10003
  %v10124 = vadd.f32 %v9694, %v10005
  %v10125 = vadd.f32 %v9695, %v10008
  %v10126 = vadd.f32 %v9696, %v10010
  %v10127 = vadd.f32 %v9697, %v10013
  %v10128 = vadd.f32 %v9698, %v10015
  %v10129 = vadd.f32 %v9699, %v10018
  %v10130 = vadd.f32 %v9700, %v10020
  %v10131 = vadd.f32 %v9701, %v10023
  %v10132 = vadd.f32 %v9702, %v10025
  %v10133 = vadd.f32 %v9703, %v10028
  %v10134 = vadd.f32 %v9704, %v10030
  %v10135 = vadd.f32 %v9705, %v10033
  %v10136 = vadd.f32 %v9706, %v10035
  %v10137 = vadd.f32 %v9707, %v10038
  %v10138 = vadd.f32 %v9708, %v10040
  %v10139 = vadd.f32 %v9709, %v10043
  %v10140 = vadd.f32 %v9710, %v10045
  %v10141 = vadd.f32 %v9711, %v10048
  %v10142 = vadd.f32 %v9712, %v10050
  %v10143 = vadd.f32 %v9713, %v10053
  %v10144 = vadd.f32 %v9714, %v10055
  %v10145 = vadd.f32 %v9715, %v10058
  %v10146 = vadd.f32 %v9716, %v10060
  %v10147 = vadd.f32 %v9717, %v10063
  %v10148 = vadd.f32 %v9718, %v10065
  %v10149 = vadd.f32 %v9719, %v10068
  %v10150 = vadd.f32 %v9720, %v10070
  %v10151 = vadd.f32 %v9721, %v10073
  %v10152 = vadd.f32 %v9722, %v10075
  %v10153 = vadd.f32 %v9723, %v10078
  %v10154 = vadd.f32 %v9724, %v10080
  %v10155 = vadd.f32 %v9725, %v10083
  %v10156 = vadd.f32 %v9726, %v10085
  %v10157 = vadd.f32 %v9727, %v10088
  %v10158 = vadd.f32 %v9728, %v10090
  %v10159 = vadd.f32 %v9729, %v10093
  %v10160 = vadd.f32 %v9730, %v10095
  %v10161 = vld [vmem:[%s8504 + $0x1] sm:$0xff]
  %v10162 = vld [vmem:[%s8504 + $0x9] sm:$0xff]
  %v10163 = vld [vmem:[%s8504 + $0x19] sm:$0xff]
  %v10164 = vld [vmem:[%s8504 + $0x21] sm:$0xff]
  %v10165 = vld [vmem:[%s8504 + $0x31] sm:$0xff]
  %v10166 = vld [vmem:[%s8504 + $0x39] sm:$0xff]
  %v10167 = vld [vmem:[%s8504 + $0x49] sm:$0xff]
  %v10168 = vld [vmem:[%s8504 + $0x51] sm:$0xff]
  %v10169 = vld [vmem:[%s8504 + $0x61] sm:$0xff]
  %v10170 = vld [vmem:[%s8504 + $0x69] sm:$0xff]
  %v10171 = vld [vmem:[%s8504 + $0x79] sm:$0xff]
  %v10172 = vld [vmem:[%s8504 + $0x81] sm:$0xff]
  %v10173 = vld [vmem:[%s8504 + $0x91] sm:$0xff]
  %v10174 = vld [vmem:[%s8504 + $0x99] sm:$0xff]
  %v10175 = vld [vmem:[%s8504 + $0xa9] sm:$0xff]
  %v10176 = vld [vmem:[%s8504 + $0xb1] sm:$0xff]
  %v10177 = vld [vmem:[%s8504 + $0xc1] sm:$0xff]
  %v10178 = vld [vmem:[%s8504 + $0xc9] sm:$0xff]
  %v10179 = vld [vmem:[%s8504 + $0xd9] sm:$0xff]
  %v10180 = vld [vmem:[%s8504 + $0xe1] sm:$0xff]
  %v10181 = vld [vmem:[%s8504 + $0xf1] sm:$0xff]
  %v10182 = vld [vmem:[%s8504 + $0xf9] sm:$0xff]
  %v10183 = vld [vmem:[%s8504 + $0x109] sm:$0xff]
  %v10184 = vld [vmem:[%s8504 + $0x111] sm:$0xff]
  %v10185 = vld [vmem:[%s8504 + $0x121] sm:$0xff]
  %v10186 = vld [vmem:[%s8504 + $0x129] sm:$0xff]
  %v10187 = vld [vmem:[%s8504 + $0x139] sm:$0xff]
  %v10188 = vld [vmem:[%s8504 + $0x141] sm:$0xff]
  %v10189 = vld [vmem:[%s8504 + $0x151] sm:$0xff]
  %v10190 = vld [vmem:[%s8504 + $0x159] sm:$0xff]
  %v10191 = vld [vmem:[%s8504 + $0x169] sm:$0xff]
  %v10192 = vld [vmem:[%s8504 + $0x171] sm:$0xff]
  %v10193 = vld [vmem:[%s8504 + $0x1b1] sm:$0xff]
  %v10194 = vld [vmem:[%s8504 + $0x1b9] sm:$0xff]
  %v10195 = vld [vmem:[%s8504 + $0x1c9] sm:$0xff]
  %v10196 = vld [vmem:[%s8504 + $0x1d1] sm:$0xff]
  %v10197 = vld [vmem:[%s8504 + $0x1e1] sm:$0xff]
  %v10198 = vld [vmem:[%s8504 + $0x1e9] sm:$0xff]
  %v10199 = vld [vmem:[%s8504 + $0x1f9] sm:$0xff]
  %v10200 = vld [vmem:[%s8504 + $0x201] sm:$0xff]
  %v10201 = vld [vmem:[%s8504 + $0x211] sm:$0xff]
  %v10202 = vld [vmem:[%s8504 + $0x219] sm:$0xff]
  %v10203 = vld [vmem:[%s8504 + $0x229] sm:$0xff]
  %v10204 = vld [vmem:[%s8504 + $0x231] sm:$0xff]
  %v10205 = vld [vmem:[%s8504 + $0x241] sm:$0xff]
  %v10206 = vld [vmem:[%s8504 + $0x249] sm:$0xff]
  %v10207 = vld [vmem:[%s8504 + $0x259] sm:$0xff]
  %v10208 = vld [vmem:[%s8504 + $0x261] sm:$0xff]
  %v10209 = vld [vmem:[%s8504 + $0x271] sm:$0xff]
  %v10210 = vld [vmem:[%s8504 + $0x279] sm:$0xff]
  %v10211 = vld [vmem:[%s8504 + $0x289] sm:$0xff]
  %v10212 = vld [vmem:[%s8504 + $0x291] sm:$0xff]
  %v10213 = vld [vmem:[%s8504 + $0x2a1] sm:$0xff]
  %v10214 = vld [vmem:[%s8504 + $0x2a9] sm:$0xff]
  %v10215 = vld [vmem:[%s8504 + $0x2b9] sm:$0xff]
  %v10216 = vld [vmem:[%s8504 + $0x2c1] sm:$0xff]
  %v10217 = vld [vmem:[%s8504 + $0x2d1] sm:$0xff]
  %v10218 = vld [vmem:[%s8504 + $0x2d9] sm:$0xff]
  %v10219 = vld [vmem:[%s8504 + $0x2e9] sm:$0xff]
  %v10220 = vld [vmem:[%s8504 + $0x2f1] sm:$0xff]
  %v10221 = vld [vmem:[%s8504 + $0x301] sm:$0xff]
  %v10222 = vld [vmem:[%s8504 + $0x309] sm:$0xff]
  %v10223 = vld [vmem:[%s8504 + $0x319] sm:$0xff]
  %v10224 = vld [vmem:[%s8504 + $0x321] sm:$0xff]
  %v10225 = vpack.c.bf16 %v10162, %v10161
  %v10226 = vpack.c.bf16 %v10164, %v10163
  %v10227 = vpack.c.bf16 %v10166, %v10165
  %v10228 = vpack.c.bf16 %v10168, %v10167
  %v10229 = vpack.c.bf16 %v10170, %v10169
  %v10230 = vpack.c.bf16 %v10172, %v10171
  %v10231 = vpack.c.bf16 %v10174, %v10173
  %v10232 = vpack.c.bf16 %v10176, %v10175
  %v10233 = vpack.c.bf16 %v10178, %v10177
  %v10234 = vpack.c.bf16 %v10180, %v10179
  %v10235 = vpack.c.bf16 %v10182, %v10181
  %v10236 = vpack.c.bf16 %v10184, %v10183
  %v10237 = vpack.c.bf16 %v10186, %v10185
  %v10238 = vpack.c.bf16 %v10188, %v10187
  %v10239 = vpack.c.bf16 %v10190, %v10189
  %v10240 = vpack.c.bf16 %v10192, %v10191
  %v10241 = vpack.c.bf16 %v10194, %v10193
  %v10242 = vpack.c.bf16 %v10196, %v10195
  %v10243 = vpack.c.bf16 %v10198, %v10197
  %v10244 = vpack.c.bf16 %v10200, %v10199
  %v10245 = vpack.c.bf16 %v10202, %v10201
  %v10246 = vpack.c.bf16 %v10204, %v10203
  %v10247 = vpack.c.bf16 %v10206, %v10205
  %v10248 = vpack.c.bf16 %v10208, %v10207
  %v10249 = vpack.c.bf16 %v10210, %v10209
  %v10250 = vpack.c.bf16 %v10212, %v10211
  %v10251 = vpack.c.bf16 %v10214, %v10213
  %v10252 = vpack.c.bf16 %v10216, %v10215
  %v10253 = vpack.c.bf16 %v10218, %v10217
  %v10254 = vpack.c.bf16 %v10220, %v10219
  %v10255 = vpack.c.bf16 %v10222, %v10221
  %v10256 = vpack.c.bf16 %v10224, %v10223
  %s10257 = scalar_lea.vmem %s4, 16
  %v10258 = vld [vmem:[%s10257] sm:$0xf]
  %v10260 = vsel %vm7725, %v10225, 0
  %v10263 = vsel %vm7725, %v10226, 0
  %v10266 = vsel %vm7725, %v10227, 0
  %v10269 = vsel %vm7725, %v10228, 0
  %v10272 = vsel %vm7725, %v10229, 0
  %v10275 = vsel %vm7725, %v10230, 0
  %v10278 = vsel %vm7725, %v10231, 0
  %v10281 = vsel %vm7725, %v10232, 0
  %v10284 = vsel %vm7725, %v10233, 0
  %v10287 = vsel %vm7725, %v10234, 0
  %v10290 = vsel %vm7725, %v10235, 0
  %v10293 = vsel %vm7725, %v10236, 0
  %v10296 = vsel %vm7725, %v10237, 0
  %v10299 = vsel %vm7725, %v10238, 0
  %v10302 = vsel %vm7725, %v10239, 0
  %v10305 = vsel %vm7725, %v10240, 0
  %v10308 = vsel %vm7725, %v10241, 0
  %v10311 = vsel %vm7725, %v10242, 0
  %v10314 = vsel %vm7725, %v10243, 0
  %v10317 = vsel %vm7725, %v10244, 0
  %v10320 = vsel %vm7725, %v10245, 0
  %v10323 = vsel %vm7725, %v10246, 0
  %v10326 = vsel %vm7725, %v10247, 0
  %v10329 = vsel %vm7725, %v10248, 0
  %v10332 = vsel %vm7725, %v10249, 0
  %v10335 = vsel %vm7725, %v10250, 0
  %v10338 = vsel %vm7725, %v10251, 0
  %v10341 = vsel %vm7725, %v10252, 0
  %v10344 = vsel %vm7725, %v10253, 0
  %v10347 = vsel %vm7725, %v10254, 0
  %v10350 = vsel %vm7725, %v10255, 0
  %v10353 = vsel %vm7725, %v10256, 0
  %v10356 = vsel %vm8860, %v10258, 0
  %10358 = vmatpush.bf16.msra.mxu0 0
  %10359 = vmatpush.bf16.msra.mxu0 0
  %10360 = vmatpush.bf16.msra.mxu0 0
  %10361 = vmatpush.bf16.msra.mxu0 0
  %10362 = vmatpush.bf16.msra.mxu0 0
  %10363 = vmatpush.bf16.msra.mxu0 0
  %10364 = vmatpush.bf16.msra.mxu0 0
  %10365 = vmatpush.bf16.msra.mxu0 %v10356
  %10366 = vmatmul.bf16.gmra.mxu0 %v10260
  %v10367 = vpop.f32.mrf.mxu0
  %v10368 = vadd.f32 0.0, %v10367
  %v10369 = vpop.f32.mrf.mxu0
  %v10370 = vadd.f32 0.0, %v10369
  %10371 = vmatmul.bf16.gmra.mxu0 %v10263
  %v10372 = vpop.f32.mrf.mxu0
  %v10373 = vadd.f32 0.0, %v10372
  %v10374 = vpop.f32.mrf.mxu0
  %v10375 = vadd.f32 0.0, %v10374
  %10376 = vmatmul.bf16.gmra.mxu0 %v10266
  %v10377 = vpop.f32.mrf.mxu0
  %v10378 = vadd.f32 0.0, %v10377
  %v10379 = vpop.f32.mrf.mxu0
  %v10380 = vadd.f32 0.0, %v10379
  %10381 = vmatmul.bf16.gmra.mxu0 %v10269
  %v10382 = vpop.f32.mrf.mxu0
  %v10383 = vadd.f32 0.0, %v10382
  %v10384 = vpop.f32.mrf.mxu0
  %v10385 = vadd.f32 0.0, %v10384
  %10386 = vmatmul.bf16.gmra.mxu0 %v10272
  %v10387 = vpop.f32.mrf.mxu0
  %v10388 = vadd.f32 0.0, %v10387
  %v10389 = vpop.f32.mrf.mxu0
  %v10390 = vadd.f32 0.0, %v10389
  %10391 = vmatmul.bf16.gmra.mxu0 %v10275
  %v10392 = vpop.f32.mrf.mxu0
  %v10393 = vadd.f32 0.0, %v10392
  %v10394 = vpop.f32.mrf.mxu0
  %v10395 = vadd.f32 0.0, %v10394
  %10396 = vmatmul.bf16.gmra.mxu0 %v10278
  %v10397 = vpop.f32.mrf.mxu0
  %v10398 = vadd.f32 0.0, %v10397
  %v10399 = vpop.f32.mrf.mxu0
  %v10400 = vadd.f32 0.0, %v10399
  %10401 = vmatmul.bf16.gmra.mxu0 %v10281
  %v10402 = vpop.f32.mrf.mxu0
  %v10403 = vadd.f32 0.0, %v10402
  %v10404 = vpop.f32.mrf.mxu0
  %v10405 = vadd.f32 0.0, %v10404
  %10406 = vmatmul.bf16.gmra.mxu0 %v10284
  %v10407 = vpop.f32.mrf.mxu0
  %v10408 = vadd.f32 0.0, %v10407
  %v10409 = vpop.f32.mrf.mxu0
  %v10410 = vadd.f32 0.0, %v10409
  %10411 = vmatmul.bf16.gmra.mxu0 %v10287
  %v10412 = vpop.f32.mrf.mxu0
  %v10413 = vadd.f32 0.0, %v10412
  %v10414 = vpop.f32.mrf.mxu0
  %v10415 = vadd.f32 0.0, %v10414
  %10416 = vmatmul.bf16.gmra.mxu0 %v10290
  %v10417 = vpop.f32.mrf.mxu0
  %v10418 = vadd.f32 0.0, %v10417
  %v10419 = vpop.f32.mrf.mxu0
  %v10420 = vadd.f32 0.0, %v10419
  %10421 = vmatmul.bf16.gmra.mxu0 %v10293
  %v10422 = vpop.f32.mrf.mxu0
  %v10423 = vadd.f32 0.0, %v10422
  %v10424 = vpop.f32.mrf.mxu0
  %v10425 = vadd.f32 0.0, %v10424
  %10426 = vmatmul.bf16.gmra.mxu0 %v10296
  %v10427 = vpop.f32.mrf.mxu0
  %v10428 = vadd.f32 0.0, %v10427
  %v10429 = vpop.f32.mrf.mxu0
  %v10430 = vadd.f32 0.0, %v10429
  %10431 = vmatmul.bf16.gmra.mxu0 %v10299
  %v10432 = vpop.f32.mrf.mxu0
  %v10433 = vadd.f32 0.0, %v10432
  %v10434 = vpop.f32.mrf.mxu0
  %v10435 = vadd.f32 0.0, %v10434
  %10436 = vmatmul.bf16.gmra.mxu0 %v10302
  %v10437 = vpop.f32.mrf.mxu0
  %v10438 = vadd.f32 0.0, %v10437
  %v10439 = vpop.f32.mrf.mxu0
  %v10440 = vadd.f32 0.0, %v10439
  %10441 = vmatmul.bf16.gmra.mxu0 %v10305
  %v10442 = vpop.f32.mrf.mxu0
  %v10443 = vadd.f32 0.0, %v10442
  %v10444 = vpop.f32.mrf.mxu0
  %v10445 = vadd.f32 0.0, %v10444
  %10446 = vmatmul.bf16.gmra.mxu0 %v10308
  %v10447 = vpop.f32.mrf.mxu0
  %v10448 = vadd.f32 0.0, %v10447
  %v10449 = vpop.f32.mrf.mxu0
  %v10450 = vadd.f32 0.0, %v10449
  %10451 = vmatmul.bf16.gmra.mxu0 %v10311
  %v10452 = vpop.f32.mrf.mxu0
  %v10453 = vadd.f32 0.0, %v10452
  %v10454 = vpop.f32.mrf.mxu0
  %v10455 = vadd.f32 0.0, %v10454
  %10456 = vmatmul.bf16.gmra.mxu0 %v10314
  %v10457 = vpop.f32.mrf.mxu0
  %v10458 = vadd.f32 0.0, %v10457
  %v10459 = vpop.f32.mrf.mxu0
  %v10460 = vadd.f32 0.0, %v10459
  %10461 = vmatmul.bf16.gmra.mxu0 %v10317
  %v10462 = vpop.f32.mrf.mxu0
  %v10463 = vadd.f32 0.0, %v10462
  %v10464 = vpop.f32.mrf.mxu0
  %v10465 = vadd.f32 0.0, %v10464
  %10466 = vmatmul.bf16.gmra.mxu0 %v10320
  %v10467 = vpop.f32.mrf.mxu0
  %v10468 = vadd.f32 0.0, %v10467
  %v10469 = vpop.f32.mrf.mxu0
  %v10470 = vadd.f32 0.0, %v10469
  %10471 = vmatmul.bf16.gmra.mxu0 %v10323
  %v10472 = vpop.f32.mrf.mxu0
  %v10473 = vadd.f32 0.0, %v10472
  %v10474 = vpop.f32.mrf.mxu0
  %v10475 = vadd.f32 0.0, %v10474
  %10476 = vmatmul.bf16.gmra.mxu0 %v10326
  %v10477 = vpop.f32.mrf.mxu0
  %v10478 = vadd.f32 0.0, %v10477
  %v10479 = vpop.f32.mrf.mxu0
  %v10480 = vadd.f32 0.0, %v10479
  %10481 = vmatmul.bf16.gmra.mxu0 %v10329
  %v10482 = vpop.f32.mrf.mxu0
  %v10483 = vadd.f32 0.0, %v10482
  %v10484 = vpop.f32.mrf.mxu0
  %v10485 = vadd.f32 0.0, %v10484
  %10486 = vmatmul.bf16.gmra.mxu0 %v10332
  %v10487 = vpop.f32.mrf.mxu0
  %v10488 = vadd.f32 0.0, %v10487
  %v10489 = vpop.f32.mrf.mxu0
  %v10490 = vadd.f32 0.0, %v10489
  %10491 = vmatmul.bf16.gmra.mxu0 %v10335
  %v10492 = vpop.f32.mrf.mxu0
  %v10493 = vadd.f32 0.0, %v10492
  %v10494 = vpop.f32.mrf.mxu0
  %v10495 = vadd.f32 0.0, %v10494
  %10496 = vmatmul.bf16.gmra.mxu0 %v10338
  %v10497 = vpop.f32.mrf.mxu0
  %v10498 = vadd.f32 0.0, %v10497
  %v10499 = vpop.f32.mrf.mxu0
  %v10500 = vadd.f32 0.0, %v10499
  %10501 = vmatmul.bf16.gmra.mxu0 %v10341
  %v10502 = vpop.f32.mrf.mxu0
  %v10503 = vadd.f32 0.0, %v10502
  %v10504 = vpop.f32.mrf.mxu0
  %v10505 = vadd.f32 0.0, %v10504
  %10506 = vmatmul.bf16.gmra.mxu0 %v10344
  %v10507 = vpop.f32.mrf.mxu0
  %v10508 = vadd.f32 0.0, %v10507
  %v10509 = vpop.f32.mrf.mxu0
  %v10510 = vadd.f32 0.0, %v10509
  %10511 = vmatmul.bf16.gmra.mxu0 %v10347
  %v10512 = vpop.f32.mrf.mxu0
  %v10513 = vadd.f32 0.0, %v10512
  %v10514 = vpop.f32.mrf.mxu0
  %v10515 = vadd.f32 0.0, %v10514
  %10516 = vmatmul.bf16.gmra.mxu0 %v10350
  %v10517 = vpop.f32.mrf.mxu0
  %v10518 = vadd.f32 0.0, %v10517
  %v10519 = vpop.f32.mrf.mxu0
  %v10520 = vadd.f32 0.0, %v10519
  %10521 = vmatmul.bf16.gmra.mxu0 %v10353
  %v10522 = vpop.f32.mrf.mxu0
  %v10523 = vadd.f32 0.0, %v10522
  %v10524 = vpop.f32.mrf.mxu0
  %v10525 = vadd.f32 0.0, %v10524
  %10526 = vdwg.mxu0
  %v10527 = vadd.f32 %v10097, %v10368
  %v10528 = vadd.f32 %v10098, %v10370
  %v10529 = vadd.f32 %v10099, %v10373
  %v10530 = vadd.f32 %v10100, %v10375
  %v10531 = vadd.f32 %v10101, %v10378
  %v10532 = vadd.f32 %v10102, %v10380
  %v10533 = vadd.f32 %v10103, %v10383
  %v10534 = vadd.f32 %v10104, %v10385
  %v10535 = vadd.f32 %v10105, %v10388
  %v10536 = vadd.f32 %v10106, %v10390
  %v10537 = vadd.f32 %v10107, %v10393
  %v10538 = vadd.f32 %v10108, %v10395
  %v10539 = vadd.f32 %v10109, %v10398
  %v10540 = vadd.f32 %v10110, %v10400
  %v10541 = vadd.f32 %v10111, %v10403
  %v10542 = vadd.f32 %v10112, %v10405
  %v10543 = vadd.f32 %v10113, %v10408
  %v10544 = vadd.f32 %v10114, %v10410
  %v10545 = vadd.f32 %v10115, %v10413
  %v10546 = vadd.f32 %v10116, %v10415
  %v10547 = vadd.f32 %v10117, %v10418
  %v10548 = vadd.f32 %v10118, %v10420
  %v10549 = vadd.f32 %v10119, %v10423
  %v10550 = vadd.f32 %v10120, %v10425
  %v10551 = vadd.f32 %v10121, %v10428
  %v10552 = vadd.f32 %v10122, %v10430
  %v10553 = vadd.f32 %v10123, %v10433
  %v10554 = vadd.f32 %v10124, %v10435
  %v10555 = vadd.f32 %v10125, %v10438
  %v10556 = vadd.f32 %v10126, %v10440
  %v10557 = vadd.f32 %v10127, %v10443
  %v10558 = vadd.f32 %v10128, %v10445
  %v10559 = vadd.f32 %v10129, %v10448
  %v10560 = vadd.f32 %v10130, %v10450
  %v10561 = vadd.f32 %v10131, %v10453
  %v10562 = vadd.f32 %v10132, %v10455
  %v10563 = vadd.f32 %v10133, %v10458
  %v10564 = vadd.f32 %v10134, %v10460
  %v10565 = vadd.f32 %v10135, %v10463
  %v10566 = vadd.f32 %v10136, %v10465
  %v10567 = vadd.f32 %v10137, %v10468
  %v10568 = vadd.f32 %v10138, %v10470
  %v10569 = vadd.f32 %v10139, %v10473
  %v10570 = vadd.f32 %v10140, %v10475
  %v10571 = vadd.f32 %v10141, %v10478
  %v10572 = vadd.f32 %v10142, %v10480
  %v10573 = vadd.f32 %v10143, %v10483
  %v10574 = vadd.f32 %v10144, %v10485
  %v10575 = vadd.f32 %v10145, %v10488
  %v10576 = vadd.f32 %v10146, %v10490
  %v10577 = vadd.f32 %v10147, %v10493
  %v10578 = vadd.f32 %v10148, %v10495
  %v10579 = vadd.f32 %v10149, %v10498
  %v10580 = vadd.f32 %v10150, %v10500
  %v10581 = vadd.f32 %v10151, %v10503
  %v10582 = vadd.f32 %v10152, %v10505
  %v10583 = vadd.f32 %v10153, %v10508
  %v10584 = vadd.f32 %v10154, %v10510
  %v10585 = vadd.f32 %v10155, %v10513
  %v10586 = vadd.f32 %v10156, %v10515
  %v10587 = vadd.f32 %v10157, %v10518
  %v10588 = vadd.f32 %v10158, %v10520
  %v10589 = vadd.f32 %v10159, %v10523
  %v10590 = vadd.f32 %v10160, %v10525
  %v10591 = vld [vmem:[%s8504 + $0x2] sm:$0xff]
  %v10592 = vld [vmem:[%s8504 + $0xa] sm:$0xff]
  %v10593 = vld [vmem:[%s8504 + $0x1a] sm:$0xff]
  %v10594 = vld [vmem:[%s8504 + $0x22] sm:$0xff]
  %v10595 = vld [vmem:[%s8504 + $0x32] sm:$0xff]
  %v10596 = vld [vmem:[%s8504 + $0x3a] sm:$0xff]
  %v10597 = vld [vmem:[%s8504 + $0x4a] sm:$0xff]
  %v10598 = vld [vmem:[%s8504 + $0x52] sm:$0xff]
  %v10599 = vld [vmem:[%s8504 + $0x62] sm:$0xff]
  %v10600 = vld [vmem:[%s8504 + $0x6a] sm:$0xff]
  %v10601 = vld [vmem:[%s8504 + $0x7a] sm:$0xff]
  %v10602 = vld [vmem:[%s8504 + $0x82] sm:$0xff]
  %v10603 = vld [vmem:[%s8504 + $0x92] sm:$0xff]
  %v10604 = vld [vmem:[%s8504 + $0x9a] sm:$0xff]
  %v10605 = vld [vmem:[%s8504 + $0xaa] sm:$0xff]
  %v10606 = vld [vmem:[%s8504 + $0xb2] sm:$0xff]
  %v10607 = vld [vmem:[%s8504 + $0xc2] sm:$0xff]
  %v10608 = vld [vmem:[%s8504 + $0xca] sm:$0xff]
  %v10609 = vld [vmem:[%s8504 + $0xda] sm:$0xff]
  %v10610 = vld [vmem:[%s8504 + $0xe2] sm:$0xff]
  %v10611 = vld [vmem:[%s8504 + $0xf2] sm:$0xff]
  %v10612 = vld [vmem:[%s8504 + $0xfa] sm:$0xff]
  %v10613 = vld [vmem:[%s8504 + $0x10a] sm:$0xff]
  %v10614 = vld [vmem:[%s8504 + $0x112] sm:$0xff]
  %v10615 = vld [vmem:[%s8504 + $0x122] sm:$0xff]
  %v10616 = vld [vmem:[%s8504 + $0x12a] sm:$0xff]
  %v10617 = vld [vmem:[%s8504 + $0x13a] sm:$0xff]
  %v10618 = vld [vmem:[%s8504 + $0x142] sm:$0xff]
  %v10619 = vld [vmem:[%s8504 + $0x152] sm:$0xff]
  %v10620 = vld [vmem:[%s8504 + $0x15a] sm:$0xff]
  %v10621 = vld [vmem:[%s8504 + $0x16a] sm:$0xff]
  %v10622 = vld [vmem:[%s8504 + $0x172] sm:$0xff]
  %v10623 = vld [vmem:[%s8504 + $0x1b2] sm:$0xff]
  %v10624 = vld [vmem:[%s8504 + $0x1ba] sm:$0xff]
  %v10625 = vld [vmem:[%s8504 + $0x1ca] sm:$0xff]
  %v10626 = vld [vmem:[%s8504 + $0x1d2] sm:$0xff]
  %v10627 = vld [vmem:[%s8504 + $0x1e2] sm:$0xff]
  %v10628 = vld [vmem:[%s8504 + $0x1ea] sm:$0xff]
  %v10629 = vld [vmem:[%s8504 + $0x1fa] sm:$0xff]
  %v10630 = vld [vmem:[%s8504 + $0x202] sm:$0xff]
  %v10631 = vld [vmem:[%s8504 + $0x212] sm:$0xff]
  %v10632 = vld [vmem:[%s8504 + $0x21a] sm:$0xff]
  %v10633 = vld [vmem:[%s8504 + $0x22a] sm:$0xff]
  %v10634 = vld [vmem:[%s8504 + $0x232] sm:$0xff]
  %v10635 = vld [vmem:[%s8504 + $0x242] sm:$0xff]
  %v10636 = vld [vmem:[%s8504 + $0x24a] sm:$0xff]
  %v10637 = vld [vmem:[%s8504 + $0x25a] sm:$0xff]
  %v10638 = vld [vmem:[%s8504 + $0x262] sm:$0xff]
  %v10639 = vld [vmem:[%s8504 + $0x272] sm:$0xff]
  %v10640 = vld [vmem:[%s8504 + $0x27a] sm:$0xff]
  %v10641 = vld [vmem:[%s8504 + $0x28a] sm:$0xff]
  %v10642 = vld [vmem:[%s8504 + $0x292] sm:$0xff]
  %v10643 = vld [vmem:[%s8504 + $0x2a2] sm:$0xff]
  %v10644 = vld [vmem:[%s8504 + $0x2aa] sm:$0xff]
  %v10645 = vld [vmem:[%s8504 + $0x2ba] sm:$0xff]
  %v10646 = vld [vmem:[%s8504 + $0x2c2] sm:$0xff]
  %v10647 = vld [vmem:[%s8504 + $0x2d2] sm:$0xff]
  %v10648 = vld [vmem:[%s8504 + $0x2da] sm:$0xff]
  %v10649 = vld [vmem:[%s8504 + $0x2ea] sm:$0xff]
  %v10650 = vld [vmem:[%s8504 + $0x2f2] sm:$0xff]
  %v10651 = vld [vmem:[%s8504 + $0x302] sm:$0xff]
  %v10652 = vld [vmem:[%s8504 + $0x30a] sm:$0xff]
  %v10653 = vld [vmem:[%s8504 + $0x31a] sm:$0xff]
  %v10654 = vld [vmem:[%s8504 + $0x322] sm:$0xff]
  %v10655 = vpack.c.bf16 %v10592, %v10591
  %v10656 = vpack.c.bf16 %v10594, %v10593
  %v10657 = vpack.c.bf16 %v10596, %v10595
  %v10658 = vpack.c.bf16 %v10598, %v10597
  %v10659 = vpack.c.bf16 %v10600, %v10599
  %v10660 = vpack.c.bf16 %v10602, %v10601
  %v10661 = vpack.c.bf16 %v10604, %v10603
  %v10662 = vpack.c.bf16 %v10606, %v10605
  %v10663 = vpack.c.bf16 %v10608, %v10607
  %v10664 = vpack.c.bf16 %v10610, %v10609
  %v10665 = vpack.c.bf16 %v10612, %v10611
  %v10666 = vpack.c.bf16 %v10614, %v10613
  %v10667 = vpack.c.bf16 %v10616, %v10615
  %v10668 = vpack.c.bf16 %v10618, %v10617
  %v10669 = vpack.c.bf16 %v10620, %v10619
  %v10670 = vpack.c.bf16 %v10622, %v10621
  %v10671 = vpack.c.bf16 %v10624, %v10623
  %v10672 = vpack.c.bf16 %v10626, %v10625
  %v10673 = vpack.c.bf16 %v10628, %v10627
  %v10674 = vpack.c.bf16 %v10630, %v10629
  %v10675 = vpack.c.bf16 %v10632, %v10631
  %v10676 = vpack.c.bf16 %v10634, %v10633
  %v10677 = vpack.c.bf16 %v10636, %v10635
  %v10678 = vpack.c.bf16 %v10638, %v10637
  %v10679 = vpack.c.bf16 %v10640, %v10639
  %v10680 = vpack.c.bf16 %v10642, %v10641
  %v10681 = vpack.c.bf16 %v10644, %v10643
  %v10682 = vpack.c.bf16 %v10646, %v10645
  %v10683 = vpack.c.bf16 %v10648, %v10647
  %v10684 = vpack.c.bf16 %v10650, %v10649
  %v10685 = vpack.c.bf16 %v10652, %v10651
  %v10686 = vpack.c.bf16 %v10654, %v10653
  %s10687 = scalar_lea.vmem %s4, 20
  %v10688 = vld [vmem:[%s10687] sm:$0xf]
  %v10690 = vsel %vm7725, %v10655, 0
  %v10693 = vsel %vm7725, %v10656, 0
  %v10696 = vsel %vm7725, %v10657, 0
  %v10699 = vsel %vm7725, %v10658, 0
  %v10702 = vsel %vm7725, %v10659, 0
  %v10705 = vsel %vm7725, %v10660, 0
  %v10708 = vsel %vm7725, %v10661, 0
  %v10711 = vsel %vm7725, %v10662, 0
  %v10714 = vsel %vm7725, %v10663, 0
  %v10717 = vsel %vm7725, %v10664, 0
  %v10720 = vsel %vm7725, %v10665, 0
  %v10723 = vsel %vm7725, %v10666, 0
  %v10726 = vsel %vm7725, %v10667, 0
  %v10729 = vsel %vm7725, %v10668, 0
  %v10732 = vsel %vm7725, %v10669, 0
  %v10735 = vsel %vm7725, %v10670, 0
  %v10738 = vsel %vm7725, %v10671, 0
  %v10741 = vsel %vm7725, %v10672, 0
  %v10744 = vsel %vm7725, %v10673, 0
  %v10747 = vsel %vm7725, %v10674, 0
  %v10750 = vsel %vm7725, %v10675, 0
  %v10753 = vsel %vm7725, %v10676, 0
  %v10756 = vsel %vm7725, %v10677, 0
  %v10759 = vsel %vm7725, %v10678, 0
  %v10762 = vsel %vm7725, %v10679, 0
  %v10765 = vsel %vm7725, %v10680, 0
  %v10768 = vsel %vm7725, %v10681, 0
  %v10771 = vsel %vm7725, %v10682, 0
  %v10774 = vsel %vm7725, %v10683, 0
  %v10777 = vsel %vm7725, %v10684, 0
  %v10780 = vsel %vm7725, %v10685, 0
  %v10783 = vsel %vm7725, %v10686, 0
  %v10786 = vsel %vm8860, %v10688, 0
  %10788 = vmatpush.bf16.msra.mxu0 0
  %10789 = vmatpush.bf16.msra.mxu0 0
  %10790 = vmatpush.bf16.msra.mxu0 0
  %10791 = vmatpush.bf16.msra.mxu0 0
  %10792 = vmatpush.bf16.msra.mxu0 0
  %10793 = vmatpush.bf16.msra.mxu0 0
  %10794 = vmatpush.bf16.msra.mxu0 0
  %10795 = vmatpush.bf16.msra.mxu0 %v10786
  %10796 = vmatmul.bf16.gmra.mxu0 %v10690
  %v10797 = vpop.f32.mrf.mxu0
  %v10798 = vadd.f32 0.0, %v10797
  %v10799 = vpop.f32.mrf.mxu0
  %v10800 = vadd.f32 0.0, %v10799
  %10801 = vmatmul.bf16.gmra.mxu0 %v10693
  %v10802 = vpop.f32.mrf.mxu0
  %v10803 = vadd.f32 0.0, %v10802
  %v10804 = vpop.f32.mrf.mxu0
  %v10805 = vadd.f32 0.0, %v10804
  %10806 = vmatmul.bf16.gmra.mxu0 %v10696
  %v10807 = vpop.f32.mrf.mxu0
  %v10808 = vadd.f32 0.0, %v10807
  %v10809 = vpop.f32.mrf.mxu0
  %v10810 = vadd.f32 0.0, %v10809
  %10811 = vmatmul.bf16.gmra.mxu0 %v10699
  %v10812 = vpop.f32.mrf.mxu0
  %v10813 = vadd.f32 0.0, %v10812
  %v10814 = vpop.f32.mrf.mxu0
  %v10815 = vadd.f32 0.0, %v10814
  %10816 = vmatmul.bf16.gmra.mxu0 %v10702
  %v10817 = vpop.f32.mrf.mxu0
  %v10818 = vadd.f32 0.0, %v10817
  %v10819 = vpop.f32.mrf.mxu0
  %v10820 = vadd.f32 0.0, %v10819
  %10821 = vmatmul.bf16.gmra.mxu0 %v10705
  %v10822 = vpop.f32.mrf.mxu0
  %v10823 = vadd.f32 0.0, %v10822
  %v10824 = vpop.f32.mrf.mxu0
  %v10825 = vadd.f32 0.0, %v10824
  %10826 = vmatmul.bf16.gmra.mxu0 %v10708
  %v10827 = vpop.f32.mrf.mxu0
  %v10828 = vadd.f32 0.0, %v10827
  %v10829 = vpop.f32.mrf.mxu0
  %v10830 = vadd.f32 0.0, %v10829
  %10831 = vmatmul.bf16.gmra.mxu0 %v10711
  %v10832 = vpop.f32.mrf.mxu0
  %v10833 = vadd.f32 0.0, %v10832
  %v10834 = vpop.f32.mrf.mxu0
  %v10835 = vadd.f32 0.0, %v10834
  %10836 = vmatmul.bf16.gmra.mxu0 %v10714
  %v10837 = vpop.f32.mrf.mxu0
  %v10838 = vadd.f32 0.0, %v10837
  %v10839 = vpop.f32.mrf.mxu0
  %v10840 = vadd.f32 0.0, %v10839
  %10841 = vmatmul.bf16.gmra.mxu0 %v10717
  %v10842 = vpop.f32.mrf.mxu0
  %v10843 = vadd.f32 0.0, %v10842
  %v10844 = vpop.f32.mrf.mxu0
  %v10845 = vadd.f32 0.0, %v10844
  %10846 = vmatmul.bf16.gmra.mxu0 %v10720
  %v10847 = vpop.f32.mrf.mxu0
  %v10848 = vadd.f32 0.0, %v10847
  %v10849 = vpop.f32.mrf.mxu0
  %v10850 = vadd.f32 0.0, %v10849
  %10851 = vmatmul.bf16.gmra.mxu0 %v10723
  %v10852 = vpop.f32.mrf.mxu0
  %v10853 = vadd.f32 0.0, %v10852
  %v10854 = vpop.f32.mrf.mxu0
  %v10855 = vadd.f32 0.0, %v10854
  %10856 = vmatmul.bf16.gmra.mxu0 %v10726
  %v10857 = vpop.f32.mrf.mxu0
  %v10858 = vadd.f32 0.0, %v10857
  %v10859 = vpop.f32.mrf.mxu0
  %v10860 = vadd.f32 0.0, %v10859
  %10861 = vmatmul.bf16.gmra.mxu0 %v10729
  %v10862 = vpop.f32.mrf.mxu0
  %v10863 = vadd.f32 0.0, %v10862
  %v10864 = vpop.f32.mrf.mxu0
  %v10865 = vadd.f32 0.0, %v10864
  %10866 = vmatmul.bf16.gmra.mxu0 %v10732
  %v10867 = vpop.f32.mrf.mxu0
  %v10868 = vadd.f32 0.0, %v10867
  %v10869 = vpop.f32.mrf.mxu0
  %v10870 = vadd.f32 0.0, %v10869
  %10871 = vmatmul.bf16.gmra.mxu0 %v10735
  %v10872 = vpop.f32.mrf.mxu0
  %v10873 = vadd.f32 0.0, %v10872
  %v10874 = vpop.f32.mrf.mxu0
  %v10875 = vadd.f32 0.0, %v10874
  %10876 = vmatmul.bf16.gmra.mxu0 %v10738
  %v10877 = vpop.f32.mrf.mxu0
  %v10878 = vadd.f32 0.0, %v10877
  %v10879 = vpop.f32.mrf.mxu0
  %v10880 = vadd.f32 0.0, %v10879
  %10881 = vmatmul.bf16.gmra.mxu0 %v10741
  %v10882 = vpop.f32.mrf.mxu0
  %v10883 = vadd.f32 0.0, %v10882
  %v10884 = vpop.f32.mrf.mxu0
  %v10885 = vadd.f32 0.0, %v10884
  %10886 = vmatmul.bf16.gmra.mxu0 %v10744
  %v10887 = vpop.f32.mrf.mxu0
  %v10888 = vadd.f32 0.0, %v10887
  %v10889 = vpop.f32.mrf.mxu0
  %v10890 = vadd.f32 0.0, %v10889
  %10891 = vmatmul.bf16.gmra.mxu0 %v10747
  %v10892 = vpop.f32.mrf.mxu0
  %v10893 = vadd.f32 0.0, %v10892
  %v10894 = vpop.f32.mrf.mxu0
  %v10895 = vadd.f32 0.0, %v10894
  %10896 = vmatmul.bf16.gmra.mxu0 %v10750
  %v10897 = vpop.f32.mrf.mxu0
  %v10898 = vadd.f32 0.0, %v10897
  %v10899 = vpop.f32.mrf.mxu0
  %v10900 = vadd.f32 0.0, %v10899
  %10901 = vmatmul.bf16.gmra.mxu0 %v10753
  %v10902 = vpop.f32.mrf.mxu0
  %v10903 = vadd.f32 0.0, %v10902
  %v10904 = vpop.f32.mrf.mxu0
  %v10905 = vadd.f32 0.0, %v10904
  %10906 = vmatmul.bf16.gmra.mxu0 %v10756
  %v10907 = vpop.f32.mrf.mxu0
  %v10908 = vadd.f32 0.0, %v10907
  %v10909 = vpop.f32.mrf.mxu0
  %v10910 = vadd.f32 0.0, %v10909
  %10911 = vmatmul.bf16.gmra.mxu0 %v10759
  %v10912 = vpop.f32.mrf.mxu0
  %v10913 = vadd.f32 0.0, %v10912
  %v10914 = vpop.f32.mrf.mxu0
  %v10915 = vadd.f32 0.0, %v10914
  %10916 = vmatmul.bf16.gmra.mxu0 %v10762
  %v10917 = vpop.f32.mrf.mxu0
  %v10918 = vadd.f32 0.0, %v10917
  %v10919 = vpop.f32.mrf.mxu0
  %v10920 = vadd.f32 0.0, %v10919
  %10921 = vmatmul.bf16.gmra.mxu0 %v10765
  %v10922 = vpop.f32.mrf.mxu0
  %v10923 = vadd.f32 0.0, %v10922
  %v10924 = vpop.f32.mrf.mxu0
  %v10925 = vadd.f32 0.0, %v10924
  %10926 = vmatmul.bf16.gmra.mxu0 %v10768
  %v10927 = vpop.f32.mrf.mxu0
  %v10928 = vadd.f32 0.0, %v10927
  %v10929 = vpop.f32.mrf.mxu0
  %v10930 = vadd.f32 0.0, %v10929
  %10931 = vmatmul.bf16.gmra.mxu0 %v10771
  %v10932 = vpop.f32.mrf.mxu0
  %v10933 = vadd.f32 0.0, %v10932
  %v10934 = vpop.f32.mrf.mxu0
  %v10935 = vadd.f32 0.0, %v10934
  %10936 = vmatmul.bf16.gmra.mxu0 %v10774
  %v10937 = vpop.f32.mrf.mxu0
  %v10938 = vadd.f32 0.0, %v10937
  %v10939 = vpop.f32.mrf.mxu0
  %v10940 = vadd.f32 0.0, %v10939
  %10941 = vmatmul.bf16.gmra.mxu0 %v10777
  %v10942 = vpop.f32.mrf.mxu0
  %v10943 = vadd.f32 0.0, %v10942
  %v10944 = vpop.f32.mrf.mxu0
  %v10945 = vadd.f32 0.0, %v10944
  %10946 = vmatmul.bf16.gmra.mxu0 %v10780
  %v10947 = vpop.f32.mrf.mxu0
  %v10948 = vadd.f32 0.0, %v10947
  %v10949 = vpop.f32.mrf.mxu0
  %v10950 = vadd.f32 0.0, %v10949
  %10951 = vmatmul.bf16.gmra.mxu0 %v10783
  %v10952 = vpop.f32.mrf.mxu0
  %v10953 = vadd.f32 0.0, %v10952
  %v10954 = vpop.f32.mrf.mxu0
  %v10955 = vadd.f32 0.0, %v10954
  %10956 = vdwg.mxu0
  %v10957 = vadd.f32 %v10527, %v10798
  %v10958 = vadd.f32 %v10528, %v10800
  %v10959 = vadd.f32 %v10529, %v10803
  %v10960 = vadd.f32 %v10530, %v10805
  %v10961 = vadd.f32 %v10531, %v10808
  %v10962 = vadd.f32 %v10532, %v10810
  %v10963 = vadd.f32 %v10533, %v10813
  %v10964 = vadd.f32 %v10534, %v10815
  %v10965 = vadd.f32 %v10535, %v10818
  %v10966 = vadd.f32 %v10536, %v10820
  %v10967 = vadd.f32 %v10537, %v10823
  %v10968 = vadd.f32 %v10538, %v10825
  %v10969 = vadd.f32 %v10539, %v10828
  %v10970 = vadd.f32 %v10540, %v10830
  %v10971 = vadd.f32 %v10541, %v10833
  %v10972 = vadd.f32 %v10542, %v10835
  %v10973 = vadd.f32 %v10543, %v10838
  %v10974 = vadd.f32 %v10544, %v10840
  %v10975 = vadd.f32 %v10545, %v10843
  %v10976 = vadd.f32 %v10546, %v10845
  %v10977 = vadd.f32 %v10547, %v10848
  %v10978 = vadd.f32 %v10548, %v10850
  %v10979 = vadd.f32 %v10549, %v10853
  %v10980 = vadd.f32 %v10550, %v10855
  %v10981 = vadd.f32 %v10551, %v10858
  %v10982 = vadd.f32 %v10552, %v10860
  %v10983 = vadd.f32 %v10553, %v10863
  %v10984 = vadd.f32 %v10554, %v10865
  %v10985 = vadd.f32 %v10555, %v10868
  %v10986 = vadd.f32 %v10556, %v10870
  %v10987 = vadd.f32 %v10557, %v10873
  %v10988 = vadd.f32 %v10558, %v10875
  %v10989 = vadd.f32 %v10559, %v10878
  %v10990 = vadd.f32 %v10560, %v10880
  %v10991 = vadd.f32 %v10561, %v10883
  %v10992 = vadd.f32 %v10562, %v10885
  %v10993 = vadd.f32 %v10563, %v10888
  %v10994 = vadd.f32 %v10564, %v10890
  %v10995 = vadd.f32 %v10565, %v10893
  %v10996 = vadd.f32 %v10566, %v10895
  %v10997 = vadd.f32 %v10567, %v10898
  %v10998 = vadd.f32 %v10568, %v10900
  %v10999 = vadd.f32 %v10569, %v10903
  %v11000 = vadd.f32 %v10570, %v10905
  %v11001 = vadd.f32 %v10571, %v10908
  %v11002 = vadd.f32 %v10572, %v10910
  %v11003 = vadd.f32 %v10573, %v10913
  %v11004 = vadd.f32 %v10574, %v10915
  %v11005 = vadd.f32 %v10575, %v10918
  %v11006 = vadd.f32 %v10576, %v10920
  %v11007 = vadd.f32 %v10577, %v10923
  %v11008 = vadd.f32 %v10578, %v10925
  %v11009 = vadd.f32 %v10579, %v10928
  %v11010 = vadd.f32 %v10580, %v10930
  %v11011 = vadd.f32 %v10581, %v10933
  %v11012 = vadd.f32 %v10582, %v10935
  %v11013 = vadd.f32 %v10583, %v10938
  %v11014 = vadd.f32 %v10584, %v10940
  %v11015 = vadd.f32 %v10585, %v10943
  %v11016 = vadd.f32 %v10586, %v10945
  %v11017 = vadd.f32 %v10587, %v10948
  %v11018 = vadd.f32 %v10588, %v10950
  %v11019 = vadd.f32 %v10589, %v10953
  %v11020 = vadd.f32 %v10590, %v10955
  %s11021 = scalar_lea.vmem [#allocation2], 48
  %v11022 = vld [vmem:[%s11021] sm:$0xff]
  %v11023 = vld [vmem:[%s11021 + $0x8] sm:$0xff]
  %v11024 = vld [vmem:[%s11021 + $0x18] sm:$0xff]
  %v11025 = vld [vmem:[%s11021 + $0x20] sm:$0xff]
  %v11026 = vld [vmem:[%s11021 + $0x30] sm:$0xff]
  %v11027 = vld [vmem:[%s11021 + $0x38] sm:$0xff]
  %v11028 = vld [vmem:[%s11021 + $0x48] sm:$0xff]
  %v11029 = vld [vmem:[%s11021 + $0x50] sm:$0xff]
  %v11030 = vld [vmem:[%s11021 + $0x60] sm:$0xff]
  %v11031 = vld [vmem:[%s11021 + $0x68] sm:$0xff]
  %v11032 = vld [vmem:[%s11021 + $0x78] sm:$0xff]
  %v11033 = vld [vmem:[%s11021 + $0x80] sm:$0xff]
  %v11034 = vld [vmem:[%s11021 + $0x90] sm:$0xff]
  %v11035 = vld [vmem:[%s11021 + $0x98] sm:$0xff]
  %v11036 = vld [vmem:[%s11021 + $0xa8] sm:$0xff]
  %v11037 = vld [vmem:[%s11021 + $0xb0] sm:$0xff]
  %v11038 = vld [vmem:[%s11021 + $0xc0] sm:$0xff]
  %v11039 = vld [vmem:[%s11021 + $0xc8] sm:$0xff]
  %v11040 = vld [vmem:[%s11021 + $0xd8] sm:$0xff]
  %v11041 = vld [vmem:[%s11021 + $0xe0] sm:$0xff]
  %v11042 = vld [vmem:[%s11021 + $0xf0] sm:$0xff]
  %v11043 = vld [vmem:[%s11021 + $0xf8] sm:$0xff]
  %v11044 = vld [vmem:[%s11021 + $0x108] sm:$0xff]
  %v11045 = vld [vmem:[%s11021 + $0x110] sm:$0xff]
  %v11046 = vld [vmem:[%s11021 + $0x120] sm:$0xff]
  %v11047 = vld [vmem:[%s11021 + $0x128] sm:$0xff]
  %v11048 = vld [vmem:[%s11021 + $0x138] sm:$0xff]
  %v11049 = vld [vmem:[%s11021 + $0x140] sm:$0xff]
  %v11050 = vld [vmem:[%s11021 + $0x150] sm:$0xff]
  %v11051 = vld [vmem:[%s11021 + $0x158] sm:$0xff]
  %v11052 = vld [vmem:[%s11021 + $0x168] sm:$0xff]
  %v11053 = vld [vmem:[%s11021 + $0x170] sm:$0xff]
  %v11054 = vld [vmem:[%s11021 + $0x1b0] sm:$0xff]
  %v11055 = vld [vmem:[%s11021 + $0x1b8] sm:$0xff]
  %v11056 = vld [vmem:[%s11021 + $0x1c8] sm:$0xff]
  %v11057 = vld [vmem:[%s11021 + $0x1d0] sm:$0xff]
  %v11058 = vld [vmem:[%s11021 + $0x1e0] sm:$0xff]
  %v11059 = vld [vmem:[%s11021 + $0x1e8] sm:$0xff]
  %v11060 = vld [vmem:[%s11021 + $0x1f8] sm:$0xff]
  %v11061 = vld [vmem:[%s11021 + $0x200] sm:$0xff]
  %v11062 = vld [vmem:[%s11021 + $0x210] sm:$0xff]
  %v11063 = vld [vmem:[%s11021 + $0x218] sm:$0xff]
  %v11064 = vld [vmem:[%s11021 + $0x228] sm:$0xff]
  %v11065 = vld [vmem:[%s11021 + $0x230] sm:$0xff]
  %v11066 = vld [vmem:[%s11021 + $0x240] sm:$0xff]
  %v11067 = vld [vmem:[%s11021 + $0x248] sm:$0xff]
  %v11068 = vld [vmem:[%s11021 + $0x258] sm:$0xff]
  %v11069 = vld [vmem:[%s11021 + $0x260] sm:$0xff]
  %v11070 = vld [vmem:[%s11021 + $0x270] sm:$0xff]
  %v11071 = vld [vmem:[%s11021 + $0x278] sm:$0xff]
  %v11072 = vld [vmem:[%s11021 + $0x288] sm:$0xff]
  %v11073 = vld [vmem:[%s11021 + $0x290] sm:$0xff]
  %v11074 = vld [vmem:[%s11021 + $0x2a0] sm:$0xff]
  %v11075 = vld [vmem:[%s11021 + $0x2a8] sm:$0xff]
  %v11076 = vld [vmem:[%s11021 + $0x2b8] sm:$0xff]
  %v11077 = vld [vmem:[%s11021 + $0x2c0] sm:$0xff]
  %v11078 = vld [vmem:[%s11021 + $0x2d0] sm:$0xff]
  %v11079 = vld [vmem:[%s11021 + $0x2d8] sm:$0xff]
  %v11080 = vld [vmem:[%s11021 + $0x2e8] sm:$0xff]
  %v11081 = vld [vmem:[%s11021 + $0x2f0] sm:$0xff]
  %v11082 = vld [vmem:[%s11021 + $0x300] sm:$0xff]
  %v11083 = vld [vmem:[%s11021 + $0x308] sm:$0xff]
  %v11084 = vld [vmem:[%s11021 + $0x318] sm:$0xff]
  %v11085 = vld [vmem:[%s11021 + $0x320] sm:$0xff]
  %v11086 = vpack.c.bf16 %v11023, %v11022
  %v11087 = vpack.c.bf16 %v11025, %v11024
  %v11088 = vpack.c.bf16 %v11027, %v11026
  %v11089 = vpack.c.bf16 %v11029, %v11028
  %v11090 = vpack.c.bf16 %v11031, %v11030
  %v11091 = vpack.c.bf16 %v11033, %v11032
  %v11092 = vpack.c.bf16 %v11035, %v11034
  %v11093 = vpack.c.bf16 %v11037, %v11036
  %v11094 = vpack.c.bf16 %v11039, %v11038
  %v11095 = vpack.c.bf16 %v11041, %v11040
  %v11096 = vpack.c.bf16 %v11043, %v11042
  %v11097 = vpack.c.bf16 %v11045, %v11044
  %v11098 = vpack.c.bf16 %v11047, %v11046
  %v11099 = vpack.c.bf16 %v11049, %v11048
  %v11100 = vpack.c.bf16 %v11051, %v11050
  %v11101 = vpack.c.bf16 %v11053, %v11052
  %v11102 = vpack.c.bf16 %v11055, %v11054
  %v11103 = vpack.c.bf16 %v11057, %v11056
  %v11104 = vpack.c.bf16 %v11059, %v11058
  %v11105 = vpack.c.bf16 %v11061, %v11060
  %v11106 = vpack.c.bf16 %v11063, %v11062
  %v11107 = vpack.c.bf16 %v11065, %v11064
  %v11108 = vpack.c.bf16 %v11067, %v11066
  %v11109 = vpack.c.bf16 %v11069, %v11068
  %v11110 = vpack.c.bf16 %v11071, %v11070
  %v11111 = vpack.c.bf16 %v11073, %v11072
  %v11112 = vpack.c.bf16 %v11075, %v11074
  %v11113 = vpack.c.bf16 %v11077, %v11076
  %v11114 = vpack.c.bf16 %v11079, %v11078
  %v11115 = vpack.c.bf16 %v11081, %v11080
  %v11116 = vpack.c.bf16 %v11083, %v11082
  %v11117 = vpack.c.bf16 %v11085, %v11084
  %s11118 = scalar_lea.vmem %s4, 24
  %v11119 = vld [vmem:[%s11118] sm:$0xf]
  %v11121 = vsel %vm7725, %v11086, 0
  %v11124 = vsel %vm7725, %v11087, 0
  %v11127 = vsel %vm7725, %v11088, 0
  %v11130 = vsel %vm7725, %v11089, 0
  %v11133 = vsel %vm7725, %v11090, 0
  %v11136 = vsel %vm7725, %v11091, 0
  %v11139 = vsel %vm7725, %v11092, 0
  %v11142 = vsel %vm7725, %v11093, 0
  %v11145 = vsel %vm7725, %v11094, 0
  %v11148 = vsel %vm7725, %v11095, 0
  %v11151 = vsel %vm7725, %v11096, 0
  %v11154 = vsel %vm7725, %v11097, 0
  %v11157 = vsel %vm7725, %v11098, 0
  %v11160 = vsel %vm7725, %v11099, 0
  %v11163 = vsel %vm7725, %v11100, 0
  %v11166 = vsel %vm7725, %v11101, 0
  %v11169 = vsel %vm7725, %v11102, 0
  %v11172 = vsel %vm7725, %v11103, 0
  %v11175 = vsel %vm7725, %v11104, 0
  %v11178 = vsel %vm7725, %v11105, 0
  %v11181 = vsel %vm7725, %v11106, 0
  %v11184 = vsel %vm7725, %v11107, 0
  %v11187 = vsel %vm7725, %v11108, 0
  %v11190 = vsel %vm7725, %v11109, 0
  %v11193 = vsel %vm7725, %v11110, 0
  %v11196 = vsel %vm7725, %v11111, 0
  %v11199 = vsel %vm7725, %v11112, 0
  %v11202 = vsel %vm7725, %v11113, 0
  %v11205 = vsel %vm7725, %v11114, 0
  %v11208 = vsel %vm7725, %v11115, 0
  %v11211 = vsel %vm7725, %v11116, 0
  %v11214 = vsel %vm7725, %v11117, 0
  %v11217 = vsel %vm8860, %v11119, 0
  %11219 = vmatpush.bf16.msra.mxu0 0
  %11220 = vmatpush.bf16.msra.mxu0 0
  %11221 = vmatpush.bf16.msra.mxu0 0
  %11222 = vmatpush.bf16.msra.mxu0 0
  %11223 = vmatpush.bf16.msra.mxu0 0
  %11224 = vmatpush.bf16.msra.mxu0 0
  %11225 = vmatpush.bf16.msra.mxu0 0
  %11226 = vmatpush.bf16.msra.mxu0 %v11217
  %11227 = vmatmul.bf16.gmra.mxu0 %v11121
  %v11228 = vpop.f32.mrf.mxu0
  %v11229 = vadd.f32 0.0, %v11228
  %v11230 = vpop.f32.mrf.mxu0
  %v11231 = vadd.f32 0.0, %v11230
  %11232 = vmatmul.bf16.gmra.mxu0 %v11124
  %v11233 = vpop.f32.mrf.mxu0
  %v11234 = vadd.f32 0.0, %v11233
  %v11235 = vpop.f32.mrf.mxu0
  %v11236 = vadd.f32 0.0, %v11235
  %11237 = vmatmul.bf16.gmra.mxu0 %v11127
  %v11238 = vpop.f32.mrf.mxu0
  %v11239 = vadd.f32 0.0, %v11238
  %v11240 = vpop.f32.mrf.mxu0
  %v11241 = vadd.f32 0.0, %v11240
  %11242 = vmatmul.bf16.gmra.mxu0 %v11130
  %v11243 = vpop.f32.mrf.mxu0
  %v11244 = vadd.f32 0.0, %v11243
  %v11245 = vpop.f32.mrf.mxu0
  %v11246 = vadd.f32 0.0, %v11245
  %11247 = vmatmul.bf16.gmra.mxu0 %v11133
  %v11248 = vpop.f32.mrf.mxu0
  %v11249 = vadd.f32 0.0, %v11248
  %v11250 = vpop.f32.mrf.mxu0
  %v11251 = vadd.f32 0.0, %v11250
  %11252 = vmatmul.bf16.gmra.mxu0 %v11136
  %v11253 = vpop.f32.mrf.mxu0
  %v11254 = vadd.f32 0.0, %v11253
  %v11255 = vpop.f32.mrf.mxu0
  %v11256 = vadd.f32 0.0, %v11255
  %11257 = vmatmul.bf16.gmra.mxu0 %v11139
  %v11258 = vpop.f32.mrf.mxu0
  %v11259 = vadd.f32 0.0, %v11258
  %v11260 = vpop.f32.mrf.mxu0
  %v11261 = vadd.f32 0.0, %v11260
  %11262 = vmatmul.bf16.gmra.mxu0 %v11142
  %v11263 = vpop.f32.mrf.mxu0
  %v11264 = vadd.f32 0.0, %v11263
  %v11265 = vpop.f32.mrf.mxu0
  %v11266 = vadd.f32 0.0, %v11265
  %11267 = vmatmul.bf16.gmra.mxu0 %v11145
  %v11268 = vpop.f32.mrf.mxu0
  %v11269 = vadd.f32 0.0, %v11268
  %v11270 = vpop.f32.mrf.mxu0
  %v11271 = vadd.f32 0.0, %v11270
  %11272 = vmatmul.bf16.gmra.mxu0 %v11148
  %v11273 = vpop.f32.mrf.mxu0
  %v11274 = vadd.f32 0.0, %v11273
  %v11275 = vpop.f32.mrf.mxu0
  %v11276 = vadd.f32 0.0, %v11275
  %11277 = vmatmul.bf16.gmra.mxu0 %v11151
  %v11278 = vpop.f32.mrf.mxu0
  %v11279 = vadd.f32 0.0, %v11278
  %v11280 = vpop.f32.mrf.mxu0
  %v11281 = vadd.f32 0.0, %v11280
  %11282 = vmatmul.bf16.gmra.mxu0 %v11154
  %v11283 = vpop.f32.mrf.mxu0
  %v11284 = vadd.f32 0.0, %v11283
  %v11285 = vpop.f32.mrf.mxu0
  %v11286 = vadd.f32 0.0, %v11285
  %11287 = vmatmul.bf16.gmra.mxu0 %v11157
  %v11288 = vpop.f32.mrf.mxu0
  %v11289 = vadd.f32 0.0, %v11288
  %v11290 = vpop.f32.mrf.mxu0
  %v11291 = vadd.f32 0.0, %v11290
  %11292 = vmatmul.bf16.gmra.mxu0 %v11160
  %v11293 = vpop.f32.mrf.mxu0
  %v11294 = vadd.f32 0.0, %v11293
  %v11295 = vpop.f32.mrf.mxu0
  %v11296 = vadd.f32 0.0, %v11295
  %11297 = vmatmul.bf16.gmra.mxu0 %v11163
  %v11298 = vpop.f32.mrf.mxu0
  %v11299 = vadd.f32 0.0, %v11298
  %v11300 = vpop.f32.mrf.mxu0
  %v11301 = vadd.f32 0.0, %v11300
  %11302 = vmatmul.bf16.gmra.mxu0 %v11166
  %v11303 = vpop.f32.mrf.mxu0
  %v11304 = vadd.f32 0.0, %v11303
  %v11305 = vpop.f32.mrf.mxu0
  %v11306 = vadd.f32 0.0, %v11305
  %11307 = vmatmul.bf16.gmra.mxu0 %v11169
  %v11308 = vpop.f32.mrf.mxu0
  %v11309 = vadd.f32 0.0, %v11308
  %v11310 = vpop.f32.mrf.mxu0
  %v11311 = vadd.f32 0.0, %v11310
  %11312 = vmatmul.bf16.gmra.mxu0 %v11172
  %v11313 = vpop.f32.mrf.mxu0
  %v11314 = vadd.f32 0.0, %v11313
  %v11315 = vpop.f32.mrf.mxu0
  %v11316 = vadd.f32 0.0, %v11315
  %11317 = vmatmul.bf16.gmra.mxu0 %v11175
  %v11318 = vpop.f32.mrf.mxu0
  %v11319 = vadd.f32 0.0, %v11318
  %v11320 = vpop.f32.mrf.mxu0
  %v11321 = vadd.f32 0.0, %v11320
  %11322 = vmatmul.bf16.gmra.mxu0 %v11178
  %v11323 = vpop.f32.mrf.mxu0
  %v11324 = vadd.f32 0.0, %v11323
  %v11325 = vpop.f32.mrf.mxu0
  %v11326 = vadd.f32 0.0, %v11325
  %11327 = vmatmul.bf16.gmra.mxu0 %v11181
  %v11328 = vpop.f32.mrf.mxu0
  %v11329 = vadd.f32 0.0, %v11328
  %v11330 = vpop.f32.mrf.mxu0
  %v11331 = vadd.f32 0.0, %v11330
  %11332 = vmatmul.bf16.gmra.mxu0 %v11184
  %v11333 = vpop.f32.mrf.mxu0
  %v11334 = vadd.f32 0.0, %v11333
  %v11335 = vpop.f32.mrf.mxu0
  %v11336 = vadd.f32 0.0, %v11335
  %11337 = vmatmul.bf16.gmra.mxu0 %v11187
  %v11338 = vpop.f32.mrf.mxu0
  %v11339 = vadd.f32 0.0, %v11338
  %v11340 = vpop.f32.mrf.mxu0
  %v11341 = vadd.f32 0.0, %v11340
  %11342 = vmatmul.bf16.gmra.mxu0 %v11190
  %v11343 = vpop.f32.mrf.mxu0
  %v11344 = vadd.f32 0.0, %v11343
  %v11345 = vpop.f32.mrf.mxu0
  %v11346 = vadd.f32 0.0, %v11345
  %11347 = vmatmul.bf16.gmra.mxu0 %v11193
  %v11348 = vpop.f32.mrf.mxu0
  %v11349 = vadd.f32 0.0, %v11348
  %v11350 = vpop.f32.mrf.mxu0
  %v11351 = vadd.f32 0.0, %v11350
  %11352 = vmatmul.bf16.gmra.mxu0 %v11196
  %v11353 = vpop.f32.mrf.mxu0
  %v11354 = vadd.f32 0.0, %v11353
  %v11355 = vpop.f32.mrf.mxu0
  %v11356 = vadd.f32 0.0, %v11355
  %11357 = vmatmul.bf16.gmra.mxu0 %v11199
  %v11358 = vpop.f32.mrf.mxu0
  %v11359 = vadd.f32 0.0, %v11358
  %v11360 = vpop.f32.mrf.mxu0
  %v11361 = vadd.f32 0.0, %v11360
  %11362 = vmatmul.bf16.gmra.mxu0 %v11202
  %v11363 = vpop.f32.mrf.mxu0
  %v11364 = vadd.f32 0.0, %v11363
  %v11365 = vpop.f32.mrf.mxu0
  %v11366 = vadd.f32 0.0, %v11365
  %11367 = vmatmul.bf16.gmra.mxu0 %v11205
  %v11368 = vpop.f32.mrf.mxu0
  %v11369 = vadd.f32 0.0, %v11368
  %v11370 = vpop.f32.mrf.mxu0
  %v11371 = vadd.f32 0.0, %v11370
  %11372 = vmatmul.bf16.gmra.mxu0 %v11208
  %v11373 = vpop.f32.mrf.mxu0
  %v11374 = vadd.f32 0.0, %v11373
  %v11375 = vpop.f32.mrf.mxu0
  %v11376 = vadd.f32 0.0, %v11375
  %11377 = vmatmul.bf16.gmra.mxu0 %v11211
  %v11378 = vpop.f32.mrf.mxu0
  %v11379 = vadd.f32 0.0, %v11378
  %v11380 = vpop.f32.mrf.mxu0
  %v11381 = vadd.f32 0.0, %v11380
  %11382 = vmatmul.bf16.gmra.mxu0 %v11214
  %v11383 = vpop.f32.mrf.mxu0
  %v11384 = vadd.f32 0.0, %v11383
  %v11385 = vpop.f32.mrf.mxu0
  %v11386 = vadd.f32 0.0, %v11385
  %11387 = vdwg.mxu0
  %v11388 = vadd.f32 %v10957, %v11229
  %v11389 = vadd.f32 %v10958, %v11231
  %v11390 = vadd.f32 %v10959, %v11234
  %v11391 = vadd.f32 %v10960, %v11236
  %v11392 = vadd.f32 %v10961, %v11239
  %v11393 = vadd.f32 %v10962, %v11241
  %v11394 = vadd.f32 %v10963, %v11244
  %v11395 = vadd.f32 %v10964, %v11246
  %v11396 = vadd.f32 %v10965, %v11249
  %v11397 = vadd.f32 %v10966, %v11251
  %v11398 = vadd.f32 %v10967, %v11254
  %v11399 = vadd.f32 %v10968, %v11256
  %v11400 = vadd.f32 %v10969, %v11259
  %v11401 = vadd.f32 %v10970, %v11261
  %v11402 = vadd.f32 %v10971, %v11264
  %v11403 = vadd.f32 %v10972, %v11266
  %v11404 = vadd.f32 %v10973, %v11269
  %v11405 = vadd.f32 %v10974, %v11271
  %v11406 = vadd.f32 %v10975, %v11274
  %v11407 = vadd.f32 %v10976, %v11276
  %v11408 = vadd.f32 %v10977, %v11279
  %v11409 = vadd.f32 %v10978, %v11281
  %v11410 = vadd.f32 %v10979, %v11284
  %v11411 = vadd.f32 %v10980, %v11286
  %v11412 = vadd.f32 %v10981, %v11289
  %v11413 = vadd.f32 %v10982, %v11291
  %v11414 = vadd.f32 %v10983, %v11294
  %v11415 = vadd.f32 %v10984, %v11296
  %v11416 = vadd.f32 %v10985, %v11299
  %v11417 = vadd.f32 %v10986, %v11301
  %v11418 = vadd.f32 %v10987, %v11304
  %v11419 = vadd.f32 %v10988, %v11306
  %v11420 = vadd.f32 %v10989, %v11309
  %v11421 = vadd.f32 %v10990, %v11311
  %v11422 = vadd.f32 %v10991, %v11314
  %v11423 = vadd.f32 %v10992, %v11316
  %v11424 = vadd.f32 %v10993, %v11319
  %v11425 = vadd.f32 %v10994, %v11321
  %v11426 = vadd.f32 %v10995, %v11324
  %v11427 = vadd.f32 %v10996, %v11326
  %v11428 = vadd.f32 %v10997, %v11329
  %v11429 = vadd.f32 %v10998, %v11331
  %v11430 = vadd.f32 %v10999, %v11334
  %v11431 = vadd.f32 %v11000, %v11336
  %v11432 = vadd.f32 %v11001, %v11339
  %v11433 = vadd.f32 %v11002, %v11341
  %v11434 = vadd.f32 %v11003, %v11344
  %v11435 = vadd.f32 %v11004, %v11346
  %v11436 = vadd.f32 %v11005, %v11349
  %v11437 = vadd.f32 %v11006, %v11351
  %v11438 = vadd.f32 %v11007, %v11354
  %v11439 = vadd.f32 %v11008, %v11356
  %v11440 = vadd.f32 %v11009, %v11359
  %v11441 = vadd.f32 %v11010, %v11361
  %v11442 = vadd.f32 %v11011, %v11364
  %v11443 = vadd.f32 %v11012, %v11366
  %v11444 = vadd.f32 %v11013, %v11369
  %v11445 = vadd.f32 %v11014, %v11371
  %v11446 = vadd.f32 %v11015, %v11374
  %v11447 = vadd.f32 %v11016, %v11376
  %v11448 = vadd.f32 %v11017, %v11379
  %v11449 = vadd.f32 %v11018, %v11381
  %v11450 = vadd.f32 %v11019, %v11384
  %v11451 = vadd.f32 %v11020, %v11386
  %v11452 = vld [vmem:[%s11021 + $0x1] sm:$0xff]
  %v11453 = vld [vmem:[%s11021 + $0x9] sm:$0xff]
  %v11454 = vld [vmem:[%s11021 + $0x19] sm:$0xff]
  %v11455 = vld [vmem:[%s11021 + $0x21] sm:$0xff]
  %v11456 = vld [vmem:[%s11021 + $0x31] sm:$0xff]
  %v11457 = vld [vmem:[%s11021 + $0x39] sm:$0xff]
  %v11458 = vld [vmem:[%s11021 + $0x49] sm:$0xff]
  %v11459 = vld [vmem:[%s11021 + $0x51] sm:$0xff]
  %v11460 = vld [vmem:[%s11021 + $0x61] sm:$0xff]
  %v11461 = vld [vmem:[%s11021 + $0x69] sm:$0xff]
  %v11462 = vld [vmem:[%s11021 + $0x79] sm:$0xff]
  %v11463 = vld [vmem:[%s11021 + $0x81] sm:$0xff]
  %v11464 = vld [vmem:[%s11021 + $0x91] sm:$0xff]
  %v11465 = vld [vmem:[%s11021 + $0x99] sm:$0xff]
  %v11466 = vld [vmem:[%s11021 + $0xa9] sm:$0xff]
  %v11467 = vld [vmem:[%s11021 + $0xb1] sm:$0xff]
  %v11468 = vld [vmem:[%s11021 + $0xc1] sm:$0xff]
  %v11469 = vld [vmem:[%s11021 + $0xc9] sm:$0xff]
  %v11470 = vld [vmem:[%s11021 + $0xd9] sm:$0xff]
  %v11471 = vld [vmem:[%s11021 + $0xe1] sm:$0xff]
  %v11472 = vld [vmem:[%s11021 + $0xf1] sm:$0xff]
  %v11473 = vld [vmem:[%s11021 + $0xf9] sm:$0xff]
  %v11474 = vld [vmem:[%s11021 + $0x109] sm:$0xff]
  %v11475 = vld [vmem:[%s11021 + $0x111] sm:$0xff]
  %v11476 = vld [vmem:[%s11021 + $0x121] sm:$0xff]
  %v11477 = vld [vmem:[%s11021 + $0x129] sm:$0xff]
  %v11478 = vld [vmem:[%s11021 + $0x139] sm:$0xff]
  %v11479 = vld [vmem:[%s11021 + $0x141] sm:$0xff]
  %v11480 = vld [vmem:[%s11021 + $0x151] sm:$0xff]
  %v11481 = vld [vmem:[%s11021 + $0x159] sm:$0xff]
  %v11482 = vld [vmem:[%s11021 + $0x169] sm:$0xff]
  %v11483 = vld [vmem:[%s11021 + $0x171] sm:$0xff]
  %v11484 = vld [vmem:[%s11021 + $0x1b1] sm:$0xff]
  %v11485 = vld [vmem:[%s11021 + $0x1b9] sm:$0xff]
  %v11486 = vld [vmem:[%s11021 + $0x1c9] sm:$0xff]
  %v11487 = vld [vmem:[%s11021 + $0x1d1] sm:$0xff]
  %v11488 = vld [vmem:[%s11021 + $0x1e1] sm:$0xff]
  %v11489 = vld [vmem:[%s11021 + $0x1e9] sm:$0xff]
  %v11490 = vld [vmem:[%s11021 + $0x1f9] sm:$0xff]
  %v11491 = vld [vmem:[%s11021 + $0x201] sm:$0xff]
  %v11492 = vld [vmem:[%s11021 + $0x211] sm:$0xff]
  %v11493 = vld [vmem:[%s11021 + $0x219] sm:$0xff]
  %v11494 = vld [vmem:[%s11021 + $0x229] sm:$0xff]
  %v11495 = vld [vmem:[%s11021 + $0x231] sm:$0xff]
  %v11496 = vld [vmem:[%s11021 + $0x241] sm:$0xff]
  %v11497 = vld [vmem:[%s11021 + $0x249] sm:$0xff]
  %v11498 = vld [vmem:[%s11021 + $0x259] sm:$0xff]
  %v11499 = vld [vmem:[%s11021 + $0x261] sm:$0xff]
  %v11500 = vld [vmem:[%s11021 + $0x271] sm:$0xff]
  %v11501 = vld [vmem:[%s11021 + $0x279] sm:$0xff]
  %v11502 = vld [vmem:[%s11021 + $0x289] sm:$0xff]
  %v11503 = vld [vmem:[%s11021 + $0x291] sm:$0xff]
  %v11504 = vld [vmem:[%s11021 + $0x2a1] sm:$0xff]
  %v11505 = vld [vmem:[%s11021 + $0x2a9] sm:$0xff]
  %v11506 = vld [vmem:[%s11021 + $0x2b9] sm:$0xff]
  %v11507 = vld [vmem:[%s11021 + $0x2c1] sm:$0xff]
  %v11508 = vld [vmem:[%s11021 + $0x2d1] sm:$0xff]
  %v11509 = vld [vmem:[%s11021 + $0x2d9] sm:$0xff]
  %v11510 = vld [vmem:[%s11021 + $0x2e9] sm:$0xff]
  %v11511 = vld [vmem:[%s11021 + $0x2f1] sm:$0xff]
  %v11512 = vld [vmem:[%s11021 + $0x301] sm:$0xff]
  %v11513 = vld [vmem:[%s11021 + $0x309] sm:$0xff]
  %v11514 = vld [vmem:[%s11021 + $0x319] sm:$0xff]
  %v11515 = vld [vmem:[%s11021 + $0x321] sm:$0xff]
  %v11516 = vpack.c.bf16 %v11453, %v11452
  %v11517 = vpack.c.bf16 %v11455, %v11454
  %v11518 = vpack.c.bf16 %v11457, %v11456
  %v11519 = vpack.c.bf16 %v11459, %v11458
  %v11520 = vpack.c.bf16 %v11461, %v11460
  %v11521 = vpack.c.bf16 %v11463, %v11462
  %v11522 = vpack.c.bf16 %v11465, %v11464
  %v11523 = vpack.c.bf16 %v11467, %v11466
  %v11524 = vpack.c.bf16 %v11469, %v11468
  %v11525 = vpack.c.bf16 %v11471, %v11470
  %v11526 = vpack.c.bf16 %v11473, %v11472
  %v11527 = vpack.c.bf16 %v11475, %v11474
  %v11528 = vpack.c.bf16 %v11477, %v11476
  %v11529 = vpack.c.bf16 %v11479, %v11478
  %v11530 = vpack.c.bf16 %v11481, %v11480
  %v11531 = vpack.c.bf16 %v11483, %v11482
  %v11532 = vpack.c.bf16 %v11485, %v11484
  %v11533 = vpack.c.bf16 %v11487, %v11486
  %v11534 = vpack.c.bf16 %v11489, %v11488
  %v11535 = vpack.c.bf16 %v11491, %v11490
  %v11536 = vpack.c.bf16 %v11493, %v11492
  %v11537 = vpack.c.bf16 %v11495, %v11494
  %v11538 = vpack.c.bf16 %v11497, %v11496
  %v11539 = vpack.c.bf16 %v11499, %v11498
  %v11540 = vpack.c.bf16 %v11501, %v11500
  %v11541 = vpack.c.bf16 %v11503, %v11502
  %v11542 = vpack.c.bf16 %v11505, %v11504
  %v11543 = vpack.c.bf16 %v11507, %v11506
  %v11544 = vpack.c.bf16 %v11509, %v11508
  %v11545 = vpack.c.bf16 %v11511, %v11510
  %v11546 = vpack.c.bf16 %v11513, %v11512
  %v11547 = vpack.c.bf16 %v11515, %v11514
  %s11548 = scalar_lea.vmem %s4, 28
  %v11549 = vld [vmem:[%s11548] sm:$0xf]
  %v11551 = vsel %vm7725, %v11516, 0
  %v11554 = vsel %vm7725, %v11517, 0
  %v11557 = vsel %vm7725, %v11518, 0
  %v11560 = vsel %vm7725, %v11519, 0
  %v11563 = vsel %vm7725, %v11520, 0
  %v11566 = vsel %vm7725, %v11521, 0
  %v11569 = vsel %vm7725, %v11522, 0
  %v11572 = vsel %vm7725, %v11523, 0
  %v11575 = vsel %vm7725, %v11524, 0
  %v11578 = vsel %vm7725, %v11525, 0
  %v11581 = vsel %vm7725, %v11526, 0
  %v11584 = vsel %vm7725, %v11527, 0
  %v11587 = vsel %vm7725, %v11528, 0
  %v11590 = vsel %vm7725, %v11529, 0
  %v11593 = vsel %vm7725, %v11530, 0
  %v11596 = vsel %vm7725, %v11531, 0
  %v11599 = vsel %vm7725, %v11532, 0
  %v11602 = vsel %vm7725, %v11533, 0
  %v11605 = vsel %vm7725, %v11534, 0
  %v11608 = vsel %vm7725, %v11535, 0
  %v11611 = vsel %vm7725, %v11536, 0
  %v11614 = vsel %vm7725, %v11537, 0
  %v11617 = vsel %vm7725, %v11538, 0
  %v11620 = vsel %vm7725, %v11539, 0
  %v11623 = vsel %vm7725, %v11540, 0
  %v11626 = vsel %vm7725, %v11541, 0
  %v11629 = vsel %vm7725, %v11542, 0
  %v11632 = vsel %vm7725, %v11543, 0
  %v11635 = vsel %vm7725, %v11544, 0
  %v11638 = vsel %vm7725, %v11545, 0
  %v11641 = vsel %vm7725, %v11546, 0
  %v11644 = vsel %vm7725, %v11547, 0
  %v11647 = vsel %vm8860, %v11549, 0
  %11649 = vmatpush.bf16.msra.mxu0 0
  %11650 = vmatpush.bf16.msra.mxu0 0
  %11651 = vmatpush.bf16.msra.mxu0 0
  %11652 = vmatpush.bf16.msra.mxu0 0
  %11653 = vmatpush.bf16.msra.mxu0 0
  %11654 = vmatpush.bf16.msra.mxu0 0
  %11655 = vmatpush.bf16.msra.mxu0 0
  %11656 = vmatpush.bf16.msra.mxu0 %v11647
  %11657 = vmatmul.bf16.gmra.mxu0 %v11551
  %v11658 = vpop.f32.mrf.mxu0
  %v11659 = vadd.f32 0.0, %v11658
  %v11660 = vpop.f32.mrf.mxu0
  %v11661 = vadd.f32 0.0, %v11660
  %11662 = vmatmul.bf16.gmra.mxu0 %v11554
  %v11663 = vpop.f32.mrf.mxu0
  %v11664 = vadd.f32 0.0, %v11663
  %v11665 = vpop.f32.mrf.mxu0
  %v11666 = vadd.f32 0.0, %v11665
  %11667 = vmatmul.bf16.gmra.mxu0 %v11557
  %v11668 = vpop.f32.mrf.mxu0
  %v11669 = vadd.f32 0.0, %v11668
  %v11670 = vpop.f32.mrf.mxu0
  %v11671 = vadd.f32 0.0, %v11670
  %11672 = vmatmul.bf16.gmra.mxu0 %v11560
  %v11673 = vpop.f32.mrf.mxu0
  %v11674 = vadd.f32 0.0, %v11673
  %v11675 = vpop.f32.mrf.mxu0
  %v11676 = vadd.f32 0.0, %v11675
  %11677 = vmatmul.bf16.gmra.mxu0 %v11563
  %v11678 = vpop.f32.mrf.mxu0
  %v11679 = vadd.f32 0.0, %v11678
  %v11680 = vpop.f32.mrf.mxu0
  %v11681 = vadd.f32 0.0, %v11680
  %11682 = vmatmul.bf16.gmra.mxu0 %v11566
  %v11683 = vpop.f32.mrf.mxu0
  %v11684 = vadd.f32 0.0, %v11683
  %v11685 = vpop.f32.mrf.mxu0
  %v11686 = vadd.f32 0.0, %v11685
  %11687 = vmatmul.bf16.gmra.mxu0 %v11569
  %v11688 = vpop.f32.mrf.mxu0
  %v11689 = vadd.f32 0.0, %v11688
  %v11690 = vpop.f32.mrf.mxu0
  %v11691 = vadd.f32 0.0, %v11690
  %11692 = vmatmul.bf16.gmra.mxu0 %v11572
  %v11693 = vpop.f32.mrf.mxu0
  %v11694 = vadd.f32 0.0, %v11693
  %v11695 = vpop.f32.mrf.mxu0
  %v11696 = vadd.f32 0.0, %v11695
  %11697 = vmatmul.bf16.gmra.mxu0 %v11575
  %v11698 = vpop.f32.mrf.mxu0
  %v11699 = vadd.f32 0.0, %v11698
  %v11700 = vpop.f32.mrf.mxu0
  %v11701 = vadd.f32 0.0, %v11700
  %11702 = vmatmul.bf16.gmra.mxu0 %v11578
  %v11703 = vpop.f32.mrf.mxu0
  %v11704 = vadd.f32 0.0, %v11703
  %v11705 = vpop.f32.mrf.mxu0
  %v11706 = vadd.f32 0.0, %v11705
  %11707 = vmatmul.bf16.gmra.mxu0 %v11581
  %v11708 = vpop.f32.mrf.mxu0
  %v11709 = vadd.f32 0.0, %v11708
  %v11710 = vpop.f32.mrf.mxu0
  %v11711 = vadd.f32 0.0, %v11710
  %11712 = vmatmul.bf16.gmra.mxu0 %v11584
  %v11713 = vpop.f32.mrf.mxu0
  %v11714 = vadd.f32 0.0, %v11713
  %v11715 = vpop.f32.mrf.mxu0
  %v11716 = vadd.f32 0.0, %v11715
  %11717 = vmatmul.bf16.gmra.mxu0 %v11587
  %v11718 = vpop.f32.mrf.mxu0
  %v11719 = vadd.f32 0.0, %v11718
  %v11720 = vpop.f32.mrf.mxu0
  %v11721 = vadd.f32 0.0, %v11720
  %11722 = vmatmul.bf16.gmra.mxu0 %v11590
  %v11723 = vpop.f32.mrf.mxu0
  %v11724 = vadd.f32 0.0, %v11723
  %v11725 = vpop.f32.mrf.mxu0
  %v11726 = vadd.f32 0.0, %v11725
  %11727 = vmatmul.bf16.gmra.mxu0 %v11593
  %v11728 = vpop.f32.mrf.mxu0
  %v11729 = vadd.f32 0.0, %v11728
  %v11730 = vpop.f32.mrf.mxu0
  %v11731 = vadd.f32 0.0, %v11730
  %11732 = vmatmul.bf16.gmra.mxu0 %v11596
  %v11733 = vpop.f32.mrf.mxu0
  %v11734 = vadd.f32 0.0, %v11733
  %v11735 = vpop.f32.mrf.mxu0
  %v11736 = vadd.f32 0.0, %v11735
  %11737 = vmatmul.bf16.gmra.mxu0 %v11599
  %v11738 = vpop.f32.mrf.mxu0
  %v11739 = vadd.f32 0.0, %v11738
  %v11740 = vpop.f32.mrf.mxu0
  %v11741 = vadd.f32 0.0, %v11740
  %11742 = vmatmul.bf16.gmra.mxu0 %v11602
  %v11743 = vpop.f32.mrf.mxu0
  %v11744 = vadd.f32 0.0, %v11743
  %v11745 = vpop.f32.mrf.mxu0
  %v11746 = vadd.f32 0.0, %v11745
  %11747 = vmatmul.bf16.gmra.mxu0 %v11605
  %v11748 = vpop.f32.mrf.mxu0
  %v11749 = vadd.f32 0.0, %v11748
  %v11750 = vpop.f32.mrf.mxu0
  %v11751 = vadd.f32 0.0, %v11750
  %11752 = vmatmul.bf16.gmra.mxu0 %v11608
  %v11753 = vpop.f32.mrf.mxu0
  %v11754 = vadd.f32 0.0, %v11753
  %v11755 = vpop.f32.mrf.mxu0
  %v11756 = vadd.f32 0.0, %v11755
  %11757 = vmatmul.bf16.gmra.mxu0 %v11611
  %v11758 = vpop.f32.mrf.mxu0
  %v11759 = vadd.f32 0.0, %v11758
  %v11760 = vpop.f32.mrf.mxu0
  %v11761 = vadd.f32 0.0, %v11760
  %11762 = vmatmul.bf16.gmra.mxu0 %v11614
  %v11763 = vpop.f32.mrf.mxu0
  %v11764 = vadd.f32 0.0, %v11763
  %v11765 = vpop.f32.mrf.mxu0
  %v11766 = vadd.f32 0.0, %v11765
  %11767 = vmatmul.bf16.gmra.mxu0 %v11617
  %v11768 = vpop.f32.mrf.mxu0
  %v11769 = vadd.f32 0.0, %v11768
  %v11770 = vpop.f32.mrf.mxu0
  %v11771 = vadd.f32 0.0, %v11770
  %11772 = vmatmul.bf16.gmra.mxu0 %v11620
  %v11773 = vpop.f32.mrf.mxu0
  %v11774 = vadd.f32 0.0, %v11773
  %v11775 = vpop.f32.mrf.mxu0
  %v11776 = vadd.f32 0.0, %v11775
  %11777 = vmatmul.bf16.gmra.mxu0 %v11623
  %v11778 = vpop.f32.mrf.mxu0
  %v11779 = vadd.f32 0.0, %v11778
  %v11780 = vpop.f32.mrf.mxu0
  %v11781 = vadd.f32 0.0, %v11780
  %11782 = vmatmul.bf16.gmra.mxu0 %v11626
  %v11783 = vpop.f32.mrf.mxu0
  %v11784 = vadd.f32 0.0, %v11783
  %v11785 = vpop.f32.mrf.mxu0
  %v11786 = vadd.f32 0.0, %v11785
  %11787 = vmatmul.bf16.gmra.mxu0 %v11629
  %v11788 = vpop.f32.mrf.mxu0
  %v11789 = vadd.f32 0.0, %v11788
  %v11790 = vpop.f32.mrf.mxu0
  %v11791 = vadd.f32 0.0, %v11790
  %11792 = vmatmul.bf16.gmra.mxu0 %v11632
  %v11793 = vpop.f32.mrf.mxu0
  %v11794 = vadd.f32 0.0, %v11793
  %v11795 = vpop.f32.mrf.mxu0
  %v11796 = vadd.f32 0.0, %v11795
  %11797 = vmatmul.bf16.gmra.mxu0 %v11635
  %v11798 = vpop.f32.mrf.mxu0
  %v11799 = vadd.f32 0.0, %v11798
  %v11800 = vpop.f32.mrf.mxu0
  %v11801 = vadd.f32 0.0, %v11800
  %11802 = vmatmul.bf16.gmra.mxu0 %v11638
  %v11803 = vpop.f32.mrf.mxu0
  %v11804 = vadd.f32 0.0, %v11803
  %v11805 = vpop.f32.mrf.mxu0
  %v11806 = vadd.f32 0.0, %v11805
  %11807 = vmatmul.bf16.gmra.mxu0 %v11641
  %v11808 = vpop.f32.mrf.mxu0
  %v11809 = vadd.f32 0.0, %v11808
  %v11810 = vpop.f32.mrf.mxu0
  %v11811 = vadd.f32 0.0, %v11810
  %11812 = vmatmul.bf16.gmra.mxu0 %v11644
  %v11813 = vpop.f32.mrf.mxu0
  %v11814 = vadd.f32 0.0, %v11813
  %v11815 = vpop.f32.mrf.mxu0
  %v11816 = vadd.f32 0.0, %v11815
  %11817 = vdwg.mxu0
  %v11818 = vadd.f32 %v11388, %v11659
  %v11819 = vadd.f32 %v11389, %v11661
  %v11820 = vadd.f32 %v11390, %v11664
  %v11821 = vadd.f32 %v11391, %v11666
  %v11822 = vadd.f32 %v11392, %v11669
  %v11823 = vadd.f32 %v11393, %v11671
  %v11824 = vadd.f32 %v11394, %v11674
  %v11825 = vadd.f32 %v11395, %v11676
  %v11826 = vadd.f32 %v11396, %v11679
  %v11827 = vadd.f32 %v11397, %v11681
  %v11828 = vadd.f32 %v11398, %v11684
  %v11829 = vadd.f32 %v11399, %v11686
  %v11830 = vadd.f32 %v11400, %v11689
  %v11831 = vadd.f32 %v11401, %v11691
  %v11832 = vadd.f32 %v11402, %v11694
  %v11833 = vadd.f32 %v11403, %v11696
  %v11834 = vadd.f32 %v11404, %v11699
  %v11835 = vadd.f32 %v11405, %v11701
  %v11836 = vadd.f32 %v11406, %v11704
  %v11837 = vadd.f32 %v11407, %v11706
  %v11838 = vadd.f32 %v11408, %v11709
  %v11839 = vadd.f32 %v11409, %v11711
  %v11840 = vadd.f32 %v11410, %v11714
  %v11841 = vadd.f32 %v11411, %v11716
  %v11842 = vadd.f32 %v11412, %v11719
  %v11843 = vadd.f32 %v11413, %v11721
  %v11844 = vadd.f32 %v11414, %v11724
  %v11845 = vadd.f32 %v11415, %v11726
  %v11846 = vadd.f32 %v11416, %v11729
  %v11847 = vadd.f32 %v11417, %v11731
  %v11848 = vadd.f32 %v11418, %v11734
  %v11849 = vadd.f32 %v11419, %v11736
  %v11850 = vadd.f32 %v11420, %v11739
  %v11851 = vadd.f32 %v11421, %v11741
  %v11852 = vadd.f32 %v11422, %v11744
  %v11853 = vadd.f32 %v11423, %v11746
  %v11854 = vadd.f32 %v11424, %v11749
  %v11855 = vadd.f32 %v11425, %v11751
  %v11856 = vadd.f32 %v11426, %v11754
  %v11857 = vadd.f32 %v11427, %v11756
  %v11858 = vadd.f32 %v11428, %v11759
  %v11859 = vadd.f32 %v11429, %v11761
  %v11860 = vadd.f32 %v11430, %v11764
  %v11861 = vadd.f32 %v11431, %v11766
  %v11862 = vadd.f32 %v11432, %v11769
  %v11863 = vadd.f32 %v11433, %v11771
  %v11864 = vadd.f32 %v11434, %v11774
  %v11865 = vadd.f32 %v11435, %v11776
  %v11866 = vadd.f32 %v11436, %v11779
  %v11867 = vadd.f32 %v11437, %v11781
  %v11868 = vadd.f32 %v11438, %v11784
  %v11869 = vadd.f32 %v11439, %v11786
  %v11870 = vadd.f32 %v11440, %v11789
  %v11871 = vadd.f32 %v11441, %v11791
  %v11872 = vadd.f32 %v11442, %v11794
  %v11873 = vadd.f32 %v11443, %v11796
  %v11874 = vadd.f32 %v11444, %v11799
  %v11875 = vadd.f32 %v11445, %v11801
  %v11876 = vadd.f32 %v11446, %v11804
  %v11877 = vadd.f32 %v11447, %v11806
  %v11878 = vadd.f32 %v11448, %v11809
  %v11879 = vadd.f32 %v11449, %v11811
  %v11880 = vadd.f32 %v11450, %v11814
  %v11881 = vadd.f32 %v11451, %v11816
  %v11882 = vld [vmem:[%s11021 + $0x2] sm:$0xff]
  %v11883 = vld [vmem:[%s11021 + $0xa] sm:$0xff]
  %v11884 = vld [vmem:[%s11021 + $0x1a] sm:$0xff]
  %v11885 = vld [vmem:[%s11021 + $0x22] sm:$0xff]
  %v11886 = vld [vmem:[%s11021 + $0x32] sm:$0xff]
  %v11887 = vld [vmem:[%s11021 + $0x3a] sm:$0xff]
  %v11888 = vld [vmem:[%s11021 + $0x4a] sm:$0xff]
  %v11889 = vld [vmem:[%s11021 + $0x52] sm:$0xff]
  %v11890 = vld [vmem:[%s11021 + $0x62] sm:$0xff]
  %v11891 = vld [vmem:[%s11021 + $0x6a] sm:$0xff]
  %v11892 = vld [vmem:[%s11021 + $0x7a] sm:$0xff]
  %v11893 = vld [vmem:[%s11021 + $0x82] sm:$0xff]
  %v11894 = vld [vmem:[%s11021 + $0x92] sm:$0xff]
  %v11895 = vld [vmem:[%s11021 + $0x9a] sm:$0xff]
  %v11896 = vld [vmem:[%s11021 + $0xaa] sm:$0xff]
  %v11897 = vld [vmem:[%s11021 + $0xb2] sm:$0xff]
  %v11898 = vld [vmem:[%s11021 + $0xc2] sm:$0xff]
  %v11899 = vld [vmem:[%s11021 + $0xca] sm:$0xff]
  %v11900 = vld [vmem:[%s11021 + $0xda] sm:$0xff]
  %v11901 = vld [vmem:[%s11021 + $0xe2] sm:$0xff]
  %v11902 = vld [vmem:[%s11021 + $0xf2] sm:$0xff]
  %v11903 = vld [vmem:[%s11021 + $0xfa] sm:$0xff]
  %v11904 = vld [vmem:[%s11021 + $0x10a] sm:$0xff]
  %v11905 = vld [vmem:[%s11021 + $0x112] sm:$0xff]
  %v11906 = vld [vmem:[%s11021 + $0x122] sm:$0xff]
  %v11907 = vld [vmem:[%s11021 + $0x12a] sm:$0xff]
  %v11908 = vld [vmem:[%s11021 + $0x13a] sm:$0xff]
  %v11909 = vld [vmem:[%s11021 + $0x142] sm:$0xff]
  %v11910 = vld [vmem:[%s11021 + $0x152] sm:$0xff]
  %v11911 = vld [vmem:[%s11021 + $0x15a] sm:$0xff]
  %v11912 = vld [vmem:[%s11021 + $0x16a] sm:$0xff]
  %v11913 = vld [vmem:[%s11021 + $0x172] sm:$0xff]
  %v11914 = vld [vmem:[%s11021 + $0x1b2] sm:$0xff]
  %v11915 = vld [vmem:[%s11021 + $0x1ba] sm:$0xff]
  %v11916 = vld [vmem:[%s11021 + $0x1ca] sm:$0xff]
  %v11917 = vld [vmem:[%s11021 + $0x1d2] sm:$0xff]
  %v11918 = vld [vmem:[%s11021 + $0x1e2] sm:$0xff]
  %v11919 = vld [vmem:[%s11021 + $0x1ea] sm:$0xff]
  %v11920 = vld [vmem:[%s11021 + $0x1fa] sm:$0xff]
  %v11921 = vld [vmem:[%s11021 + $0x202] sm:$0xff]
  %v11922 = vld [vmem:[%s11021 + $0x212] sm:$0xff]
  %v11923 = vld [vmem:[%s11021 + $0x21a] sm:$0xff]
  %v11924 = vld [vmem:[%s11021 + $0x22a] sm:$0xff]
  %v11925 = vld [vmem:[%s11021 + $0x232] sm:$0xff]
  %v11926 = vld [vmem:[%s11021 + $0x242] sm:$0xff]
  %v11927 = vld [vmem:[%s11021 + $0x24a] sm:$0xff]
  %v11928 = vld [vmem:[%s11021 + $0x25a] sm:$0xff]
  %v11929 = vld [vmem:[%s11021 + $0x262] sm:$0xff]
  %v11930 = vld [vmem:[%s11021 + $0x272] sm:$0xff]
  %v11931 = vld [vmem:[%s11021 + $0x27a] sm:$0xff]
  %v11932 = vld [vmem:[%s11021 + $0x28a] sm:$0xff]
  %v11933 = vld [vmem:[%s11021 + $0x292] sm:$0xff]
  %v11934 = vld [vmem:[%s11021 + $0x2a2] sm:$0xff]
  %v11935 = vld [vmem:[%s11021 + $0x2aa] sm:$0xff]
  %v11936 = vld [vmem:[%s11021 + $0x2ba] sm:$0xff]
  %v11937 = vld [vmem:[%s11021 + $0x2c2] sm:$0xff]
  %v11938 = vld [vmem:[%s11021 + $0x2d2] sm:$0xff]
  %v11939 = vld [vmem:[%s11021 + $0x2da] sm:$0xff]
  %v11940 = vld [vmem:[%s11021 + $0x2ea] sm:$0xff]
  %v11941 = vld [vmem:[%s11021 + $0x2f2] sm:$0xff]
  %v11942 = vld [vmem:[%s11021 + $0x302] sm:$0xff]
  %v11943 = vld [vmem:[%s11021 + $0x30a] sm:$0xff]
  %v11944 = vld [vmem:[%s11021 + $0x31a] sm:$0xff]
  %v11945 = vld [vmem:[%s11021 + $0x322] sm:$0xff]
  %v11946 = vpack.c.bf16 %v11883, %v11882
  %v11947 = vpack.c.bf16 %v11885, %v11884
  %v11948 = vpack.c.bf16 %v11887, %v11886
  %v11949 = vpack.c.bf16 %v11889, %v11888
  %v11950 = vpack.c.bf16 %v11891, %v11890
  %v11951 = vpack.c.bf16 %v11893, %v11892
  %v11952 = vpack.c.bf16 %v11895, %v11894
  %v11953 = vpack.c.bf16 %v11897, %v11896
  %v11954 = vpack.c.bf16 %v11899, %v11898
  %v11955 = vpack.c.bf16 %v11901, %v11900
  %v11956 = vpack.c.bf16 %v11903, %v11902
  %v11957 = vpack.c.bf16 %v11905, %v11904
  %v11958 = vpack.c.bf16 %v11907, %v11906
  %v11959 = vpack.c.bf16 %v11909, %v11908
  %v11960 = vpack.c.bf16 %v11911, %v11910
  %v11961 = vpack.c.bf16 %v11913, %v11912
  %v11962 = vpack.c.bf16 %v11915, %v11914
  %v11963 = vpack.c.bf16 %v11917, %v11916
  %v11964 = vpack.c.bf16 %v11919, %v11918
  %v11965 = vpack.c.bf16 %v11921, %v11920
  %v11966 = vpack.c.bf16 %v11923, %v11922
  %v11967 = vpack.c.bf16 %v11925, %v11924
  %v11968 = vpack.c.bf16 %v11927, %v11926
  %v11969 = vpack.c.bf16 %v11929, %v11928
  %v11970 = vpack.c.bf16 %v11931, %v11930
  %v11971 = vpack.c.bf16 %v11933, %v11932
  %v11972 = vpack.c.bf16 %v11935, %v11934
  %v11973 = vpack.c.bf16 %v11937, %v11936
  %v11974 = vpack.c.bf16 %v11939, %v11938
  %v11975 = vpack.c.bf16 %v11941, %v11940
  %v11976 = vpack.c.bf16 %v11943, %v11942
  %v11977 = vpack.c.bf16 %v11945, %v11944
  %s11978 = scalar_lea.vmem %s4, 32
  %v11979 = vld [vmem:[%s11978] sm:$0xf]
  %v11981 = vsel %vm7725, %v11946, 0
  %v11984 = vsel %vm7725, %v11947, 0
  %v11987 = vsel %vm7725, %v11948, 0
  %v11990 = vsel %vm7725, %v11949, 0
  %v11993 = vsel %vm7725, %v11950, 0
  %v11996 = vsel %vm7725, %v11951, 0
  %v11999 = vsel %vm7725, %v11952, 0
  %v12002 = vsel %vm7725, %v11953, 0
  %v12005 = vsel %vm7725, %v11954, 0
  %v12008 = vsel %vm7725, %v11955, 0
  %v12011 = vsel %vm7725, %v11956, 0
  %v12014 = vsel %vm7725, %v11957, 0
  %v12017 = vsel %vm7725, %v11958, 0
  %v12020 = vsel %vm7725, %v11959, 0
  %v12023 = vsel %vm7725, %v11960, 0
  %v12026 = vsel %vm7725, %v11961, 0
  %v12029 = vsel %vm7725, %v11962, 0
  %v12032 = vsel %vm7725, %v11963, 0
  %v12035 = vsel %vm7725, %v11964, 0
  %v12038 = vsel %vm7725, %v11965, 0
  %v12041 = vsel %vm7725, %v11966, 0
  %v12044 = vsel %vm7725, %v11967, 0
  %v12047 = vsel %vm7725, %v11968, 0
  %v12050 = vsel %vm7725, %v11969, 0
  %v12053 = vsel %vm7725, %v11970, 0
  %v12056 = vsel %vm7725, %v11971, 0
  %v12059 = vsel %vm7725, %v11972, 0
  %v12062 = vsel %vm7725, %v11973, 0
  %v12065 = vsel %vm7725, %v11974, 0
  %v12068 = vsel %vm7725, %v11975, 0
  %v12071 = vsel %vm7725, %v11976, 0
  %v12074 = vsel %vm7725, %v11977, 0
  %v12077 = vsel %vm8860, %v11979, 0
  %12079 = vmatpush.bf16.msra.mxu0 0
  %12080 = vmatpush.bf16.msra.mxu0 0
  %12081 = vmatpush.bf16.msra.mxu0 0
  %12082 = vmatpush.bf16.msra.mxu0 0
  %12083 = vmatpush.bf16.msra.mxu0 0
  %12084 = vmatpush.bf16.msra.mxu0 0
  %12085 = vmatpush.bf16.msra.mxu0 0
  %12086 = vmatpush.bf16.msra.mxu0 %v12077
  %12087 = vmatmul.bf16.gmra.mxu0 %v11981
  %v12088 = vpop.f32.mrf.mxu0
  %v12089 = vadd.f32 0.0, %v12088
  %v12090 = vpop.f32.mrf.mxu0
  %v12091 = vadd.f32 0.0, %v12090
  %12092 = vmatmul.bf16.gmra.mxu0 %v11984
  %v12093 = vpop.f32.mrf.mxu0
  %v12094 = vadd.f32 0.0, %v12093
  %v12095 = vpop.f32.mrf.mxu0
  %v12096 = vadd.f32 0.0, %v12095
  %12097 = vmatmul.bf16.gmra.mxu0 %v11987
  %v12098 = vpop.f32.mrf.mxu0
  %v12099 = vadd.f32 0.0, %v12098
  %v12100 = vpop.f32.mrf.mxu0
  %v12101 = vadd.f32 0.0, %v12100
  %12102 = vmatmul.bf16.gmra.mxu0 %v11990
  %v12103 = vpop.f32.mrf.mxu0
  %v12104 = vadd.f32 0.0, %v12103
  %v12105 = vpop.f32.mrf.mxu0
  %v12106 = vadd.f32 0.0, %v12105
  %12107 = vmatmul.bf16.gmra.mxu0 %v11993
  %v12108 = vpop.f32.mrf.mxu0
  %v12109 = vadd.f32 0.0, %v12108
  %v12110 = vpop.f32.mrf.mxu0
  %v12111 = vadd.f32 0.0, %v12110
  %12112 = vmatmul.bf16.gmra.mxu0 %v11996
  %v12113 = vpop.f32.mrf.mxu0
  %v12114 = vadd.f32 0.0, %v12113
  %v12115 = vpop.f32.mrf.mxu0
  %v12116 = vadd.f32 0.0, %v12115
  %12117 = vmatmul.bf16.gmra.mxu0 %v11999
  %v12118 = vpop.f32.mrf.mxu0
  %v12119 = vadd.f32 0.0, %v12118
  %v12120 = vpop.f32.mrf.mxu0
  %v12121 = vadd.f32 0.0, %v12120
  %12122 = vmatmul.bf16.gmra.mxu0 %v12002
  %v12123 = vpop.f32.mrf.mxu0
  %v12124 = vadd.f32 0.0, %v12123
  %v12125 = vpop.f32.mrf.mxu0
  %v12126 = vadd.f32 0.0, %v12125
  %12127 = vmatmul.bf16.gmra.mxu0 %v12005
  %v12128 = vpop.f32.mrf.mxu0
  %v12129 = vadd.f32 0.0, %v12128
  %v12130 = vpop.f32.mrf.mxu0
  %v12131 = vadd.f32 0.0, %v12130
  %12132 = vmatmul.bf16.gmra.mxu0 %v12008
  %v12133 = vpop.f32.mrf.mxu0
  %v12134 = vadd.f32 0.0, %v12133
  %v12135 = vpop.f32.mrf.mxu0
  %v12136 = vadd.f32 0.0, %v12135
  %12137 = vmatmul.bf16.gmra.mxu0 %v12011
  %v12138 = vpop.f32.mrf.mxu0
  %v12139 = vadd.f32 0.0, %v12138
  %v12140 = vpop.f32.mrf.mxu0
  %v12141 = vadd.f32 0.0, %v12140
  %12142 = vmatmul.bf16.gmra.mxu0 %v12014
  %v12143 = vpop.f32.mrf.mxu0
  %v12144 = vadd.f32 0.0, %v12143
  %v12145 = vpop.f32.mrf.mxu0
  %v12146 = vadd.f32 0.0, %v12145
  %12147 = vmatmul.bf16.gmra.mxu0 %v12017
  %v12148 = vpop.f32.mrf.mxu0
  %v12149 = vadd.f32 0.0, %v12148
  %v12150 = vpop.f32.mrf.mxu0
  %v12151 = vadd.f32 0.0, %v12150
  %12152 = vmatmul.bf16.gmra.mxu0 %v12020
  %v12153 = vpop.f32.mrf.mxu0
  %v12154 = vadd.f32 0.0, %v12153
  %v12155 = vpop.f32.mrf.mxu0
  %v12156 = vadd.f32 0.0, %v12155
  %12157 = vmatmul.bf16.gmra.mxu0 %v12023
  %v12158 = vpop.f32.mrf.mxu0
  %v12159 = vadd.f32 0.0, %v12158
  %v12160 = vpop.f32.mrf.mxu0
  %v12161 = vadd.f32 0.0, %v12160
  %12162 = vmatmul.bf16.gmra.mxu0 %v12026
  %v12163 = vpop.f32.mrf.mxu0
  %v12164 = vadd.f32 0.0, %v12163
  %v12165 = vpop.f32.mrf.mxu0
  %v12166 = vadd.f32 0.0, %v12165
  %12167 = vmatmul.bf16.gmra.mxu0 %v12029
  %v12168 = vpop.f32.mrf.mxu0
  %v12169 = vadd.f32 0.0, %v12168
  %v12170 = vpop.f32.mrf.mxu0
  %v12171 = vadd.f32 0.0, %v12170
  %12172 = vmatmul.bf16.gmra.mxu0 %v12032
  %v12173 = vpop.f32.mrf.mxu0
  %v12174 = vadd.f32 0.0, %v12173
  %v12175 = vpop.f32.mrf.mxu0
  %v12176 = vadd.f32 0.0, %v12175
  %12177 = vmatmul.bf16.gmra.mxu0 %v12035
  %v12178 = vpop.f32.mrf.mxu0
  %v12179 = vadd.f32 0.0, %v12178
  %v12180 = vpop.f32.mrf.mxu0
  %v12181 = vadd.f32 0.0, %v12180
  %12182 = vmatmul.bf16.gmra.mxu0 %v12038
  %v12183 = vpop.f32.mrf.mxu0
  %v12184 = vadd.f32 0.0, %v12183
  %v12185 = vpop.f32.mrf.mxu0
  %v12186 = vadd.f32 0.0, %v12185
  %12187 = vmatmul.bf16.gmra.mxu0 %v12041
  %v12188 = vpop.f32.mrf.mxu0
  %v12189 = vadd.f32 0.0, %v12188
  %v12190 = vpop.f32.mrf.mxu0
  %v12191 = vadd.f32 0.0, %v12190
  %12192 = vmatmul.bf16.gmra.mxu0 %v12044
  %v12193 = vpop.f32.mrf.mxu0
  %v12194 = vadd.f32 0.0, %v12193
  %v12195 = vpop.f32.mrf.mxu0
  %v12196 = vadd.f32 0.0, %v12195
  %12197 = vmatmul.bf16.gmra.mxu0 %v12047
  %v12198 = vpop.f32.mrf.mxu0
  %v12199 = vadd.f32 0.0, %v12198
  %v12200 = vpop.f32.mrf.mxu0
  %v12201 = vadd.f32 0.0, %v12200
  %12202 = vmatmul.bf16.gmra.mxu0 %v12050
  %v12203 = vpop.f32.mrf.mxu0
  %v12204 = vadd.f32 0.0, %v12203
  %v12205 = vpop.f32.mrf.mxu0
  %v12206 = vadd.f32 0.0, %v12205
  %12207 = vmatmul.bf16.gmra.mxu0 %v12053
  %v12208 = vpop.f32.mrf.mxu0
  %v12209 = vadd.f32 0.0, %v12208
  %v12210 = vpop.f32.mrf.mxu0
  %v12211 = vadd.f32 0.0, %v12210
  %12212 = vmatmul.bf16.gmra.mxu0 %v12056
  %v12213 = vpop.f32.mrf.mxu0
  %v12214 = vadd.f32 0.0, %v12213
  %v12215 = vpop.f32.mrf.mxu0
  %v12216 = vadd.f32 0.0, %v12215
  %12217 = vmatmul.bf16.gmra.mxu0 %v12059
  %v12218 = vpop.f32.mrf.mxu0
  %v12219 = vadd.f32 0.0, %v12218
  %v12220 = vpop.f32.mrf.mxu0
  %v12221 = vadd.f32 0.0, %v12220
  %12222 = vmatmul.bf16.gmra.mxu0 %v12062
  %v12223 = vpop.f32.mrf.mxu0
  %v12224 = vadd.f32 0.0, %v12223
  %v12225 = vpop.f32.mrf.mxu0
  %v12226 = vadd.f32 0.0, %v12225
  %12227 = vmatmul.bf16.gmra.mxu0 %v12065
  %v12228 = vpop.f32.mrf.mxu0
  %v12229 = vadd.f32 0.0, %v12228
  %v12230 = vpop.f32.mrf.mxu0
  %v12231 = vadd.f32 0.0, %v12230
  %12232 = vmatmul.bf16.gmra.mxu0 %v12068
  %v12233 = vpop.f32.mrf.mxu0
  %v12234 = vadd.f32 0.0, %v12233
  %v12235 = vpop.f32.mrf.mxu0
  %v12236 = vadd.f32 0.0, %v12235
  %12237 = vmatmul.bf16.gmra.mxu0 %v12071
  %v12238 = vpop.f32.mrf.mxu0
  %v12239 = vadd.f32 0.0, %v12238
  %v12240 = vpop.f32.mrf.mxu0
  %v12241 = vadd.f32 0.0, %v12240
  %12242 = vmatmul.bf16.gmra.mxu0 %v12074
  %v12243 = vpop.f32.mrf.mxu0
  %v12244 = vadd.f32 0.0, %v12243
  %v12245 = vpop.f32.mrf.mxu0
  %v12246 = vadd.f32 0.0, %v12245
  %12247 = vdwg.mxu0
  %v12248 = vadd.f32 %v11818, %v12089
  %v12249 = vadd.f32 %v11819, %v12091
  %v12250 = vadd.f32 %v11820, %v12094
  %v12251 = vadd.f32 %v11821, %v12096
  %v12252 = vadd.f32 %v11822, %v12099
  %v12253 = vadd.f32 %v11823, %v12101
  %v12254 = vadd.f32 %v11824, %v12104
  %v12255 = vadd.f32 %v11825, %v12106
  %v12256 = vadd.f32 %v11826, %v12109
  %v12257 = vadd.f32 %v11827, %v12111
  %v12258 = vadd.f32 %v11828, %v12114
  %v12259 = vadd.f32 %v11829, %v12116
  %v12260 = vadd.f32 %v11830, %v12119
  %v12261 = vadd.f32 %v11831, %v12121
  %v12262 = vadd.f32 %v11832, %v12124
  %v12263 = vadd.f32 %v11833, %v12126
  %v12264 = vadd.f32 %v11834, %v12129
  %v12265 = vadd.f32 %v11835, %v12131
  %v12266 = vadd.f32 %v11836, %v12134
  %v12267 = vadd.f32 %v11837, %v12136
  %v12268 = vadd.f32 %v11838, %v12139
  %v12269 = vadd.f32 %v11839, %v12141
  %v12270 = vadd.f32 %v11840, %v12144
  %v12271 = vadd.f32 %v11841, %v12146
  %v12272 = vadd.f32 %v11842, %v12149
  %v12273 = vadd.f32 %v11843, %v12151
  %v12274 = vadd.f32 %v11844, %v12154
  %v12275 = vadd.f32 %v11845, %v12156
  %v12276 = vadd.f32 %v11846, %v12159
  %v12277 = vadd.f32 %v11847, %v12161
  %v12278 = vadd.f32 %v11848, %v12164
  %v12279 = vadd.f32 %v11849, %v12166
  %v12280 = vadd.f32 %v11850, %v12169
  %v12281 = vadd.f32 %v11851, %v12171
  %v12282 = vadd.f32 %v11852, %v12174
  %v12283 = vadd.f32 %v11853, %v12176
  %v12284 = vadd.f32 %v11854, %v12179
  %v12285 = vadd.f32 %v11855, %v12181
  %v12286 = vadd.f32 %v11856, %v12184
  %v12287 = vadd.f32 %v11857, %v12186
  %v12288 = vadd.f32 %v11858, %v12189
  %v12289 = vadd.f32 %v11859, %v12191
  %v12290 = vadd.f32 %v11860, %v12194
  %v12291 = vadd.f32 %v11861, %v12196
  %v12292 = vadd.f32 %v11862, %v12199
  %v12293 = vadd.f32 %v11863, %v12201
  %v12294 = vadd.f32 %v11864, %v12204
  %v12295 = vadd.f32 %v11865, %v12206
  %v12296 = vadd.f32 %v11866, %v12209
  %v12297 = vadd.f32 %v11867, %v12211
  %v12298 = vadd.f32 %v11868, %v12214
  %v12299 = vadd.f32 %v11869, %v12216
  %v12300 = vadd.f32 %v11870, %v12219
  %v12301 = vadd.f32 %v11871, %v12221
  %v12302 = vadd.f32 %v11872, %v12224
  %v12303 = vadd.f32 %v11873, %v12226
  %v12304 = vadd.f32 %v11874, %v12229
  %v12305 = vadd.f32 %v11875, %v12231
  %v12306 = vadd.f32 %v11876, %v12234
  %v12307 = vadd.f32 %v11877, %v12236
  %v12308 = vadd.f32 %v11878, %v12239
  %v12309 = vadd.f32 %v11879, %v12241
  %v12310 = vadd.f32 %v11880, %v12244
  %v12311 = vadd.f32 %v11881, %v12246
  %v12312 = vld [vmem:[%s5] sm:$0x1]
  %v12313 = vld [vmem:[%s6] sm:$0x1]
  %v12314 = vsel %vm7725, %v12248, 0.0
  %v12315 = vsel %vm7725, %v12249, 0.0
  %v12316 = vadd.f32 %v12314, %v12315
  %v12317 = vsel %vm7725, %v12250, 0.0
  %v12318 = vadd.f32 %v12316, %v12317
  %v12319 = vsel %vm7725, %v12251, 0.0
  %v12320 = vadd.f32 %v12318, %v12319
  %v12321 = vsel %vm7725, %v12252, 0.0
  %v12322 = vadd.f32 %v12320, %v12321
  %v12323 = vsel %vm7725, %v12253, 0.0
  %v12324 = vadd.f32 %v12322, %v12323
  %v12325 = vsel %vm7725, %v12254, 0.0
  %v12326 = vadd.f32 %v12324, %v12325
  %v12327 = vsel %vm7725, %v12255, 0.0
  %v12328 = vadd.f32 %v12326, %v12327
  %v12329 = vsel %vm7725, %v12256, 0.0
  %v12330 = vadd.f32 %v12328, %v12329
  %v12331 = vsel %vm7725, %v12257, 0.0
  %v12332 = vadd.f32 %v12330, %v12331
  %v12333 = vsel %vm7725, %v12258, 0.0
  %v12334 = vadd.f32 %v12332, %v12333
  %v12335 = vsel %vm7725, %v12259, 0.0
  %v12336 = vadd.f32 %v12334, %v12335
  %v12337 = vsel %vm7725, %v12260, 0.0
  %v12338 = vadd.f32 %v12336, %v12337
  %v12339 = vsel %vm7725, %v12261, 0.0
  %v12340 = vadd.f32 %v12338, %v12339
  %v12341 = vsel %vm7725, %v12262, 0.0
  %v12342 = vadd.f32 %v12340, %v12341
  %v12343 = vsel %vm7725, %v12263, 0.0
  %v12344 = vadd.f32 %v12342, %v12343
  %v12345 = vsel %vm7725, %v12264, 0.0
  %v12346 = vadd.f32 %v12344, %v12345
  %v12347 = vsel %vm7725, %v12265, 0.0
  %v12348 = vadd.f32 %v12346, %v12347
  %v12349 = vsel %vm7725, %v12266, 0.0
  %v12350 = vadd.f32 %v12348, %v12349
  %v12351 = vsel %vm7725, %v12267, 0.0
  %v12352 = vadd.f32 %v12350, %v12351
  %v12353 = vsel %vm7725, %v12268, 0.0
  %v12354 = vadd.f32 %v12352, %v12353
  %v12355 = vsel %vm7725, %v12269, 0.0
  %v12356 = vadd.f32 %v12354, %v12355
  %v12357 = vsel %vm7725, %v12270, 0.0
  %v12358 = vadd.f32 %v12356, %v12357
  %v12359 = vsel %vm7725, %v12271, 0.0
  %v12360 = vadd.f32 %v12358, %v12359
  %v12361 = vsel %vm7725, %v12272, 0.0
  %v12362 = vadd.f32 %v12360, %v12361
  %v12363 = vsel %vm7725, %v12273, 0.0
  %v12364 = vadd.f32 %v12362, %v12363
  %v12365 = vsel %vm7725, %v12274, 0.0
  %v12366 = vadd.f32 %v12364, %v12365
  %v12367 = vsel %vm7725, %v12275, 0.0
  %v12368 = vadd.f32 %v12366, %v12367
  %v12369 = vsel %vm7725, %v12276, 0.0
  %v12370 = vadd.f32 %v12368, %v12369
  %v12371 = vsel %vm7725, %v12277, 0.0
  %v12372 = vadd.f32 %v12370, %v12371
  %v12373 = vsel %vm7725, %v12278, 0.0
  %v12374 = vadd.f32 %v12372, %v12373
  %v12375 = vsel %vm7725, %v12279, 0.0
  %v12376 = vadd.f32 %v12374, %v12375
  %v12377 = vsel %vm7725, %v12280, 0.0
  %v12378 = vadd.f32 %v12376, %v12377
  %v12379 = vsel %vm7725, %v12281, 0.0
  %v12380 = vadd.f32 %v12378, %v12379
  %v12381 = vsel %vm7725, %v12282, 0.0
  %v12382 = vadd.f32 %v12380, %v12381
  %v12383 = vsel %vm7725, %v12283, 0.0
  %v12384 = vadd.f32 %v12382, %v12383
  %v12385 = vsel %vm7725, %v12284, 0.0
  %v12386 = vadd.f32 %v12384, %v12385
  %v12387 = vsel %vm7725, %v12285, 0.0
  %v12388 = vadd.f32 %v12386, %v12387
  %v12389 = vsel %vm7725, %v12286, 0.0
  %v12390 = vadd.f32 %v12388, %v12389
  %v12391 = vsel %vm7725, %v12287, 0.0
  %v12392 = vadd.f32 %v12390, %v12391
  %v12393 = vsel %vm7725, %v12288, 0.0
  %v12394 = vadd.f32 %v12392, %v12393
  %v12395 = vsel %vm7725, %v12289, 0.0
  %v12396 = vadd.f32 %v12394, %v12395
  %v12397 = vsel %vm7725, %v12290, 0.0
  %v12398 = vadd.f32 %v12396, %v12397
  %v12399 = vsel %vm7725, %v12291, 0.0
  %v12400 = vadd.f32 %v12398, %v12399
  %v12401 = vsel %vm7725, %v12292, 0.0
  %v12402 = vadd.f32 %v12400, %v12401
  %v12403 = vsel %vm7725, %v12293, 0.0
  %v12404 = vadd.f32 %v12402, %v12403
  %v12405 = vsel %vm7725, %v12294, 0.0
  %v12406 = vadd.f32 %v12404, %v12405
  %v12407 = vsel %vm7725, %v12295, 0.0
  %v12408 = vadd.f32 %v12406, %v12407
  %v12409 = vsel %vm7725, %v12296, 0.0
  %v12410 = vadd.f32 %v12408, %v12409
  %v12411 = vsel %vm7725, %v12297, 0.0
  %v12412 = vadd.f32 %v12410, %v12411
  %v12413 = vsel %vm7725, %v12298, 0.0
  %v12414 = vadd.f32 %v12412, %v12413
  %v12415 = vsel %vm7725, %v12299, 0.0
  %v12416 = vadd.f32 %v12414, %v12415
  %v12417 = vsel %vm7725, %v12300, 0.0
  %v12418 = vadd.f32 %v12416, %v12417
  %v12419 = vsel %vm7725, %v12301, 0.0
  %v12420 = vadd.f32 %v12418, %v12419
  %v12421 = vsel %vm7725, %v12302, 0.0
  %v12422 = vadd.f32 %v12420, %v12421
  %v12423 = vsel %vm7725, %v12303, 0.0
  %v12424 = vadd.f32 %v12422, %v12423
  %v12425 = vsel %vm7725, %v12304, 0.0
  %v12426 = vadd.f32 %v12424, %v12425
  %v12427 = vsel %vm7725, %v12305, 0.0
  %v12428 = vadd.f32 %v12426, %v12427
  %v12429 = vsel %vm7725, %v12306, 0.0
  %v12430 = vadd.f32 %v12428, %v12429
  %v12431 = vsel %vm7725, %v12307, 0.0
  %v12432 = vadd.f32 %v12430, %v12431
  %v12433 = vsel %vm7725, %v12308, 0.0
  %v12434 = vadd.f32 %v12432, %v12433
  %v12435 = vsel %vm7725, %v12309, 0.0
  %v12436 = vadd.f32 %v12434, %v12435
  %v12437 = vsel %vm7725, %v12310, 0.0
  %v12438 = vadd.f32 %v12436, %v12437
  %v12439 = vsel %vm7725, %v12311, 0.0
  %v12440 = vadd.f32 %v12438, %v12439
  %v12441 = vrot.slane %v12440, 4
  %v12442 = vadd.f32 %v12440, %v12441
  %v12443 = vrot.slane %v12442, 2
  %v12444 = vadd.f32 %v12442, %v12443
  %v12445 = vrot.slane %v12444, 1
  %v12446 = vadd.f32 %v12444, %v12445
  %v12447 = vmul.f32 %v12446, 0.001953125
  %v12448 = vsub.f32 %v12248, %v12447
  %v12449 = vsub.f32 %v12249, %v12447
  %v12450 = vsub.f32 %v12250, %v12447
  %v12451 = vsub.f32 %v12251, %v12447
  %v12452 = vsub.f32 %v12252, %v12447
  %v12453 = vsub.f32 %v12253, %v12447
  %v12454 = vsub.f32 %v12254, %v12447
  %v12455 = vsub.f32 %v12255, %v12447
  %v12456 = vsub.f32 %v12256, %v12447
  %v12457 = vsub.f32 %v12257, %v12447
  %v12458 = vsub.f32 %v12258, %v12447
  %v12459 = vsub.f32 %v12259, %v12447
  %v12460 = vsub.f32 %v12260, %v12447
  %v12461 = vsub.f32 %v12261, %v12447
  %v12462 = vsub.f32 %v12262, %v12447
  %v12463 = vsub.f32 %v12263, %v12447
  %v12464 = vsub.f32 %v12264, %v12447
  %v12465 = vsub.f32 %v12265, %v12447
  %v12466 = vsub.f32 %v12266, %v12447
  %v12467 = vsub.f32 %v12267, %v12447
  %v12468 = vsub.f32 %v12268, %v12447
  %v12469 = vsub.f32 %v12269, %v12447
  %v12470 = vsub.f32 %v12270, %v12447
  %v12471 = vsub.f32 %v12271, %v12447
  %v12472 = vsub.f32 %v12272, %v12447
  %v12473 = vsub.f32 %v12273, %v12447
  %v12474 = vsub.f32 %v12274, %v12447
  %v12475 = vsub.f32 %v12275, %v12447
  %v12476 = vsub.f32 %v12276, %v12447
  %v12477 = vsub.f32 %v12277, %v12447
  %v12478 = vsub.f32 %v12278, %v12447
  %v12479 = vsub.f32 %v12279, %v12447
  %v12480 = vsub.f32 %v12280, %v12447
  %v12481 = vsub.f32 %v12281, %v12447
  %v12482 = vsub.f32 %v12282, %v12447
  %v12483 = vsub.f32 %v12283, %v12447
  %v12484 = vsub.f32 %v12284, %v12447
  %v12485 = vsub.f32 %v12285, %v12447
  %v12486 = vsub.f32 %v12286, %v12447
  %v12487 = vsub.f32 %v12287, %v12447
  %v12488 = vsub.f32 %v12288, %v12447
  %v12489 = vsub.f32 %v12289, %v12447
  %v12490 = vsub.f32 %v12290, %v12447
  %v12491 = vsub.f32 %v12291, %v12447
  %v12492 = vsub.f32 %v12292, %v12447
  %v12493 = vsub.f32 %v12293, %v12447
  %v12494 = vsub.f32 %v12294, %v12447
  %v12495 = vsub.f32 %v12295, %v12447
  %v12496 = vsub.f32 %v12296, %v12447
  %v12497 = vsub.f32 %v12297, %v12447
  %v12498 = vsub.f32 %v12298, %v12447
  %v12499 = vsub.f32 %v12299, %v12447
  %v12500 = vsub.f32 %v12300, %v12447
  %v12501 = vsub.f32 %v12301, %v12447
  %v12502 = vsub.f32 %v12302, %v12447
  %v12503 = vsub.f32 %v12303, %v12447
  %v12504 = vsub.f32 %v12304, %v12447
  %v12505 = vsub.f32 %v12305, %v12447
  %v12506 = vsub.f32 %v12306, %v12447
  %v12507 = vsub.f32 %v12307, %v12447
  %v12508 = vsub.f32 %v12308, %v12447
  %v12509 = vsub.f32 %v12309, %v12447
  %v12510 = vsub.f32 %v12310, %v12447
  %v12511 = vsub.f32 %v12311, %v12447
  %v12512 = vmul.f32 %v12448, %v12448
  %v12513 = vmul.f32 %v12449, %v12449
  %v12514 = vmul.f32 %v12450, %v12450
  %v12515 = vmul.f32 %v12451, %v12451
  %v12516 = vmul.f32 %v12452, %v12452
  %v12517 = vmul.f32 %v12453, %v12453
  %v12518 = vmul.f32 %v12454, %v12454
  %v12519 = vmul.f32 %v12455, %v12455
  %v12520 = vmul.f32 %v12456, %v12456
  %v12521 = vmul.f32 %v12457, %v12457
  %v12522 = vmul.f32 %v12458, %v12458
  %v12523 = vmul.f32 %v12459, %v12459
  %v12524 = vmul.f32 %v12460, %v12460
  %v12525 = vmul.f32 %v12461, %v12461
  %v12526 = vmul.f32 %v12462, %v12462
  %v12527 = vmul.f32 %v12463, %v12463
  %v12528 = vmul.f32 %v12464, %v12464
  %v12529 = vmul.f32 %v12465, %v12465
  %v12530 = vmul.f32 %v12466, %v12466
  %v12531 = vmul.f32 %v12467, %v12467
  %v12532 = vmul.f32 %v12468, %v12468
  %v12533 = vmul.f32 %v12469, %v12469
  %v12534 = vmul.f32 %v12470, %v12470
  %v12535 = vmul.f32 %v12471, %v12471
  %v12536 = vmul.f32 %v12472, %v12472
  %v12537 = vmul.f32 %v12473, %v12473
  %v12538 = vmul.f32 %v12474, %v12474
  %v12539 = vmul.f32 %v12475, %v12475
  %v12540 = vmul.f32 %v12476, %v12476
  %v12541 = vmul.f32 %v12477, %v12477
  %v12542 = vmul.f32 %v12478, %v12478
  %v12543 = vmul.f32 %v12479, %v12479
  %v12544 = vmul.f32 %v12480, %v12480
  %v12545 = vmul.f32 %v12481, %v12481
  %v12546 = vmul.f32 %v12482, %v12482
  %v12547 = vmul.f32 %v12483, %v12483
  %v12548 = vmul.f32 %v12484, %v12484
  %v12549 = vmul.f32 %v12485, %v12485
  %v12550 = vmul.f32 %v12486, %v12486
  %v12551 = vmul.f32 %v12487, %v12487
  %v12552 = vmul.f32 %v12488, %v12488
  %v12553 = vmul.f32 %v12489, %v12489
  %v12554 = vmul.f32 %v12490, %v12490
  %v12555 = vmul.f32 %v12491, %v12491
  %v12556 = vmul.f32 %v12492, %v12492
  %v12557 = vmul.f32 %v12493, %v12493
  %v12558 = vmul.f32 %v12494, %v12494
  %v12559 = vmul.f32 %v12495, %v12495
  %v12560 = vmul.f32 %v12496, %v12496
  %v12561 = vmul.f32 %v12497, %v12497
  %v12562 = vmul.f32 %v12498, %v12498
  %v12563 = vmul.f32 %v12499, %v12499
  %v12564 = vmul.f32 %v12500, %v12500
  %v12565 = vmul.f32 %v12501, %v12501
  %v12566 = vmul.f32 %v12502, %v12502
  %v12567 = vmul.f32 %v12503, %v12503
  %v12568 = vmul.f32 %v12504, %v12504
  %v12569 = vmul.f32 %v12505, %v12505
  %v12570 = vmul.f32 %v12506, %v12506
  %v12571 = vmul.f32 %v12507, %v12507
  %v12572 = vmul.f32 %v12508, %v12508
  %v12573 = vmul.f32 %v12509, %v12509
  %v12574 = vmul.f32 %v12510, %v12510
  %v12575 = vmul.f32 %v12511, %v12511
  %v12576 = vsel %vm7725, %v12512, 0.0
  %v12577 = vsel %vm7725, %v12513, 0.0
  %v12578 = vadd.f32 %v12576, %v12577
  %v12579 = vsel %vm7725, %v12514, 0.0
  %v12580 = vadd.f32 %v12578, %v12579
  %v12581 = vsel %vm7725, %v12515, 0.0
  %v12582 = vadd.f32 %v12580, %v12581
  %v12583 = vsel %vm7725, %v12516, 0.0
  %v12584 = vadd.f32 %v12582, %v12583
  %v12585 = vsel %vm7725, %v12517, 0.0
  %v12586 = vadd.f32 %v12584, %v12585
  %v12587 = vsel %vm7725, %v12518, 0.0
  %v12588 = vadd.f32 %v12586, %v12587
  %v12589 = vsel %vm7725, %v12519, 0.0
  %v12590 = vadd.f32 %v12588, %v12589
  %v12591 = vsel %vm7725, %v12520, 0.0
  %v12592 = vadd.f32 %v12590, %v12591
  %v12593 = vsel %vm7725, %v12521, 0.0
  %v12594 = vadd.f32 %v12592, %v12593
  %v12595 = vsel %vm7725, %v12522, 0.0
  %v12596 = vadd.f32 %v12594, %v12595
  %v12597 = vsel %vm7725, %v12523, 0.0
  %v12598 = vadd.f32 %v12596, %v12597
  %v12599 = vsel %vm7725, %v12524, 0.0
  %v12600 = vadd.f32 %v12598, %v12599
  %v12601 = vsel %vm7725, %v12525, 0.0
  %v12602 = vadd.f32 %v12600, %v12601
  %v12603 = vsel %vm7725, %v12526, 0.0
  %v12604 = vadd.f32 %v12602, %v12603
  %v12605 = vsel %vm7725, %v12527, 0.0
  %v12606 = vadd.f32 %v12604, %v12605
  %v12607 = vsel %vm7725, %v12528, 0.0
  %v12608 = vadd.f32 %v12606, %v12607
  %v12609 = vsel %vm7725, %v12529, 0.0
  %v12610 = vadd.f32 %v12608, %v12609
  %v12611 = vsel %vm7725, %v12530, 0.0
  %v12612 = vadd.f32 %v12610, %v12611
  %v12613 = vsel %vm7725, %v12531, 0.0
  %v12614 = vadd.f32 %v12612, %v12613
  %v12615 = vsel %vm7725, %v12532, 0.0
  %v12616 = vadd.f32 %v12614, %v12615
  %v12617 = vsel %vm7725, %v12533, 0.0
  %v12618 = vadd.f32 %v12616, %v12617
  %v12619 = vsel %vm7725, %v12534, 0.0
  %v12620 = vadd.f32 %v12618, %v12619
  %v12621 = vsel %vm7725, %v12535, 0.0
  %v12622 = vadd.f32 %v12620, %v12621
  %v12623 = vsel %vm7725, %v12536, 0.0
  %v12624 = vadd.f32 %v12622, %v12623
  %v12625 = vsel %vm7725, %v12537, 0.0
  %v12626 = vadd.f32 %v12624, %v12625
  %v12627 = vsel %vm7725, %v12538, 0.0
  %v12628 = vadd.f32 %v12626, %v12627
  %v12629 = vsel %vm7725, %v12539, 0.0
  %v12630 = vadd.f32 %v12628, %v12629
  %v12631 = vsel %vm7725, %v12540, 0.0
  %v12632 = vadd.f32 %v12630, %v12631
  %v12633 = vsel %vm7725, %v12541, 0.0
  %v12634 = vadd.f32 %v12632, %v12633
  %v12635 = vsel %vm7725, %v12542, 0.0
  %v12636 = vadd.f32 %v12634, %v12635
  %v12637 = vsel %vm7725, %v12543, 0.0
  %v12638 = vadd.f32 %v12636, %v12637
  %v12639 = vsel %vm7725, %v12544, 0.0
  %v12640 = vadd.f32 %v12638, %v12639
  %v12641 = vsel %vm7725, %v12545, 0.0
  %v12642 = vadd.f32 %v12640, %v12641
  %v12643 = vsel %vm7725, %v12546, 0.0
  %v12644 = vadd.f32 %v12642, %v12643
  %v12645 = vsel %vm7725, %v12547, 0.0
  %v12646 = vadd.f32 %v12644, %v12645
  %v12647 = vsel %vm7725, %v12548, 0.0
  %v12648 = vadd.f32 %v12646, %v12647
  %v12649 = vsel %vm7725, %v12549, 0.0
  %v12650 = vadd.f32 %v12648, %v12649
  %v12651 = vsel %vm7725, %v12550, 0.0
  %v12652 = vadd.f32 %v12650, %v12651
  %v12653 = vsel %vm7725, %v12551, 0.0
  %v12654 = vadd.f32 %v12652, %v12653
  %v12655 = vsel %vm7725, %v12552, 0.0
  %v12656 = vadd.f32 %v12654, %v12655
  %v12657 = vsel %vm7725, %v12553, 0.0
  %v12658 = vadd.f32 %v12656, %v12657
  %v12659 = vsel %vm7725, %v12554, 0.0
  %v12660 = vadd.f32 %v12658, %v12659
  %v12661 = vsel %vm7725, %v12555, 0.0
  %v12662 = vadd.f32 %v12660, %v12661
  %v12663 = vsel %vm7725, %v12556, 0.0
  %v12664 = vadd.f32 %v12662, %v12663
  %v12665 = vsel %vm7725, %v12557, 0.0
  %v12666 = vadd.f32 %v12664, %v12665
  %v12667 = vsel %vm7725, %v12558, 0.0
  %v12668 = vadd.f32 %v12666, %v12667
  %v12669 = vsel %vm7725, %v12559, 0.0
  %v12670 = vadd.f32 %v12668, %v12669
  %v12671 = vsel %vm7725, %v12560, 0.0
  %v12672 = vadd.f32 %v12670, %v12671
  %v12673 = vsel %vm7725, %v12561, 0.0
  %v12674 = vadd.f32 %v12672, %v12673
  %v12675 = vsel %vm7725, %v12562, 0.0
  %v12676 = vadd.f32 %v12674, %v12675
  %v12677 = vsel %vm7725, %v12563, 0.0
  %v12678 = vadd.f32 %v12676, %v12677
  %v12679 = vsel %vm7725, %v12564, 0.0
  %v12680 = vadd.f32 %v12678, %v12679
  %v12681 = vsel %vm7725, %v12565, 0.0
  %v12682 = vadd.f32 %v12680, %v12681
  %v12683 = vsel %vm7725, %v12566, 0.0
  %v12684 = vadd.f32 %v12682, %v12683
  %v12685 = vsel %vm7725, %v12567, 0.0
  %v12686 = vadd.f32 %v12684, %v12685
  %v12687 = vsel %vm7725, %v12568, 0.0
  %v12688 = vadd.f32 %v12686, %v12687
  %v12689 = vsel %vm7725, %v12569, 0.0
  %v12690 = vadd.f32 %v12688, %v12689
  %v12691 = vsel %vm7725, %v12570, 0.0
  %v12692 = vadd.f32 %v12690, %v12691
  %v12693 = vsel %vm7725, %v12571, 0.0
  %v12694 = vadd.f32 %v12692, %v12693
  %v12695 = vsel %vm7725, %v12572, 0.0
  %v12696 = vadd.f32 %v12694, %v12695
  %v12697 = vsel %vm7725, %v12573, 0.0
  %v12698 = vadd.f32 %v12696, %v12697
  %v12699 = vsel %vm7725, %v12574, 0.0
  %v12700 = vadd.f32 %v12698, %v12699
  %v12701 = vsel %vm7725, %v12575, 0.0
  %v12702 = vadd.f32 %v12700, %v12701
  %v12703 = vrot.slane %v12702, 4
  %v12704 = vadd.f32 %v12702, %v12703
  %v12705 = vrot.slane %v12704, 2
  %v12706 = vadd.f32 %v12704, %v12705
  %v12707 = vrot.slane %v12706, 1
  %v12708 = vadd.f32 %v12706, %v12707
  %v12709 = vmul.f32 %v12708, 0.001953125
  %v12710 = vadd.f32 %v12709, 1e-05
  %v12711 = vrsqrt.pop %v12710
  %v12712 = vmul.f32 %v12711, %v12710
  %v12713 = vmul.f32 %v12712, %v12711
  %v12714 = vmul.f32 0.5, %v12713
  %v12715 = vsub.f32 1.5, %v12714
  %v12716 = vmul.f32 %v12711, %v12715
  %vm12717 = vweird.f32 %v12710
  %vm12718 = vweird.f32 %v12711
  %vm12719 = vmor %vm12717, %vm12718
  %v12720 = vsel %vm12719, %v12711, %v12716
  %v12721 = vmul.f32 %v12448, %v12720
  %v12722 = vmul.f32 %v12449, %v12720
  %v12723 = vmul.f32 %v12450, %v12720
  %v12724 = vmul.f32 %v12451, %v12720
  %v12725 = vmul.f32 %v12452, %v12720
  %v12726 = vmul.f32 %v12453, %v12720
  %v12727 = vmul.f32 %v12454, %v12720
  %v12728 = vmul.f32 %v12455, %v12720
  %v12729 = vmul.f32 %v12456, %v12720
  %v12730 = vmul.f32 %v12457, %v12720
  %v12731 = vmul.f32 %v12458, %v12720
  %v12732 = vmul.f32 %v12459, %v12720
  %v12733 = vmul.f32 %v12460, %v12720
  %v12734 = vmul.f32 %v12461, %v12720
  %v12735 = vmul.f32 %v12462, %v12720
  %v12736 = vmul.f32 %v12463, %v12720
  %v12737 = vmul.f32 %v12464, %v12720
  %v12738 = vmul.f32 %v12465, %v12720
  %v12739 = vmul.f32 %v12466, %v12720
  %v12740 = vmul.f32 %v12467, %v12720
  %v12741 = vmul.f32 %v12468, %v12720
  %v12742 = vmul.f32 %v12469, %v12720
  %v12743 = vmul.f32 %v12470, %v12720
  %v12744 = vmul.f32 %v12471, %v12720
  %v12745 = vmul.f32 %v12472, %v12720
  %v12746 = vmul.f32 %v12473, %v12720
  %v12747 = vmul.f32 %v12474, %v12720
  %v12748 = vmul.f32 %v12475, %v12720
  %v12749 = vmul.f32 %v12476, %v12720
  %v12750 = vmul.f32 %v12477, %v12720
  %v12751 = vmul.f32 %v12478, %v12720
  %v12752 = vmul.f32 %v12479, %v12720
  %v12753 = vmul.f32 %v12480, %v12720
  %v12754 = vmul.f32 %v12481, %v12720
  %v12755 = vmul.f32 %v12482, %v12720
  %v12756 = vmul.f32 %v12483, %v12720
  %v12757 = vmul.f32 %v12484, %v12720
  %v12758 = vmul.f32 %v12485, %v12720
  %v12759 = vmul.f32 %v12486, %v12720
  %v12760 = vmul.f32 %v12487, %v12720
  %v12761 = vmul.f32 %v12488, %v12720
  %v12762 = vmul.f32 %v12489, %v12720
  %v12763 = vmul.f32 %v12490, %v12720
  %v12764 = vmul.f32 %v12491, %v12720
  %v12765 = vmul.f32 %v12492, %v12720
  %v12766 = vmul.f32 %v12493, %v12720
  %v12767 = vmul.f32 %v12494, %v12720
  %v12768 = vmul.f32 %v12495, %v12720
  %v12769 = vmul.f32 %v12496, %v12720
  %v12770 = vmul.f32 %v12497, %v12720
  %v12771 = vmul.f32 %v12498, %v12720
  %v12772 = vmul.f32 %v12499, %v12720
  %v12773 = vmul.f32 %v12500, %v12720
  %v12774 = vmul.f32 %v12501, %v12720
  %v12775 = vmul.f32 %v12502, %v12720
  %v12776 = vmul.f32 %v12503, %v12720
  %v12777 = vmul.f32 %v12504, %v12720
  %v12778 = vmul.f32 %v12505, %v12720
  %v12779 = vmul.f32 %v12506, %v12720
  %v12780 = vmul.f32 %v12507, %v12720
  %v12781 = vmul.f32 %v12508, %v12720
  %v12782 = vmul.f32 %v12509, %v12720
  %v12783 = vmul.f32 %v12510, %v12720
  %v12784 = vmul.f32 %v12511, %v12720
  %v12786 = vperm.slane %v12312, 0
  %v12788 = vmul.f32 %v12721, %v12786
  %v12789 = vmul.f32 %v12722, %v12786
  %v12790 = vmul.f32 %v12723, %v12786
  %v12791 = vmul.f32 %v12724, %v12786
  %v12792 = vmul.f32 %v12725, %v12786
  %v12793 = vmul.f32 %v12726, %v12786
  %v12794 = vmul.f32 %v12727, %v12786
  %v12795 = vmul.f32 %v12728, %v12786
  %v12796 = vmul.f32 %v12729, %v12786
  %v12797 = vmul.f32 %v12730, %v12786
  %v12798 = vmul.f32 %v12731, %v12786
  %v12799 = vmul.f32 %v12732, %v12786
  %v12800 = vmul.f32 %v12733, %v12786
  %v12801 = vmul.f32 %v12734, %v12786
  %v12802 = vmul.f32 %v12735, %v12786
  %v12803 = vmul.f32 %v12736, %v12786
  %v12804 = vmul.f32 %v12737, %v12786
  %v12805 = vmul.f32 %v12738, %v12786
  %v12806 = vmul.f32 %v12739, %v12786
  %v12807 = vmul.f32 %v12740, %v12786
  %v12808 = vmul.f32 %v12741, %v12786
  %v12809 = vmul.f32 %v12742, %v12786
  %v12810 = vmul.f32 %v12743, %v12786
  %v12811 = vmul.f32 %v12744, %v12786
  %v12812 = vmul.f32 %v12745, %v12786
  %v12813 = vmul.f32 %v12746, %v12786
  %v12814 = vmul.f32 %v12747, %v12786
  %v12815 = vmul.f32 %v12748, %v12786
  %v12816 = vmul.f32 %v12749, %v12786
  %v12817 = vmul.f32 %v12750, %v12786
  %v12818 = vmul.f32 %v12751, %v12786
  %v12819 = vmul.f32 %v12752, %v12786
  %v12820 = vmul.f32 %v12753, %v12786
  %v12821 = vmul.f32 %v12754, %v12786
  %v12822 = vmul.f32 %v12755, %v12786
  %v12823 = vmul.f32 %v12756, %v12786
  %v12824 = vmul.f32 %v12757, %v12786
  %v12825 = vmul.f32 %v12758, %v12786
  %v12826 = vmul.f32 %v12759, %v12786
  %v12827 = vmul.f32 %v12760, %v12786
  %v12828 = vmul.f32 %v12761, %v12786
  %v12829 = vmul.f32 %v12762, %v12786
  %v12830 = vmul.f32 %v12763, %v12786
  %v12831 = vmul.f32 %v12764, %v12786
  %v12832 = vmul.f32 %v12765, %v12786
  %v12833 = vmul.f32 %v12766, %v12786
  %v12834 = vmul.f32 %v12767, %v12786
  %v12835 = vmul.f32 %v12768, %v12786
  %v12836 = vmul.f32 %v12769, %v12786
  %v12837 = vmul.f32 %v12770, %v12786
  %v12838 = vmul.f32 %v12771, %v12786
  %v12839 = vmul.f32 %v12772, %v12786
  %v12840 = vmul.f32 %v12773, %v12786
  %v12841 = vmul.f32 %v12774, %v12786
  %v12842 = vmul.f32 %v12775, %v12786
  %v12843 = vmul.f32 %v12776, %v12786
  %v12844 = vmul.f32 %v12777, %v12786
  %v12845 = vmul.f32 %v12778, %v12786
  %v12846 = vmul.f32 %v12779, %v12786
  %v12847 = vmul.f32 %v12780, %v12786
  %v12848 = vmul.f32 %v12781, %v12786
  %v12849 = vmul.f32 %v12782, %v12786
  %v12850 = vmul.f32 %v12783, %v12786
  %v12851 = vmul.f32 %v12784, %v12786
  %v12853 = vperm.slane %v12313, 0
  %v12855 = vadd.f32 %v12788, %v12853
  %v12856 = vadd.f32 %v12789, %v12853
  %v12857 = vadd.f32 %v12790, %v12853
  %v12858 = vadd.f32 %v12791, %v12853
  %v12859 = vadd.f32 %v12792, %v12853
  %v12860 = vadd.f32 %v12793, %v12853
  %v12861 = vadd.f32 %v12794, %v12853
  %v12862 = vadd.f32 %v12795, %v12853
  %v12863 = vadd.f32 %v12796, %v12853
  %v12864 = vadd.f32 %v12797, %v12853
  %v12865 = vadd.f32 %v12798, %v12853
  %v12866 = vadd.f32 %v12799, %v12853
  %v12867 = vadd.f32 %v12800, %v12853
  %v12868 = vadd.f32 %v12801, %v12853
  %v12869 = vadd.f32 %v12802, %v12853
  %v12870 = vadd.f32 %v12803, %v12853
  %v12871 = vadd.f32 %v12804, %v12853
  %v12872 = vadd.f32 %v12805, %v12853
  %v12873 = vadd.f32 %v12806, %v12853
  %v12874 = vadd.f32 %v12807, %v12853
  %v12875 = vadd.f32 %v12808, %v12853
  %v12876 = vadd.f32 %v12809, %v12853
  %v12877 = vadd.f32 %v12810, %v12853
  %v12878 = vadd.f32 %v12811, %v12853
  %v12879 = vadd.f32 %v12812, %v12853
  %v12880 = vadd.f32 %v12813, %v12853
  %v12881 = vadd.f32 %v12814, %v12853
  %v12882 = vadd.f32 %v12815, %v12853
  %v12883 = vadd.f32 %v12816, %v12853
  %v12884 = vadd.f32 %v12817, %v12853
  %v12885 = vadd.f32 %v12818, %v12853
  %v12886 = vadd.f32 %v12819, %v12853
  %v12887 = vadd.f32 %v12820, %v12853
  %v12888 = vadd.f32 %v12821, %v12853
  %v12889 = vadd.f32 %v12822, %v12853
  %v12890 = vadd.f32 %v12823, %v12853
  %v12891 = vadd.f32 %v12824, %v12853
  %v12892 = vadd.f32 %v12825, %v12853
  %v12893 = vadd.f32 %v12826, %v12853
  %v12894 = vadd.f32 %v12827, %v12853
  %v12895 = vadd.f32 %v12828, %v12853
  %v12896 = vadd.f32 %v12829, %v12853
  %v12897 = vadd.f32 %v12830, %v12853
  %v12898 = vadd.f32 %v12831, %v12853
  %v12899 = vadd.f32 %v12832, %v12853
  %v12900 = vadd.f32 %v12833, %v12853
  %v12901 = vadd.f32 %v12834, %v12853
  %v12902 = vadd.f32 %v12835, %v12853
  %v12903 = vadd.f32 %v12836, %v12853
  %v12904 = vadd.f32 %v12837, %v12853
  %v12905 = vadd.f32 %v12838, %v12853
  %v12906 = vadd.f32 %v12839, %v12853
  %v12907 = vadd.f32 %v12840, %v12853
  %v12908 = vadd.f32 %v12841, %v12853
  %v12909 = vadd.f32 %v12842, %v12853
  %v12910 = vadd.f32 %v12843, %v12853
  %v12911 = vadd.f32 %v12844, %v12853
  %v12912 = vadd.f32 %v12845, %v12853
  %v12913 = vadd.f32 %v12846, %v12853
  %v12914 = vadd.f32 %v12847, %v12853
  %v12915 = vadd.f32 %v12848, %v12853
  %v12916 = vadd.f32 %v12849, %v12853
  %v12917 = vadd.f32 %v12850, %v12853
  %v12918 = vadd.f32 %v12851, %v12853
  %v12919 = vld [vmem:[%s2453] sm:$0xf]
  %v12920 = vld [vmem:[%s2453 + $0x4] sm:$0xf]
  %v12921 = vld [vmem:[%s2453 + $0x8] sm:$0x1]
  %v12922 = vld [vmem:[%s2453 + $0xc] sm:$0xf]
  %v12923 = vld [vmem:[%s2453 + $0x10] sm:$0xf]
  %v12924 = vld [vmem:[%s2453 + $0x14] sm:$0x1]
  %v12925 = vld [vmem:[%s2453 + $0x18] sm:$0xf]
  %v12926 = vld [vmem:[%s2453 + $0x1c] sm:$0xf]
  %v12927 = vld [vmem:[%s2453 + $0x20] sm:$0x1]
  %v12928 = vld [vmem:[%s2453 + $0x24] sm:$0xf]
  %v12929 = vld [vmem:[%s2453 + $0x28] sm:$0xf]
  %v12930 = vld [vmem:[%s2453 + $0x2c] sm:$0x1]
  %v12931 = vld [vmem:[%s2453 + $0x30] sm:$0xf]
  %v12932 = vld [vmem:[%s2453 + $0x34] sm:$0xf]
  %v12933 = vld [vmem:[%s2453 + $0x38] sm:$0x1]
  %v12934 = vld [vmem:[%s2453 + $0x3c] sm:$0xf]
  %v12935 = vld [vmem:[%s2453 + $0x40] sm:$0xf]
  %v12936 = vld [vmem:[%s2453 + $0x44] sm:$0x1]
  %v12937 = vld [vmem:[%s2453 + $0x48] sm:$0xf]
  %v12938 = vld [vmem:[%s2453 + $0x4c] sm:$0xf]
  %v12939 = vld [vmem:[%s2453 + $0x50] sm:$0x1]
  %v12940 = vld [vmem:[%s2453 + $0x54] sm:$0xf]
  %v12941 = vld [vmem:[%s2453 + $0x58] sm:$0xf]
  %v12942 = vld [vmem:[%s2453 + $0x5c] sm:$0x1]
  %v12943 = vld [vmem:[%s2453 + $0x60] sm:$0xf]
  %v12944 = vld [vmem:[%s2453 + $0x64] sm:$0xf]
  %v12945 = vld [vmem:[%s2453 + $0x68] sm:$0x1]
  %v12946 = vld [vmem:[%s2453 + $0x6c] sm:$0xf]
  %v12947 = vld [vmem:[%s2453 + $0x70] sm:$0xf]
  %v12948 = vld [vmem:[%s2453 + $0x74] sm:$0x1]
  %v12949 = vld [vmem:[%s2453 + $0x78] sm:$0xf]
  %v12950 = vld [vmem:[%s2453 + $0x7c] sm:$0xf]
  %v12951 = vld [vmem:[%s2453 + $0x80] sm:$0x1]
  %v12952 = vld [vmem:[%s2453 + $0x84] sm:$0xf]
  %v12953 = vld [vmem:[%s2453 + $0x88] sm:$0xf]
  %v12954 = vld [vmem:[%s2453 + $0x8c] sm:$0x1]
  %v12955 = vld [vmem:[%s2453 + $0x90] sm:$0xf]
  %v12956 = vld [vmem:[%s2453 + $0x94] sm:$0xf]
  %v12957 = vld [vmem:[%s2453 + $0x98] sm:$0x1]
  %v12958 = vld [vmem:[%s2453 + $0x9c] sm:$0xf]
  %v12959 = vld [vmem:[%s2453 + $0xa0] sm:$0xf]
  %v12960 = vld [vmem:[%s2453 + $0xa4] sm:$0x1]
  %v12961 = vld [vmem:[%s2453 + $0xa8] sm:$0xf]
  %v12962 = vld [vmem:[%s2453 + $0xac] sm:$0xf]
  %v12963 = vld [vmem:[%s2453 + $0xb0] sm:$0x1]
  %v12964 = vld [vmem:[%s2453 + $0xb4] sm:$0xf]
  %v12965 = vld [vmem:[%s2453 + $0xb8] sm:$0xf]
  %v12966 = vld [vmem:[%s2453 + $0xbc] sm:$0x1]
  %v12967 = vld [vmem:[%s2453 + $0xd8] sm:$0xf]
  %v12968 = vld [vmem:[%s2453 + $0xdc] sm:$0xf]
  %v12969 = vld [vmem:[%s2453 + $0xe0] sm:$0x1]
  %v12970 = vld [vmem:[%s2453 + $0xe4] sm:$0xf]
  %v12971 = vld [vmem:[%s2453 + $0xe8] sm:$0xf]
  %v12972 = vld [vmem:[%s2453 + $0xec] sm:$0x1]
  %v12973 = vld [vmem:[%s2453 + $0xf0] sm:$0xf]
  %v12974 = vld [vmem:[%s2453 + $0xf4] sm:$0xf]
  %v12975 = vld [vmem:[%s2453 + $0xf8] sm:$0x1]
  %v12976 = vld [vmem:[%s2453 + $0xfc] sm:$0xf]
  %v12977 = vld [vmem:[%s2453 + $0x100] sm:$0xf]
  %v12978 = vld [vmem:[%s2453 + $0x104] sm:$0x1]
  %v12979 = vld [vmem:[%s2453 + $0x108] sm:$0xf]
  %v12980 = vld [vmem:[%s2453 + $0x10c] sm:$0xf]
  %v12981 = vld [vmem:[%s2453 + $0x110] sm:$0x1]
  %v12982 = vld [vmem:[%s2453 + $0x114] sm:$0xf]
  %v12983 = vld [vmem:[%s2453 + $0x118] sm:$0xf]
  %v12984 = vld [vmem:[%s2453 + $0x11c] sm:$0x1]
  %v12985 = vld [vmem:[%s2453 + $0x120] sm:$0xf]
  %v12986 = vld [vmem:[%s2453 + $0x124] sm:$0xf]
  %v12987 = vld [vmem:[%s2453 + $0x128] sm:$0x1]
  %v12988 = vld [vmem:[%s2453 + $0x12c] sm:$0xf]
  %v12989 = vld [vmem:[%s2453 + $0x130] sm:$0xf]
  %v12990 = vld [vmem:[%s2453 + $0x134] sm:$0x1]
  %v12991 = vld [vmem:[%s2453 + $0x138] sm:$0xf]
  %v12992 = vld [vmem:[%s2453 + $0x13c] sm:$0xf]
  %v12993 = vld [vmem:[%s2453 + $0x140] sm:$0x1]
  %v12994 = vld [vmem:[%s2453 + $0x144] sm:$0xf]
  %v12995 = vld [vmem:[%s2453 + $0x148] sm:$0xf]
  %v12996 = vld [vmem:[%s2453 + $0x14c] sm:$0x1]
  %v12997 = vld [vmem:[%s2453 + $0x150] sm:$0xf]
  %v12998 = vld [vmem:[%s2453 + $0x154] sm:$0xf]
  %v12999 = vld [vmem:[%s2453 + $0x158] sm:$0x1]
  %v13000 = vld [vmem:[%s2453 + $0x15c] sm:$0xf]
  %v13001 = vld [vmem:[%s2453 + $0x160] sm:$0xf]
  %v13002 = vld [vmem:[%s2453 + $0x164] sm:$0x1]
  %v13003 = vld [vmem:[%s2453 + $0x168] sm:$0xf]
  %v13004 = vld [vmem:[%s2453 + $0x16c] sm:$0xf]
  %v13005 = vld [vmem:[%s2453 + $0x170] sm:$0x1]
  %v13006 = vld [vmem:[%s2453 + $0x174] sm:$0xf]
  %v13007 = vld [vmem:[%s2453 + $0x178] sm:$0xf]
  %v13008 = vld [vmem:[%s2453 + $0x17c] sm:$0x1]
  %v13009 = vld [vmem:[%s2453 + $0x180] sm:$0xf]
  %v13010 = vld [vmem:[%s2453 + $0x184] sm:$0xf]
  %v13011 = vld [vmem:[%s2453 + $0x188] sm:$0x1]
  %v13012 = vld [vmem:[%s2453 + $0x18c] sm:$0xf]
  %v13013 = vld [vmem:[%s2453 + $0x190] sm:$0xf]
  %v13014 = vld [vmem:[%s2453 + $0x194] sm:$0x1]
  %v13016 = vshrl.u32 %v12919, 16
  %v13018 = vrot.slane %v13016, 4
  %v13019 = vshll.u32 %v12919, 16
  %v13021 = vrot.slane %v13019, 5
  %v13022 = vor.u32 %v13018, %v13021
  %v13023 = vrot.slane %v13022, 4
  %v13025 = vshll.u32 %v12920, 16
  %v13027 = vrot.slane %v13025, 5
  %v13028 = vsel %vm135, %v13023, %v13027
  %v13029 = vshrl.u32 %v12920, 16
  %v13031 = vrot.slane %v13029, 4
  %v13032 = vor.u32 %v13031, %v13027
  %v13033 = vrot.slane %v13032, 4
  %v13035 = vshll.u32 %v12921, 16
  %v13037 = vrot.slane %v13035, 5
  %v13038 = vsel %vm135, %v13033, %v13037
  %v13040 = vshrl.u32 %v12922, 16
  %v13042 = vrot.slane %v13040, 4
  %v13043 = vshll.u32 %v12922, 16
  %v13045 = vrot.slane %v13043, 5
  %v13046 = vor.u32 %v13042, %v13045
  %v13047 = vrot.slane %v13046, 4
  %v13049 = vshll.u32 %v12923, 16
  %v13051 = vrot.slane %v13049, 5
  %v13052 = vsel %vm135, %v13047, %v13051
  %v13053 = vshrl.u32 %v12923, 16
  %v13055 = vrot.slane %v13053, 4
  %v13056 = vor.u32 %v13055, %v13051
  %v13057 = vrot.slane %v13056, 4
  %v13059 = vshll.u32 %v12924, 16
  %v13061 = vrot.slane %v13059, 5
  %v13062 = vsel %vm135, %v13057, %v13061
  %v13064 = vshrl.u32 %v12925, 16
  %v13066 = vrot.slane %v13064, 4
  %v13067 = vshll.u32 %v12925, 16
  %v13069 = vrot.slane %v13067, 5
  %v13070 = vor.u32 %v13066, %v13069
  %v13071 = vrot.slane %v13070, 4
  %v13073 = vshll.u32 %v12926, 16
  %v13075 = vrot.slane %v13073, 5
  %v13076 = vsel %vm135, %v13071, %v13075
  %v13077 = vshrl.u32 %v12926, 16
  %v13079 = vrot.slane %v13077, 4
  %v13080 = vor.u32 %v13079, %v13075
  %v13081 = vrot.slane %v13080, 4
  %v13083 = vshll.u32 %v12927, 16
  %v13085 = vrot.slane %v13083, 5
  %v13086 = vsel %vm135, %v13081, %v13085
  %v13088 = vshrl.u32 %v12928, 16
  %v13090 = vrot.slane %v13088, 4
  %v13091 = vshll.u32 %v12928, 16
  %v13093 = vrot.slane %v13091, 5
  %v13094 = vor.u32 %v13090, %v13093
  %v13095 = vrot.slane %v13094, 4
  %v13097 = vshll.u32 %v12929, 16
  %v13099 = vrot.slane %v13097, 5
  %v13100 = vsel %vm135, %v13095, %v13099
  %v13101 = vshrl.u32 %v12929, 16
  %v13103 = vrot.slane %v13101, 4
  %v13104 = vor.u32 %v13103, %v13099
  %v13105 = vrot.slane %v13104, 4
  %v13107 = vshll.u32 %v12930, 16
  %v13109 = vrot.slane %v13107, 5
  %v13110 = vsel %vm135, %v13105, %v13109
  %v13112 = vshrl.u32 %v12931, 16
  %v13114 = vrot.slane %v13112, 4
  %v13115 = vshll.u32 %v12931, 16
  %v13117 = vrot.slane %v13115, 5
  %v13118 = vor.u32 %v13114, %v13117
  %v13119 = vrot.slane %v13118, 4
  %v13121 = vshll.u32 %v12932, 16
  %v13123 = vrot.slane %v13121, 5
  %v13124 = vsel %vm135, %v13119, %v13123
  %v13125 = vshrl.u32 %v12932, 16
  %v13127 = vrot.slane %v13125, 4
  %v13128 = vor.u32 %v13127, %v13123
  %v13129 = vrot.slane %v13128, 4
  %v13131 = vshll.u32 %v12933, 16
  %v13133 = vrot.slane %v13131, 5
  %v13134 = vsel %vm135, %v13129, %v13133
  %v13136 = vshrl.u32 %v12934, 16
  %v13138 = vrot.slane %v13136, 4
  %v13139 = vshll.u32 %v12934, 16
  %v13141 = vrot.slane %v13139, 5
  %v13142 = vor.u32 %v13138, %v13141
  %v13143 = vrot.slane %v13142, 4
  %v13145 = vshll.u32 %v12935, 16
  %v13147 = vrot.slane %v13145, 5
  %v13148 = vsel %vm135, %v13143, %v13147
  %v13149 = vshrl.u32 %v12935, 16
  %v13151 = vrot.slane %v13149, 4
  %v13152 = vor.u32 %v13151, %v13147
  %v13153 = vrot.slane %v13152, 4
  %v13155 = vshll.u32 %v12936, 16
  %v13157 = vrot.slane %v13155, 5
  %v13158 = vsel %vm135, %v13153, %v13157
  %v13160 = vshrl.u32 %v12937, 16
  %v13162 = vrot.slane %v13160, 4
  %v13163 = vshll.u32 %v12937, 16
  %v13165 = vrot.slane %v13163, 5
  %v13166 = vor.u32 %v13162, %v13165
  %v13167 = vrot.slane %v13166, 4
  %v13169 = vshll.u32 %v12938, 16
  %v13171 = vrot.slane %v13169, 5
  %v13172 = vsel %vm135, %v13167, %v13171
  %v13173 = vshrl.u32 %v12938, 16
  %v13175 = vrot.slane %v13173, 4
  %v13176 = vor.u32 %v13175, %v13171
  %v13177 = vrot.slane %v13176, 4
  %v13179 = vshll.u32 %v12939, 16
  %v13181 = vrot.slane %v13179, 5
  %v13182 = vsel %vm135, %v13177, %v13181
  %v13184 = vshrl.u32 %v12940, 16
  %v13186 = vrot.slane %v13184, 4
  %v13187 = vshll.u32 %v12940, 16
  %v13189 = vrot.slane %v13187, 5
  %v13190 = vor.u32 %v13186, %v13189
  %v13191 = vrot.slane %v13190, 4
  %v13193 = vshll.u32 %v12941, 16
  %v13195 = vrot.slane %v13193, 5
  %v13196 = vsel %vm135, %v13191, %v13195
  %v13197 = vshrl.u32 %v12941, 16
  %v13199 = vrot.slane %v13197, 4
  %v13200 = vor.u32 %v13199, %v13195
  %v13201 = vrot.slane %v13200, 4
  %v13203 = vshll.u32 %v12942, 16
  %v13205 = vrot.slane %v13203, 5
  %v13206 = vsel %vm135, %v13201, %v13205
  %v13208 = vshrl.u32 %v12943, 16
  %v13210 = vrot.slane %v13208, 4
  %v13211 = vshll.u32 %v12943, 16
  %v13213 = vrot.slane %v13211, 5
  %v13214 = vor.u32 %v13210, %v13213
  %v13215 = vrot.slane %v13214, 4
  %v13217 = vshll.u32 %v12944, 16
  %v13219 = vrot.slane %v13217, 5
  %v13220 = vsel %vm135, %v13215, %v13219
  %v13221 = vshrl.u32 %v12944, 16
  %v13223 = vrot.slane %v13221, 4
  %v13224 = vor.u32 %v13223, %v13219
  %v13225 = vrot.slane %v13224, 4
  %v13227 = vshll.u32 %v12945, 16
  %v13229 = vrot.slane %v13227, 5
  %v13230 = vsel %vm135, %v13225, %v13229
  %v13232 = vshrl.u32 %v12946, 16
  %v13234 = vrot.slane %v13232, 4
  %v13235 = vshll.u32 %v12946, 16
  %v13237 = vrot.slane %v13235, 5
  %v13238 = vor.u32 %v13234, %v13237
  %v13239 = vrot.slane %v13238, 4
  %v13241 = vshll.u32 %v12947, 16
  %v13243 = vrot.slane %v13241, 5
  %v13244 = vsel %vm135, %v13239, %v13243
  %v13245 = vshrl.u32 %v12947, 16
  %v13247 = vrot.slane %v13245, 4
  %v13248 = vor.u32 %v13247, %v13243
  %v13249 = vrot.slane %v13248, 4
  %v13251 = vshll.u32 %v12948, 16
  %v13253 = vrot.slane %v13251, 5
  %v13254 = vsel %vm135, %v13249, %v13253
  %v13256 = vshrl.u32 %v12949, 16
  %v13258 = vrot.slane %v13256, 4
  %v13259 = vshll.u32 %v12949, 16
  %v13261 = vrot.slane %v13259, 5
  %v13262 = vor.u32 %v13258, %v13261
  %v13263 = vrot.slane %v13262, 4
  %v13265 = vshll.u32 %v12950, 16
  %v13267 = vrot.slane %v13265, 5
  %v13268 = vsel %vm135, %v13263, %v13267
  %v13269 = vshrl.u32 %v12950, 16
  %v13271 = vrot.slane %v13269, 4
  %v13272 = vor.u32 %v13271, %v13267
  %v13273 = vrot.slane %v13272, 4
  %v13275 = vshll.u32 %v12951, 16
  %v13277 = vrot.slane %v13275, 5
  %v13278 = vsel %vm135, %v13273, %v13277
  %v13280 = vshrl.u32 %v12952, 16
  %v13282 = vrot.slane %v13280, 4
  %v13283 = vshll.u32 %v12952, 16
  %v13285 = vrot.slane %v13283, 5
  %v13286 = vor.u32 %v13282, %v13285
  %v13287 = vrot.slane %v13286, 4
  %v13289 = vshll.u32 %v12953, 16
  %v13291 = vrot.slane %v13289, 5
  %v13292 = vsel %vm135, %v13287, %v13291
  %v13293 = vshrl.u32 %v12953, 16
  %v13295 = vrot.slane %v13293, 4
  %v13296 = vor.u32 %v13295, %v13291
  %v13297 = vrot.slane %v13296, 4
  %v13299 = vshll.u32 %v12954, 16
  %v13301 = vrot.slane %v13299, 5
  %v13302 = vsel %vm135, %v13297, %v13301
  %v13304 = vshrl.u32 %v12955, 16
  %v13306 = vrot.slane %v13304, 4
  %v13307 = vshll.u32 %v12955, 16
  %v13309 = vrot.slane %v13307, 5
  %v13310 = vor.u32 %v13306, %v13309
  %v13311 = vrot.slane %v13310, 4
  %v13313 = vshll.u32 %v12956, 16
  %v13315 = vrot.slane %v13313, 5
  %v13316 = vsel %vm135, %v13311, %v13315
  %v13317 = vshrl.u32 %v12956, 16
  %v13319 = vrot.slane %v13317, 4
  %v13320 = vor.u32 %v13319, %v13315
  %v13321 = vrot.slane %v13320, 4
  %v13323 = vshll.u32 %v12957, 16
  %v13325 = vrot.slane %v13323, 5
  %v13326 = vsel %vm135, %v13321, %v13325
  %v13328 = vshrl.u32 %v12958, 16
  %v13330 = vrot.slane %v13328, 4
  %v13331 = vshll.u32 %v12958, 16
  %v13333 = vrot.slane %v13331, 5
  %v13334 = vor.u32 %v13330, %v13333
  %v13335 = vrot.slane %v13334, 4
  %v13337 = vshll.u32 %v12959, 16
  %v13339 = vrot.slane %v13337, 5
  %v13340 = vsel %vm135, %v13335, %v13339
  %v13341 = vshrl.u32 %v12959, 16
  %v13343 = vrot.slane %v13341, 4
  %v13344 = vor.u32 %v13343, %v13339
  %v13345 = vrot.slane %v13344, 4
  %v13347 = vshll.u32 %v12960, 16
  %v13349 = vrot.slane %v13347, 5
  %v13350 = vsel %vm135, %v13345, %v13349
  %v13352 = vshrl.u32 %v12961, 16
  %v13354 = vrot.slane %v13352, 4
  %v13355 = vshll.u32 %v12961, 16
  %v13357 = vrot.slane %v13355, 5
  %v13358 = vor.u32 %v13354, %v13357
  %v13359 = vrot.slane %v13358, 4
  %v13361 = vshll.u32 %v12962, 16
  %v13363 = vrot.slane %v13361, 5
  %v13364 = vsel %vm135, %v13359, %v13363
  %v13365 = vshrl.u32 %v12962, 16
  %v13367 = vrot.slane %v13365, 4
  %v13368 = vor.u32 %v13367, %v13363
  %v13369 = vrot.slane %v13368, 4
  %v13371 = vshll.u32 %v12963, 16
  %v13373 = vrot.slane %v13371, 5
  %v13374 = vsel %vm135, %v13369, %v13373
  %v13376 = vshrl.u32 %v12964, 16
  %v13378 = vrot.slane %v13376, 4
  %v13379 = vshll.u32 %v12964, 16
  %v13381 = vrot.slane %v13379, 5
  %v13382 = vor.u32 %v13378, %v13381
  %v13383 = vrot.slane %v13382, 4
  %v13385 = vshll.u32 %v12965, 16
  %v13387 = vrot.slane %v13385, 5
  %v13388 = vsel %vm135, %v13383, %v13387
  %v13389 = vshrl.u32 %v12965, 16
  %v13391 = vrot.slane %v13389, 4
  %v13392 = vor.u32 %v13391, %v13387
  %v13393 = vrot.slane %v13392, 4
  %v13395 = vshll.u32 %v12966, 16
  %v13397 = vrot.slane %v13395, 5
  %v13398 = vsel %vm135, %v13393, %v13397
  %v13400 = vshrl.u32 %v12967, 16
  %v13402 = vrot.slane %v13400, 4
  %v13403 = vshll.u32 %v12967, 16
  %v13405 = vrot.slane %v13403, 5
  %v13406 = vor.u32 %v13402, %v13405
  %v13407 = vrot.slane %v13406, 4
  %v13409 = vshll.u32 %v12968, 16
  %v13411 = vrot.slane %v13409, 5
  %v13412 = vsel %vm135, %v13407, %v13411
  %v13413 = vshrl.u32 %v12968, 16
  %v13415 = vrot.slane %v13413, 4
  %v13416 = vor.u32 %v13415, %v13411
  %v13417 = vrot.slane %v13416, 4
  %v13419 = vshll.u32 %v12969, 16
  %v13421 = vrot.slane %v13419, 5
  %v13422 = vsel %vm135, %v13417, %v13421
  %v13424 = vshrl.u32 %v12970, 16
  %v13426 = vrot.slane %v13424, 4
  %v13427 = vshll.u32 %v12970, 16
  %v13429 = vrot.slane %v13427, 5
  %v13430 = vor.u32 %v13426, %v13429
  %v13431 = vrot.slane %v13430, 4
  %v13433 = vshll.u32 %v12971, 16
  %v13435 = vrot.slane %v13433, 5
  %v13436 = vsel %vm135, %v13431, %v13435
  %v13437 = vshrl.u32 %v12971, 16
  %v13439 = vrot.slane %v13437, 4
  %v13440 = vor.u32 %v13439, %v13435
  %v13441 = vrot.slane %v13440, 4
  %v13443 = vshll.u32 %v12972, 16
  %v13445 = vrot.slane %v13443, 5
  %v13446 = vsel %vm135, %v13441, %v13445
  %v13448 = vshrl.u32 %v12973, 16
  %v13450 = vrot.slane %v13448, 4
  %v13451 = vshll.u32 %v12973, 16
  %v13453 = vrot.slane %v13451, 5
  %v13454 = vor.u32 %v13450, %v13453
  %v13455 = vrot.slane %v13454, 4
  %v13457 = vshll.u32 %v12974, 16
  %v13459 = vrot.slane %v13457, 5
  %v13460 = vsel %vm135, %v13455, %v13459
  %v13461 = vshrl.u32 %v12974, 16
  %v13463 = vrot.slane %v13461, 4
  %v13464 = vor.u32 %v13463, %v13459
  %v13465 = vrot.slane %v13464, 4
  %v13467 = vshll.u32 %v12975, 16
  %v13469 = vrot.slane %v13467, 5
  %v13470 = vsel %vm135, %v13465, %v13469
  %v13472 = vshrl.u32 %v12976, 16
  %v13474 = vrot.slane %v13472, 4
  %v13475 = vshll.u32 %v12976, 16
  %v13477 = vrot.slane %v13475, 5
  %v13478 = vor.u32 %v13474, %v13477
  %v13479 = vrot.slane %v13478, 4
  %v13481 = vshll.u32 %v12977, 16
  %v13483 = vrot.slane %v13481, 5
  %v13484 = vsel %vm135, %v13479, %v13483
  %v13485 = vshrl.u32 %v12977, 16
  %v13487 = vrot.slane %v13485, 4
  %v13488 = vor.u32 %v13487, %v13483
  %v13489 = vrot.slane %v13488, 4
  %v13491 = vshll.u32 %v12978, 16
  %v13493 = vrot.slane %v13491, 5
  %v13494 = vsel %vm135, %v13489, %v13493
  %v13496 = vshrl.u32 %v12979, 16
  %v13498 = vrot.slane %v13496, 4
  %v13499 = vshll.u32 %v12979, 16
  %v13501 = vrot.slane %v13499, 5
  %v13502 = vor.u32 %v13498, %v13501
  %v13503 = vrot.slane %v13502, 4
  %v13505 = vshll.u32 %v12980, 16
  %v13507 = vrot.slane %v13505, 5
  %v13508 = vsel %vm135, %v13503, %v13507
  %v13509 = vshrl.u32 %v12980, 16
  %v13511 = vrot.slane %v13509, 4
  %v13512 = vor.u32 %v13511, %v13507
  %v13513 = vrot.slane %v13512, 4
  %v13515 = vshll.u32 %v12981, 16
  %v13517 = vrot.slane %v13515, 5
  %v13518 = vsel %vm135, %v13513, %v13517
  %v13520 = vshrl.u32 %v12982, 16
  %v13522 = vrot.slane %v13520, 4
  %v13523 = vshll.u32 %v12982, 16
  %v13525 = vrot.slane %v13523, 5
  %v13526 = vor.u32 %v13522, %v13525
  %v13527 = vrot.slane %v13526, 4
  %v13529 = vshll.u32 %v12983, 16
  %v13531 = vrot.slane %v13529, 5
  %v13532 = vsel %vm135, %v13527, %v13531
  %v13533 = vshrl.u32 %v12983, 16
  %v13535 = vrot.slane %v13533, 4
  %v13536 = vor.u32 %v13535, %v13531
  %v13537 = vrot.slane %v13536, 4
  %v13539 = vshll.u32 %v12984, 16
  %v13541 = vrot.slane %v13539, 5
  %v13542 = vsel %vm135, %v13537, %v13541
  %v13544 = vshrl.u32 %v12985, 16
  %v13546 = vrot.slane %v13544, 4
  %v13547 = vshll.u32 %v12985, 16
  %v13549 = vrot.slane %v13547, 5
  %v13550 = vor.u32 %v13546, %v13549
  %v13551 = vrot.slane %v13550, 4
  %v13553 = vshll.u32 %v12986, 16
  %v13555 = vrot.slane %v13553, 5
  %v13556 = vsel %vm135, %v13551, %v13555
  %v13557 = vshrl.u32 %v12986, 16
  %v13559 = vrot.slane %v13557, 4
  %v13560 = vor.u32 %v13559, %v13555
  %v13561 = vrot.slane %v13560, 4
  %v13563 = vshll.u32 %v12987, 16
  %v13565 = vrot.slane %v13563, 5
  %v13566 = vsel %vm135, %v13561, %v13565
  %v13568 = vshrl.u32 %v12988, 16
  %v13570 = vrot.slane %v13568, 4
  %v13571 = vshll.u32 %v12988, 16
  %v13573 = vrot.slane %v13571, 5
  %v13574 = vor.u32 %v13570, %v13573
  %v13575 = vrot.slane %v13574, 4
  %v13577 = vshll.u32 %v12989, 16
  %v13579 = vrot.slane %v13577, 5
  %v13580 = vsel %vm135, %v13575, %v13579
  %v13581 = vshrl.u32 %v12989, 16
  %v13583 = vrot.slane %v13581, 4
  %v13584 = vor.u32 %v13583, %v13579
  %v13585 = vrot.slane %v13584, 4
  %v13587 = vshll.u32 %v12990, 16
  %v13589 = vrot.slane %v13587, 5
  %v13590 = vsel %vm135, %v13585, %v13589
  %v13592 = vshrl.u32 %v12991, 16
  %v13594 = vrot.slane %v13592, 4
  %v13595 = vshll.u32 %v12991, 16
  %v13597 = vrot.slane %v13595, 5
  %v13598 = vor.u32 %v13594, %v13597
  %v13599 = vrot.slane %v13598, 4
  %v13601 = vshll.u32 %v12992, 16
  %v13603 = vrot.slane %v13601, 5
  %v13604 = vsel %vm135, %v13599, %v13603
  %v13605 = vshrl.u32 %v12992, 16
  %v13607 = vrot.slane %v13605, 4
  %v13608 = vor.u32 %v13607, %v13603
  %v13609 = vrot.slane %v13608, 4
  %v13611 = vshll.u32 %v12993, 16
  %v13613 = vrot.slane %v13611, 5
  %v13614 = vsel %vm135, %v13609, %v13613
  %v13616 = vshrl.u32 %v12994, 16
  %v13618 = vrot.slane %v13616, 4
  %v13619 = vshll.u32 %v12994, 16
  %v13621 = vrot.slane %v13619, 5
  %v13622 = vor.u32 %v13618, %v13621
  %v13623 = vrot.slane %v13622, 4
  %v13625 = vshll.u32 %v12995, 16
  %v13627 = vrot.slane %v13625, 5
  %v13628 = vsel %vm135, %v13623, %v13627
  %v13629 = vshrl.u32 %v12995, 16
  %v13631 = vrot.slane %v13629, 4
  %v13632 = vor.u32 %v13631, %v13627
  %v13633 = vrot.slane %v13632, 4
  %v13635 = vshll.u32 %v12996, 16
  %v13637 = vrot.slane %v13635, 5
  %v13638 = vsel %vm135, %v13633, %v13637
  %v13640 = vshrl.u32 %v12997, 16
  %v13642 = vrot.slane %v13640, 4
  %v13643 = vshll.u32 %v12997, 16
  %v13645 = vrot.slane %v13643, 5
  %v13646 = vor.u32 %v13642, %v13645
  %v13647 = vrot.slane %v13646, 4
  %v13649 = vshll.u32 %v12998, 16
  %v13651 = vrot.slane %v13649, 5
  %v13652 = vsel %vm135, %v13647, %v13651
  %v13653 = vshrl.u32 %v12998, 16
  %v13655 = vrot.slane %v13653, 4
  %v13656 = vor.u32 %v13655, %v13651
  %v13657 = vrot.slane %v13656, 4
  %v13659 = vshll.u32 %v12999, 16
  %v13661 = vrot.slane %v13659, 5
  %v13662 = vsel %vm135, %v13657, %v13661
  %v13664 = vshrl.u32 %v13000, 16
  %v13666 = vrot.slane %v13664, 4
  %v13667 = vshll.u32 %v13000, 16
  %v13669 = vrot.slane %v13667, 5
  %v13670 = vor.u32 %v13666, %v13669
  %v13671 = vrot.slane %v13670, 4
  %v13673 = vshll.u32 %v13001, 16
  %v13675 = vrot.slane %v13673, 5
  %v13676 = vsel %vm135, %v13671, %v13675
  %v13677 = vshrl.u32 %v13001, 16
  %v13679 = vrot.slane %v13677, 4
  %v13680 = vor.u32 %v13679, %v13675
  %v13681 = vrot.slane %v13680, 4
  %v13683 = vshll.u32 %v13002, 16
  %v13685 = vrot.slane %v13683, 5
  %v13686 = vsel %vm135, %v13681, %v13685
  %v13688 = vshrl.u32 %v13003, 16
  %v13690 = vrot.slane %v13688, 4
  %v13691 = vshll.u32 %v13003, 16
  %v13693 = vrot.slane %v13691, 5
  %v13694 = vor.u32 %v13690, %v13693
  %v13695 = vrot.slane %v13694, 4
  %v13697 = vshll.u32 %v13004, 16
  %v13699 = vrot.slane %v13697, 5
  %v13700 = vsel %vm135, %v13695, %v13699
  %v13701 = vshrl.u32 %v13004, 16
  %v13703 = vrot.slane %v13701, 4
  %v13704 = vor.u32 %v13703, %v13699
  %v13705 = vrot.slane %v13704, 4
  %v13707 = vshll.u32 %v13005, 16
  %v13709 = vrot.slane %v13707, 5
  %v13710 = vsel %vm135, %v13705, %v13709
  %v13712 = vshrl.u32 %v13006, 16
  %v13714 = vrot.slane %v13712, 4
  %v13715 = vshll.u32 %v13006, 16
  %v13717 = vrot.slane %v13715, 5
  %v13718 = vor.u32 %v13714, %v13717
  %v13719 = vrot.slane %v13718, 4
  %v13721 = vshll.u32 %v13007, 16
  %v13723 = vrot.slane %v13721, 5
  %v13724 = vsel %vm135, %v13719, %v13723
  %v13725 = vshrl.u32 %v13007, 16
  %v13727 = vrot.slane %v13725, 4
  %v13728 = vor.u32 %v13727, %v13723
  %v13729 = vrot.slane %v13728, 4
  %v13731 = vshll.u32 %v13008, 16
  %v13733 = vrot.slane %v13731, 5
  %v13734 = vsel %vm135, %v13729, %v13733
  %v13736 = vshrl.u32 %v13009, 16
  %v13738 = vrot.slane %v13736, 4
  %v13739 = vshll.u32 %v13009, 16
  %v13741 = vrot.slane %v13739, 5
  %v13742 = vor.u32 %v13738, %v13741
  %v13743 = vrot.slane %v13742, 4
  %v13745 = vshll.u32 %v13010, 16
  %v13747 = vrot.slane %v13745, 5
  %v13748 = vsel %vm135, %v13743, %v13747
  %v13749 = vshrl.u32 %v13010, 16
  %v13751 = vrot.slane %v13749, 4
  %v13752 = vor.u32 %v13751, %v13747
  %v13753 = vrot.slane %v13752, 4
  %v13755 = vshll.u32 %v13011, 16
  %v13757 = vrot.slane %v13755, 5
  %v13758 = vsel %vm135, %v13753, %v13757
  %v13760 = vshrl.u32 %v13012, 16
  %v13762 = vrot.slane %v13760, 4
  %v13763 = vshll.u32 %v13012, 16
  %v13765 = vrot.slane %v13763, 5
  %v13766 = vor.u32 %v13762, %v13765
  %v13767 = vrot.slane %v13766, 4
  %v13769 = vshll.u32 %v13013, 16
  %v13771 = vrot.slane %v13769, 5
  %v13772 = vsel %vm135, %v13767, %v13771
  %v13773 = vshrl.u32 %v13013, 16
  %v13775 = vrot.slane %v13773, 4
  %v13776 = vor.u32 %v13775, %v13771
  %v13777 = vrot.slane %v13776, 4
  %v13779 = vshll.u32 %v13014, 16
  %v13781 = vrot.slane %v13779, 5
  %v13782 = vsel %vm135, %v13777, %v13781
  %v13783 = vld [vmem:[%s7] sm:$0x3]
  %v13784 = vunpack.c.l.b16 %v13028
  %v13785 = vunpack.c.l.b16 %v13038
  %v13786 = vunpack.c.l.b16 %v13052
  %v13787 = vunpack.c.l.b16 %v13062
  %v13788 = vunpack.c.l.b16 %v13076
  %v13789 = vunpack.c.l.b16 %v13086
  %v13790 = vunpack.c.l.b16 %v13100
  %v13791 = vunpack.c.l.b16 %v13110
  %v13792 = vunpack.c.l.b16 %v13124
  %v13793 = vunpack.c.l.b16 %v13134
  %v13794 = vunpack.c.l.b16 %v13148
  %v13795 = vunpack.c.l.b16 %v13158
  %v13796 = vunpack.c.l.b16 %v13172
  %v13797 = vunpack.c.l.b16 %v13182
  %v13798 = vunpack.c.l.b16 %v13196
  %v13799 = vunpack.c.l.b16 %v13206
  %v13800 = vunpack.c.l.b16 %v13220
  %v13801 = vunpack.c.l.b16 %v13230
  %v13802 = vunpack.c.l.b16 %v13244
  %v13803 = vunpack.c.l.b16 %v13254
  %v13804 = vunpack.c.l.b16 %v13268
  %v13805 = vunpack.c.l.b16 %v13278
  %v13806 = vunpack.c.l.b16 %v13292
  %v13807 = vunpack.c.l.b16 %v13302
  %v13808 = vunpack.c.l.b16 %v13316
  %v13809 = vunpack.c.l.b16 %v13326
  %v13810 = vunpack.c.l.b16 %v13340
  %v13811 = vunpack.c.l.b16 %v13350
  %v13812 = vunpack.c.l.b16 %v13364
  %v13813 = vunpack.c.l.b16 %v13374
  %v13814 = vunpack.c.l.b16 %v13388
  %v13815 = vunpack.c.l.b16 %v13398
  %v13816 = vunpack.c.l.b16 %v13412
  %v13817 = vunpack.c.l.b16 %v13422
  %v13818 = vunpack.c.l.b16 %v13436
  %v13819 = vunpack.c.l.b16 %v13446
  %v13820 = vunpack.c.l.b16 %v13460
  %v13821 = vunpack.c.l.b16 %v13470
  %v13822 = vunpack.c.l.b16 %v13484
  %v13823 = vunpack.c.l.b16 %v13494
  %v13824 = vunpack.c.l.b16 %v13508
  %v13825 = vunpack.c.l.b16 %v13518
  %v13826 = vunpack.c.l.b16 %v13532
  %v13827 = vunpack.c.l.b16 %v13542
  %v13828 = vunpack.c.l.b16 %v13556
  %v13829 = vunpack.c.l.b16 %v13566
  %v13830 = vunpack.c.l.b16 %v13580
  %v13831 = vunpack.c.l.b16 %v13590
  %v13832 = vunpack.c.l.b16 %v13604
  %v13833 = vunpack.c.l.b16 %v13614
  %v13834 = vunpack.c.l.b16 %v13628
  %v13835 = vunpack.c.l.b16 %v13638
  %v13836 = vunpack.c.l.b16 %v13652
  %v13837 = vunpack.c.l.b16 %v13662
  %v13838 = vunpack.c.l.b16 %v13676
  %v13839 = vunpack.c.l.b16 %v13686
  %v13840 = vunpack.c.l.b16 %v13700
  %v13841 = vunpack.c.l.b16 %v13710
  %v13842 = vunpack.c.l.b16 %v13724
  %v13843 = vunpack.c.l.b16 %v13734
  %v13844 = vunpack.c.l.b16 %v13748
  %v13845 = vunpack.c.l.b16 %v13758
  %v13846 = vunpack.c.l.b16 %v13772
  %v13847 = vunpack.c.l.b16 %v13782
  %v13848 = vpack.c.b16 %v13785, %v13784
  %v13849 = vpack.c.b16 %v13787, %v13786
  %v13850 = vpack.c.b16 %v13789, %v13788
  %v13851 = vpack.c.b16 %v13791, %v13790
  %v13852 = vpack.c.b16 %v13793, %v13792
  %v13853 = vpack.c.b16 %v13795, %v13794
  %v13854 = vpack.c.b16 %v13797, %v13796
  %v13855 = vpack.c.b16 %v13799, %v13798
  %v13856 = vpack.c.b16 %v13801, %v13800
  %v13857 = vpack.c.b16 %v13803, %v13802
  %v13858 = vpack.c.b16 %v13805, %v13804
  %v13859 = vpack.c.b16 %v13807, %v13806
  %v13860 = vpack.c.b16 %v13809, %v13808
  %v13861 = vpack.c.b16 %v13811, %v13810
  %v13862 = vpack.c.b16 %v13813, %v13812
  %v13863 = vpack.c.b16 %v13815, %v13814
  %v13864 = vpack.c.b16 %v13817, %v13816
  %v13865 = vpack.c.b16 %v13819, %v13818
  %v13866 = vpack.c.b16 %v13821, %v13820
  %v13867 = vpack.c.b16 %v13823, %v13822
  %v13868 = vpack.c.b16 %v13825, %v13824
  %v13869 = vpack.c.b16 %v13827, %v13826
  %v13870 = vpack.c.b16 %v13829, %v13828
  %v13871 = vpack.c.b16 %v13831, %v13830
  %v13872 = vpack.c.b16 %v13833, %v13832
  %v13873 = vpack.c.b16 %v13835, %v13834
  %v13874 = vpack.c.b16 %v13837, %v13836
  %v13875 = vpack.c.b16 %v13839, %v13838
  %v13876 = vpack.c.b16 %v13841, %v13840
  %v13877 = vpack.c.b16 %v13843, %v13842
  %v13878 = vpack.c.b16 %v13845, %v13844
  %v13879 = vpack.c.b16 %v13847, %v13846
  %v13881 = vsel %vm1002, %v13848, 0
  %v13884 = vsel %vm1002, %v13849, 0
  %v13887 = vsel %vm1002, %v13850, 0
  %v13890 = vsel %vm1002, %v13851, 0
  %v13893 = vsel %vm1002, %v13852, 0
  %v13896 = vsel %vm1002, %v13853, 0
  %v13899 = vsel %vm1002, %v13854, 0
  %v13902 = vsel %vm1002, %v13855, 0
  %v13905 = vsel %vm1002, %v13856, 0
  %v13908 = vsel %vm1002, %v13857, 0
  %v13911 = vsel %vm1002, %v13858, 0
  %v13914 = vsel %vm1002, %v13859, 0
  %v13917 = vsel %vm1002, %v13860, 0
  %v13920 = vsel %vm1002, %v13861, 0
  %v13923 = vsel %vm1002, %v13862, 0
  %v13926 = vsel %vm1002, %v13863, 0
  %v13929 = vsel %vm1002, %v13864, 0
  %v13932 = vsel %vm1002, %v13865, 0
  %v13935 = vsel %vm1002, %v13866, 0
  %v13938 = vsel %vm1002, %v13867, 0
  %v13941 = vsel %vm1002, %v13868, 0
  %v13944 = vsel %vm1002, %v13869, 0
  %v13947 = vsel %vm1002, %v13870, 0
  %v13950 = vsel %vm1002, %v13871, 0
  %v13953 = vsel %vm1002, %v13872, 0
  %v13956 = vsel %vm1002, %v13873, 0
  %v13959 = vsel %vm1002, %v13874, 0
  %v13962 = vsel %vm1002, %v13875, 0
  %v13965 = vsel %vm1002, %v13876, 0
  %v13968 = vsel %vm1002, %v13877, 0
  %v13971 = vsel %vm1002, %v13878, 0
  %v13974 = vsel %vm1002, %v13879, 0
  %v13977 = vsel %vm1099, %v13783, 0
  %13979 = vmatpush.bf16.msra.mxu0 0
  %13980 = vmatpush.bf16.msra.mxu0 0
  %13981 = vmatpush.bf16.msra.mxu0 0
  %13982 = vmatpush.bf16.msra.mxu0 0
  %13983 = vmatpush.bf16.msra.mxu0 0
  %13984 = vmatpush.bf16.msra.mxu0 0
  %13985 = vmatpush.bf16.msra.mxu0 0
  %13986 = vmatpush.bf16.msra.mxu0 %v13977
  %13987 = vmatmul.bf16.gmra.mxu0 %v13881
  %v13988 = vpop.f32.mrf.mxu0
  %v13989 = vadd.f32 0.0, %v13988
  %v13990 = vpop.f32.mrf.mxu0
  %v13991 = vadd.f32 0.0, %v13990
  %13992 = vmatmul.bf16.gmra.mxu0 %v13884
  %v13993 = vpop.f32.mrf.mxu0
  %v13994 = vadd.f32 0.0, %v13993
  %v13995 = vpop.f32.mrf.mxu0
  %v13996 = vadd.f32 0.0, %v13995
  %13997 = vmatmul.bf16.gmra.mxu0 %v13887
  %v13998 = vpop.f32.mrf.mxu0
  %v13999 = vadd.f32 0.0, %v13998
  %v14000 = vpop.f32.mrf.mxu0
  %v14001 = vadd.f32 0.0, %v14000
  %14002 = vmatmul.bf16.gmra.mxu0 %v13890
  %v14003 = vpop.f32.mrf.mxu0
  %v14004 = vadd.f32 0.0, %v14003
  %v14005 = vpop.f32.mrf.mxu0
  %v14006 = vadd.f32 0.0, %v14005
  %14007 = vmatmul.bf16.gmra.mxu0 %v13893
  %v14008 = vpop.f32.mrf.mxu0
  %v14009 = vadd.f32 0.0, %v14008
  %v14010 = vpop.f32.mrf.mxu0
  %v14011 = vadd.f32 0.0, %v14010
  %14012 = vmatmul.bf16.gmra.mxu0 %v13896
  %v14013 = vpop.f32.mrf.mxu0
  %v14014 = vadd.f32 0.0, %v14013
  %v14015 = vpop.f32.mrf.mxu0
  %v14016 = vadd.f32 0.0, %v14015
  %14017 = vmatmul.bf16.gmra.mxu0 %v13899
  %v14018 = vpop.f32.mrf.mxu0
  %v14019 = vadd.f32 0.0, %v14018
  %v14020 = vpop.f32.mrf.mxu0
  %v14021 = vadd.f32 0.0, %v14020
  %14022 = vmatmul.bf16.gmra.mxu0 %v13902
  %v14023 = vpop.f32.mrf.mxu0
  %v14024 = vadd.f32 0.0, %v14023
  %v14025 = vpop.f32.mrf.mxu0
  %v14026 = vadd.f32 0.0, %v14025
  %14027 = vmatmul.bf16.gmra.mxu0 %v13905
  %v14028 = vpop.f32.mrf.mxu0
  %v14029 = vadd.f32 0.0, %v14028
  %v14030 = vpop.f32.mrf.mxu0
  %v14031 = vadd.f32 0.0, %v14030
  %14032 = vmatmul.bf16.gmra.mxu0 %v13908
  %v14033 = vpop.f32.mrf.mxu0
  %v14034 = vadd.f32 0.0, %v14033
  %v14035 = vpop.f32.mrf.mxu0
  %v14036 = vadd.f32 0.0, %v14035
  %14037 = vmatmul.bf16.gmra.mxu0 %v13911
  %v14038 = vpop.f32.mrf.mxu0
  %v14039 = vadd.f32 0.0, %v14038
  %v14040 = vpop.f32.mrf.mxu0
  %v14041 = vadd.f32 0.0, %v14040
  %14042 = vmatmul.bf16.gmra.mxu0 %v13914
  %v14043 = vpop.f32.mrf.mxu0
  %v14044 = vadd.f32 0.0, %v14043
  %v14045 = vpop.f32.mrf.mxu0
  %v14046 = vadd.f32 0.0, %v14045
  %14047 = vmatmul.bf16.gmra.mxu0 %v13917
  %v14048 = vpop.f32.mrf.mxu0
  %v14049 = vadd.f32 0.0, %v14048
  %v14050 = vpop.f32.mrf.mxu0
  %v14051 = vadd.f32 0.0, %v14050
  %14052 = vmatmul.bf16.gmra.mxu0 %v13920
  %v14053 = vpop.f32.mrf.mxu0
  %v14054 = vadd.f32 0.0, %v14053
  %v14055 = vpop.f32.mrf.mxu0
  %v14056 = vadd.f32 0.0, %v14055
  %14057 = vmatmul.bf16.gmra.mxu0 %v13923
  %v14058 = vpop.f32.mrf.mxu0
  %v14059 = vadd.f32 0.0, %v14058
  %v14060 = vpop.f32.mrf.mxu0
  %v14061 = vadd.f32 0.0, %v14060
  %14062 = vmatmul.bf16.gmra.mxu0 %v13926
  %v14063 = vpop.f32.mrf.mxu0
  %v14064 = vadd.f32 0.0, %v14063
  %v14065 = vpop.f32.mrf.mxu0
  %v14066 = vadd.f32 0.0, %v14065
  %14067 = vmatmul.bf16.gmra.mxu0 %v13929
  %v14068 = vpop.f32.mrf.mxu0
  %v14069 = vadd.f32 0.0, %v14068
  %v14070 = vpop.f32.mrf.mxu0
  %v14071 = vadd.f32 0.0, %v14070
  %14072 = vmatmul.bf16.gmra.mxu0 %v13932
  %v14073 = vpop.f32.mrf.mxu0
  %v14074 = vadd.f32 0.0, %v14073
  %v14075 = vpop.f32.mrf.mxu0
  %v14076 = vadd.f32 0.0, %v14075
  %14077 = vmatmul.bf16.gmra.mxu0 %v13935
  %v14078 = vpop.f32.mrf.mxu0
  %v14079 = vadd.f32 0.0, %v14078
  %v14080 = vpop.f32.mrf.mxu0
  %v14081 = vadd.f32 0.0, %v14080
  %14082 = vmatmul.bf16.gmra.mxu0 %v13938
  %v14083 = vpop.f32.mrf.mxu0
  %v14084 = vadd.f32 0.0, %v14083
  %v14085 = vpop.f32.mrf.mxu0
  %v14086 = vadd.f32 0.0, %v14085
  %14087 = vmatmul.bf16.gmra.mxu0 %v13941
  %v14088 = vpop.f32.mrf.mxu0
  %v14089 = vadd.f32 0.0, %v14088
  %v14090 = vpop.f32.mrf.mxu0
  %v14091 = vadd.f32 0.0, %v14090
  %14092 = vmatmul.bf16.gmra.mxu0 %v13944
  %v14093 = vpop.f32.mrf.mxu0
  %v14094 = vadd.f32 0.0, %v14093
  %v14095 = vpop.f32.mrf.mxu0
  %v14096 = vadd.f32 0.0, %v14095
  %14097 = vmatmul.bf16.gmra.mxu0 %v13947
  %v14098 = vpop.f32.mrf.mxu0
  %v14099 = vadd.f32 0.0, %v14098
  %v14100 = vpop.f32.mrf.mxu0
  %v14101 = vadd.f32 0.0, %v14100
  %14102 = vmatmul.bf16.gmra.mxu0 %v13950
  %v14103 = vpop.f32.mrf.mxu0
  %v14104 = vadd.f32 0.0, %v14103
  %v14105 = vpop.f32.mrf.mxu0
  %v14106 = vadd.f32 0.0, %v14105
  %14107 = vmatmul.bf16.gmra.mxu0 %v13953
  %v14108 = vpop.f32.mrf.mxu0
  %v14109 = vadd.f32 0.0, %v14108
  %v14110 = vpop.f32.mrf.mxu0
  %v14111 = vadd.f32 0.0, %v14110
  %14112 = vmatmul.bf16.gmra.mxu0 %v13956
  %v14113 = vpop.f32.mrf.mxu0
  %v14114 = vadd.f32 0.0, %v14113
  %v14115 = vpop.f32.mrf.mxu0
  %v14116 = vadd.f32 0.0, %v14115
  %14117 = vmatmul.bf16.gmra.mxu0 %v13959
  %v14118 = vpop.f32.mrf.mxu0
  %v14119 = vadd.f32 0.0, %v14118
  %v14120 = vpop.f32.mrf.mxu0
  %v14121 = vadd.f32 0.0, %v14120
  %14122 = vmatmul.bf16.gmra.mxu0 %v13962
  %v14123 = vpop.f32.mrf.mxu0
  %v14124 = vadd.f32 0.0, %v14123
  %v14125 = vpop.f32.mrf.mxu0
  %v14126 = vadd.f32 0.0, %v14125
  %14127 = vmatmul.bf16.gmra.mxu0 %v13965
  %v14128 = vpop.f32.mrf.mxu0
  %v14129 = vadd.f32 0.0, %v14128
  %v14130 = vpop.f32.mrf.mxu0
  %v14131 = vadd.f32 0.0, %v14130
  %14132 = vmatmul.bf16.gmra.mxu0 %v13968
  %v14133 = vpop.f32.mrf.mxu0
  %v14134 = vadd.f32 0.0, %v14133
  %v14135 = vpop.f32.mrf.mxu0
  %v14136 = vadd.f32 0.0, %v14135
  %14137 = vmatmul.bf16.gmra.mxu0 %v13971
  %v14138 = vpop.f32.mrf.mxu0
  %v14139 = vadd.f32 0.0, %v14138
  %v14140 = vpop.f32.mrf.mxu0
  %v14141 = vadd.f32 0.0, %v14140
  %14142 = vmatmul.bf16.gmra.mxu0 %v13974
  %v14143 = vpop.f32.mrf.mxu0
  %v14144 = vadd.f32 0.0, %v14143
  %v14145 = vpop.f32.mrf.mxu0
  %v14146 = vadd.f32 0.0, %v14145
  %14147 = vdwg.mxu0
  %v14148 = vld [vmem:[%s8] sm:$0x1]
  %v14149 = vld [vmem:[%s9] sm:$0x1]
  %v14150 = vsel %vm7725, %v13989, 0.0
  %v14151 = vsel %vm7725, %v13991, 0.0
  %v14152 = vadd.f32 %v14150, %v14151
  %v14153 = vsel %vm7725, %v13994, 0.0
  %v14154 = vadd.f32 %v14152, %v14153
  %v14155 = vsel %vm7725, %v13996, 0.0
  %v14156 = vadd.f32 %v14154, %v14155
  %v14157 = vsel %vm7725, %v13999, 0.0
  %v14158 = vadd.f32 %v14156, %v14157
  %v14159 = vsel %vm7725, %v14001, 0.0
  %v14160 = vadd.f32 %v14158, %v14159
  %v14161 = vsel %vm7725, %v14004, 0.0
  %v14162 = vadd.f32 %v14160, %v14161
  %v14163 = vsel %vm7725, %v14006, 0.0
  %v14164 = vadd.f32 %v14162, %v14163
  %v14165 = vsel %vm7725, %v14009, 0.0
  %v14166 = vadd.f32 %v14164, %v14165
  %v14167 = vsel %vm7725, %v14011, 0.0
  %v14168 = vadd.f32 %v14166, %v14167
  %v14169 = vsel %vm7725, %v14014, 0.0
  %v14170 = vadd.f32 %v14168, %v14169
  %v14171 = vsel %vm7725, %v14016, 0.0
  %v14172 = vadd.f32 %v14170, %v14171
  %v14173 = vsel %vm7725, %v14019, 0.0
  %v14174 = vadd.f32 %v14172, %v14173
  %v14175 = vsel %vm7725, %v14021, 0.0
  %v14176 = vadd.f32 %v14174, %v14175
  %v14177 = vsel %vm7725, %v14024, 0.0
  %v14178 = vadd.f32 %v14176, %v14177
  %v14179 = vsel %vm7725, %v14026, 0.0
  %v14180 = vadd.f32 %v14178, %v14179
  %v14181 = vsel %vm7725, %v14029, 0.0
  %v14182 = vadd.f32 %v14180, %v14181
  %v14183 = vsel %vm7725, %v14031, 0.0
  %v14184 = vadd.f32 %v14182, %v14183
  %v14185 = vsel %vm7725, %v14034, 0.0
  %v14186 = vadd.f32 %v14184, %v14185
  %v14187 = vsel %vm7725, %v14036, 0.0
  %v14188 = vadd.f32 %v14186, %v14187
  %v14189 = vsel %vm7725, %v14039, 0.0
  %v14190 = vadd.f32 %v14188, %v14189
  %v14191 = vsel %vm7725, %v14041, 0.0
  %v14192 = vadd.f32 %v14190, %v14191
  %v14193 = vsel %vm7725, %v14044, 0.0
  %v14194 = vadd.f32 %v14192, %v14193
  %v14195 = vsel %vm7725, %v14046, 0.0
  %v14196 = vadd.f32 %v14194, %v14195
  %v14197 = vsel %vm7725, %v14049, 0.0
  %v14198 = vadd.f32 %v14196, %v14197
  %v14199 = vsel %vm7725, %v14051, 0.0
  %v14200 = vadd.f32 %v14198, %v14199
  %v14201 = vsel %vm7725, %v14054, 0.0
  %v14202 = vadd.f32 %v14200, %v14201
  %v14203 = vsel %vm7725, %v14056, 0.0
  %v14204 = vadd.f32 %v14202, %v14203
  %v14205 = vsel %vm7725, %v14059, 0.0
  %v14206 = vadd.f32 %v14204, %v14205
  %v14207 = vsel %vm7725, %v14061, 0.0
  %v14208 = vadd.f32 %v14206, %v14207
  %v14209 = vsel %vm7725, %v14064, 0.0
  %v14210 = vadd.f32 %v14208, %v14209
  %v14211 = vsel %vm7725, %v14066, 0.0
  %v14212 = vadd.f32 %v14210, %v14211
  %v14213 = vsel %vm7725, %v14069, 0.0
  %v14214 = vadd.f32 %v14212, %v14213
  %v14215 = vsel %vm7725, %v14071, 0.0
  %v14216 = vadd.f32 %v14214, %v14215
  %v14217 = vsel %vm7725, %v14074, 0.0
  %v14218 = vadd.f32 %v14216, %v14217
  %v14219 = vsel %vm7725, %v14076, 0.0
  %v14220 = vadd.f32 %v14218, %v14219
  %v14221 = vsel %vm7725, %v14079, 0.0
  %v14222 = vadd.f32 %v14220, %v14221
  %v14223 = vsel %vm7725, %v14081, 0.0
  %v14224 = vadd.f32 %v14222, %v14223
  %v14225 = vsel %vm7725, %v14084, 0.0
  %v14226 = vadd.f32 %v14224, %v14225
  %v14227 = vsel %vm7725, %v14086, 0.0
  %v14228 = vadd.f32 %v14226, %v14227
  %v14229 = vsel %vm7725, %v14089, 0.0
  %v14230 = vadd.f32 %v14228, %v14229
  %v14231 = vsel %vm7725, %v14091, 0.0
  %v14232 = vadd.f32 %v14230, %v14231
  %v14233 = vsel %vm7725, %v14094, 0.0
  %v14234 = vadd.f32 %v14232, %v14233
  %v14235 = vsel %vm7725, %v14096, 0.0
  %v14236 = vadd.f32 %v14234, %v14235
  %v14237 = vsel %vm7725, %v14099, 0.0
  %v14238 = vadd.f32 %v14236, %v14237
  %v14239 = vsel %vm7725, %v14101, 0.0
  %v14240 = vadd.f32 %v14238, %v14239
  %v14241 = vsel %vm7725, %v14104, 0.0
  %v14242 = vadd.f32 %v14240, %v14241
  %v14243 = vsel %vm7725, %v14106, 0.0
  %v14244 = vadd.f32 %v14242, %v14243
  %v14245 = vsel %vm7725, %v14109, 0.0
  %v14246 = vadd.f32 %v14244, %v14245
  %v14247 = vsel %vm7725, %v14111, 0.0
  %v14248 = vadd.f32 %v14246, %v14247
  %v14249 = vsel %vm7725, %v14114, 0.0
  %v14250 = vadd.f32 %v14248, %v14249
  %v14251 = vsel %vm7725, %v14116, 0.0
  %v14252 = vadd.f32 %v14250, %v14251
  %v14253 = vsel %vm7725, %v14119, 0.0
  %v14254 = vadd.f32 %v14252, %v14253
  %v14255 = vsel %vm7725, %v14121, 0.0
  %v14256 = vadd.f32 %v14254, %v14255
  %v14257 = vsel %vm7725, %v14124, 0.0
  %v14258 = vadd.f32 %v14256, %v14257
  %v14259 = vsel %vm7725, %v14126, 0.0
  %v14260 = vadd.f32 %v14258, %v14259
  %v14261 = vsel %vm7725, %v14129, 0.0
  %v14262 = vadd.f32 %v14260, %v14261
  %v14263 = vsel %vm7725, %v14131, 0.0
  %v14264 = vadd.f32 %v14262, %v14263
  %v14265 = vsel %vm7725, %v14134, 0.0
  %v14266 = vadd.f32 %v14264, %v14265
  %v14267 = vsel %vm7725, %v14136, 0.0
  %v14268 = vadd.f32 %v14266, %v14267
  %v14269 = vsel %vm7725, %v14139, 0.0
  %v14270 = vadd.f32 %v14268, %v14269
  %v14271 = vsel %vm7725, %v14141, 0.0
  %v14272 = vadd.f32 %v14270, %v14271
  %v14273 = vsel %vm7725, %v14144, 0.0
  %v14274 = vadd.f32 %v14272, %v14273
  %v14275 = vsel %vm7725, %v14146, 0.0
  %v14276 = vadd.f32 %v14274, %v14275
  %v14277 = vrot.slane %v14276, 4
  %v14278 = vadd.f32 %v14276, %v14277
  %v14279 = vrot.slane %v14278, 2
  %v14280 = vadd.f32 %v14278, %v14279
  %v14281 = vrot.slane %v14280, 1
  %v14282 = vadd.f32 %v14280, %v14281
  %v14283 = vmul.f32 %v14282, 0.001953125
  %v14284 = vsub.f32 %v13989, %v14283
  %v14285 = vsub.f32 %v13991, %v14283
  %v14286 = vsub.f32 %v13994, %v14283
  %v14287 = vsub.f32 %v13996, %v14283
  %v14288 = vsub.f32 %v13999, %v14283
  %v14289 = vsub.f32 %v14001, %v14283
  %v14290 = vsub.f32 %v14004, %v14283
  %v14291 = vsub.f32 %v14006, %v14283
  %v14292 = vsub.f32 %v14009, %v14283
  %v14293 = vsub.f32 %v14011, %v14283
  %v14294 = vsub.f32 %v14014, %v14283
  %v14295 = vsub.f32 %v14016, %v14283
  %v14296 = vsub.f32 %v14019, %v14283
  %v14297 = vsub.f32 %v14021, %v14283
  %v14298 = vsub.f32 %v14024, %v14283
  %v14299 = vsub.f32 %v14026, %v14283
  %v14300 = vsub.f32 %v14029, %v14283
  %v14301 = vsub.f32 %v14031, %v14283
  %v14302 = vsub.f32 %v14034, %v14283
  %v14303 = vsub.f32 %v14036, %v14283
  %v14304 = vsub.f32 %v14039, %v14283
  %v14305 = vsub.f32 %v14041, %v14283
  %v14306 = vsub.f32 %v14044, %v14283
  %v14307 = vsub.f32 %v14046, %v14283
  %v14308 = vsub.f32 %v14049, %v14283
  %v14309 = vsub.f32 %v14051, %v14283
  %v14310 = vsub.f32 %v14054, %v14283
  %v14311 = vsub.f32 %v14056, %v14283
  %v14312 = vsub.f32 %v14059, %v14283
  %v14313 = vsub.f32 %v14061, %v14283
  %v14314 = vsub.f32 %v14064, %v14283
  %v14315 = vsub.f32 %v14066, %v14283
  %v14316 = vsub.f32 %v14069, %v14283
  %v14317 = vsub.f32 %v14071, %v14283
  %v14318 = vsub.f32 %v14074, %v14283
  %v14319 = vsub.f32 %v14076, %v14283
  %v14320 = vsub.f32 %v14079, %v14283
  %v14321 = vsub.f32 %v14081, %v14283
  %v14322 = vsub.f32 %v14084, %v14283
  %v14323 = vsub.f32 %v14086, %v14283
  %v14324 = vsub.f32 %v14089, %v14283
  %v14325 = vsub.f32 %v14091, %v14283
  %v14326 = vsub.f32 %v14094, %v14283
  %v14327 = vsub.f32 %v14096, %v14283
  %v14328 = vsub.f32 %v14099, %v14283
  %v14329 = vsub.f32 %v14101, %v14283
  %v14330 = vsub.f32 %v14104, %v14283
  %v14331 = vsub.f32 %v14106, %v14283
  %v14332 = vsub.f32 %v14109, %v14283
  %v14333 = vsub.f32 %v14111, %v14283
  %v14334 = vsub.f32 %v14114, %v14283
  %v14335 = vsub.f32 %v14116, %v14283
  %v14336 = vsub.f32 %v14119, %v14283
  %v14337 = vsub.f32 %v14121, %v14283
  %v14338 = vsub.f32 %v14124, %v14283
  %v14339 = vsub.f32 %v14126, %v14283
  %v14340 = vsub.f32 %v14129, %v14283
  %v14341 = vsub.f32 %v14131, %v14283
  %v14342 = vsub.f32 %v14134, %v14283
  %v14343 = vsub.f32 %v14136, %v14283
  %v14344 = vsub.f32 %v14139, %v14283
  %v14345 = vsub.f32 %v14141, %v14283
  %v14346 = vsub.f32 %v14144, %v14283
  %v14347 = vsub.f32 %v14146, %v14283
  %v14348 = vmul.f32 %v14284, %v14284
  %v14349 = vmul.f32 %v14285, %v14285
  %v14350 = vmul.f32 %v14286, %v14286
  %v14351 = vmul.f32 %v14287, %v14287
  %v14352 = vmul.f32 %v14288, %v14288
  %v14353 = vmul.f32 %v14289, %v14289
  %v14354 = vmul.f32 %v14290, %v14290
  %v14355 = vmul.f32 %v14291, %v14291
  %v14356 = vmul.f32 %v14292, %v14292
  %v14357 = vmul.f32 %v14293, %v14293
  %v14358 = vmul.f32 %v14294, %v14294
  %v14359 = vmul.f32 %v14295, %v14295
  %v14360 = vmul.f32 %v14296, %v14296
  %v14361 = vmul.f32 %v14297, %v14297
  %v14362 = vmul.f32 %v14298, %v14298
  %v14363 = vmul.f32 %v14299, %v14299
  %v14364 = vmul.f32 %v14300, %v14300
  %v14365 = vmul.f32 %v14301, %v14301
  %v14366 = vmul.f32 %v14302, %v14302
  %v14367 = vmul.f32 %v14303, %v14303
  %v14368 = vmul.f32 %v14304, %v14304
  %v14369 = vmul.f32 %v14305, %v14305
  %v14370 = vmul.f32 %v14306, %v14306
  %v14371 = vmul.f32 %v14307, %v14307
  %v14372 = vmul.f32 %v14308, %v14308
  %v14373 = vmul.f32 %v14309, %v14309
  %v14374 = vmul.f32 %v14310, %v14310
  %v14375 = vmul.f32 %v14311, %v14311
  %v14376 = vmul.f32 %v14312, %v14312
  %v14377 = vmul.f32 %v14313, %v14313
  %v14378 = vmul.f32 %v14314, %v14314
  %v14379 = vmul.f32 %v14315, %v14315
  %v14380 = vmul.f32 %v14316, %v14316
  %v14381 = vmul.f32 %v14317, %v14317
  %v14382 = vmul.f32 %v14318, %v14318
  %v14383 = vmul.f32 %v14319, %v14319
  %v14384 = vmul.f32 %v14320, %v14320
  %v14385 = vmul.f32 %v14321, %v14321
  %v14386 = vmul.f32 %v14322, %v14322
  %v14387 = vmul.f32 %v14323, %v14323
  %v14388 = vmul.f32 %v14324, %v14324
  %v14389 = vmul.f32 %v14325, %v14325
  %v14390 = vmul.f32 %v14326, %v14326
  %v14391 = vmul.f32 %v14327, %v14327
  %v14392 = vmul.f32 %v14328, %v14328
  %v14393 = vmul.f32 %v14329, %v14329
  %v14394 = vmul.f32 %v14330, %v14330
  %v14395 = vmul.f32 %v14331, %v14331
  %v14396 = vmul.f32 %v14332, %v14332
  %v14397 = vmul.f32 %v14333, %v14333
  %v14398 = vmul.f32 %v14334, %v14334
  %v14399 = vmul.f32 %v14335, %v14335
  %v14400 = vmul.f32 %v14336, %v14336
  %v14401 = vmul.f32 %v14337, %v14337
  %v14402 = vmul.f32 %v14338, %v14338
  %v14403 = vmul.f32 %v14339, %v14339
  %v14404 = vmul.f32 %v14340, %v14340
  %v14405 = vmul.f32 %v14341, %v14341
  %v14406 = vmul.f32 %v14342, %v14342
  %v14407 = vmul.f32 %v14343, %v14343
  %v14408 = vmul.f32 %v14344, %v14344
  %v14409 = vmul.f32 %v14345, %v14345
  %v14410 = vmul.f32 %v14346, %v14346
  %v14411 = vmul.f32 %v14347, %v14347
  %v14412 = vsel %vm7725, %v14348, 0.0
  %v14413 = vsel %vm7725, %v14349, 0.0
  %v14414 = vadd.f32 %v14412, %v14413
  %v14415 = vsel %vm7725, %v14350, 0.0
  %v14416 = vadd.f32 %v14414, %v14415
  %v14417 = vsel %vm7725, %v14351, 0.0
  %v14418 = vadd.f32 %v14416, %v14417
  %v14419 = vsel %vm7725, %v14352, 0.0
  %v14420 = vadd.f32 %v14418, %v14419
  %v14421 = vsel %vm7725, %v14353, 0.0
  %v14422 = vadd.f32 %v14420, %v14421
  %v14423 = vsel %vm7725, %v14354, 0.0
  %v14424 = vadd.f32 %v14422, %v14423
  %v14425 = vsel %vm7725, %v14355, 0.0
  %v14426 = vadd.f32 %v14424, %v14425
  %v14427 = vsel %vm7725, %v14356, 0.0
  %v14428 = vadd.f32 %v14426, %v14427
  %v14429 = vsel %vm7725, %v14357, 0.0
  %v14430 = vadd.f32 %v14428, %v14429
  %v14431 = vsel %vm7725, %v14358, 0.0
  %v14432 = vadd.f32 %v14430, %v14431
  %v14433 = vsel %vm7725, %v14359, 0.0
  %v14434 = vadd.f32 %v14432, %v14433
  %v14435 = vsel %vm7725, %v14360, 0.0
  %v14436 = vadd.f32 %v14434, %v14435
  %v14437 = vsel %vm7725, %v14361, 0.0
  %v14438 = vadd.f32 %v14436, %v14437
  %v14439 = vsel %vm7725, %v14362, 0.0
  %v14440 = vadd.f32 %v14438, %v14439
  %v14441 = vsel %vm7725, %v14363, 0.0
  %v14442 = vadd.f32 %v14440, %v14441
  %v14443 = vsel %vm7725, %v14364, 0.0
  %v14444 = vadd.f32 %v14442, %v14443
  %v14445 = vsel %vm7725, %v14365, 0.0
  %v14446 = vadd.f32 %v14444, %v14445
  %v14447 = vsel %vm7725, %v14366, 0.0
  %v14448 = vadd.f32 %v14446, %v14447
  %v14449 = vsel %vm7725, %v14367, 0.0
  %v14450 = vadd.f32 %v14448, %v14449
  %v14451 = vsel %vm7725, %v14368, 0.0
  %v14452 = vadd.f32 %v14450, %v14451
  %v14453 = vsel %vm7725, %v14369, 0.0
  %v14454 = vadd.f32 %v14452, %v14453
  %v14455 = vsel %vm7725, %v14370, 0.0
  %v14456 = vadd.f32 %v14454, %v14455
  %v14457 = vsel %vm7725, %v14371, 0.0
  %v14458 = vadd.f32 %v14456, %v14457
  %v14459 = vsel %vm7725, %v14372, 0.0
  %v14460 = vadd.f32 %v14458, %v14459
  %v14461 = vsel %vm7725, %v14373, 0.0
  %v14462 = vadd.f32 %v14460, %v14461
  %v14463 = vsel %vm7725, %v14374, 0.0
  %v14464 = vadd.f32 %v14462, %v14463
  %v14465 = vsel %vm7725, %v14375, 0.0
  %v14466 = vadd.f32 %v14464, %v14465
  %v14467 = vsel %vm7725, %v14376, 0.0
  %v14468 = vadd.f32 %v14466, %v14467
  %v14469 = vsel %vm7725, %v14377, 0.0
  %v14470 = vadd.f32 %v14468, %v14469
  %v14471 = vsel %vm7725, %v14378, 0.0
  %v14472 = vadd.f32 %v14470, %v14471
  %v14473 = vsel %vm7725, %v14379, 0.0
  %v14474 = vadd.f32 %v14472, %v14473
  %v14475 = vsel %vm7725, %v14380, 0.0
  %v14476 = vadd.f32 %v14474, %v14475
  %v14477 = vsel %vm7725, %v14381, 0.0
  %v14478 = vadd.f32 %v14476, %v14477
  %v14479 = vsel %vm7725, %v14382, 0.0
  %v14480 = vadd.f32 %v14478, %v14479
  %v14481 = vsel %vm7725, %v14383, 0.0
  %v14482 = vadd.f32 %v14480, %v14481
  %v14483 = vsel %vm7725, %v14384, 0.0
  %v14484 = vadd.f32 %v14482, %v14483
  %v14485 = vsel %vm7725, %v14385, 0.0
  %v14486 = vadd.f32 %v14484, %v14485
  %v14487 = vsel %vm7725, %v14386, 0.0
  %v14488 = vadd.f32 %v14486, %v14487
  %v14489 = vsel %vm7725, %v14387, 0.0
  %v14490 = vadd.f32 %v14488, %v14489
  %v14491 = vsel %vm7725, %v14388, 0.0
  %v14492 = vadd.f32 %v14490, %v14491
  %v14493 = vsel %vm7725, %v14389, 0.0
  %v14494 = vadd.f32 %v14492, %v14493
  %v14495 = vsel %vm7725, %v14390, 0.0
  %v14496 = vadd.f32 %v14494, %v14495
  %v14497 = vsel %vm7725, %v14391, 0.0
  %v14498 = vadd.f32 %v14496, %v14497
  %v14499 = vsel %vm7725, %v14392, 0.0
  %v14500 = vadd.f32 %v14498, %v14499
  %v14501 = vsel %vm7725, %v14393, 0.0
  %v14502 = vadd.f32 %v14500, %v14501
  %v14503 = vsel %vm7725, %v14394, 0.0
  %v14504 = vadd.f32 %v14502, %v14503
  %v14505 = vsel %vm7725, %v14395, 0.0
  %v14506 = vadd.f32 %v14504, %v14505
  %v14507 = vsel %vm7725, %v14396, 0.0
  %v14508 = vadd.f32 %v14506, %v14507
  %v14509 = vsel %vm7725, %v14397, 0.0
  %v14510 = vadd.f32 %v14508, %v14509
  %v14511 = vsel %vm7725, %v14398, 0.0
  %v14512 = vadd.f32 %v14510, %v14511
  %v14513 = vsel %vm7725, %v14399, 0.0
  %v14514 = vadd.f32 %v14512, %v14513
  %v14515 = vsel %vm7725, %v14400, 0.0
  %v14516 = vadd.f32 %v14514, %v14515
  %v14517 = vsel %vm7725, %v14401, 0.0
  %v14518 = vadd.f32 %v14516, %v14517
  %v14519 = vsel %vm7725, %v14402, 0.0
  %v14520 = vadd.f32 %v14518, %v14519
  %v14521 = vsel %vm7725, %v14403, 0.0
  %v14522 = vadd.f32 %v14520, %v14521
  %v14523 = vsel %vm7725, %v14404, 0.0
  %v14524 = vadd.f32 %v14522, %v14523
  %v14525 = vsel %vm7725, %v14405, 0.0
  %v14526 = vadd.f32 %v14524, %v14525
  %v14527 = vsel %vm7725, %v14406, 0.0
  %v14528 = vadd.f32 %v14526, %v14527
  %v14529 = vsel %vm7725, %v14407, 0.0
  %v14530 = vadd.f32 %v14528, %v14529
  %v14531 = vsel %vm7725, %v14408, 0.0
  %v14532 = vadd.f32 %v14530, %v14531
  %v14533 = vsel %vm7725, %v14409, 0.0
  %v14534 = vadd.f32 %v14532, %v14533
  %v14535 = vsel %vm7725, %v14410, 0.0
  %v14536 = vadd.f32 %v14534, %v14535
  %v14537 = vsel %vm7725, %v14411, 0.0
  %v14538 = vadd.f32 %v14536, %v14537
  %v14539 = vrot.slane %v14538, 4
  %v14540 = vadd.f32 %v14538, %v14539
  %v14541 = vrot.slane %v14540, 2
  %v14542 = vadd.f32 %v14540, %v14541
  %v14543 = vrot.slane %v14542, 1
  %v14544 = vadd.f32 %v14542, %v14543
  %v14545 = vmul.f32 %v14544, 0.001953125
  %v14546 = vadd.f32 %v14545, 1e-05
  %v14547 = vrsqrt.pop %v14546
  %v14548 = vmul.f32 %v14547, %v14546
  %v14549 = vmul.f32 %v14548, %v14547
  %v14550 = vmul.f32 0.5, %v14549
  %v14551 = vsub.f32 1.5, %v14550
  %v14552 = vmul.f32 %v14547, %v14551
  %vm14553 = vweird.f32 %v14546
  %vm14554 = vweird.f32 %v14547
  %vm14555 = vmor %vm14553, %vm14554
  %v14556 = vsel %vm14555, %v14547, %v14552
  %v14557 = vmul.f32 %v14284, %v14556
  %v14558 = vmul.f32 %v14285, %v14556
  %v14559 = vmul.f32 %v14286, %v14556
  %v14560 = vmul.f32 %v14287, %v14556
  %v14561 = vmul.f32 %v14288, %v14556
  %v14562 = vmul.f32 %v14289, %v14556
  %v14563 = vmul.f32 %v14290, %v14556
  %v14564 = vmul.f32 %v14291, %v14556
  %v14565 = vmul.f32 %v14292, %v14556
  %v14566 = vmul.f32 %v14293, %v14556
  %v14567 = vmul.f32 %v14294, %v14556
  %v14568 = vmul.f32 %v14295, %v14556
  %v14569 = vmul.f32 %v14296, %v14556
  %v14570 = vmul.f32 %v14297, %v14556
  %v14571 = vmul.f32 %v14298, %v14556
  %v14572 = vmul.f32 %v14299, %v14556
  %v14573 = vmul.f32 %v14300, %v14556
  %v14574 = vmul.f32 %v14301, %v14556
  %v14575 = vmul.f32 %v14302, %v14556
  %v14576 = vmul.f32 %v14303, %v14556
  %v14577 = vmul.f32 %v14304, %v14556
  %v14578 = vmul.f32 %v14305, %v14556
  %v14579 = vmul.f32 %v14306, %v14556
  %v14580 = vmul.f32 %v14307, %v14556
  %v14581 = vmul.f32 %v14308, %v14556
  %v14582 = vmul.f32 %v14309, %v14556
  %v14583 = vmul.f32 %v14310, %v14556
  %v14584 = vmul.f32 %v14311, %v14556
  %v14585 = vmul.f32 %v14312, %v14556
  %v14586 = vmul.f32 %v14313, %v14556
  %v14587 = vmul.f32 %v14314, %v14556
  %v14588 = vmul.f32 %v14315, %v14556
  %v14589 = vmul.f32 %v14316, %v14556
  %v14590 = vmul.f32 %v14317, %v14556
  %v14591 = vmul.f32 %v14318, %v14556
  %v14592 = vmul.f32 %v14319, %v14556
  %v14593 = vmul.f32 %v14320, %v14556
  %v14594 = vmul.f32 %v14321, %v14556
  %v14595 = vmul.f32 %v14322, %v14556
  %v14596 = vmul.f32 %v14323, %v14556
  %v14597 = vmul.f32 %v14324, %v14556
  %v14598 = vmul.f32 %v14325, %v14556
  %v14599 = vmul.f32 %v14326, %v14556
  %v14600 = vmul.f32 %v14327, %v14556
  %v14601 = vmul.f32 %v14328, %v14556
  %v14602 = vmul.f32 %v14329, %v14556
  %v14603 = vmul.f32 %v14330, %v14556
  %v14604 = vmul.f32 %v14331, %v14556
  %v14605 = vmul.f32 %v14332, %v14556
  %v14606 = vmul.f32 %v14333, %v14556
  %v14607 = vmul.f32 %v14334, %v14556
  %v14608 = vmul.f32 %v14335, %v14556
  %v14609 = vmul.f32 %v14336, %v14556
  %v14610 = vmul.f32 %v14337, %v14556
  %v14611 = vmul.f32 %v14338, %v14556
  %v14612 = vmul.f32 %v14339, %v14556
  %v14613 = vmul.f32 %v14340, %v14556
  %v14614 = vmul.f32 %v14341, %v14556
  %v14615 = vmul.f32 %v14342, %v14556
  %v14616 = vmul.f32 %v14343, %v14556
  %v14617 = vmul.f32 %v14344, %v14556
  %v14618 = vmul.f32 %v14345, %v14556
  %v14619 = vmul.f32 %v14346, %v14556
  %v14620 = vmul.f32 %v14347, %v14556
  %v14622 = vperm.slane %v14148, 0
  %v14624 = vmul.f32 %v14557, %v14622
  %v14625 = vmul.f32 %v14558, %v14622
  %v14626 = vmul.f32 %v14559, %v14622
  %v14627 = vmul.f32 %v14560, %v14622
  %v14628 = vmul.f32 %v14561, %v14622
  %v14629 = vmul.f32 %v14562, %v14622
  %v14630 = vmul.f32 %v14563, %v14622
  %v14631 = vmul.f32 %v14564, %v14622
  %v14632 = vmul.f32 %v14565, %v14622
  %v14633 = vmul.f32 %v14566, %v14622
  %v14634 = vmul.f32 %v14567, %v14622
  %v14635 = vmul.f32 %v14568, %v14622
  %v14636 = vmul.f32 %v14569, %v14622
  %v14637 = vmul.f32 %v14570, %v14622
  %v14638 = vmul.f32 %v14571, %v14622
  %v14639 = vmul.f32 %v14572, %v14622
  %v14640 = vmul.f32 %v14573, %v14622
  %v14641 = vmul.f32 %v14574, %v14622
  %v14642 = vmul.f32 %v14575, %v14622
  %v14643 = vmul.f32 %v14576, %v14622
  %v14644 = vmul.f32 %v14577, %v14622
  %v14645 = vmul.f32 %v14578, %v14622
  %v14646 = vmul.f32 %v14579, %v14622
  %v14647 = vmul.f32 %v14580, %v14622
  %v14648 = vmul.f32 %v14581, %v14622
  %v14649 = vmul.f32 %v14582, %v14622
  %v14650 = vmul.f32 %v14583, %v14622
  %v14651 = vmul.f32 %v14584, %v14622
  %v14652 = vmul.f32 %v14585, %v14622
  %v14653 = vmul.f32 %v14586, %v14622
  %v14654 = vmul.f32 %v14587, %v14622
  %v14655 = vmul.f32 %v14588, %v14622
  %v14656 = vmul.f32 %v14589, %v14622
  %v14657 = vmul.f32 %v14590, %v14622
  %v14658 = vmul.f32 %v14591, %v14622
  %v14659 = vmul.f32 %v14592, %v14622
  %v14660 = vmul.f32 %v14593, %v14622
  %v14661 = vmul.f32 %v14594, %v14622
  %v14662 = vmul.f32 %v14595, %v14622
  %v14663 = vmul.f32 %v14596, %v14622
  %v14664 = vmul.f32 %v14597, %v14622
  %v14665 = vmul.f32 %v14598, %v14622
  %v14666 = vmul.f32 %v14599, %v14622
  %v14667 = vmul.f32 %v14600, %v14622
  %v14668 = vmul.f32 %v14601, %v14622
  %v14669 = vmul.f32 %v14602, %v14622
  %v14670 = vmul.f32 %v14603, %v14622
  %v14671 = vmul.f32 %v14604, %v14622
  %v14672 = vmul.f32 %v14605, %v14622
  %v14673 = vmul.f32 %v14606, %v14622
  %v14674 = vmul.f32 %v14607, %v14622
  %v14675 = vmul.f32 %v14608, %v14622
  %v14676 = vmul.f32 %v14609, %v14622
  %v14677 = vmul.f32 %v14610, %v14622
  %v14678 = vmul.f32 %v14611, %v14622
  %v14679 = vmul.f32 %v14612, %v14622
  %v14680 = vmul.f32 %v14613, %v14622
  %v14681 = vmul.f32 %v14614, %v14622
  %v14682 = vmul.f32 %v14615, %v14622
  %v14683 = vmul.f32 %v14616, %v14622
  %v14684 = vmul.f32 %v14617, %v14622
  %v14685 = vmul.f32 %v14618, %v14622
  %v14686 = vmul.f32 %v14619, %v14622
  %v14687 = vmul.f32 %v14620, %v14622
  %v14689 = vperm.slane %v14149, 0
  %v14691 = vadd.f32 %v14624, %v14689
  %v14692 = vadd.f32 %v14625, %v14689
  %v14693 = vadd.f32 %v14626, %v14689
  %v14694 = vadd.f32 %v14627, %v14689
  %v14695 = vadd.f32 %v14628, %v14689
  %v14696 = vadd.f32 %v14629, %v14689
  %v14697 = vadd.f32 %v14630, %v14689
  %v14698 = vadd.f32 %v14631, %v14689
  %v14699 = vadd.f32 %v14632, %v14689
  %v14700 = vadd.f32 %v14633, %v14689
  %v14701 = vadd.f32 %v14634, %v14689
  %v14702 = vadd.f32 %v14635, %v14689
  %v14703 = vadd.f32 %v14636, %v14689
  %v14704 = vadd.f32 %v14637, %v14689
  %v14705 = vadd.f32 %v14638, %v14689
  %v14706 = vadd.f32 %v14639, %v14689
  %v14707 = vadd.f32 %v14640, %v14689
  %v14708 = vadd.f32 %v14641, %v14689
  %v14709 = vadd.f32 %v14642, %v14689
  %v14710 = vadd.f32 %v14643, %v14689
  %v14711 = vadd.f32 %v14644, %v14689
  %v14712 = vadd.f32 %v14645, %v14689
  %v14713 = vadd.f32 %v14646, %v14689
  %v14714 = vadd.f32 %v14647, %v14689
  %v14715 = vadd.f32 %v14648, %v14689
  %v14716 = vadd.f32 %v14649, %v14689
  %v14717 = vadd.f32 %v14650, %v14689
  %v14718 = vadd.f32 %v14651, %v14689
  %v14719 = vadd.f32 %v14652, %v14689
  %v14720 = vadd.f32 %v14653, %v14689
  %v14721 = vadd.f32 %v14654, %v14689
  %v14722 = vadd.f32 %v14655, %v14689
  %v14723 = vadd.f32 %v14656, %v14689
  %v14724 = vadd.f32 %v14657, %v14689
  %v14725 = vadd.f32 %v14658, %v14689
  %v14726 = vadd.f32 %v14659, %v14689
  %v14727 = vadd.f32 %v14660, %v14689
  %v14728 = vadd.f32 %v14661, %v14689
  %v14729 = vadd.f32 %v14662, %v14689
  %v14730 = vadd.f32 %v14663, %v14689
  %v14731 = vadd.f32 %v14664, %v14689
  %v14732 = vadd.f32 %v14665, %v14689
  %v14733 = vadd.f32 %v14666, %v14689
  %v14734 = vadd.f32 %v14667, %v14689
  %v14735 = vadd.f32 %v14668, %v14689
  %v14736 = vadd.f32 %v14669, %v14689
  %v14737 = vadd.f32 %v14670, %v14689
  %v14738 = vadd.f32 %v14671, %v14689
  %v14739 = vadd.f32 %v14672, %v14689
  %v14740 = vadd.f32 %v14673, %v14689
  %v14741 = vadd.f32 %v14674, %v14689
  %v14742 = vadd.f32 %v14675, %v14689
  %v14743 = vadd.f32 %v14676, %v14689
  %v14744 = vadd.f32 %v14677, %v14689
  %v14745 = vadd.f32 %v14678, %v14689
  %v14746 = vadd.f32 %v14679, %v14689
  %v14747 = vadd.f32 %v14680, %v14689
  %v14748 = vadd.f32 %v14681, %v14689
  %v14749 = vadd.f32 %v14682, %v14689
  %v14750 = vadd.f32 %v14683, %v14689
  %v14751 = vadd.f32 %v14684, %v14689
  %v14752 = vadd.f32 %v14685, %v14689
  %v14753 = vadd.f32 %v14686, %v14689
  %v14754 = vadd.f32 %v14687, %v14689
  %v14755 = vadd.f32 %v12855, %v14691
  %v14756 = vadd.f32 %v12856, %v14692
  %v14757 = vadd.f32 %v12857, %v14693
  %v14758 = vadd.f32 %v12858, %v14694
  %v14759 = vadd.f32 %v12859, %v14695
  %v14760 = vadd.f32 %v12860, %v14696
  %v14761 = vadd.f32 %v12861, %v14697
  %v14762 = vadd.f32 %v12862, %v14698
  %v14763 = vadd.f32 %v12863, %v14699
  %v14764 = vadd.f32 %v12864, %v14700
  %v14765 = vadd.f32 %v12865, %v14701
  %v14766 = vadd.f32 %v12866, %v14702
  %v14767 = vadd.f32 %v12867, %v14703
  %v14768 = vadd.f32 %v12868, %v14704
  %v14769 = vadd.f32 %v12869, %v14705
  %v14770 = vadd.f32 %v12870, %v14706
  %v14771 = vadd.f32 %v12871, %v14707
  %v14772 = vadd.f32 %v12872, %v14708
  %v14773 = vadd.f32 %v12873, %v14709
  %v14774 = vadd.f32 %v12874, %v14710
  %v14775 = vadd.f32 %v12875, %v14711
  %v14776 = vadd.f32 %v12876, %v14712
  %v14777 = vadd.f32 %v12877, %v14713
  %v14778 = vadd.f32 %v12878, %v14714
  %v14779 = vadd.f32 %v12879, %v14715
  %v14780 = vadd.f32 %v12880, %v14716
  %v14781 = vadd.f32 %v12881, %v14717
  %v14782 = vadd.f32 %v12882, %v14718
  %v14783 = vadd.f32 %v12883, %v14719
  %v14784 = vadd.f32 %v12884, %v14720
  %v14785 = vadd.f32 %v12885, %v14721
  %v14786 = vadd.f32 %v12886, %v14722
  %v14787 = vadd.f32 %v12887, %v14723
  %v14788 = vadd.f32 %v12888, %v14724
  %v14789 = vadd.f32 %v12889, %v14725
  %v14790 = vadd.f32 %v12890, %v14726
  %v14791 = vadd.f32 %v12891, %v14727
  %v14792 = vadd.f32 %v12892, %v14728
  %v14793 = vadd.f32 %v12893, %v14729
  %v14794 = vadd.f32 %v12894, %v14730
  %v14795 = vadd.f32 %v12895, %v14731
  %v14796 = vadd.f32 %v12896, %v14732
  %v14797 = vadd.f32 %v12897, %v14733
  %v14798 = vadd.f32 %v12898, %v14734
  %v14799 = vadd.f32 %v12899, %v14735
  %v14800 = vadd.f32 %v12900, %v14736
  %v14801 = vadd.f32 %v12901, %v14737
  %v14802 = vadd.f32 %v12902, %v14738
  %v14803 = vadd.f32 %v12903, %v14739
  %v14804 = vadd.f32 %v12904, %v14740
  %v14805 = vadd.f32 %v12905, %v14741
  %v14806 = vadd.f32 %v12906, %v14742
  %v14807 = vadd.f32 %v12907, %v14743
  %v14808 = vadd.f32 %v12908, %v14744
  %v14809 = vadd.f32 %v12909, %v14745
  %v14810 = vadd.f32 %v12910, %v14746
  %v14811 = vadd.f32 %v12911, %v14747
  %v14812 = vadd.f32 %v12912, %v14748
  %v14813 = vadd.f32 %v12913, %v14749
  %v14814 = vadd.f32 %v12914, %v14750
  %v14815 = vadd.f32 %v12915, %v14751
  %v14816 = vadd.f32 %v12916, %v14752
  %v14817 = vadd.f32 %v12917, %v14753
  %v14818 = vadd.f32 %v12918, %v14754
  %v14819 = vmax.f32 %v14755, 0.0
  %v14820 = vmax.f32 %v14756, 0.0
  %v14821 = vmax.f32 %v14757, 0.0
  %v14822 = vmax.f32 %v14758, 0.0
  %v14823 = vmax.f32 %v14759, 0.0
  %v14824 = vmax.f32 %v14760, 0.0
  %v14825 = vmax.f32 %v14761, 0.0
  %v14826 = vmax.f32 %v14762, 0.0
  %v14827 = vmax.f32 %v14763, 0.0
  %v14828 = vmax.f32 %v14764, 0.0
  %v14829 = vmax.f32 %v14765, 0.0
  %v14830 = vmax.f32 %v14766, 0.0
  %v14831 = vmax.f32 %v14767, 0.0
  %v14832 = vmax.f32 %v14768, 0.0
  %v14833 = vmax.f32 %v14769, 0.0
  %v14834 = vmax.f32 %v14770, 0.0
  %v14835 = vmax.f32 %v14771, 0.0
  %v14836 = vmax.f32 %v14772, 0.0
  %v14837 = vmax.f32 %v14773, 0.0
  %v14838 = vmax.f32 %v14774, 0.0
  %v14839 = vmax.f32 %v14775, 0.0
  %v14840 = vmax.f32 %v14776, 0.0
  %v14841 = vmax.f32 %v14777, 0.0
  %v14842 = vmax.f32 %v14778, 0.0
  %v14843 = vmax.f32 %v14779, 0.0
  %v14844 = vmax.f32 %v14780, 0.0
  %v14845 = vmax.f32 %v14781, 0.0
  %v14846 = vmax.f32 %v14782, 0.0
  %v14847 = vmax.f32 %v14783, 0.0
  %v14848 = vmax.f32 %v14784, 0.0
  %v14849 = vmax.f32 %v14785, 0.0
  %v14850 = vmax.f32 %v14786, 0.0
  %v14851 = vmax.f32 %v14787, 0.0
  %v14852 = vmax.f32 %v14788, 0.0
  %v14853 = vmax.f32 %v14789, 0.0
  %v14854 = vmax.f32 %v14790, 0.0
  %v14855 = vmax.f32 %v14791, 0.0
  %v14856 = vmax.f32 %v14792, 0.0
  %v14857 = vmax.f32 %v14793, 0.0
  %v14858 = vmax.f32 %v14794, 0.0
  %v14859 = vmax.f32 %v14795, 0.0
  %v14860 = vmax.f32 %v14796, 0.0
  %v14861 = vmax.f32 %v14797, 0.0
  %v14862 = vmax.f32 %v14798, 0.0
  %v14863 = vmax.f32 %v14799, 0.0
  %v14864 = vmax.f32 %v14800, 0.0
  %v14865 = vmax.f32 %v14801, 0.0
  %v14866 = vmax.f32 %v14802, 0.0
  %v14867 = vmax.f32 %v14803, 0.0
  %v14868 = vmax.f32 %v14804, 0.0
  %v14869 = vmax.f32 %v14805, 0.0
  %v14870 = vmax.f32 %v14806, 0.0
  %v14871 = vmax.f32 %v14807, 0.0
  %v14872 = vmax.f32 %v14808, 0.0
  %v14873 = vmax.f32 %v14809, 0.0
  %v14874 = vmax.f32 %v14810, 0.0
  %v14875 = vmax.f32 %v14811, 0.0
  %v14876 = vmax.f32 %v14812, 0.0
  %v14877 = vmax.f32 %v14813, 0.0
  %v14878 = vmax.f32 %v14814, 0.0
  %v14879 = vmax.f32 %v14815, 0.0
  %v14880 = vmax.f32 %v14816, 0.0
  %v14881 = vmax.f32 %v14817, 0.0
  %v14882 = vmax.f32 %v14818, 0.0
  %14883 = vst.msk [vmem:[%s10] sm:$0xff] %vm7725, %v14819
  %14884 = vst.msk [vmem:[%s10 + $0x8] sm:$0xff] %vm7725, %v14820
  %14885 = vst.msk [vmem:[%s10 + $0x10] sm:$0xff] %vm7725, %v14821
  %14886 = vst.msk [vmem:[%s10 + $0x18] sm:$0xff] %vm7725, %v14822
  %14887 = vst.msk [vmem:[%s10 + $0x20] sm:$0xff] %vm7725, %v14823
  %14888 = vst.msk [vmem:[%s10 + $0x28] sm:$0xff] %vm7725, %v14824
  %14889 = vst.msk [vmem:[%s10 + $0x30] sm:$0xff] %vm7725, %v14825
  %14890 = vst.msk [vmem:[%s10 + $0x38] sm:$0xff] %vm7725, %v14826
  %14891 = vst.msk [vmem:[%s10 + $0x40] sm:$0xff] %vm7725, %v14827
  %14892 = vst.msk [vmem:[%s10 + $0x48] sm:$0xff] %vm7725, %v14828
  %14893 = vst.msk [vmem:[%s10 + $0x50] sm:$0xff] %vm7725, %v14829
  %14894 = vst.msk [vmem:[%s10 + $0x58] sm:$0xff] %vm7725, %v14830
  %14895 = vst.msk [vmem:[%s10 + $0x60] sm:$0xff] %vm7725, %v14831
  %14896 = vst.msk [vmem:[%s10 + $0x68] sm:$0xff] %vm7725, %v14832
  %14897 = vst.msk [vmem:[%s10 + $0x70] sm:$0xff] %vm7725, %v14833
  %14898 = vst.msk [vmem:[%s10 + $0x78] sm:$0xff] %vm7725, %v14834
  %14899 = vst.msk [vmem:[%s10 + $0x80] sm:$0xff] %vm7725, %v14835
  %14900 = vst.msk [vmem:[%s10 + $0x88] sm:$0xff] %vm7725, %v14836
  %14901 = vst.msk [vmem:[%s10 + $0x90] sm:$0xff] %vm7725, %v14837
  %14902 = vst.msk [vmem:[%s10 + $0x98] sm:$0xff] %vm7725, %v14838
  %14903 = vst.msk [vmem:[%s10 + $0xa0] sm:$0xff] %vm7725, %v14839
  %14904 = vst.msk [vmem:[%s10 + $0xa8] sm:$0xff] %vm7725, %v14840
  %14905 = vst.msk [vmem:[%s10 + $0xb0] sm:$0xff] %vm7725, %v14841
  %14906 = vst.msk [vmem:[%s10 + $0xb8] sm:$0xff] %vm7725, %v14842
  %14907 = vst.msk [vmem:[%s10 + $0xc0] sm:$0xff] %vm7725, %v14843
  %14908 = vst.msk [vmem:[%s10 + $0xc8] sm:$0xff] %vm7725, %v14844
  %14909 = vst.msk [vmem:[%s10 + $0xd0] sm:$0xff] %vm7725, %v14845
  %14910 = vst.msk [vmem:[%s10 + $0xd8] sm:$0xff] %vm7725, %v14846
  %14911 = vst.msk [vmem:[%s10 + $0xe0] sm:$0xff] %vm7725, %v14847
  %14912 = vst.msk [vmem:[%s10 + $0xe8] sm:$0xff] %vm7725, %v14848
  %14913 = vst.msk [vmem:[%s10 + $0xf0] sm:$0xff] %vm7725, %v14849
  %14914 = vst.msk [vmem:[%s10 + $0xf8] sm:$0xff] %vm7725, %v14850
  %14915 = vst.msk [vmem:[%s10 + $0x100] sm:$0xff] %vm7725, %v14851
  %14916 = vst.msk [vmem:[%s10 + $0x108] sm:$0xff] %vm7725, %v14852
  %14917 = vst.msk [vmem:[%s10 + $0x110] sm:$0xff] %vm7725, %v14853
  %14918 = vst.msk [vmem:[%s10 + $0x118] sm:$0xff] %vm7725, %v14854
  %14919 = vst.msk [vmem:[%s10 + $0x120] sm:$0xff] %vm7725, %v14855
  %14920 = vst.msk [vmem:[%s10 + $0x128] sm:$0xff] %vm7725, %v14856
  %14921 = vst.msk [vmem:[%s10 + $0x130] sm:$0xff] %vm7725, %v14857
  %14922 = vst.msk [vmem:[%s10 + $0x138] sm:$0xff] %vm7725, %v14858
  %14923 = vst.msk [vmem:[%s10 + $0x140] sm:$0xff] %vm7725, %v14859
  %14924 = vst.msk [vmem:[%s10 + $0x148] sm:$0xff] %vm7725, %v14860
  %14925 = vst.msk [vmem:[%s10 + $0x150] sm:$0xff] %vm7725, %v14861
  %14926 = vst.msk [vmem:[%s10 + $0x158] sm:$0xff] %vm7725, %v14862
  %14927 = vst.msk [vmem:[%s10 + $0x160] sm:$0xff] %vm7725, %v14863
  %14928 = vst.msk [vmem:[%s10 + $0x168] sm:$0xff] %vm7725, %v14864
  %14929 = vst.msk [vmem:[%s10 + $0x170] sm:$0xff] %vm7725, %v14865
  %14930 = vst.msk [vmem:[%s10 + $0x178] sm:$0xff] %vm7725, %v14866
  %14931 = vst.msk [vmem:[%s10 + $0x180] sm:$0xff] %vm7725, %v14867
  %14932 = vst.msk [vmem:[%s10 + $0x188] sm:$0xff] %vm7725, %v14868
  %14933 = vst.msk [vmem:[%s10 + $0x190] sm:$0xff] %vm7725, %v14869
  %14934 = vst.msk [vmem:[%s10 + $0x198] sm:$0xff] %vm7725, %v14870
  %14935 = vst.msk [vmem:[%s10 + $0x1a0] sm:$0xff] %vm7725, %v14871
  %14936 = vst.msk [vmem:[%s10 + $0x1a8] sm:$0xff] %vm7725, %v14872
  %14937 = vst.msk [vmem:[%s10 + $0x1b0] sm:$0xff] %vm7725, %v14873
  %14938 = vst.msk [vmem:[%s10 + $0x1b8] sm:$0xff] %vm7725, %v14874
  %14939 = vst.msk [vmem:[%s10 + $0x1c0] sm:$0xff] %vm7725, %v14875
  %14940 = vst.msk [vmem:[%s10 + $0x1c8] sm:$0xff] %vm7725, %v14876
  %14941 = vst.msk [vmem:[%s10 + $0x1d0] sm:$0xff] %vm7725, %v14877
  %14942 = vst.msk [vmem:[%s10 + $0x1d8] sm:$0xff] %vm7725, %v14878
  %14943 = vst.msk [vmem:[%s10 + $0x1e0] sm:$0xff] %vm7725, %v14879
  %14944 = vst.msk [vmem:[%s10 + $0x1e8] sm:$0xff] %vm7725, %v14880
  %14945 = vst.msk [vmem:[%s10 + $0x1f0] sm:$0xff] %vm7725, %v14881
  %14946 = vst.msk [vmem:[%s10 + $0x1f8] sm:$0xff] %vm7725, %v14882
  // Predicated region
  $region42: #{tpu_custom_call.1} parent=0 // pred_check
    _
  $region43: #{tpu_custom_call.1} parent=0 // pred_check_branch
    %14948 = sbr.rel (0) target = $region45
  $region44: #{tpu_custom_call.1} parent=0 // pred_region
    _
  $region45: #{tpu_custom_call.1} parent=0 // pred_fallthru
    _
  // Predicated region
  $region46: #{tpu_custom_call.1} parent=0 // pred_check
    _
  $region47: #{tpu_custom_call.1} parent=0 // pred_check_branch
    %14950 = sbr.rel (0) target = $region49
  $region48: #{tpu_custom_call.1} parent=0 // pred_region
    _
  $region49: #{tpu_custom_call.1} parent=0 // pred_fallthru
    _

</llo_original>
